<compile_context>
chip_gen: v7x
topology: tpu7x:2x2x1
jax: 0.10.0
libtpu: 0.0.40
codegen_flags: <defaults>
</compile_context>

<pallas_src>
import functools

import jax
import jax.numpy as jnp
from jax.experimental import pallas as pl
from jax.experimental.pallas import tpu as pltpu

BN_EPS = 1e-5
LANE = 128


def _ceil_to(x, m):
    return (x + m - 1) // m * m


# --------------------------------------------------------------------------
# im2col tap fill (lane-aligned, bf16, ref-sliced)
# --------------------------------------------------------------------------
def _fill_im2col_tap(imc_ref, stage_ref, tap):
    """Copy tap (kh, kw) of a 3x3 same-padding window into the im2col scratch.

    stage_ref : VMEM (Bt, H, W, Cp) bf16, channel-padded source (pad cols = 0).
    imc_ref   : VMEM (Bt, H, W, K) bf16, K >= 9*Cp; tap occupies lanes
                [tap*Cp, (tap+1)*Cp).  Cp is a multiple of 128, so every tap
                write is a lane-aligned, full-lane (unmasked) store.
    Out-of-bounds halo rows/cols are zero-filled with small strip stores;
    no zero-padded activation copy is ever materialized.
    """
    Bt, H, W, Cp = stage_ref.shape
    kh, kw = tap // 3, tap % 3
    dh, dw = kh - 1, kw - 1
    j0 = tap * Cp
    h_lo, h_hi = max(0, -dh), min(H, H - dh)
    w_lo, w_hi = max(0, -dw), min(W, W - dw)
    zdt = imc_ref.dtype
    if h_lo > 0:
        imc_ref[:, 0:h_lo, :, j0:j0 + Cp] = jnp.zeros((Bt, h_lo, W, Cp), zdt)
    if h_hi < H:
        imc_ref[:, h_hi:H, :, j0:j0 + Cp] = jnp.zeros((Bt, H - h_hi, W, Cp), zdt)
    if w_lo > 0:
        imc_ref[:, :, 0:w_lo, j0:j0 + Cp] = jnp.zeros((Bt, H, w_lo, Cp), zdt)
    if w_hi < W:
        imc_ref[:, :, w_hi:W, j0:j0 + Cp] = jnp.zeros((Bt, H, W - w_hi, Cp), zdt)
    imc_ref[:, h_lo:h_hi, w_lo:w_hi, j0:j0 + Cp] = (
        stage_ref[:, h_lo + dh:h_hi + dh, w_lo + dw:w_hi + dw, :])


# --------------------------------------------------------------------------
# pass 1: conv1 (im2col -> one MXU matmul) + per-tile BN partial statistics
# --------------------------------------------------------------------------
def _conv1_stats_kernel(x_ref, w1_ref, h1_ref, stats_ref, imc_ref, stage_ref):
    Bt, H, W, Cin = x_ref.shape
    Cout = h1_ref.shape[-1]
    Cp = stage_ref.shape[-1]

    # Stage x once as bf16 with channels padded to a lane multiple.  The pad
    # columns are re-zeroed every step (scratch persists across steps and the
    # grid may be split across TensorCores, so no program_id==0 init).
    stage_ref[..., 0:Cin] = x_ref[...].astype(jnp.bfloat16)
    if Cin < Cp:
        stage_ref[..., Cin:Cp] = jnp.zeros((Bt, H, W, Cp - Cin), jnp.bfloat16)

    for tap in range(9):
        _fill_im2col_tap(imc_ref, stage_ref, tap)

    patches = imc_ref[...].reshape(Bt * H * W, 9 * Cp)          # bf16
    h1 = jnp.dot(patches, w1_ref[...],                          # bf16 x bf16
                 preferred_element_type=jnp.float32)            # f32 accumulate

    # bf16 round-trip for the largest HBM tensor; stats from the f32 values.
    h1_ref[...] = h1.reshape(Bt, H, W, Cout).astype(h1_ref.dtype)
    stats_ref[0:1, 0:1, :] = jnp.sum(h1, axis=0).reshape(1, 1, Cout)
    stats_ref[0:1, 1:2, :] = jnp.sum(h1 * h1, axis=0).reshape(1, 1, Cout)


# --------------------------------------------------------------------------
# pass 2: BN affine + ReLU + conv2 (+ fused 1x1 projection) + shortcut add
# --------------------------------------------------------------------------
def _bn_relu_conv2_add_kernel(has_projection, h1_ref, x_ref, w2_ref, s_ref,
                              t_ref, out_ref, imc_ref, stage_ref):
    Bt, H, W, Cout = h1_ref.shape
    Cin = x_ref.shape[-1]
    Cp = stage_ref.shape[-1]
    K = imc_ref.shape[-1]

    # BN collapsed to one FMA (s, t precomputed from global batch stats);
    # BN / ReLU math stays in f32, result staged as bf16 (lane-padded).
    s = s_ref[...].reshape(1, 1, 1, Cout)
    t = t_ref[...].reshape(1, 1, 1, Cout)
    y1 = jnp.maximum(h1_ref[...].astype(jnp.float32) * s + t, 0.0)
    stage_ref[..., 0:Cout] = y1.astype(jnp.bfloat16)
    if Cout < Cp:
        stage_ref[..., Cout:Cp] = jnp.zeros((Bt, H, W, Cp - Cout), jnp.bfloat16)

    for tap in range(9):
        _fill_im2col_tap(imc_ref, stage_ref, tap)

    if has_projection:
        # 1x1 projection shortcut fused into the same MXU contraction:
        # x's Cin channels become extra K columns, wsc is stacked under w2.
        imc_ref[..., 9 * Cp:9 * Cp + Cin] = x_ref[...].astype(jnp.bfloat16)

    patches = imc_ref[...].reshape(Bt * H * W, K)
    acc = jnp.dot(patches, w2_ref[...], preferred_element_type=jnp.float32)

    if not has_projection:
        # identity shortcut (Cin == Cout): add in f32, no MXU launch.
        acc = acc + x_ref[...].reshape(Bt * H * W, Cin).astype(jnp.float32)

    out_ref[...] = acc.reshape(Bt, H, W, Cout).astype(out_ref.dtype)


# --------------------------------------------------------------------------
# parameters / weight prep (one-time, outside the grid loop)
# --------------------------------------------------------------------------
def init_basic_block_params(key, in_channels, out_channels, stride=1,
                            dtype=jnp.float32):
    """Deterministic synthetic parameters (same shapes as the nn.Module)."""
    k1, k2, k3, k4, k5 = jax.random.split(key, 5)
    w1 = 0.1 * jax.random.normal(k1, (3, 3, in_channels, out_channels), dtype)
    w2 = 0.1 * jax.random.normal(k2, (3, 3, out_channels, out_channels), dtype)
    g1 = 1.0 + 0.1 * jax.random.normal(k3, (out_channels,), dtype)
    b1 = 0.1 * jax.random.normal(k4, (out_channels,), dtype)
    params = dict(
        w1=w1.reshape(9 * in_channels, out_channels),   # (kh, kw, cin) x cout
        w2=w2.reshape(9 * out_channels, out_channels),
        g1=g1.reshape(1, out_channels),
        b1=b1.reshape(1, out_channels),
    )
    if stride != 1 or in_channels != out_channels:
        params["wsc"] = 0.1 * jax.random.normal(
            k5, (in_channels, out_channels), dtype)
    # empty Sequential (identity shortcut): no "wsc" key -> projection skipped.
    return params


def _prep_block_weights(params, Cin, Cout, Cpi, Cpo, has_projection):
    """bf16 cast + channel-pad + wsc stacking, once per call (not per step)."""
    w1 = params["w1"].reshape(9, Cin, Cout).astype(jnp.bfloat16)
    w1p = jnp.zeros((9, Cpi, Cout), jnp.bfloat16).at[:, :Cin, :].set(w1)
    w1p = w1p.reshape(9 * Cpi, Cout)

    w2 = params["w2"].reshape(9, Cout, Cout).astype(jnp.bfloat16)
    w2p = jnp.zeros((9, Cpo, Cout), jnp.bfloat16).at[:, :Cout, :].set(w2)
    w2p = w2p.reshape(9 * Cpo, Cout)
    if has_projection:
        w2p = jnp.concatenate([w2p, params["wsc"].astype(jnp.bfloat16)], axis=0)
    return w1p, w2p


# --------------------------------------------------------------------------
# tiling / VMEM sizing
# --------------------------------------------------------------------------
def _vmem_capacity_bytes():
    try:
        return int(pltpu.get_tpu_info().vmem_capacity_bytes)
    except Exception:
        return 64 * 1024 * 1024   # v7x per-core capacity; safe everywhere


def _pass_vmem_bytes(Bt, H, W, Cin, Cout, Cpi, Cpo, K2):
    """Rough per-step VMEM need (double-buffered I/O blocks + scratch)."""
    hw = Bt * H * W
    bf, f4 = 2, 4
    io1 = 2 * (hw * Cin * f4 + hw * Cout * bf + 2 * Cout * f4) + 2 * 9 * Cpi * Cout * bf
    sc1 = hw * 9 * Cpi * bf + hw * Cpi * bf
    io2 = 2 * (hw * Cout * bf + hw * Cin * f4 + hw * Cout * f4) + 2 * K2 * Cout * bf
    sc2 = hw * K2 * bf + hw * Cpo * bf
    return max(io1 + sc1, io2 + sc2)


def _pick_batch_tile(N, budget_bytes, need_fn):
    """Largest divisor of N that fits the budget, preferring >= 2 grid steps
    (keeps both v7x TensorCores busy and leaves pipelining something to do)."""
    fits = [b for b in range(1, N + 1) if N % b == 0 and need_fn(b) <= budget_bytes]
    if not fits:
        return 1  # TODO(synk): H-row tiling for blocks that exceed VMEM at Bt=1.
    multi = [b for b in fits if N // b >= 2]
    return max(multi) if multi else max(fits)


# --------------------------------------------------------------------------
# forward
# --------------------------------------------------------------------------
def basic_block_forward_nhwc(x, params):
    """x: (N, H, W, Cin) NHWC.  Returns (N, H, W, Cout)."""
    N, H, W, Cin = x.shape
    Cout = params["w1"].shape[-1]
    has_projection = "wsc" in params
    Cpi = _ceil_to(Cin, LANE)                      # lane-aligned padded channels
    Cpo = _ceil_to(Cout, LANE)
    K2 = 9 * Cpo + (Cin if has_projection else 0)  # conv2 (+ fused projection) K

    capacity = _vmem_capacity_bytes()
    need_fn = lambda b: _pass_vmem_bytes(b, H, W, Cin, Cout, Cpi, Cpo, K2)
    Bt = _pick_batch_tile(N, capacity // 3, need_fn)
    G = N // Bt
    vmem_limit = int(max(32 * 1024 * 1024,
                         min(need_fn(Bt) * 5 // 4, capacity * 3 // 4)))

    w1p, w2s = _prep_block_weights(params, Cin, Cout, Cpi, Cpo, has_projection)

    cparams = pltpu.CompilerParams(
        dimension_semantics=("parallel",),         # megacore-shardable batch axis
        vmem_limit_bytes=vmem_limit,
    )

    # ---- pass 1: conv1 + per-tile BN partial statistics ---------------------
    h1, stats = pl.pallas_call(
        _conv1_stats_kernel,
        grid=(G,),
        in_specs=[
            pl.BlockSpec((Bt, H, W, Cin), lambda g: (g, 0, 0, 0)),   # x
            pl.BlockSpec((9 * Cpi, Cout), lambda g: (0, 0)),         # w1 (bf16)
        ],
        out_specs=[
            pl.BlockSpec((Bt, H, W, Cout), lambda g: (g, 0, 0, 0)),  # h1 (bf16)
            pl.BlockSpec((1, 2, Cout), lambda g: (g, 0, 0)),         # [sum, sumsq]
        ],
        out_shape=[
            jax.ShapeDtypeStruct((N, H, W, Cout), jnp.bfloat16),
            jax.ShapeDtypeStruct((G, 2, Cout), jnp.float32),
        ],
        scratch_shapes=[
            pltpu.VMEM((Bt, H, W, 9 * Cpi), jnp.bfloat16),   # im2col
            pltpu.VMEM((Bt, H, W, Cpi), jnp.bfloat16),       # staged x
        ],
        compiler_params=cparams,
    )(x, w1p)

    # ---- tiny global reduction of partial stats (exact training-mode BN) ----
    cnt = jnp.float32(N * H * W)
    total = jnp.sum(stats, axis=0)                  # (2, Cout)
    mean = total[0] / cnt
    # NOTE: E[x^2] - E[x]^2 in f32 can cancel when |mean| >> std; clamp >= 0.
    var = jnp.maximum(total[1] / cnt - mean * mean, 0.0)
    s = params["g1"][0] * jax.lax.rsqrt(var + BN_EPS)
    t = params["b1"][0] - mean * s
    s = s.reshape(1, Cout).astype(jnp.float32)
    t = t.reshape(1, Cout).astype(jnp.float32)

    # ---- pass 2: BN affine + ReLU + conv2 + shortcut -------------------------
    out = pl.pallas_call(
        functools.partial(_bn_relu_conv2_add_kernel, has_projection),
        grid=(G,),
        in_specs=[
            pl.BlockSpec((Bt, H, W, Cout), lambda g: (g, 0, 0, 0)),  # h1 (bf16)
            pl.BlockSpec((Bt, H, W, Cin), lambda g: (g, 0, 0, 0)),   # x (shortcut)
            pl.BlockSpec((K2, Cout), lambda g: (0, 0)),              # w2 (+wsc)
            pl.BlockSpec((1, Cout), lambda g: (0, 0)),               # s
            pl.BlockSpec((1, Cout), lambda g: (0, 0)),               # t
        ],
        out_specs=pl.BlockSpec((Bt, H, W, Cout), lambda g: (g, 0, 0, 0)),
        out_shape=jax.ShapeDtypeStruct((N, H, W, Cout), x.dtype),
        scratch_shapes=[
            pltpu.VMEM((Bt, H, W, K2), jnp.bfloat16),        # im2col (+ x cols)
            pltpu.VMEM((Bt, H, W, Cpo), jnp.bfloat16),       # staged y1
        ],
        compiler_params=cparams,
    )(h1, x, w2s, s, t)
    return out


@functools.partial(jax.jit, static_argnames=("stride",))
def basic_block_forward(x_nchw, params, stride=1):
    if stride != 1:
        # TODO(synk): strided 3x3/1x1 convs (downsampling blocks) not implemented.
        raise NotImplementedError("stride != 1 not implemented in this kernel")
    x = jnp.transpose(x_nchw, (0, 2, 3, 1))          # NCHW -> NHWC
    out = basic_block_forward_nhwc(x, params)
    return jnp.transpose(out, (0, 3, 1, 2))          # NHWC -> NCHW


# --------------------------------------------------------------------------
# pure-JAX f32 reference (PyTorch training-mode forward)
# --------------------------------------------------------------------------
def _reference_forward(x_nchw, params):
    x = jnp.transpose(x_nchw, (0, 2, 3, 1)).astype(jnp.float32)
    Cin = x.shape[-1]
    Cout = params["w1"].shape[-1]
    w1 = params["w1"].reshape(3, 3, Cin, Cout)
    w2 = params["w2"].reshape(3, 3, Cout, Cout)

    def conv(a, w):
        return jax.lax.conv_general_dilated(
            a, w, (1, 1), "SAME", dimension_numbers=("NHWC", "HWIO", "NHWC"))

    h1 = conv(x, w1)
    mean = h1.mean(axis=(0, 1, 2))
    var = ((h1 - mean) ** 2).mean(axis=(0, 1, 2))
    y1 = (h1 - mean) / jnp.sqrt(var + BN_EPS) * params["g1"][0] + params["b1"][0]
    y1 = jnp.maximum(y1, 0.0)
    h2 = conv(y1, w2)
    if "wsc" in params:
        identity = jnp.einsum("nhwc,cd->nhwd", x, params["wsc"])
    else:
        identity = x
    return jnp.transpose(h2 + identity, (0, 3, 1, 2))


if __name__ == "__main__":
    key = jax.random.PRNGKey(0)
    kx1, kp1, kx2, kp2 = jax.random.split(key, 4)

    # Case 1: projection shortcut (in_channels != out_channels).
    x1 = jax.random.normal(kx1, (2, 4, 16, 16), jnp.float32)      # NCHW
    p1 = init_basic_block_params(kp1, 4, 8, stride=1)
    out1 = jax.block_until_ready(basic_block_forward(x1, p1, stride=1))
    ref1 = _reference_forward(x1, p1)
    assert out1.shape == (2, 8, 16, 16), out1.shape
    err1 = float(jnp.max(jnp.abs(out1 - ref1)))
    # Tolerance relaxed vs the f32 reference: MXU operands and the h1/y1
    # intermediates are bf16 (f32 accumulation / BN math).
    assert jnp.allclose(out1, ref1, atol=5e-2, rtol=5e-2), err1

    # Case 2: identity shortcut (in_channels == out_channels, stride 1).
    x2 = jax.random.normal(kx2, (2, 8, 16, 16), jnp.float32)      # NCHW
    p2 = init_basic_block_params(kp2, 8, 8, stride=1)
    out2 = jax.block_until_ready(basic_block_forward(x2, p2, stride=1))
    ref2 = _reference_forward(x2, p2)
    assert out2.shape == (2, 8, 16, 16), out2.shape
    err2 = float(jnp.max(jnp.abs(out2 - ref2)))
    assert jnp.allclose(out2, ref2, atol=5e-2, rtol=5e-2), err2

    print("KERNEL_OK")
</pallas_src>

<mosaic_0001>
module attributes {stable_mosaic.version = 11 : i64} {
  func.func @_conv1_stats_kernel(%arg0: i32, %arg1: memref<1x16x16x4xf32, #tpu.memory_space<vmem>>, %arg2: memref<1152x8xbf16, #tpu.memory_space<vmem>>, %arg3: memref<1x16x16x8xbf16, #tpu.memory_space<vmem>>, %arg4: memref<1x2x8xf32, #tpu.memory_space<vmem>>, %arg5: memref<1x16x16x1152xbf16, #tpu.memory_space<vmem>>, %arg6: memref<1x16x16x128xbf16, #tpu.memory_space<vmem>>) attributes {dimension_semantics = [#tpu.dimension_semantics<parallel>], iteration_bounds = array<i64: 2>, scalar_prefetch = 0 : i64, scratch_operands = 2 : i64, tpu.core_type = #tpu.core_type<tc>, window_params = [{transform_indices = @transform_0, window_bounds = array<i64: 1, 16, 16, 4>}, {pipeline_mode = #tpu.pipeline_mode<synchronous>, transform_indices = @transform_1, window_bounds = array<i64: 1152, 8>}, {transform_indices = @transform_2, window_bounds = array<i64: 1, 16, 16, 8>}, {transform_indices = @transform_3, window_bounds = array<i64: 1, 2, 8>}]} {
    %c0 = arith.constant 0 : index
    %c0_0 = arith.constant 0 : index
    %c0_1 = arith.constant 0 : index
    %c0_2 = arith.constant 0 : index
    %0 = vector.load %arg1[%c0, %c0_0, %c0_1, %c0_2] : memref<1x16x16x4xf32, #tpu.memory_space<vmem>>, vector<1x16x16x4xf32>
    %1 = arith.truncf %0 : vector<1x16x16x4xf32> to vector<1x16x16x4xbf16>
    %c0_3 = arith.constant 0 : index
    %c0_4 = arith.constant 0 : index
    %c0_5 = arith.constant 0 : index
    %c0_6 = arith.constant 0 : index
    %2 = vector.load %arg6[%c0_3, %c0_4, %c0_5, %c0_6] : memref<1x16x16x128xbf16, #tpu.memory_space<vmem>>, vector<1x16x16x4xbf16>
    tpu.vector_store %arg6[%c0_3, %c0_4, %c0_5, %c0_6], %1 {strides = array<i32>} : memref<1x16x16x128xbf16, #tpu.memory_space<vmem>>, vector<1x16x16x4xbf16>,
    %cst = arith.constant 0.000000e+00 : bf16
    %3 = vector.broadcast %cst : bf16 to vector<1x16x16x124xbf16>
    %c0_7 = arith.constant 0 : index
    %c0_8 = arith.constant 0 : index
    %c0_9 = arith.constant 0 : index
    %c4 = arith.constant 4 : index
    %4 = vector.load %arg6[%c0_7, %c0_8, %c0_9, %c4] : memref<1x16x16x128xbf16, #tpu.memory_space<vmem>>, vector<1x16x16x124xbf16>
    tpu.vector_store %arg6[%c0_7, %c0_8, %c0_9, %c4], %3 {strides = array<i32>} : memref<1x16x16x128xbf16, #tpu.memory_space<vmem>>, vector<1x16x16x124xbf16>,
    %cst_10 = arith.constant 0.000000e+00 : bf16
    %5 = vector.broadcast %cst_10 : bf16 to vector<1x1x16x128xbf16>
    %c0_11 = arith.constant 0 : index
    %c0_12 = arith.constant 0 : index
    %c0_13 = arith.constant 0 : index
    %c0_14 = arith.constant 0 : index
    %6 = vector.load %arg5[%c0_11, %c0_12, %c0_13, %c0_14] : memref<1x16x16x1152xbf16, #tpu.memory_space<vmem>>, vector<1x1x16x128xbf16>
    tpu.vector_store %arg5[%c0_11, %c0_12, %c0_13, %c0_14], %5 {strides = array<i32>} : memref<1x16x16x1152xbf16, #tpu.memory_space<vmem>>, vector<1x1x16x128xbf16>,
    %cst_15 = arith.constant 0.000000e+00 : bf16
    %7 = vector.broadcast %cst_15 : bf16 to vector<1x16x1x128xbf16>
    %c0_16 = arith.constant 0 : index
    %c0_17 = arith.constant 0 : index
    %c0_18 = arith.constant 0 : index
    %c0_19 = arith.constant 0 : index
    %8 = vector.load %arg5[%c0_16, %c0_17, %c0_18, %c0_19] : memref<1x16x16x1152xbf16, #tpu.memory_space<vmem>>, vector<1x16x1x128xbf16>
    tpu.vector_store %arg5[%c0_16, %c0_17, %c0_18, %c0_19], %7 {strides = array<i32>} : memref<1x16x16x1152xbf16, #tpu.memory_space<vmem>>, vector<1x16x1x128xbf16>,
    %c0_20 = arith.constant 0 : index
    %c0_21 = arith.constant 0 : index
    %c0_22 = arith.constant 0 : index
    %c0_23 = arith.constant 0 : index
    %9 = vector.load %arg6[%c0_20, %c0_21, %c0_22, %c0_23] : memref<1x16x16x128xbf16, #tpu.memory_space<vmem>>, vector<1x15x15x128xbf16>
    %c0_24 = arith.constant 0 : index
    %c1 = arith.constant 1 : index
    %c1_25 = arith.constant 1 : index
    %c0_26 = arith.constant 0 : index
    %10 = vector.load %arg5[%c0_24, %c1, %c1_25, %c0_26] : memref<1x16x16x1152xbf16, #tpu.memory_space<vmem>>, vector<1x15x15x128xbf16>
    tpu.vector_store %arg5[%c0_24, %c1, %c1_25, %c0_26], %9 {strides = array<i32>} : memref<1x16x16x1152xbf16, #tpu.memory_space<vmem>>, vector<1x15x15x128xbf16>,
    %cst_27 = arith.constant 0.000000e+00 : bf16
    %11 = vector.broadcast %cst_27 : bf16 to vector<1x1x16x128xbf16>
    %c0_28 = arith.constant 0 : index
    %c0_29 = arith.constant 0 : index
    %c0_30 = arith.constant 0 : index
    %c128 = arith.constant 128 : index
    %12 = vector.load %arg5[%c0_28, %c0_29, %c0_30, %c128] : memref<1x16x16x1152xbf16, #tpu.memory_space<vmem>>, vector<1x1x16x128xbf16>
    tpu.vector_store %arg5[%c0_28, %c0_29, %c0_30, %c128], %11 {strides = array<i32>} : memref<1x16x16x1152xbf16, #tpu.memory_space<vmem>>, vector<1x1x16x128xbf16>,
    %c0_31 = arith.constant 0 : index
    %c0_32 = arith.constant 0 : index
    %c0_33 = arith.constant 0 : index
    %c0_34 = arith.constant 0 : index
    %13 = vector.load %arg6[%c0_31, %c0_32, %c0_33, %c0_34] : memref<1x16x16x128xbf16, #tpu.memory_space<vmem>>, vector<1x15x16x128xbf16>
    %c0_35 = arith.constant 0 : index
    %c1_36 = arith.constant 1 : index
    %c0_37 = arith.constant 0 : index
    %c128_38 = arith.constant 128 : index
    %14 = vector.load %arg5[%c0_35, %c1_36, %c0_37, %c128_38] : memref<1x16x16x1152xbf16, #tpu.memory_space<vmem>>, vector<1x15x16x128xbf16>
    tpu.vector_store %arg5[%c0_35, %c1_36, %c0_37, %c128_38], %13 {strides = array<i32>} : memref<1x16x16x1152xbf16, #tpu.memory_space<vmem>>, vector<1x15x16x128xbf16>,
    %cst_39 = arith.constant 0.000000e+00 : bf16
    %15 = vector.broadcast %cst_39 : bf16 to vector<1x1x16x128xbf16>
    %c0_40 = arith.constant 0 : index
    %c0_41 = arith.constant 0 : index
    %c0_42 = arith.constant 0 : index
    %c256 = arith.constant 256 : index
    %16 = vector.load %arg5[%c0_40, %c0_41, %c0_42, %c256] : memref<1x16x16x1152xbf16, #tpu.memory_space<vmem>>, vector<1x1x16x128xbf16>
    tpu.vector_store %arg5[%c0_40, %c0_41, %c0_42, %c256], %15 {strides = array<i32>} : memref<1x16x16x1152xbf16, #tpu.memory_space<vmem>>, vector<1x1x16x128xbf16>,
    %cst_43 = arith.constant 0.000000e+00 : bf16
    %17 = vector.broadcast %cst_43 : bf16 to vector<1x16x1x128xbf16>
    %c0_44 = arith.constant 0 : index
    %c0_45 = arith.constant 0 : index
    %c15 = arith.constant 15 : index
    %c256_46 = arith.constant 256 : index
    %18 = vector.load %arg5[%c0_44, %c0_45, %c15, %c256_46] : memref<1x16x16x1152xbf16, #tpu.memory_space<vmem>>, vector<1x16x1x128xbf16>
    tpu.vector_store %arg5[%c0_44, %c0_45, %c15, %c256_46], %17 {strides = array<i32>} : memref<1x16x16x1152xbf16, #tpu.memory_space<vmem>>, vector<1x16x1x128xbf16>,
    %c0_47 = arith.constant 0 : index
    %c0_48 = arith.constant 0 : index
    %c1_49 = arith.constant 1 : index
    %c0_50 = arith.constant 0 : index
    %19 = vector.load %arg6[%c0_47, %c0_48, %c1_49, %c0_50] : memref<1x16x16x128xbf16, #tpu.memory_space<vmem>>, vector<1x15x15x128xbf16>
    %c0_51 = arith.constant 0 : index
    %c1_52 = arith.constant 1 : index
    %c0_53 = arith.constant 0 : index
    %c256_54 = arith.constant 256 : index
    %20 = vector.load %arg5[%c0_51, %c1_52, %c0_53, %c256_54] : memref<1x16x16x1152xbf16, #tpu.memory_space<vmem>>, vector<1x15x15x128xbf16>
    tpu.vector_store %arg5[%c0_51, %c1_52, %c0_53, %c256_54], %19 {strides = array<i32>} : memref<1x16x16x1152xbf16, #tpu.memory_space<vmem>>, vector<1x15x15x128xbf16>,
    %cst_55 = arith.constant 0.000000e+00 : bf16
    %21 = vector.broadcast %cst_55 : bf16 to vector<1x16x1x128xbf16>
    %c0_56 = arith.constant 0 : index
    %c0_57 = arith.constant 0 : index
    %c0_58 = arith.constant 0 : index
    %c384 = arith.constant 384 : index
    %22 = vector.load %arg5[%c0_56, %c0_57, %c0_58, %c384] : memref<1x16x16x1152xbf16, #tpu.memory_space<vmem>>, vector<1x16x1x128xbf16>
    tpu.vector_store %arg5[%c0_56, %c0_57, %c0_58, %c384], %21 {strides = array<i32>} : memref<1x16x16x1152xbf16, #tpu.memory_space<vmem>>, vector<1x16x1x128xbf16>,
    %c0_59 = arith.constant 0 : index
    %c0_60 = arith.constant 0 : index
    %c0_61 = arith.constant 0 : index
    %c0_62 = arith.constant 0 : index
    %23 = vector.load %arg6[%c0_59, %c0_60, %c0_61, %c0_62] : memref<1x16x16x128xbf16, #tpu.memory_space<vmem>>, vector<1x16x15x128xbf16>
    %c0_63 = arith.constant 0 : index
    %c0_64 = arith.constant 0 : index
    %c1_65 = arith.constant 1 : index
    %c384_66 = arith.constant 384 : index
    %24 = vector.load %arg5[%c0_63, %c0_64, %c1_65, %c384_66] : memref<1x16x16x1152xbf16, #tpu.memory_space<vmem>>, vector<1x16x15x128xbf16>
    tpu.vector_store %arg5[%c0_63, %c0_64, %c1_65, %c384_66], %23 {strides = array<i32>} : memref<1x16x16x1152xbf16, #tpu.memory_space<vmem>>, vector<1x16x15x128xbf16>,
    %c0_67 = arith.constant 0 : index
    %c0_68 = arith.constant 0 : index
    %c0_69 = arith.constant 0 : index
    %c0_70 = arith.constant 0 : index
    %25 = vector.load %arg6[%c0_67, %c0_68, %c0_69, %c0_70] : memref<1x16x16x128xbf16, #tpu.memory_space<vmem>>, vector<1x16x16x128xbf16>
    %c0_71 = arith.constant 0 : index
    %c0_72 = arith.constant 0 : index
    %c0_73 = arith.constant 0 : index
    %c512 = arith.constant 512 : index
    %26 = vector.load %arg5[%c0_71, %c0_72, %c0_73, %c512] : memref<1x16x16x1152xbf16, #tpu.memory_space<vmem>>, vector<1x16x16x128xbf16>
    tpu.vector_store %arg5[%c0_71, %c0_72, %c0_73, %c512], %25 {strides = array<i32>} : memref<1x16x16x1152xbf16, #tpu.memory_space<vmem>>, vector<1x16x16x128xbf16>,
    %cst_74 = arith.constant 0.000000e+00 : bf16
    %27 = vector.broadcast %cst_74 : bf16 to vector<1x16x1x128xbf16>
    %c0_75 = arith.constant 0 : index
    %c0_76 = arith.constant 0 : index
    %c15_77 = arith.constant 15 : index
    %c640 = arith.constant 640 : index
    %28 = vector.load %arg5[%c0_75, %c0_76, %c15_77, %c640] : memref<1x16x16x1152xbf16, #tpu.memory_space<vmem>>, vector<1x16x1x128xbf16>
    tpu.vector_store %arg5[%c0_75, %c0_76, %c15_77, %c640], %27 {strides = array<i32>} : memref<1x16x16x1152xbf16, #tpu.memory_space<vmem>>, vector<1x16x1x128xbf16>,
    %c0_78 = arith.constant 0 : index
    %c0_79 = arith.constant 0 : index
    %c1_80 = arith.constant 1 : index
    %c0_81 = arith.constant 0 : index
    %29 = vector.load %arg6[%c0_78, %c0_79, %c1_80, %c0_81] : memref<1x16x16x128xbf16, #tpu.memory_space<vmem>>, vector<1x16x15x128xbf16>
    %c0_82 = arith.constant 0 : index
    %c0_83 = arith.constant 0 : index
    %c0_84 = arith.constant 0 : index
    %c640_85 = arith.constant 640 : index
    %30 = vector.load %arg5[%c0_82, %c0_83, %c0_84, %c640_85] : memref<1x16x16x1152xbf16, #tpu.memory_space<vmem>>, vector<1x16x15x128xbf16>
    tpu.vector_store %arg5[%c0_82, %c0_83, %c0_84, %c640_85], %29 {strides = array<i32>} : memref<1x16x16x1152xbf16, #tpu.memory_space<vmem>>, vector<1x16x15x128xbf16>,
    %cst_86 = arith.constant 0.000000e+00 : bf16
    %31 = vector.broadcast %cst_86 : bf16 to vector<1x1x16x128xbf16>
    %c0_87 = arith.constant 0 : index
    %c15_88 = arith.constant 15 : index
    %c0_89 = arith.constant 0 : index
    %c768 = arith.constant 768 : index
    %32 = vector.load %arg5[%c0_87, %c15_88, %c0_89, %c768] : memref<1x16x16x1152xbf16, #tpu.memory_space<vmem>>, vector<1x1x16x128xbf16>
    tpu.vector_store %arg5[%c0_87, %c15_88, %c0_89, %c768], %31 {strides = array<i32>} : memref<1x16x16x1152xbf16, #tpu.memory_space<vmem>>, vector<1x1x16x128xbf16>,
    %cst_90 = arith.constant 0.000000e+00 : bf16
    %33 = vector.broadcast %cst_90 : bf16 to vector<1x16x1x128xbf16>
    %c0_91 = arith.constant 0 : index
    %c0_92 = arith.constant 0 : index
    %c0_93 = arith.constant 0 : index
    %c768_94 = arith.constant 768 : index
    %34 = vector.load %arg5[%c0_91, %c0_92, %c0_93, %c768_94] : memref<1x16x16x1152xbf16, #tpu.memory_space<vmem>>, vector<1x16x1x128xbf16>
    tpu.vector_store %arg5[%c0_91, %c0_92, %c0_93, %c768_94], %33 {strides = array<i32>} : memref<1x16x16x1152xbf16, #tpu.memory_space<vmem>>, vector<1x16x1x128xbf16>,
    %c0_95 = arith.constant 0 : index
    %c1_96 = arith.constant 1 : index
    %c0_97 = arith.constant 0 : index
    %c0_98 = arith.constant 0 : index
    %35 = vector.load %arg6[%c0_95, %c1_96, %c0_97, %c0_98] : memref<1x16x16x128xbf16, #tpu.memory_space<vmem>>, vector<1x15x15x128xbf16>
    %c0_99 = arith.constant 0 : index
    %c0_100 = arith.constant 0 : index
    %c1_101 = arith.constant 1 : index
    %c768_102 = arith.constant 768 : index
    %36 = vector.load %arg5[%c0_99, %c0_100, %c1_101, %c768_102] : memref<1x16x16x1152xbf16, #tpu.memory_space<vmem>>, vector<1x15x15x128xbf16>
    tpu.vector_store %arg5[%c0_99, %c0_100, %c1_101, %c768_102], %35 {strides = array<i32>} : memref<1x16x16x1152xbf16, #tpu.memory_space<vmem>>, vector<1x15x15x128xbf16>,
    %cst_103 = arith.constant 0.000000e+00 : bf16
    %37 = vector.broadcast %cst_103 : bf16 to vector<1x1x16x128xbf16>
    %c0_104 = arith.constant 0 : index
    %c15_105 = arith.constant 15 : index
    %c0_106 = arith.constant 0 : index
    %c896 = arith.constant 896 : index
    %38 = vector.load %arg5[%c0_104, %c15_105, %c0_106, %c896] : memref<1x16x16x1152xbf16, #tpu.memory_space<vmem>>, vector<1x1x16x128xbf16>
    tpu.vector_store %arg5[%c0_104, %c15_105, %c0_106, %c896], %37 {strides = array<i32>} : memref<1x16x16x1152xbf16, #tpu.memory_space<vmem>>, vector<1x1x16x128xbf16>,
    %c0_107 = arith.constant 0 : index
    %c1_108 = arith.constant 1 : index
    %c0_109 = arith.constant 0 : index
    %c0_110 = arith.constant 0 : index
    %39 = vector.load %arg6[%c0_107, %c1_108, %c0_109, %c0_110] : memref<1x16x16x128xbf16, #tpu.memory_space<vmem>>, vector<1x15x16x128xbf16>
    %c0_111 = arith.constant 0 : index
    %c0_112 = arith.constant 0 : index
    %c0_113 = arith.constant 0 : index
    %c896_114 = arith.constant 896 : index
    %40 = vector.load %arg5[%c0_111, %c0_112, %c0_113, %c896_114] : memref<1x16x16x1152xbf16, #tpu.memory_space<vmem>>, vector<1x15x16x128xbf16>
    tpu.vector_store %arg5[%c0_111, %c0_112, %c0_113, %c896_114], %39 {strides = array<i32>} : memref<1x16x16x1152xbf16, #tpu.memory_space<vmem>>, vector<1x15x16x128xbf16>,
    %cst_115 = arith.constant 0.000000e+00 : bf16
    %41 = vector.broadcast %cst_115 : bf16 to vector<1x1x16x128xbf16>
    %c0_116 = arith.constant 0 : index
    %c15_117 = arith.constant 15 : index
    %c0_118 = arith.constant 0 : index
    %c1024 = arith.constant 1024 : index
    %42 = vector.load %arg5[%c0_116, %c15_117, %c0_118, %c1024] : memref<1x16x16x1152xbf16, #tpu.memory_space<vmem>>, vector<1x1x16x128xbf16>
    tpu.vector_store %arg5[%c0_116, %c15_117, %c0_118, %c1024], %41 {strides = array<i32>} : memref<1x16x16x1152xbf16, #tpu.memory_space<vmem>>, vector<1x1x16x128xbf16>,
    %cst_119 = arith.constant 0.000000e+00 : bf16
    %43 = vector.broadcast %cst_119 : bf16 to vector<1x16x1x128xbf16>
    %c0_120 = arith.constant 0 : index
    %c0_121 = arith.constant 0 : index
    %c15_122 = arith.constant 15 : index
    %c1024_123 = arith.constant 1024 : index
    %44 = vector.load %arg5[%c0_120, %c0_121, %c15_122, %c1024_123] : memref<1x16x16x1152xbf16, #tpu.memory_space<vmem>>, vector<1x16x1x128xbf16>
    tpu.vector_store %arg5[%c0_120, %c0_121, %c15_122, %c1024_123], %43 {strides = array<i32>} : memref<1x16x16x1152xbf16, #tpu.memory_space<vmem>>, vector<1x16x1x128xbf16>,
    %c0_124 = arith.constant 0 : index
    %c1_125 = arith.constant 1 : index
    %c1_126 = arith.constant 1 : index
    %c0_127 = arith.constant 0 : index
    %45 = vector.load %arg6[%c0_124, %c1_125, %c1_126, %c0_127] : memref<1x16x16x128xbf16, #tpu.memory_space<vmem>>, vector<1x15x15x128xbf16>
    %c0_128 = arith.constant 0 : index
    %c0_129 = arith.constant 0 : index
    %c0_130 = arith.constant 0 : index
    %c1024_131 = arith.constant 1024 : index
    %46 = vector.load %arg5[%c0_128, %c0_129, %c0_130, %c1024_131] : memref<1x16x16x1152xbf16, #tpu.memory_space<vmem>>, vector<1x15x15x128xbf16>
    tpu.vector_store %arg5[%c0_128, %c0_129, %c0_130, %c1024_131], %45 {strides = array<i32>} : memref<1x16x16x1152xbf16, #tpu.memory_space<vmem>>, vector<1x15x15x128xbf16>,
    %c0_132 = arith.constant 0 : index
    %c0_133 = arith.constant 0 : index
    %c0_134 = arith.constant 0 : index
    %c0_135 = arith.constant 0 : index
    %47 = vector.load %arg5[%c0_132, %c0_133, %c0_134, %c0_135] : memref<1x16x16x1152xbf16, #tpu.memory_space<vmem>>, vector<1x16x16x1152xbf16>
    %48 = vector.shape_cast %47 : vector<1x16x16x1152xbf16> to vector<256x1152xbf16>
    %c0_136 = arith.constant 0 : index
    %c0_137 = arith.constant 0 : index
    %49 = vector.load %arg2[%c0_136, %c0_137] : memref<1152x8xbf16, #tpu.memory_space<vmem>>, vector<1152x8xbf16>
    %cst_138 = arith.constant dense<0.000000e+00> : vector<256x8xf32>
    %50 = tpu.matmul %48, %49, %cst_138 {dimension_numbers = #tpu.dot_dimension_numbers<[1], [0], [0], [1], [0, 0, 1, 1], [], []>} : vector<256x1152xbf16>, vector<1152x8xbf16>, vector<256x8xf32> -> vector<256x8xf32>
    %51 = vector.shape_cast %50 : vector<256x8xf32> to vector<1x16x16x8xf32>
    %52 = arith.truncf %51 : vector<1x16x16x8xf32> to vector<1x16x16x8xbf16>
    %c0_139 = arith.constant 0 : index
    %c0_140 = arith.constant 0 : index
    %c0_141 = arith.constant 0 : index
    %c0_142 = arith.constant 0 : index
    %53 = vector.load %arg3[%c0_139, %c0_140, %c0_141, %c0_142] : memref<1x16x16x8xbf16, #tpu.memory_space<vmem>>, vector<1x16x16x8xbf16>
    tpu.vector_store %arg3[%c0_139, %c0_140, %c0_141, %c0_142], %52 {strides = array<i32>} : memref<1x16x16x8xbf16, #tpu.memory_space<vmem>>, vector<1x16x16x8xbf16>,
    %cst_143 = arith.constant dense<0.000000e+00> : vector<8xf32>
    %54 = vector.multi_reduction <add>, %50, %cst_143 [0] : vector<256x8xf32> to vector<8xf32>
    %55 = vector.shape_cast %54 : vector<8xf32> to vector<1x1x8xf32>
    %c0_144 = arith.constant 0 : index
    %c0_145 = arith.constant 0 : index
    %c0_146 = arith.constant 0 : index
    %56 = vector.load %arg4[%c0_144, %c0_145, %c0_146] : memref<1x2x8xf32, #tpu.memory_space<vmem>>, vector<1x1x8xf32>
    tpu.vector_store %arg4[%c0_144, %c0_145, %c0_146], %55 {strides = array<i32>} : memref<1x2x8xf32, #tpu.memory_space<vmem>>, vector<1x1x8xf32>,
    %57 = arith.mulf %50, %50 : vector<256x8xf32>
    %cst_147 = arith.constant dense<0.000000e+00> : vector<8xf32>
    %58 = vector.multi_reduction <add>, %57, %cst_147 [0] : vector<256x8xf32> to vector<8xf32>
    %59 = vector.shape_cast %58 : vector<8xf32> to vector<1x1x8xf32>
    %c0_148 = arith.constant 0 : index
    %c1_149 = arith.constant 1 : index
    %c0_150 = arith.constant 0 : index
    %60 = vector.load %arg4[%c0_148, %c1_149, %c0_150] : memref<1x2x8xf32, #tpu.memory_space<vmem>>, vector<1x1x8xf32>
    tpu.vector_store %arg4[%c0_148, %c1_149, %c0_150], %59 {strides = array<i32>} : memref<1x2x8xf32, #tpu.memory_space<vmem>>, vector<1x1x8xf32>,
    return
  }
  func.func @transform_0(%arg0: i32) -> (i32, i32, i32, i32) {
    %c0_i32 = arith.constant 0 : i32
    %c0_i32_0 = arith.constant 0 : i32
    %c0_i32_1 = arith.constant 0 : i32
    %c0_i32_2 = arith.constant 0 : i32
    return %arg0, %c0_i32, %c0_i32_0, %c0_i32_1 : i32, i32, i32, i32
  }
  func.func @transform_1(%arg0: i32) -> (i32, i32) {
    %c0_i32 = arith.constant 0 : i32
    %c0_i32_0 = arith.constant 0 : i32
    %c0_i32_1 = arith.constant 0 : i32
    return %c0_i32, %c0_i32_0 : i32, i32
  }
  func.func @transform_2(%arg0: i32) -> (i32, i32, i32, i32) {
    %c0_i32 = arith.constant 0 : i32
    %c0_i32_0 = arith.constant 0 : i32
    %c0_i32_1 = arith.constant 0 : i32
    %c0_i32_2 = arith.constant 0 : i32
    return %arg0, %c0_i32, %c0_i32_0, %c0_i32_1 : i32, i32, i32, i32
  }
  func.func @transform_3(%arg0: i32) -> (i32, i32, i32) {
    %c0_i32 = arith.constant 0 : i32
    %c0_i32_0 = arith.constant 0 : i32
    %c0_i32_1 = arith.constant 0 : i32
    return %arg0, %c0_i32, %c0_i32_0 : i32, i32, i32
  }
}

module attributes {stable_mosaic.version = 11 : i64} {
  func.func @_bn_relu_conv2_add_kernel(%arg0: i32, %arg1: memref<1x16x16x8xbf16, #tpu.memory_space<vmem>>, %arg2: memref<1x16x16x4xf32, #tpu.memory_space<vmem>>, %arg3: memref<1156x8xbf16, #tpu.memory_space<vmem>>, %arg4: memref<1x8xf32, #tpu.memory_space<vmem>>, %arg5: memref<1x8xf32, #tpu.memory_space<vmem>>, %arg6: memref<1x16x16x8xf32, #tpu.memory_space<vmem>>, %arg7: memref<1x16x16x1156xbf16, #tpu.memory_space<vmem>>, %arg8: memref<1x16x16x128xbf16, #tpu.memory_space<vmem>>) attributes {dimension_semantics = [#tpu.dimension_semantics<parallel>], iteration_bounds = array<i64: 2>, scalar_prefetch = 0 : i64, scratch_operands = 2 : i64, tpu.core_type = #tpu.core_type<tc>, window_params = [{transform_indices = @transform_0, window_bounds = array<i64: 1, 16, 16, 8>}, {transform_indices = @transform_1, window_bounds = array<i64: 1, 16, 16, 4>}, {pipeline_mode = #tpu.pipeline_mode<synchronous>, transform_indices = @transform_2, window_bounds = array<i64: 1156, 8>}, {pipeline_mode = #tpu.pipeline_mode<synchronous>, transform_indices = @transform_3, window_bounds = array<i64: 1, 8>}, {pipeline_mode = #tpu.pipeline_mode<synchronous>, transform_indices = @transform_4, window_bounds = array<i64: 1, 8>}, {transform_indices = @transform_5, window_bounds = array<i64: 1, 16, 16, 8>}]} {
    %c0 = arith.constant 0 : index
    %c0_0 = arith.constant 0 : index
    %0 = vector.load %arg4[%c0, %c0_0] : memref<1x8xf32, #tpu.memory_space<vmem>>, vector<1x8xf32>
    %1 = vector.shape_cast %0 : vector<1x8xf32> to vector<1x1x1x8xf32>
    %c0_1 = arith.constant 0 : index
    %c0_2 = arith.constant 0 : index
    %2 = vector.load %arg5[%c0_1, %c0_2] : memref<1x8xf32, #tpu.memory_space<vmem>>, vector<1x8xf32>
    %3 = vector.shape_cast %2 : vector<1x8xf32> to vector<1x1x1x8xf32>
    %c0_3 = arith.constant 0 : index
    %c0_4 = arith.constant 0 : index
    %c0_5 = arith.constant 0 : index
    %c0_6 = arith.constant 0 : index
    %4 = vector.load %arg1[%c0_3, %c0_4, %c0_5, %c0_6] : memref<1x16x16x8xbf16, #tpu.memory_space<vmem>>, vector<1x16x16x8xbf16>
    %5 = arith.extf %4 : vector<1x16x16x8xbf16> to vector<1x16x16x8xf32>
    %6 = vector.broadcast %1 : vector<1x1x1x8xf32> to vector<1x16x16x8xf32>
    %7 = arith.mulf %5, %6 : vector<1x16x16x8xf32>
    %8 = vector.broadcast %3 : vector<1x1x1x8xf32> to vector<1x16x16x8xf32>
    %9 = arith.addf %7, %8 : vector<1x16x16x8xf32>
    %cst = arith.constant 0.000000e+00 : f32
    %10 = vector.broadcast %cst : f32 to vector<1x16x16x8xf32>
    %11 = arith.maximumf %9, %10 : vector<1x16x16x8xf32>
    %12 = arith.truncf %11 : vector<1x16x16x8xf32> to vector<1x16x16x8xbf16>
    %c0_7 = arith.constant 0 : index
    %c0_8 = arith.constant 0 : index
    %c0_9 = arith.constant 0 : index
    %c0_10 = arith.constant 0 : index
    %13 = vector.load %arg8[%c0_7, %c0_8, %c0_9, %c0_10] : memref<1x16x16x128xbf16, #tpu.memory_space<vmem>>, vector<1x16x16x8xbf16>
    tpu.vector_store %arg8[%c0_7, %c0_8, %c0_9, %c0_10], %12 {strides = array<i32>} : memref<1x16x16x128xbf16, #tpu.memory_space<vmem>>, vector<1x16x16x8xbf16>,
    %cst_11 = arith.constant 0.000000e+00 : bf16
    %14 = vector.broadcast %cst_11 : bf16 to vector<1x16x16x120xbf16>
    %c0_12 = arith.constant 0 : index
    %c0_13 = arith.constant 0 : index
    %c0_14 = arith.constant 0 : index
    %c8 = arith.constant 8 : index
    %15 = vector.load %arg8[%c0_12, %c0_13, %c0_14, %c8] : memref<1x16x16x128xbf16, #tpu.memory_space<vmem>>, vector<1x16x16x120xbf16>
    tpu.vector_store %arg8[%c0_12, %c0_13, %c0_14, %c8], %14 {strides = array<i32>} : memref<1x16x16x128xbf16, #tpu.memory_space<vmem>>, vector<1x16x16x120xbf16>,
    %cst_15 = arith.constant 0.000000e+00 : bf16
    %16 = vector.broadcast %cst_15 : bf16 to vector<1x1x16x128xbf16>
    %c0_16 = arith.constant 0 : index
    %c0_17 = arith.constant 0 : index
    %c0_18 = arith.constant 0 : index
    %c0_19 = arith.constant 0 : index
    %17 = vector.load %arg7[%c0_16, %c0_17, %c0_18, %c0_19] : memref<1x16x16x1156xbf16, #tpu.memory_space<vmem>>, vector<1x1x16x128xbf16>
    tpu.vector_store %arg7[%c0_16, %c0_17, %c0_18, %c0_19], %16 {strides = array<i32>} : memref<1x16x16x1156xbf16, #tpu.memory_space<vmem>>, vector<1x1x16x128xbf16>,
    %cst_20 = arith.constant 0.000000e+00 : bf16
    %18 = vector.broadcast %cst_20 : bf16 to vector<1x16x1x128xbf16>
    %c0_21 = arith.constant 0 : index
    %c0_22 = arith.constant 0 : index
    %c0_23 = arith.constant 0 : index
    %c0_24 = arith.constant 0 : index
    %19 = vector.load %arg7[%c0_21, %c0_22, %c0_23, %c0_24] : memref<1x16x16x1156xbf16, #tpu.memory_space<vmem>>, vector<1x16x1x128xbf16>
    tpu.vector_store %arg7[%c0_21, %c0_22, %c0_23, %c0_24], %18 {strides = array<i32>} : memref<1x16x16x1156xbf16, #tpu.memory_space<vmem>>, vector<1x16x1x128xbf16>,
    %c0_25 = arith.constant 0 : index
    %c0_26 = arith.constant 0 : index
    %c0_27 = arith.constant 0 : index
    %c0_28 = arith.constant 0 : index
    %20 = vector.load %arg8[%c0_25, %c0_26, %c0_27, %c0_28] : memref<1x16x16x128xbf16, #tpu.memory_space<vmem>>, vector<1x15x15x128xbf16>
    %c0_29 = arith.constant 0 : index
    %c1 = arith.constant 1 : index
    %c1_30 = arith.constant 1 : index
    %c0_31 = arith.constant 0 : index
    %21 = vector.load %arg7[%c0_29, %c1, %c1_30, %c0_31] : memref<1x16x16x1156xbf16, #tpu.memory_space<vmem>>, vector<1x15x15x128xbf16>
    tpu.vector_store %arg7[%c0_29, %c1, %c1_30, %c0_31], %20 {strides = array<i32>} : memref<1x16x16x1156xbf16, #tpu.memory_space<vmem>>, vector<1x15x15x128xbf16>,
    %cst_32 = arith.constant 0.000000e+00 : bf16
    %22 = vector.broadcast %cst_32 : bf16 to vector<1x1x16x128xbf16>
    %c0_33 = arith.constant 0 : index
    %c0_34 = arith.constant 0 : index
    %c0_35 = arith.constant 0 : index
    %c128 = arith.constant 128 : index
    %23 = vector.load %arg7[%c0_33, %c0_34, %c0_35, %c128] : memref<1x16x16x1156xbf16, #tpu.memory_space<vmem>>, vector<1x1x16x128xbf16>
    tpu.vector_store %arg7[%c0_33, %c0_34, %c0_35, %c128], %22 {strides = array<i32>} : memref<1x16x16x1156xbf16, #tpu.memory_space<vmem>>, vector<1x1x16x128xbf16>,
    %c0_36 = arith.constant 0 : index
    %c0_37 = arith.constant 0 : index
    %c0_38 = arith.constant 0 : index
    %c0_39 = arith.constant 0 : index
    %24 = vector.load %arg8[%c0_36, %c0_37, %c0_38, %c0_39] : memref<1x16x16x128xbf16, #tpu.memory_space<vmem>>, vector<1x15x16x128xbf16>
    %c0_40 = arith.constant 0 : index
    %c1_41 = arith.constant 1 : index
    %c0_42 = arith.constant 0 : index
    %c128_43 = arith.constant 128 : index
    %25 = vector.load %arg7[%c0_40, %c1_41, %c0_42, %c128_43] : memref<1x16x16x1156xbf16, #tpu.memory_space<vmem>>, vector<1x15x16x128xbf16>
    tpu.vector_store %arg7[%c0_40, %c1_41, %c0_42, %c128_43], %24 {strides = array<i32>} : memref<1x16x16x1156xbf16, #tpu.memory_space<vmem>>, vector<1x15x16x128xbf16>,
    %cst_44 = arith.constant 0.000000e+00 : bf16
    %26 = vector.broadcast %cst_44 : bf16 to vector<1x1x16x128xbf16>
    %c0_45 = arith.constant 0 : index
    %c0_46 = arith.constant 0 : index
    %c0_47 = arith.constant 0 : index
    %c256 = arith.constant 256 : index
    %27 = vector.load %arg7[%c0_45, %c0_46, %c0_47, %c256] : memref<1x16x16x1156xbf16, #tpu.memory_space<vmem>>, vector<1x1x16x128xbf16>
    tpu.vector_store %arg7[%c0_45, %c0_46, %c0_47, %c256], %26 {strides = array<i32>} : memref<1x16x16x1156xbf16, #tpu.memory_space<vmem>>, vector<1x1x16x128xbf16>,
    %cst_48 = arith.constant 0.000000e+00 : bf16
    %28 = vector.broadcast %cst_48 : bf16 to vector<1x16x1x128xbf16>
    %c0_49 = arith.constant 0 : index
    %c0_50 = arith.constant 0 : index
    %c15 = arith.constant 15 : index
    %c256_51 = arith.constant 256 : index
    %29 = vector.load %arg7[%c0_49, %c0_50, %c15, %c256_51] : memref<1x16x16x1156xbf16, #tpu.memory_space<vmem>>, vector<1x16x1x128xbf16>
    tpu.vector_store %arg7[%c0_49, %c0_50, %c15, %c256_51], %28 {strides = array<i32>} : memref<1x16x16x1156xbf16, #tpu.memory_space<vmem>>, vector<1x16x1x128xbf16>,
    %c0_52 = arith.constant 0 : index
    %c0_53 = arith.constant 0 : index
    %c1_54 = arith.constant 1 : index
    %c0_55 = arith.constant 0 : index
    %30 = vector.load %arg8[%c0_52, %c0_53, %c1_54, %c0_55] : memref<1x16x16x128xbf16, #tpu.memory_space<vmem>>, vector<1x15x15x128xbf16>
    %c0_56 = arith.constant 0 : index
    %c1_57 = arith.constant 1 : index
    %c0_58 = arith.constant 0 : index
    %c256_59 = arith.constant 256 : index
    %31 = vector.load %arg7[%c0_56, %c1_57, %c0_58, %c256_59] : memref<1x16x16x1156xbf16, #tpu.memory_space<vmem>>, vector<1x15x15x128xbf16>
    tpu.vector_store %arg7[%c0_56, %c1_57, %c0_58, %c256_59], %30 {strides = array<i32>} : memref<1x16x16x1156xbf16, #tpu.memory_space<vmem>>, vector<1x15x15x128xbf16>,
    %cst_60 = arith.constant 0.000000e+00 : bf16
    %32 = vector.broadcast %cst_60 : bf16 to vector<1x16x1x128xbf16>
    %c0_61 = arith.constant 0 : index
    %c0_62 = arith.constant 0 : index
    %c0_63 = arith.constant 0 : index
    %c384 = arith.constant 384 : index
    %33 = vector.load %arg7[%c0_61, %c0_62, %c0_63, %c384] : memref<1x16x16x1156xbf16, #tpu.memory_space<vmem>>, vector<1x16x1x128xbf16>
    tpu.vector_store %arg7[%c0_61, %c0_62, %c0_63, %c384], %32 {strides = array<i32>} : memref<1x16x16x1156xbf16, #tpu.memory_space<vmem>>, vector<1x16x1x128xbf16>,
    %c0_64 = arith.constant 0 : index
    %c0_65 = arith.constant 0 : index
    %c0_66 = arith.constant 0 : index
    %c0_67 = arith.constant 0 : index
    %34 = vector.load %arg8[%c0_64, %c0_65, %c0_66, %c0_67] : memref<1x16x16x128xbf16, #tpu.memory_space<vmem>>, vector<1x16x15x128xbf16>
    %c0_68 = arith.constant 0 : index
    %c0_69 = arith.constant 0 : index
    %c1_70 = arith.constant 1 : index
    %c384_71 = arith.constant 384 : index
    %35 = vector.load %arg7[%c0_68, %c0_69, %c1_70, %c384_71] : memref<1x16x16x1156xbf16, #tpu.memory_space<vmem>>, vector<1x16x15x128xbf16>
    tpu.vector_store %arg7[%c0_68, %c0_69, %c1_70, %c384_71], %34 {strides = array<i32>} : memref<1x16x16x1156xbf16, #tpu.memory_space<vmem>>, vector<1x16x15x128xbf16>,
    %c0_72 = arith.constant 0 : index
    %c0_73 = arith.constant 0 : index
    %c0_74 = arith.constant 0 : index
    %c0_75 = arith.constant 0 : index
    %36 = vector.load %arg8[%c0_72, %c0_73, %c0_74, %c0_75] : memref<1x16x16x128xbf16, #tpu.memory_space<vmem>>, vector<1x16x16x128xbf16>
    %c0_76 = arith.constant 0 : index
    %c0_77 = arith.constant 0 : index
    %c0_78 = arith.constant 0 : index
    %c512 = arith.constant 512 : index
    %37 = vector.load %arg7[%c0_76, %c0_77, %c0_78, %c512] : memref<1x16x16x1156xbf16, #tpu.memory_space<vmem>>, vector<1x16x16x128xbf16>
    tpu.vector_store %arg7[%c0_76, %c0_77, %c0_78, %c512], %36 {strides = array<i32>} : memref<1x16x16x1156xbf16, #tpu.memory_space<vmem>>, vector<1x16x16x128xbf16>,
    %cst_79 = arith.constant 0.000000e+00 : bf16
    %38 = vector.broadcast %cst_79 : bf16 to vector<1x16x1x128xbf16>
    %c0_80 = arith.constant 0 : index
    %c0_81 = arith.constant 0 : index
    %c15_82 = arith.constant 15 : index
    %c640 = arith.constant 640 : index
    %39 = vector.load %arg7[%c0_80, %c0_81, %c15_82, %c640] : memref<1x16x16x1156xbf16, #tpu.memory_space<vmem>>, vector<1x16x1x128xbf16>
    tpu.vector_store %arg7[%c0_80, %c0_81, %c15_82, %c640], %38 {strides = array<i32>} : memref<1x16x16x1156xbf16, #tpu.memory_space<vmem>>, vector<1x16x1x128xbf16>,
    %c0_83 = arith.constant 0 : index
    %c0_84 = arith.constant 0 : index
    %c1_85 = arith.constant 1 : index
    %c0_86 = arith.constant 0 : index
    %40 = vector.load %arg8[%c0_83, %c0_84, %c1_85, %c0_86] : memref<1x16x16x128xbf16, #tpu.memory_space<vmem>>, vector<1x16x15x128xbf16>
    %c0_87 = arith.constant 0 : index
    %c0_88 = arith.constant 0 : index
    %c0_89 = arith.constant 0 : index
    %c640_90 = arith.constant 640 : index
    %41 = vector.load %arg7[%c0_87, %c0_88, %c0_89, %c640_90] : memref<1x16x16x1156xbf16, #tpu.memory_space<vmem>>, vector<1x16x15x128xbf16>
    tpu.vector_store %arg7[%c0_87, %c0_88, %c0_89, %c640_90], %40 {strides = array<i32>} : memref<1x16x16x1156xbf16, #tpu.memory_space<vmem>>, vector<1x16x15x128xbf16>,
    %cst_91 = arith.constant 0.000000e+00 : bf16
    %42 = vector.broadcast %cst_91 : bf16 to vector<1x1x16x128xbf16>
    %c0_92 = arith.constant 0 : index
    %c15_93 = arith.constant 15 : index
    %c0_94 = arith.constant 0 : index
    %c768 = arith.constant 768 : index
    %43 = vector.load %arg7[%c0_92, %c15_93, %c0_94, %c768] : memref<1x16x16x1156xbf16, #tpu.memory_space<vmem>>, vector<1x1x16x128xbf16>
    tpu.vector_store %arg7[%c0_92, %c15_93, %c0_94, %c768], %42 {strides = array<i32>} : memref<1x16x16x1156xbf16, #tpu.memory_space<vmem>>, vector<1x1x16x128xbf16>,
    %cst_95 = arith.constant 0.000000e+00 : bf16
    %44 = vector.broadcast %cst_95 : bf16 to vector<1x16x1x128xbf16>
    %c0_96 = arith.constant 0 : index
    %c0_97 = arith.constant 0 : index
    %c0_98 = arith.constant 0 : index
    %c768_99 = arith.constant 768 : index
    %45 = vector.load %arg7[%c0_96, %c0_97, %c0_98, %c768_99] : memref<1x16x16x1156xbf16, #tpu.memory_space<vmem>>, vector<1x16x1x128xbf16>
    tpu.vector_store %arg7[%c0_96, %c0_97, %c0_98, %c768_99], %44 {strides = array<i32>} : memref<1x16x16x1156xbf16, #tpu.memory_space<vmem>>, vector<1x16x1x128xbf16>,
    %c0_100 = arith.constant 0 : index
    %c1_101 = arith.constant 1 : index
    %c0_102 = arith.constant 0 : index
    %c0_103 = arith.constant 0 : index
    %46 = vector.load %arg8[%c0_100, %c1_101, %c0_102, %c0_103] : memref<1x16x16x128xbf16, #tpu.memory_space<vmem>>, vector<1x15x15x128xbf16>
    %c0_104 = arith.constant 0 : index
    %c0_105 = arith.constant 0 : index
    %c1_106 = arith.constant 1 : index
    %c768_107 = arith.constant 768 : index
    %47 = vector.load %arg7[%c0_104, %c0_105, %c1_106, %c768_107] : memref<1x16x16x1156xbf16, #tpu.memory_space<vmem>>, vector<1x15x15x128xbf16>
    tpu.vector_store %arg7[%c0_104, %c0_105, %c1_106, %c768_107], %46 {strides = array<i32>} : memref<1x16x16x1156xbf16, #tpu.memory_space<vmem>>, vector<1x15x15x128xbf16>,
    %cst_108 = arith.constant 0.000000e+00 : bf16
    %48 = vector.broadcast %cst_108 : bf16 to vector<1x1x16x128xbf16>
    %c0_109 = arith.constant 0 : index
    %c15_110 = arith.constant 15 : index
    %c0_111 = arith.constant 0 : index
    %c896 = arith.constant 896 : index
    %49 = vector.load %arg7[%c0_109, %c15_110, %c0_111, %c896] : memref<1x16x16x1156xbf16, #tpu.memory_space<vmem>>, vector<1x1x16x128xbf16>
    tpu.vector_store %arg7[%c0_109, %c15_110, %c0_111, %c896], %48 {strides = array<i32>} : memref<1x16x16x1156xbf16, #tpu.memory_space<vmem>>, vector<1x1x16x128xbf16>,
    %c0_112 = arith.constant 0 : index
    %c1_113 = arith.constant 1 : index
    %c0_114 = arith.constant 0 : index
    %c0_115 = arith.constant 0 : index
    %50 = vector.load %arg8[%c0_112, %c1_113, %c0_114, %c0_115] : memref<1x16x16x128xbf16, #tpu.memory_space<vmem>>, vector<1x15x16x128xbf16>
    %c0_116 = arith.constant 0 : index
    %c0_117 = arith.constant 0 : index
    %c0_118 = arith.constant 0 : index
    %c896_119 = arith.constant 896 : index
    %51 = vector.load %arg7[%c0_116, %c0_117, %c0_118, %c896_119] : memref<1x16x16x1156xbf16, #tpu.memory_space<vmem>>, vector<1x15x16x128xbf16>
    tpu.vector_store %arg7[%c0_116, %c0_117, %c0_118, %c896_119], %50 {strides = array<i32>} : memref<1x16x16x1156xbf16, #tpu.memory_space<vmem>>, vector<1x15x16x128xbf16>,
    %cst_120 = arith.constant 0.000000e+00 : bf16
    %52 = vector.broadcast %cst_120 : bf16 to vector<1x1x16x128xbf16>
    %c0_121 = arith.constant 0 : index
    %c15_122 = arith.constant 15 : index
    %c0_123 = arith.constant 0 : index
    %c1024 = arith.constant 1024 : index
    %53 = vector.load %arg7[%c0_121, %c15_122, %c0_123, %c1024] : memref<1x16x16x1156xbf16, #tpu.memory_space<vmem>>, vector<1x1x16x128xbf16>
    tpu.vector_store %arg7[%c0_121, %c15_122, %c0_123, %c1024], %52 {strides = array<i32>} : memref<1x16x16x1156xbf16, #tpu.memory_space<vmem>>, vector<1x1x16x128xbf16>,
    %cst_124 = arith.constant 0.000000e+00 : bf16
    %54 = vector.broadcast %cst_124 : bf16 to vector<1x16x1x128xbf16>
    %c0_125 = arith.constant 0 : index
    %c0_126 = arith.constant 0 : index
    %c15_127 = arith.constant 15 : index
    %c1024_128 = arith.constant 1024 : index
    %55 = vector.load %arg7[%c0_125, %c0_126, %c15_127, %c1024_128] : memref<1x16x16x1156xbf16, #tpu.memory_space<vmem>>, vector<1x16x1x128xbf16>
    tpu.vector_store %arg7[%c0_125, %c0_126, %c15_127, %c1024_128], %54 {strides = array<i32>} : memref<1x16x16x1156xbf16, #tpu.memory_space<vmem>>, vector<1x16x1x128xbf16>,
    %c0_129 = arith.constant 0 : index
    %c1_130 = arith.constant 1 : index
    %c1_131 = arith.constant 1 : index
    %c0_132 = arith.constant 0 : index
    %56 = vector.load %arg8[%c0_129, %c1_130, %c1_131, %c0_132] : memref<1x16x16x128xbf16, #tpu.memory_space<vmem>>, vector<1x15x15x128xbf16>
    %c0_133 = arith.constant 0 : index
    %c0_134 = arith.constant 0 : index
    %c0_135 = arith.constant 0 : index
    %c1024_136 = arith.constant 1024 : index
    %57 = vector.load %arg7[%c0_133, %c0_134, %c0_135, %c1024_136] : memref<1x16x16x1156xbf16, #tpu.memory_space<vmem>>, vector<1x15x15x128xbf16>
    tpu.vector_store %arg7[%c0_133, %c0_134, %c0_135, %c1024_136], %56 {strides = array<i32>} : memref<1x16x16x1156xbf16, #tpu.memory_space<vmem>>, vector<1x15x15x128xbf16>,
    %c0_137 = arith.constant 0 : index
    %c0_138 = arith.constant 0 : index
    %c0_139 = arith.constant 0 : index
    %c0_140 = arith.constant 0 : index
    %58 = vector.load %arg2[%c0_137, %c0_138, %c0_139, %c0_140] : memref<1x16x16x4xf32, #tpu.memory_space<vmem>>, vector<1x16x16x4xf32>
    %59 = arith.truncf %58 : vector<1x16x16x4xf32> to vector<1x16x16x4xbf16>
    %c0_141 = arith.constant 0 : index
    %c0_142 = arith.constant 0 : index
    %c0_143 = arith.constant 0 : index
    %c1152 = arith.constant 1152 : index
    %60 = vector.load %arg7[%c0_141, %c0_142, %c0_143, %c1152] : memref<1x16x16x1156xbf16, #tpu.memory_space<vmem>>, vector<1x16x16x4xbf16>
    tpu.vector_store %arg7[%c0_141, %c0_142, %c0_143, %c1152], %59 {strides = array<i32>} : memref<1x16x16x1156xbf16, #tpu.memory_space<vmem>>, vector<1x16x16x4xbf16>,
    %c0_144 = arith.constant 0 : index
    %c0_145 = arith.constant 0 : index
    %c0_146 = arith.constant 0 : index
    %c0_147 = arith.constant 0 : index
    %61 = vector.load %arg7[%c0_144, %c0_145, %c0_146, %c0_147] : memref<1x16x16x1156xbf16, #tpu.memory_space<vmem>>, vector<1x16x16x1156xbf16>
    %62 = vector.shape_cast %61 : vector<1x16x16x1156xbf16> to vector<256x1156xbf16>
    %c0_148 = arith.constant 0 : index
    %c0_149 = arith.constant 0 : index
    %63 = vector.load %arg3[%c0_148, %c0_149] : memref<1156x8xbf16, #tpu.memory_space<vmem>>, vector<1156x8xbf16>
    %cst_150 = arith.constant dense<0.000000e+00> : vector<256x8xf32>
    %64 = tpu.matmul %62, %63, %cst_150 {dimension_numbers = #tpu.dot_dimension_numbers<[1], [0], [0], [1], [0, 0, 1, 1], [], []>} : vector<256x1156xbf16>, vector<1156x8xbf16>, vector<256x8xf32> -> vector<256x8xf32>
    %65 = vector.shape_cast %64 : vector<256x8xf32> to vector<1x16x16x8xf32>
    %c0_151 = arith.constant 0 : index
    %c0_152 = arith.constant 0 : index
    %c0_153 = arith.constant 0 : index
    %c0_154 = arith.constant 0 : index
    %66 = vector.load %arg6[%c0_151, %c0_152, %c0_153, %c0_154] : memref<1x16x16x8xf32, #tpu.memory_space<vmem>>, vector<1x16x16x8xf32>
    tpu.vector_store %arg6[%c0_151, %c0_152, %c0_153, %c0_154], %65 {strides = array<i32>} : memref<1x16x16x8xf32, #tpu.memory_space<vmem>>, vector<1x16x16x8xf32>,
    return
  }
  func.func @transform_0(%arg0: i32) -> (i32, i32, i32, i32) {
    %c0_i32 = arith.constant 0 : i32
    %c0_i32_0 = arith.constant 0 : i32
    %c0_i32_1 = arith.constant 0 : i32
    %c0_i32_2 = arith.constant 0 : i32
    return %arg0, %c0_i32, %c0_i32_0, %c0_i32_1 : i32, i32, i32, i32
  }
  func.func @transform_1(%arg0: i32) -> (i32, i32, i32, i32) {
    %c0_i32 = arith.constant 0 : i32
    %c0_i32_0 = arith.constant 0 : i32
    %c0_i32_1 = arith.constant 0 : i32
    %c0_i32_2 = arith.constant 0 : i32
    return %arg0, %c0_i32, %c0_i32_0, %c0_i32_1 : i32, i32, i32, i32
  }
  func.func @transform_2(%arg0: i32) -> (i32, i32) {
    %c0_i32 = arith.constant 0 : i32
    %c0_i32_0 = arith.constant 0 : i32
    %c0_i32_1 = arith.constant 0 : i32
    return %c0_i32, %c0_i32_0 : i32, i32
  }
  func.func @transform_3(%arg0: i32) -> (i32, i32) {
    %c0_i32 = arith.constant 0 : i32
    %c0_i32_0 = arith.constant 0 : i32
    %c0_i32_1 = arith.constant 0 : i32
    return %c0_i32, %c0_i32_0 : i32, i32
  }
  func.func @transform_4(%arg0: i32) -> (i32, i32) {
    %c0_i32 = arith.constant 0 : i32
    %c0_i32_0 = arith.constant 0 : i32
    %c0_i32_1 = arith.constant 0 : i32
    return %c0_i32, %c0_i32_0 : i32, i32
  }
  func.func @transform_5(%arg0: i32) -> (i32, i32, i32, i32) {
    %c0_i32 = arith.constant 0 : i32
    %c0_i32_0 = arith.constant 0 : i32
    %c0_i32_1 = arith.constant 0 : i32
    %c0_i32_2 = arith.constant 0 : i32
    return %arg0, %c0_i32, %c0_i32_0, %c0_i32_1 : i32, i32, i32, i32
  }
}

</mosaic_0001>

<llo_original>
// kernel: basic_block_forward.2
$region0: #{basic_block_forward.2}
  #allocation0 [shape = 'u32[]', space=smem, size = 0x4, offset = 0x4, fixed_abs, tag = 'smem constant byte address 0x4 - core index']
  #allocation1 [shape = 'u32[144,128]{1,0:T(1,128)}', space=vmem, size = 0x12000, scoped, tag = 'internal scratch']
  #allocation2 [shape = 'bf16[1,16,16,1152]{3,2,1,0:T(16,128)(2,1)}', space=vmem, size = 0x90000, scoped, tag = 'scratch operand']
  #allocation3 [shape = 'bf16[1,16,16,128]{3,2,1,0:T(16,128)(2,1)}', space=vmem, size = 0x10000, scoped, tag = 'scratch operand']
  %s0 = inlined_call_operand.vmem [shape: f32[2,16,16,4], index: 0, kind: input, shape index: {}]
  %s1 = inlined_call_operand.vmem [shape: bf16[1152,8], index: 1, kind: input, shape index: {}]
  %s2 = inlined_call_operand.vmem [shape: bf16[2,16,16,8], index: 2, kind: output, shape index: {0}]
  %s3 = inlined_call_operand.vmem [shape: f32[2,2,8], index: 3, kind: output, shape index: {1}]
  %4 = xla_tuple %s2, %s3
  %s5 = sld [smem:[#allocation0]]
  $region49: #{basic_block_forward.2} parent=0
    _
  %s7 = ssub.s32 1, %s5
  %s8 = scalar_select 0, %s7, %s5
  loop: start=0, step=1, limit=4
  $region2: #{basic_block_forward.2} parent=0 // loop_pre_header
    _
  $region3: #{basic_block_forward.2} parent=0 // loop_header
    %s10 = sphi 0, %s14
    %p11 = scmp.ge.s32.totalorder %s10, 4
    %s20 = sphi 0, %s22
    %s23 = sphi 0, %s20
    %s24 = sphi 0, %s23
    %s40 = sphi 0, %s24
    %s44 = sphi 0, %s44
    %s46 = sphi 0, %s44
    %s47 = sphi 0, %s46
    %s61 = sphi 0, %s47
    %s67 = sphi 0, %s69
    %s70 = sphi 0, %s67
    %s71 = sphi 0, %s70
    %s87 = sphi 0, %s71
    %s93 = sphi 0, %s95
    %s96 = sphi 0, %s93
    %s97 = sphi 0, %s96
    %s113 = sphi 0, %s97
  $region4: #{basic_block_forward.2} parent=0 // loop_header_branch
    %13 = sbr.rel (%p11) target = $region8
  $region5: #{basic_block_forward.2} parent=0 // loop_body
    %s15 = ssub.s32 %s10, 1
    %s16 = ssub.s32 %s10, 2
    %s17 = sadd.s32 %s10, 1
    %s18 = ssub.s32 %s10, %s17
    %p19 = scmp.eq.s32.totalorder %s18, 0
    %s21 = sadd.s32 %s20, 1
    %s22 = scalar_select %p19, %s20, %s21
    %p25 = pneg %p19
    %p26 = scmp.eq.s32.totalorder %s10, 1
    %p27 = por %p25, %p26
    %p28 = scmp.ne.s32.totalorder %s20, %s23
    %p29 = scmp.eq.s32.totalorder %s10, 0
    %p30 = por %p28, %p29
    %p31 = scmp.ne.s32.totalorder %s20, %s23
    %p32 = scmp.eq.s32.totalorder %s15, 1
    %p33 = por %p31, %p32
    %p34 = scmp.ne.s32.totalorder %s23, %s24
    %p35 = scmp.eq.s32.totalorder %s15, 0
    %p36 = por %p34, %p35
    %p37 = scmp.ne.s32.totalorder %s23, %s24
    %p38 = scmp.eq.s32.totalorder %s16, 1
    %p39 = por %p37, %p38
    %p41 = scmp.ne.s32.totalorder %s24, %s40
    %p42 = scmp.eq.s32.totalorder %s16, 0
    %p43 = por %p41, %p42
    %s45 = sadd.s32 %s44, 1
    %p48 = scmp.eq.s32.totalorder %s10, 1
    %p49 = scmp.ne.s32.totalorder %s44, %s46
    %p50 = scmp.eq.s32.totalorder %s10, 0
    %p51 = por %p49, %p50
    %p52 = scmp.ne.s32.totalorder %s44, %s46
    %p53 = scmp.eq.s32.totalorder %s15, 1
    %p54 = por %p52, %p53
    %p55 = scmp.ne.s32.totalorder %s46, %s47
    %p56 = scmp.eq.s32.totalorder %s15, 0
    %p57 = por %p55, %p56
    %p58 = scmp.ne.s32.totalorder %s46, %s47
    %p59 = scmp.eq.s32.totalorder %s16, 1
    %p60 = por %p58, %p59
    %p62 = scmp.ne.s32.totalorder %s47, %s61
    %p63 = scmp.eq.s32.totalorder %s16, 0
    %p64 = por %p62, %p63
    %s65 = ssub.s32 %s10, %s17
    %p66 = scmp.eq.s32.totalorder %s65, 0
    %s68 = sadd.s32 %s67, 1
    %s69 = scalar_select %p66, %s67, %s68
    %p72 = pneg %p66
    %p73 = scmp.eq.s32.totalorder %s10, 1
    %p74 = por %p72, %p73
    %p75 = scmp.ne.s32.totalorder %s67, %s70
    %p76 = scmp.eq.s32.totalorder %s10, 0
    %p77 = por %p75, %p76
    %p78 = scmp.ne.s32.totalorder %s67, %s70
    %p79 = scmp.eq.s32.totalorder %s15, 1
    %p80 = por %p78, %p79
    %p81 = scmp.ne.s32.totalorder %s70, %s71
    %p82 = scmp.eq.s32.totalorder %s15, 0
    %p83 = por %p81, %p82
    %p84 = scmp.ne.s32.totalorder %s70, %s71
    %p85 = scmp.eq.s32.totalorder %s16, 1
    %p86 = por %p84, %p85
    %p88 = scmp.ne.s32.totalorder %s71, %s87
    %p89 = scmp.eq.s32.totalorder %s16, 0
    %p90 = por %p88, %p89
    %s91 = ssub.s32 %s10, %s17
    %p92 = scmp.eq.s32.totalorder %s91, 0
    %s94 = sadd.s32 %s93, 1
    %s95 = scalar_select %p92, %s93, %s94
    %p98 = pneg %p92
    %p99 = scmp.eq.s32.totalorder %s10, 1
    %p100 = por %p98, %p99
    %p101 = scmp.ne.s32.totalorder %s93, %s96
    %p102 = scmp.eq.s32.totalorder %s10, 0
    %p103 = por %p101, %p102
    %p104 = scmp.ne.s32.totalorder %s93, %s96
    %p105 = scmp.eq.s32.totalorder %s15, 1
    %p106 = por %p104, %p105
    %p107 = scmp.ne.s32.totalorder %s96, %s97
    %p108 = scmp.eq.s32.totalorder %s15, 0
    %p109 = por %p107, %p108
    %p110 = scmp.ne.s32.totalorder %s96, %s97
    %p111 = scmp.eq.s32.totalorder %s16, 1
    %p112 = por %p110, %p111
    %p114 = scmp.ne.s32.totalorder %s97, %s113
    %p115 = scmp.eq.s32.totalorder %s16, 0
    %p116 = por %p114, %p115
    %p117 = scmp.le.s32.totalorder 1, %s10
    %p118 = scmp.lt.s32.totalorder %s10, 3
    %p119 = pnand %p117, %p118
    %p120 = pneg %p119
    // Predicated region
    $region9: #{basic_block_forward.2} parent=5 // pred_check
      _
    $region10: #{basic_block_forward.2} parent=5 // pred_check_branch
      %122 = sbr.rel (%p119) target = $region12
    $region11: #{basic_block_forward.2} parent=5 // pred_region
      %s123 = ssub.s32 %s10, 1
      // Predicated region
      $region13: #{basic_block_forward.2} parent=11 // pred_check
        %p124 = pneg %p57
      $region14: #{basic_block_forward.2} parent=11 // pred_check_branch
        %126 = sbr.rel (%p124) target = $region16
      $region15: #{basic_block_forward.2} parent=11 // pred_region
        _
      $region16: #{basic_block_forward.2} parent=11 // pred_fallthru
        _
    $region12: #{basic_block_forward.2} parent=5 // pred_fallthru
      _
    %p127 = scmp.lt.s32.totalorder %s10, 2
    // Predicated region
    $region17: #{basic_block_forward.2} parent=5 // pred_check
      %p128 = pneg %p127
    $region18: #{basic_block_forward.2} parent=5 // pred_check_branch
      %130 = sbr.rel (%p128) target = $region20
    $region19: #{basic_block_forward.2} parent=5 // pred_region
      // Predicated region
      $region21: #{basic_block_forward.2} parent=19 // pred_check
        %p131 = pneg %p30
      $region22: #{basic_block_forward.2} parent=19 // pred_check_branch
        %133 = sbr.rel (%p131) target = $region24
      $region23: #{basic_block_forward.2} parent=19 // pred_region
        %p134 = scmp.lt.s32.totalorder %s10, 1
        %s135 = scalar_select %p134, %s10, 1
        %s136 = smul.addr %s135, 32
        %s137 = smul.addr %s136, 8
        %s138 = scalar_lea.vmem %s0, %s137
      $region24: #{basic_block_forward.2} parent=19 // pred_fallthru
        _
    $region20: #{basic_block_forward.2} parent=5 // pred_fallthru
      _
    %p139 = scmp.le.s32.totalorder 1, %s10
    %p140 = scmp.lt.s32.totalorder %s10, 3
    %p141 = pnand %p139, %p140
    %p142 = pneg %p141
    // Predicated region
    $region25: #{basic_block_forward.2} parent=5 // pred_check
      _
    $region26: #{basic_block_forward.2} parent=5 // pred_check_branch
      %144 = sbr.rel (%p141) target = $region28
    $region27: #{basic_block_forward.2} parent=5 // pred_region
      %s145 = ssub.s32 %s10, 1
      %p146 = scmp.lt.s32.totalorder %s15, 1
      %s147 = scalar_select %p146, %s15, 1
      %s148 = smul.addr %s147, 32
      %s149 = smul.addr %s148, 8
      %s150 = scalar_lea.vmem %s0, %s149
      %p151 = pneg %p36
      %p152 = pneg %p33
      %p153 = pneg %p57
      %p154 = pneg %p54
      %p155 = pneg %p83
      %p156 = pneg %p80
      %p157 = scmp.lt.s32.totalorder %s15, 1
      %s158 = scalar_select %p157, %s15, 1
      %s159 = smul.addr %s158, 32
      %s160 = smul.addr %s159, 4
      %s161 = scalar_lea.vmem %s2, %s160
      %p162 = pneg %p109
      %p163 = pneg %p106
      %p164 = scmp.lt.s32.totalorder %s15, 1
      %s165 = scalar_select %p164, %s15, 1
      %s166 = smul.addr %s165, 2
      %s167 = scalar_lea.vmem %s3, %s166
      %p168 = scmp.lt.s32.totalorder %s15, 1
      %s169 = scalar_select %p168, %s15, 1
      %s170 = smul.addr %s169, 32
      %s171 = smul.addr %s170, 8
      %s172 = scalar_lea.vmem %s0, %s171
      %p173 = scmp.lt.s32.totalorder %s15, 1
      %s174 = scalar_select %p173, %s15, 1
      %s175 = smul.addr %s174, 32
      %s176 = smul.addr %s175, 4
      %s177 = scalar_lea.vmem %s2, %s176
      %p178 = scmp.lt.s32.totalorder %s15, 1
      %s179 = scalar_select %p178, %s15, 1
      %s180 = smul.addr %s179, 2
      %s181 = scalar_lea.vmem %s3, %s180
      %v183 = vld [vmem:[%s172] sm:$0xff]
      %v184 = vld [vmem:[%s172 + $0x8] sm:$0xff]
      %v185 = vld [vmem:[%s172 + $0x10] sm:$0xff]
      %v186 = vld [vmem:[%s172 + $0x18] sm:$0xff]
      %v187 = vld [vmem:[%s172 + $0x20] sm:$0xff]
      %v188 = vld [vmem:[%s172 + $0x28] sm:$0xff]
      %v189 = vld [vmem:[%s172 + $0x30] sm:$0xff]
      %v190 = vld [vmem:[%s172 + $0x38] sm:$0xff]
      %v191 = vld [vmem:[%s172 + $0x40] sm:$0xff]
      %v192 = vld [vmem:[%s172 + $0x48] sm:$0xff]
      %v193 = vld [vmem:[%s172 + $0x50] sm:$0xff]
      %v194 = vld [vmem:[%s172 + $0x58] sm:$0xff]
      %v195 = vld [vmem:[%s172 + $0x60] sm:$0xff]
      %v196 = vld [vmem:[%s172 + $0x68] sm:$0xff]
      %v197 = vld [vmem:[%s172 + $0x70] sm:$0xff]
      %v198 = vld [vmem:[%s172 + $0x78] sm:$0xff]
      %v199 = vld [vmem:[%s172 + $0x80] sm:$0xff]
      %v200 = vld [vmem:[%s172 + $0x88] sm:$0xff]
      %v201 = vld [vmem:[%s172 + $0x90] sm:$0xff]
      %v202 = vld [vmem:[%s172 + $0x98] sm:$0xff]
      %v203 = vld [vmem:[%s172 + $0xa0] sm:$0xff]
      %v204 = vld [vmem:[%s172 + $0xa8] sm:$0xff]
      %v205 = vld [vmem:[%s172 + $0xb0] sm:$0xff]
      %v206 = vld [vmem:[%s172 + $0xb8] sm:$0xff]
      %v207 = vld [vmem:[%s172 + $0xc0] sm:$0xff]
      %v208 = vld [vmem:[%s172 + $0xc8] sm:$0xff]
      %v209 = vld [vmem:[%s172 + $0xd0] sm:$0xff]
      %v210 = vld [vmem:[%s172 + $0xd8] sm:$0xff]
      %v211 = vld [vmem:[%s172 + $0xe0] sm:$0xff]
      %v212 = vld [vmem:[%s172 + $0xe8] sm:$0xff]
      %v213 = vld [vmem:[%s172 + $0xf0] sm:$0xff]
      %v214 = vld [vmem:[%s172 + $0xf8] sm:$0xff]
      %v215 = vpack.c.bf16 %v184, %v183
      %v216 = vpack.c.bf16 %v186, %v185
      %v217 = vpack.c.bf16 %v188, %v187
      %v218 = vpack.c.bf16 %v190, %v189
      %v219 = vpack.c.bf16 %v192, %v191
      %v220 = vpack.c.bf16 %v194, %v193
      %v221 = vpack.c.bf16 %v196, %v195
      %v222 = vpack.c.bf16 %v198, %v197
      %v223 = vpack.c.bf16 %v200, %v199
      %v224 = vpack.c.bf16 %v202, %v201
      %v225 = vpack.c.bf16 %v204, %v203
      %v226 = vpack.c.bf16 %v206, %v205
      %v227 = vpack.c.bf16 %v208, %v207
      %v228 = vpack.c.bf16 %v210, %v209
      %v229 = vpack.c.bf16 %v212, %v211
      %v230 = vpack.c.bf16 %v214, %v213
      %vm231 = vcmask 31744
      %232 = vst.msk [vmem:[#allocation3] sm:$0xff] %vm231, %v215
      %233 = vst.msk [vmem:[#allocation3 + $0x8] sm:$0xff] %vm231, %v216
      %234 = vst.msk [vmem:[#allocation3 + $0x10] sm:$0xff] %vm231, %v217
      %235 = vst.msk [vmem:[#allocation3 + $0x18] sm:$0xff] %vm231, %v218
      %236 = vst.msk [vmem:[#allocation3 + $0x20] sm:$0xff] %vm231, %v219
      %237 = vst.msk [vmem:[#allocation3 + $0x28] sm:$0xff] %vm231, %v220
      %238 = vst.msk [vmem:[#allocation3 + $0x30] sm:$0xff] %vm231, %v221
      %239 = vst.msk [vmem:[#allocation3 + $0x38] sm:$0xff] %vm231, %v222
      %240 = vst.msk [vmem:[#allocation3 + $0x40] sm:$0xff] %vm231, %v223
      %241 = vst.msk [vmem:[#allocation3 + $0x48] sm:$0xff] %vm231, %v224
      %242 = vst.msk [vmem:[#allocation3 + $0x50] sm:$0xff] %vm231, %v225
      %243 = vst.msk [vmem:[#allocation3 + $0x58] sm:$0xff] %vm231, %v226
      %244 = vst.msk [vmem:[#allocation3 + $0x60] sm:$0xff] %vm231, %v227
      %245 = vst.msk [vmem:[#allocation3 + $0x68] sm:$0xff] %vm231, %v228
      %246 = vst.msk [vmem:[#allocation3 + $0x70] sm:$0xff] %vm231, %v229
      %247 = vst.msk [vmem:[#allocation3 + $0x78] sm:$0xff] %vm231, %v230
      %vm248 = vcmask 1047584
      %249 = vst.msk [vmem:[#allocation3] sm:$0xff] %vm248, 0
      %250 = vst.msk [vmem:[#allocation3 + $0x8] sm:$0xff] %vm248, 0
      %251 = vst.msk [vmem:[#allocation3 + $0x10] sm:$0xff] %vm248, 0
      %252 = vst.msk [vmem:[#allocation3 + $0x18] sm:$0xff] %vm248, 0
      %253 = vst.msk [vmem:[#allocation3 + $0x20] sm:$0xff] %vm248, 0
      %254 = vst.msk [vmem:[#allocation3 + $0x28] sm:$0xff] %vm248, 0
      %255 = vst.msk [vmem:[#allocation3 + $0x30] sm:$0xff] %vm248, 0
      %256 = vst.msk [vmem:[#allocation3 + $0x38] sm:$0xff] %vm248, 0
      %257 = vst.msk [vmem:[#allocation3 + $0x40] sm:$0xff] %vm248, 0
      %258 = vst.msk [vmem:[#allocation3 + $0x48] sm:$0xff] %vm248, 0
      %259 = vst.msk [vmem:[#allocation3 + $0x50] sm:$0xff] %vm248, 0
      %260 = vst.msk [vmem:[#allocation3 + $0x58] sm:$0xff] %vm248, 0
      %261 = vst.msk [vmem:[#allocation3 + $0x60] sm:$0xff] %vm248, 0
      %262 = vst.msk [vmem:[#allocation3 + $0x68] sm:$0xff] %vm248, 0
      %263 = vst.msk [vmem:[#allocation3 + $0x70] sm:$0xff] %vm248, 0
      %264 = vst.msk [vmem:[#allocation3 + $0x78] sm:$0xff] %vm248, 0
      %265 = vst [vmem:[#allocation2] sm:$0xff] 0
      %vm266 = vcmask 1040384
      %vm267 = vsmask.f32 256
      %vm268 = vmand %vm266, %vm267
      %v269 = vld [vmem:[#allocation2] sm:$0x1]
      %v270 = vsel %vm268, 0, %v269
      %271 = vst [vmem:[#allocation2] sm:$0x1] %v270
      %v272 = vld [vmem:[#allocation2 + $0x48] sm:$0x1]
      %v273 = vsel %vm268, 0, %v272
      %274 = vst [vmem:[#allocation2 + $0x48] sm:$0x1] %v273
      %v275 = vld [vmem:[#allocation2 + $0x90] sm:$0x1]
      %v276 = vsel %vm268, 0, %v275
      %277 = vst [vmem:[#allocation2 + $0x90] sm:$0x1] %v276
      %v278 = vld [vmem:[#allocation2 + $0xd8] sm:$0x1]
      %v279 = vsel %vm268, 0, %v278
      %280 = vst [vmem:[#allocation2 + $0xd8] sm:$0x1] %v279
      %v281 = vld [vmem:[#allocation2 + $0x120] sm:$0x1]
      %v282 = vsel %vm268, 0, %v281
      %283 = vst [vmem:[#allocation2 + $0x120] sm:$0x1] %v282
      %v284 = vld [vmem:[#allocation2 + $0x168] sm:$0x1]
      %v285 = vsel %vm268, 0, %v284
      %286 = vst [vmem:[#allocation2 + $0x168] sm:$0x1] %v285
      %v287 = vld [vmem:[#allocation2 + $0x1b0] sm:$0x1]
      %v288 = vsel %vm268, 0, %v287
      %289 = vst [vmem:[#allocation2 + $0x1b0] sm:$0x1] %v288
      %v290 = vld [vmem:[#allocation2 + $0x1f8] sm:$0x1]
      %v291 = vsel %vm268, 0, %v290
      %292 = vst [vmem:[#allocation2 + $0x1f8] sm:$0x1] %v291
      %v293 = vld [vmem:[#allocation2 + $0x240] sm:$0x1]
      %v294 = vsel %vm268, 0, %v293
      %295 = vst [vmem:[#allocation2 + $0x240] sm:$0x1] %v294
      %v296 = vld [vmem:[#allocation2 + $0x288] sm:$0x1]
      %v297 = vsel %vm268, 0, %v296
      %298 = vst [vmem:[#allocation2 + $0x288] sm:$0x1] %v297
      %v299 = vld [vmem:[#allocation2 + $0x2d0] sm:$0x1]
      %v300 = vsel %vm268, 0, %v299
      %301 = vst [vmem:[#allocation2 + $0x2d0] sm:$0x1] %v300
      %v302 = vld [vmem:[#allocation2 + $0x318] sm:$0x1]
      %v303 = vsel %vm268, 0, %v302
      %304 = vst [vmem:[#allocation2 + $0x318] sm:$0x1] %v303
      %v305 = vld [vmem:[#allocation2 + $0x360] sm:$0x1]
      %v306 = vsel %vm268, 0, %v305
      %307 = vst [vmem:[#allocation2 + $0x360] sm:$0x1] %v306
      %v308 = vld [vmem:[#allocation2 + $0x3a8] sm:$0x1]
      %v309 = vsel %vm268, 0, %v308
      %310 = vst [vmem:[#allocation2 + $0x3a8] sm:$0x1] %v309
      %v311 = vld [vmem:[#allocation2 + $0x3f0] sm:$0x1]
      %v312 = vsel %vm268, 0, %v311
      %313 = vst [vmem:[#allocation2 + $0x3f0] sm:$0x1] %v312
      %v314 = vld [vmem:[#allocation2 + $0x438] sm:$0x1]
      %v315 = vsel %vm268, 0, %v314
      %316 = vst [vmem:[#allocation2 + $0x438] sm:$0x1] %v315
      %v317 = vld [vmem:[#allocation3] sm:$0xff]
      %v318 = vld [vmem:[#allocation3 + $0x8] sm:$0xff]
      %v319 = vld [vmem:[#allocation3 + $0x10] sm:$0xff]
      %v320 = vld [vmem:[#allocation3 + $0x18] sm:$0xff]
      %v321 = vld [vmem:[#allocation3 + $0x20] sm:$0xff]
      %v322 = vld [vmem:[#allocation3 + $0x28] sm:$0xff]
      %v323 = vld [vmem:[#allocation3 + $0x30] sm:$0xff]
      %v324 = vld [vmem:[#allocation3 + $0x38] sm:$0xff]
      %v325 = vld [vmem:[#allocation3 + $0x40] sm:$0xff]
      %v326 = vld [vmem:[#allocation3 + $0x48] sm:$0xff]
      %v327 = vld [vmem:[#allocation3 + $0x50] sm:$0xff]
      %v328 = vld [vmem:[#allocation3 + $0x58] sm:$0xff]
      %v329 = vld [vmem:[#allocation3 + $0x60] sm:$0xff]
      %v330 = vld [vmem:[#allocation3 + $0x68] sm:$0xff]
      %v331 = vld [vmem:[#allocation3 + $0x70] sm:$0xff]
      %v333 = vshrl.u32 %v317, 16
      %v335 = vrot.slane %v333, 7
      %v336 = vshll.u32 %v317, 16
      %v338 = vor.u32 %v335, %v336
      %v340 = vshrl.u32 %v318, 16
      %v342 = vrot.slane %v340, 7
      %v343 = vshll.u32 %v318, 16
      %v345 = vor.u32 %v342, %v343
      %v347 = vshrl.u32 %v319, 16
      %v349 = vrot.slane %v347, 7
      %v350 = vshll.u32 %v319, 16
      %v352 = vor.u32 %v349, %v350
      %v354 = vshrl.u32 %v320, 16
      %v356 = vrot.slane %v354, 7
      %v357 = vshll.u32 %v320, 16
      %v359 = vor.u32 %v356, %v357
      %v361 = vshrl.u32 %v321, 16
      %v363 = vrot.slane %v361, 7
      %v364 = vshll.u32 %v321, 16
      %v366 = vor.u32 %v363, %v364
      %v368 = vshrl.u32 %v322, 16
      %v370 = vrot.slane %v368, 7
      %v371 = vshll.u32 %v322, 16
      %v373 = vor.u32 %v370, %v371
      %v375 = vshrl.u32 %v323, 16
      %v377 = vrot.slane %v375, 7
      %v378 = vshll.u32 %v323, 16
      %v380 = vor.u32 %v377, %v378
      %v382 = vshrl.u32 %v324, 16
      %v384 = vrot.slane %v382, 7
      %v385 = vshll.u32 %v324, 16
      %v387 = vor.u32 %v384, %v385
      %v389 = vshrl.u32 %v325, 16
      %v391 = vrot.slane %v389, 7
      %v392 = vshll.u32 %v325, 16
      %v394 = vor.u32 %v391, %v392
      %v396 = vshrl.u32 %v326, 16
      %v398 = vrot.slane %v396, 7
      %v399 = vshll.u32 %v326, 16
      %v401 = vor.u32 %v398, %v399
      %v403 = vshrl.u32 %v327, 16
      %v405 = vrot.slane %v403, 7
      %v406 = vshll.u32 %v327, 16
      %v408 = vor.u32 %v405, %v406
      %v410 = vshrl.u32 %v328, 16
      %v412 = vrot.slane %v410, 7
      %v413 = vshll.u32 %v328, 16
      %v415 = vor.u32 %v412, %v413
      %v417 = vshrl.u32 %v329, 16
      %v419 = vrot.slane %v417, 7
      %v420 = vshll.u32 %v329, 16
      %v422 = vor.u32 %v419, %v420
      %v424 = vshrl.u32 %v330, 16
      %v426 = vrot.slane %v424, 7
      %v427 = vshll.u32 %v330, 16
      %v429 = vor.u32 %v426, %v427
      %v431 = vshrl.u32 %v331, 16
      %v433 = vrot.slane %v431, 7
      %v434 = vshll.u32 %v331, 16
      %v436 = vor.u32 %v433, %v434
      %s452 = scalar_lea.vmem [#allocation2], 72
      %vm453 = vcmask 1047552
      %vm454 = vsmask.f32 7938
      %vm455 = vmand %vm453, %vm454
      %v456 = vld [vmem:[%s452] sm:$0xff]
      %v457 = vsel %vm455, %v338, %v456
      %458 = vst [vmem:[%s452] sm:$0xff] %v457
      %v459 = vld [vmem:[%s452 + $0x48] sm:$0xff]
      %v460 = vsel %vm455, %v345, %v459
      %461 = vst [vmem:[%s452 + $0x48] sm:$0xff] %v460
      %v462 = vld [vmem:[%s452 + $0x90] sm:$0xff]
      %v463 = vsel %vm455, %v352, %v462
      %464 = vst [vmem:[%s452 + $0x90] sm:$0xff] %v463
      %v465 = vld [vmem:[%s452 + $0xd8] sm:$0xff]
      %v466 = vsel %vm455, %v359, %v465
      %467 = vst [vmem:[%s452 + $0xd8] sm:$0xff] %v466
      %v468 = vld [vmem:[%s452 + $0x120] sm:$0xff]
      %v469 = vsel %vm455, %v366, %v468
      %470 = vst [vmem:[%s452 + $0x120] sm:$0xff] %v469
      %v471 = vld [vmem:[%s452 + $0x168] sm:$0xff]
      %v472 = vsel %vm455, %v373, %v471
      %473 = vst [vmem:[%s452 + $0x168] sm:$0xff] %v472
      %v474 = vld [vmem:[%s452 + $0x1b0] sm:$0xff]
      %v475 = vsel %vm455, %v380, %v474
      %476 = vst [vmem:[%s452 + $0x1b0] sm:$0xff] %v475
      %v477 = vld [vmem:[%s452 + $0x1f8] sm:$0xff]
      %v478 = vsel %vm455, %v387, %v477
      %479 = vst [vmem:[%s452 + $0x1f8] sm:$0xff] %v478
      %v480 = vld [vmem:[%s452 + $0x240] sm:$0xff]
      %v481 = vsel %vm455, %v394, %v480
      %482 = vst [vmem:[%s452 + $0x240] sm:$0xff] %v481
      %v483 = vld [vmem:[%s452 + $0x288] sm:$0xff]
      %v484 = vsel %vm455, %v401, %v483
      %485 = vst [vmem:[%s452 + $0x288] sm:$0xff] %v484
      %v486 = vld [vmem:[%s452 + $0x2d0] sm:$0xff]
      %v487 = vsel %vm455, %v408, %v486
      %488 = vst [vmem:[%s452 + $0x2d0] sm:$0xff] %v487
      %v489 = vld [vmem:[%s452 + $0x318] sm:$0xff]
      %v490 = vsel %vm455, %v415, %v489
      %491 = vst [vmem:[%s452 + $0x318] sm:$0xff] %v490
      %v492 = vld [vmem:[%s452 + $0x360] sm:$0xff]
      %v493 = vsel %vm455, %v422, %v492
      %494 = vst [vmem:[%s452 + $0x360] sm:$0xff] %v493
      %v495 = vld [vmem:[%s452 + $0x3a8] sm:$0xff]
      %v496 = vsel %vm455, %v429, %v495
      %497 = vst [vmem:[%s452 + $0x3a8] sm:$0xff] %v496
      %v498 = vld [vmem:[%s452 + $0x3f0] sm:$0xff]
      %v499 = vsel %vm455, %v436, %v498
      %500 = vst [vmem:[%s452 + $0x3f0] sm:$0xff] %v499
      %501 = vst [vmem:[#allocation2 + $0x8] sm:$0xff] 0
      %v502 = vld [vmem:[#allocation3] sm:$0xff]
      %v503 = vld [vmem:[#allocation3 + $0x8] sm:$0xff]
      %v504 = vld [vmem:[#allocation3 + $0x10] sm:$0xff]
      %v505 = vld [vmem:[#allocation3 + $0x18] sm:$0xff]
      %v506 = vld [vmem:[#allocation3 + $0x20] sm:$0xff]
      %v507 = vld [vmem:[#allocation3 + $0x28] sm:$0xff]
      %v508 = vld [vmem:[#allocation3 + $0x30] sm:$0xff]
      %v509 = vld [vmem:[#allocation3 + $0x38] sm:$0xff]
      %v510 = vld [vmem:[#allocation3 + $0x40] sm:$0xff]
      %v511 = vld [vmem:[#allocation3 + $0x48] sm:$0xff]
      %v512 = vld [vmem:[#allocation3 + $0x50] sm:$0xff]
      %v513 = vld [vmem:[#allocation3 + $0x58] sm:$0xff]
      %v514 = vld [vmem:[#allocation3 + $0x60] sm:$0xff]
      %v515 = vld [vmem:[#allocation3 + $0x68] sm:$0xff]
      %v516 = vld [vmem:[#allocation3 + $0x70] sm:$0xff]
      %517 = vst [vmem:[%s452 + $0x8] sm:$0xff] %v502
      %518 = vst [vmem:[%s452 + $0x50] sm:$0xff] %v503
      %519 = vst [vmem:[%s452 + $0x98] sm:$0xff] %v504
      %520 = vst [vmem:[%s452 + $0xe0] sm:$0xff] %v505
      %521 = vst [vmem:[%s452 + $0x128] sm:$0xff] %v506
      %522 = vst [vmem:[%s452 + $0x170] sm:$0xff] %v507
      %523 = vst [vmem:[%s452 + $0x1b8] sm:$0xff] %v508
      %524 = vst [vmem:[%s452 + $0x200] sm:$0xff] %v509
      %525 = vst [vmem:[%s452 + $0x248] sm:$0xff] %v510
      %526 = vst [vmem:[%s452 + $0x290] sm:$0xff] %v511
      %527 = vst [vmem:[%s452 + $0x2d8] sm:$0xff] %v512
      %528 = vst [vmem:[%s452 + $0x320] sm:$0xff] %v513
      %529 = vst [vmem:[%s452 + $0x368] sm:$0xff] %v514
      %530 = vst [vmem:[%s452 + $0x3b0] sm:$0xff] %v515
      %531 = vst [vmem:[%s452 + $0x3f8] sm:$0xff] %v516
      %532 = vst [vmem:[#allocation2 + $0x10] sm:$0xff] 0
      %vm533 = vcmask 1047559
      %vm534 = vsmask.f32 7966
      %vm535 = vmand %vm533, %vm534
      %v536 = vld [vmem:[#allocation2 + $0x10] sm:$0x80]
      %v537 = vsel %vm535, 0, %v536
      %538 = vst [vmem:[#allocation2 + $0x10] sm:$0x80] %v537
      %v539 = vld [vmem:[#allocation2 + $0x58] sm:$0x80]
      %v540 = vsel %vm535, 0, %v539
      %541 = vst [vmem:[#allocation2 + $0x58] sm:$0x80] %v540
      %v542 = vld [vmem:[#allocation2 + $0xa0] sm:$0x80]
      %v543 = vsel %vm535, 0, %v542
      %544 = vst [vmem:[#allocation2 + $0xa0] sm:$0x80] %v543
      %v545 = vld [vmem:[#allocation2 + $0xe8] sm:$0x80]
      %v546 = vsel %vm535, 0, %v545
      %547 = vst [vmem:[#allocation2 + $0xe8] sm:$0x80] %v546
      %v548 = vld [vmem:[#allocation2 + $0x130] sm:$0x80]
      %v549 = vsel %vm535, 0, %v548
      %550 = vst [vmem:[#allocation2 + $0x130] sm:$0x80] %v549
      %v551 = vld [vmem:[#allocation2 + $0x178] sm:$0x80]
      %v552 = vsel %vm535, 0, %v551
      %553 = vst [vmem:[#allocation2 + $0x178] sm:$0x80] %v552
      %v554 = vld [vmem:[#allocation2 + $0x1c0] sm:$0x80]
      %v555 = vsel %vm535, 0, %v554
      %556 = vst [vmem:[#allocation2 + $0x1c0] sm:$0x80] %v555
      %v557 = vld [vmem:[#allocation2 + $0x208] sm:$0x80]
      %v558 = vsel %vm535, 0, %v557
      %559 = vst [vmem:[#allocation2 + $0x208] sm:$0x80] %v558
      %v560 = vld [vmem:[#allocation2 + $0x250] sm:$0x80]
      %v561 = vsel %vm535, 0, %v560
      %562 = vst [vmem:[#allocation2 + $0x250] sm:$0x80] %v561
      %v563 = vld [vmem:[#allocation2 + $0x298] sm:$0x80]
      %v564 = vsel %vm535, 0, %v563
      %565 = vst [vmem:[#allocation2 + $0x298] sm:$0x80] %v564
      %v566 = vld [vmem:[#allocation2 + $0x2e0] sm:$0x80]
      %v567 = vsel %vm535, 0, %v566
      %568 = vst [vmem:[#allocation2 + $0x2e0] sm:$0x80] %v567
      %v569 = vld [vmem:[#allocation2 + $0x328] sm:$0x80]
      %v570 = vsel %vm535, 0, %v569
      %571 = vst [vmem:[#allocation2 + $0x328] sm:$0x80] %v570
      %v572 = vld [vmem:[#allocation2 + $0x370] sm:$0x80]
      %v573 = vsel %vm535, 0, %v572
      %574 = vst [vmem:[#allocation2 + $0x370] sm:$0x80] %v573
      %v575 = vld [vmem:[#allocation2 + $0x3b8] sm:$0x80]
      %v576 = vsel %vm535, 0, %v575
      %577 = vst [vmem:[#allocation2 + $0x3b8] sm:$0x80] %v576
      %v578 = vld [vmem:[#allocation2 + $0x400] sm:$0x80]
      %v579 = vsel %vm535, 0, %v578
      %580 = vst [vmem:[#allocation2 + $0x400] sm:$0x80] %v579
      %v581 = vld [vmem:[#allocation2 + $0x448] sm:$0x80]
      %v582 = vsel %vm535, 0, %v581
      %583 = vst [vmem:[#allocation2 + $0x448] sm:$0x80] %v582
      %v584 = vld [vmem:[#allocation3] sm:$0xff]
      %v585 = vld [vmem:[#allocation3 + $0x8] sm:$0xff]
      %v586 = vld [vmem:[#allocation3 + $0x10] sm:$0xff]
      %v587 = vld [vmem:[#allocation3 + $0x18] sm:$0xff]
      %v588 = vld [vmem:[#allocation3 + $0x20] sm:$0xff]
      %v589 = vld [vmem:[#allocation3 + $0x28] sm:$0xff]
      %v590 = vld [vmem:[#allocation3 + $0x30] sm:$0xff]
      %v591 = vld [vmem:[#allocation3 + $0x38] sm:$0xff]
      %v592 = vld [vmem:[#allocation3 + $0x40] sm:$0xff]
      %v593 = vld [vmem:[#allocation3 + $0x48] sm:$0xff]
      %v594 = vld [vmem:[#allocation3 + $0x50] sm:$0xff]
      %v595 = vld [vmem:[#allocation3 + $0x58] sm:$0xff]
      %v596 = vld [vmem:[#allocation3 + $0x60] sm:$0xff]
      %v597 = vld [vmem:[#allocation3 + $0x68] sm:$0xff]
      %v598 = vld [vmem:[#allocation3 + $0x70] sm:$0xff]
      %v600 = vshrl.u32 %v584, 16
      %v602 = vshll.u32 %v584, 16
      %v604 = vrot.slane %v602, 1
      %v605 = vor.u32 %v600, %v604
      %v607 = vshrl.u32 %v585, 16
      %v609 = vshll.u32 %v585, 16
      %v611 = vrot.slane %v609, 1
      %v612 = vor.u32 %v607, %v611
      %v614 = vshrl.u32 %v586, 16
      %v616 = vshll.u32 %v586, 16
      %v618 = vrot.slane %v616, 1
      %v619 = vor.u32 %v614, %v618
      %v621 = vshrl.u32 %v587, 16
      %v623 = vshll.u32 %v587, 16
      %v625 = vrot.slane %v623, 1
      %v626 = vor.u32 %v621, %v625
      %v628 = vshrl.u32 %v588, 16
      %v630 = vshll.u32 %v588, 16
      %v632 = vrot.slane %v630, 1
      %v633 = vor.u32 %v628, %v632
      %v635 = vshrl.u32 %v589, 16
      %v637 = vshll.u32 %v589, 16
      %v639 = vrot.slane %v637, 1
      %v640 = vor.u32 %v635, %v639
      %v642 = vshrl.u32 %v590, 16
      %v644 = vshll.u32 %v590, 16
      %v646 = vrot.slane %v644, 1
      %v647 = vor.u32 %v642, %v646
      %v649 = vshrl.u32 %v591, 16
      %v651 = vshll.u32 %v591, 16
      %v653 = vrot.slane %v651, 1
      %v654 = vor.u32 %v649, %v653
      %v656 = vshrl.u32 %v592, 16
      %v658 = vshll.u32 %v592, 16
      %v660 = vrot.slane %v658, 1
      %v661 = vor.u32 %v656, %v660
      %v663 = vshrl.u32 %v593, 16
      %v665 = vshll.u32 %v593, 16
      %v667 = vrot.slane %v665, 1
      %v668 = vor.u32 %v663, %v667
      %v670 = vshrl.u32 %v594, 16
      %v672 = vshll.u32 %v594, 16
      %v674 = vrot.slane %v672, 1
      %v675 = vor.u32 %v670, %v674
      %v677 = vshrl.u32 %v595, 16
      %v679 = vshll.u32 %v595, 16
      %v681 = vrot.slane %v679, 1
      %v682 = vor.u32 %v677, %v681
      %v684 = vshrl.u32 %v596, 16
      %v686 = vshll.u32 %v596, 16
      %v688 = vrot.slane %v686, 1
      %v689 = vor.u32 %v684, %v688
      %v691 = vshrl.u32 %v597, 16
      %v693 = vshll.u32 %v597, 16
      %v695 = vrot.slane %v693, 1
      %v696 = vor.u32 %v691, %v695
      %v698 = vshrl.u32 %v598, 16
      %v700 = vshll.u32 %v598, 16
      %v702 = vrot.slane %v700, 1
      %v703 = vor.u32 %v698, %v702
      %vm719 = vsmask.f32 7424
      %vm720 = vmand %vm453, %vm719
      %v721 = vld [vmem:[%s452 + $0x10] sm:$0xff]
      %v722 = vsel %vm720, %v605, %v721
      %723 = vst [vmem:[%s452 + $0x10] sm:$0xff] %v722
      %v724 = vld [vmem:[%s452 + $0x58] sm:$0xff]
      %v725 = vsel %vm720, %v612, %v724
      %726 = vst [vmem:[%s452 + $0x58] sm:$0xff] %v725
      %v727 = vld [vmem:[%s452 + $0xa0] sm:$0xff]
      %v728 = vsel %vm720, %v619, %v727
      %729 = vst [vmem:[%s452 + $0xa0] sm:$0xff] %v728
      %v730 = vld [vmem:[%s452 + $0xe8] sm:$0xff]
      %v731 = vsel %vm720, %v626, %v730
      %732 = vst [vmem:[%s452 + $0xe8] sm:$0xff] %v731
      %v733 = vld [vmem:[%s452 + $0x130] sm:$0xff]
      %v734 = vsel %vm720, %v633, %v733
      %735 = vst [vmem:[%s452 + $0x130] sm:$0xff] %v734
      %v736 = vld [vmem:[%s452 + $0x178] sm:$0xff]
      %v737 = vsel %vm720, %v640, %v736
      %738 = vst [vmem:[%s452 + $0x178] sm:$0xff] %v737
      %v739 = vld [vmem:[%s452 + $0x1c0] sm:$0xff]
      %v740 = vsel %vm720, %v647, %v739
      %741 = vst [vmem:[%s452 + $0x1c0] sm:$0xff] %v740
      %v742 = vld [vmem:[%s452 + $0x208] sm:$0xff]
      %v743 = vsel %vm720, %v654, %v742
      %744 = vst [vmem:[%s452 + $0x208] sm:$0xff] %v743
      %v745 = vld [vmem:[%s452 + $0x250] sm:$0xff]
      %v746 = vsel %vm720, %v661, %v745
      %747 = vst [vmem:[%s452 + $0x250] sm:$0xff] %v746
      %v748 = vld [vmem:[%s452 + $0x298] sm:$0xff]
      %v749 = vsel %vm720, %v668, %v748
      %750 = vst [vmem:[%s452 + $0x298] sm:$0xff] %v749
      %v751 = vld [vmem:[%s452 + $0x2e0] sm:$0xff]
      %v752 = vsel %vm720, %v675, %v751
      %753 = vst [vmem:[%s452 + $0x2e0] sm:$0xff] %v752
      %v754 = vld [vmem:[%s452 + $0x328] sm:$0xff]
      %v755 = vsel %vm720, %v682, %v754
      %756 = vst [vmem:[%s452 + $0x328] sm:$0xff] %v755
      %v757 = vld [vmem:[%s452 + $0x370] sm:$0xff]
      %v758 = vsel %vm720, %v689, %v757
      %759 = vst [vmem:[%s452 + $0x370] sm:$0xff] %v758
      %v760 = vld [vmem:[%s452 + $0x3b8] sm:$0xff]
      %v761 = vsel %vm720, %v696, %v760
      %762 = vst [vmem:[%s452 + $0x3b8] sm:$0xff] %v761
      %v763 = vld [vmem:[%s452 + $0x400] sm:$0xff]
      %v764 = vsel %vm720, %v703, %v763
      %765 = vst [vmem:[%s452 + $0x400] sm:$0xff] %v764
      %v766 = vld [vmem:[#allocation2 + $0x18] sm:$0x1]
      %v767 = vsel %vm268, 0, %v766
      %768 = vst [vmem:[#allocation2 + $0x18] sm:$0x1] %v767
      %v769 = vld [vmem:[#allocation2 + $0x60] sm:$0x1]
      %v770 = vsel %vm268, 0, %v769
      %771 = vst [vmem:[#allocation2 + $0x60] sm:$0x1] %v770
      %v772 = vld [vmem:[#allocation2 + $0xa8] sm:$0x1]
      %v773 = vsel %vm268, 0, %v772
      %774 = vst [vmem:[#allocation2 + $0xa8] sm:$0x1] %v773
      %v775 = vld [vmem:[#allocation2 + $0xf0] sm:$0x1]
      %v776 = vsel %vm268, 0, %v775
      %777 = vst [vmem:[#allocation2 + $0xf0] sm:$0x1] %v776
      %v778 = vld [vmem:[#allocation2 + $0x138] sm:$0x1]
      %v779 = vsel %vm268, 0, %v778
      %780 = vst [vmem:[#allocation2 + $0x138] sm:$0x1] %v779
      %v781 = vld [vmem:[#allocation2 + $0x180] sm:$0x1]
      %v782 = vsel %vm268, 0, %v781
      %783 = vst [vmem:[#allocation2 + $0x180] sm:$0x1] %v782
      %v784 = vld [vmem:[#allocation2 + $0x1c8] sm:$0x1]
      %v785 = vsel %vm268, 0, %v784
      %786 = vst [vmem:[#allocation2 + $0x1c8] sm:$0x1] %v785
      %v787 = vld [vmem:[#allocation2 + $0x210] sm:$0x1]
      %v788 = vsel %vm268, 0, %v787
      %789 = vst [vmem:[#allocation2 + $0x210] sm:$0x1] %v788
      %v790 = vld [vmem:[#allocation2 + $0x258] sm:$0x1]
      %v791 = vsel %vm268, 0, %v790
      %792 = vst [vmem:[#allocation2 + $0x258] sm:$0x1] %v791
      %v793 = vld [vmem:[#allocation2 + $0x2a0] sm:$0x1]
      %v794 = vsel %vm268, 0, %v793
      %795 = vst [vmem:[#allocation2 + $0x2a0] sm:$0x1] %v794
      %v796 = vld [vmem:[#allocation2 + $0x2e8] sm:$0x1]
      %v797 = vsel %vm268, 0, %v796
      %798 = vst [vmem:[#allocation2 + $0x2e8] sm:$0x1] %v797
      %v799 = vld [vmem:[#allocation2 + $0x330] sm:$0x1]
      %v800 = vsel %vm268, 0, %v799
      %801 = vst [vmem:[#allocation2 + $0x330] sm:$0x1] %v800
      %v802 = vld [vmem:[#allocation2 + $0x378] sm:$0x1]
      %v803 = vsel %vm268, 0, %v802
      %804 = vst [vmem:[#allocation2 + $0x378] sm:$0x1] %v803
      %v805 = vld [vmem:[#allocation2 + $0x3c0] sm:$0x1]
      %v806 = vsel %vm268, 0, %v805
      %807 = vst [vmem:[#allocation2 + $0x3c0] sm:$0x1] %v806
      %v808 = vld [vmem:[#allocation2 + $0x408] sm:$0x1]
      %v809 = vsel %vm268, 0, %v808
      %810 = vst [vmem:[#allocation2 + $0x408] sm:$0x1] %v809
      %v811 = vld [vmem:[#allocation2 + $0x450] sm:$0x1]
      %v812 = vsel %vm268, 0, %v811
      %813 = vst [vmem:[#allocation2 + $0x450] sm:$0x1] %v812
      %v814 = vld [vmem:[#allocation3] sm:$0xff]
      %v815 = vld [vmem:[#allocation3 + $0x8] sm:$0xff]
      %v816 = vld [vmem:[#allocation3 + $0x10] sm:$0xff]
      %v817 = vld [vmem:[#allocation3 + $0x18] sm:$0xff]
      %v818 = vld [vmem:[#allocation3 + $0x20] sm:$0xff]
      %v819 = vld [vmem:[#allocation3 + $0x28] sm:$0xff]
      %v820 = vld [vmem:[#allocation3 + $0x30] sm:$0xff]
      %v821 = vld [vmem:[#allocation3 + $0x38] sm:$0xff]
      %v822 = vld [vmem:[#allocation3 + $0x40] sm:$0xff]
      %v823 = vld [vmem:[#allocation3 + $0x48] sm:$0xff]
      %v824 = vld [vmem:[#allocation3 + $0x50] sm:$0xff]
      %v825 = vld [vmem:[#allocation3 + $0x58] sm:$0xff]
      %v826 = vld [vmem:[#allocation3 + $0x60] sm:$0xff]
      %v827 = vld [vmem:[#allocation3 + $0x68] sm:$0xff]
      %v828 = vld [vmem:[#allocation3 + $0x70] sm:$0xff]
      %v829 = vld [vmem:[#allocation3 + $0x78] sm:$0xff]
      %v831 = vshrl.u32 %v814, 16
      %v833 = vrot.slane %v831, 7
      %v834 = vshll.u32 %v814, 16
      %v836 = vor.u32 %v833, %v834
      %v838 = vshrl.u32 %v815, 16
      %v840 = vrot.slane %v838, 7
      %v841 = vshll.u32 %v815, 16
      %v843 = vor.u32 %v840, %v841
      %v845 = vshrl.u32 %v816, 16
      %v847 = vrot.slane %v845, 7
      %v848 = vshll.u32 %v816, 16
      %v850 = vor.u32 %v847, %v848
      %v852 = vshrl.u32 %v817, 16
      %v854 = vrot.slane %v852, 7
      %v855 = vshll.u32 %v817, 16
      %v857 = vor.u32 %v854, %v855
      %v859 = vshrl.u32 %v818, 16
      %v861 = vrot.slane %v859, 7
      %v862 = vshll.u32 %v818, 16
      %v864 = vor.u32 %v861, %v862
      %v866 = vshrl.u32 %v819, 16
      %v868 = vrot.slane %v866, 7
      %v869 = vshll.u32 %v819, 16
      %v871 = vor.u32 %v868, %v869
      %v873 = vshrl.u32 %v820, 16
      %v875 = vrot.slane %v873, 7
      %v876 = vshll.u32 %v820, 16
      %v878 = vor.u32 %v875, %v876
      %v880 = vshrl.u32 %v821, 16
      %v882 = vrot.slane %v880, 7
      %v883 = vshll.u32 %v821, 16
      %v885 = vor.u32 %v882, %v883
      %v887 = vshrl.u32 %v822, 16
      %v889 = vrot.slane %v887, 7
      %v890 = vshll.u32 %v822, 16
      %v892 = vor.u32 %v889, %v890
      %v894 = vshrl.u32 %v823, 16
      %v896 = vrot.slane %v894, 7
      %v897 = vshll.u32 %v823, 16
      %v899 = vor.u32 %v896, %v897
      %v901 = vshrl.u32 %v824, 16
      %v903 = vrot.slane %v901, 7
      %v904 = vshll.u32 %v824, 16
      %v906 = vor.u32 %v903, %v904
      %v908 = vshrl.u32 %v825, 16
      %v910 = vrot.slane %v908, 7
      %v911 = vshll.u32 %v825, 16
      %v913 = vor.u32 %v910, %v911
      %v915 = vshrl.u32 %v826, 16
      %v917 = vrot.slane %v915, 7
      %v918 = vshll.u32 %v826, 16
      %v920 = vor.u32 %v917, %v918
      %v922 = vshrl.u32 %v827, 16
      %v924 = vrot.slane %v922, 7
      %v925 = vshll.u32 %v827, 16
      %v927 = vor.u32 %v924, %v925
      %v929 = vshrl.u32 %v828, 16
      %v931 = vrot.slane %v929, 7
      %v932 = vshll.u32 %v828, 16
      %v934 = vor.u32 %v931, %v932
      %v936 = vshrl.u32 %v829, 16
      %v938 = vrot.slane %v936, 7
      %v939 = vshll.u32 %v829, 16
      %v941 = vor.u32 %v938, %v939
      %v958 = vld [vmem:[#allocation2 + $0x18] sm:$0xff]
      %v959 = vsel %vm455, %v836, %v958
      %960 = vst [vmem:[#allocation2 + $0x18] sm:$0xff] %v959
      %v961 = vld [vmem:[#allocation2 + $0x60] sm:$0xff]
      %v962 = vsel %vm455, %v843, %v961
      %963 = vst [vmem:[#allocation2 + $0x60] sm:$0xff] %v962
      %v964 = vld [vmem:[#allocation2 + $0xa8] sm:$0xff]
      %v965 = vsel %vm455, %v850, %v964
      %966 = vst [vmem:[#allocation2 + $0xa8] sm:$0xff] %v965
      %v967 = vld [vmem:[#allocation2 + $0xf0] sm:$0xff]
      %v968 = vsel %vm455, %v857, %v967
      %969 = vst [vmem:[#allocation2 + $0xf0] sm:$0xff] %v968
      %v970 = vld [vmem:[#allocation2 + $0x138] sm:$0xff]
      %v971 = vsel %vm455, %v864, %v970
      %972 = vst [vmem:[#allocation2 + $0x138] sm:$0xff] %v971
      %v973 = vld [vmem:[#allocation2 + $0x180] sm:$0xff]
      %v974 = vsel %vm455, %v871, %v973
      %975 = vst [vmem:[#allocation2 + $0x180] sm:$0xff] %v974
      %v976 = vld [vmem:[#allocation2 + $0x1c8] sm:$0xff]
      %v977 = vsel %vm455, %v878, %v976
      %978 = vst [vmem:[#allocation2 + $0x1c8] sm:$0xff] %v977
      %v979 = vld [vmem:[#allocation2 + $0x210] sm:$0xff]
      %v980 = vsel %vm455, %v885, %v979
      %981 = vst [vmem:[#allocation2 + $0x210] sm:$0xff] %v980
      %v982 = vld [vmem:[#allocation2 + $0x258] sm:$0xff]
      %v983 = vsel %vm455, %v892, %v982
      %984 = vst [vmem:[#allocation2 + $0x258] sm:$0xff] %v983
      %v985 = vld [vmem:[#allocation2 + $0x2a0] sm:$0xff]
      %v986 = vsel %vm455, %v899, %v985
      %987 = vst [vmem:[#allocation2 + $0x2a0] sm:$0xff] %v986
      %v988 = vld [vmem:[#allocation2 + $0x2e8] sm:$0xff]
      %v989 = vsel %vm455, %v906, %v988
      %990 = vst [vmem:[#allocation2 + $0x2e8] sm:$0xff] %v989
      %v991 = vld [vmem:[#allocation2 + $0x330] sm:$0xff]
      %v992 = vsel %vm455, %v913, %v991
      %993 = vst [vmem:[#allocation2 + $0x330] sm:$0xff] %v992
      %v994 = vld [vmem:[#allocation2 + $0x378] sm:$0xff]
      %v995 = vsel %vm455, %v920, %v994
      %996 = vst [vmem:[#allocation2 + $0x378] sm:$0xff] %v995
      %v997 = vld [vmem:[#allocation2 + $0x3c0] sm:$0xff]
      %v998 = vsel %vm455, %v927, %v997
      %999 = vst [vmem:[#allocation2 + $0x3c0] sm:$0xff] %v998
      %v1000 = vld [vmem:[#allocation2 + $0x408] sm:$0xff]
      %v1001 = vsel %vm455, %v934, %v1000
      %1002 = vst [vmem:[#allocation2 + $0x408] sm:$0xff] %v1001
      %v1003 = vld [vmem:[#allocation2 + $0x450] sm:$0xff]
      %v1004 = vsel %vm455, %v941, %v1003
      %1005 = vst [vmem:[#allocation2 + $0x450] sm:$0xff] %v1004
      %v1006 = vld [vmem:[#allocation3] sm:$0xff]
      %v1007 = vld [vmem:[#allocation3 + $0x8] sm:$0xff]
      %v1008 = vld [vmem:[#allocation3 + $0x10] sm:$0xff]
      %v1009 = vld [vmem:[#allocation3 + $0x18] sm:$0xff]
      %v1010 = vld [vmem:[#allocation3 + $0x20] sm:$0xff]
      %v1011 = vld [vmem:[#allocation3 + $0x28] sm:$0xff]
      %v1012 = vld [vmem:[#allocation3 + $0x30] sm:$0xff]
      %v1013 = vld [vmem:[#allocation3 + $0x38] sm:$0xff]
      %v1014 = vld [vmem:[#allocation3 + $0x40] sm:$0xff]
      %v1015 = vld [vmem:[#allocation3 + $0x48] sm:$0xff]
      %v1016 = vld [vmem:[#allocation3 + $0x50] sm:$0xff]
      %v1017 = vld [vmem:[#allocation3 + $0x58] sm:$0xff]
      %v1018 = vld [vmem:[#allocation3 + $0x60] sm:$0xff]
      %v1019 = vld [vmem:[#allocation3 + $0x68] sm:$0xff]
      %v1020 = vld [vmem:[#allocation3 + $0x70] sm:$0xff]
      %v1021 = vld [vmem:[#allocation3 + $0x78] sm:$0xff]
      %1022 = vst [vmem:[#allocation2 + $0x20] sm:$0xff] %v1006
      %1023 = vst [vmem:[#allocation2 + $0x68] sm:$0xff] %v1007
      %1024 = vst [vmem:[#allocation2 + $0xb0] sm:$0xff] %v1008
      %1025 = vst [vmem:[#allocation2 + $0xf8] sm:$0xff] %v1009
      %1026 = vst [vmem:[#allocation2 + $0x140] sm:$0xff] %v1010
      %1027 = vst [vmem:[#allocation2 + $0x188] sm:$0xff] %v1011
      %1028 = vst [vmem:[#allocation2 + $0x1d0] sm:$0xff] %v1012
      %1029 = vst [vmem:[#allocation2 + $0x218] sm:$0xff] %v1013
      %1030 = vst [vmem:[#allocation2 + $0x260] sm:$0xff] %v1014
      %1031 = vst [vmem:[#allocation2 + $0x2a8] sm:$0xff] %v1015
      %1032 = vst [vmem:[#allocation2 + $0x2f0] sm:$0xff] %v1016
      %1033 = vst [vmem:[#allocation2 + $0x338] sm:$0xff] %v1017
      %1034 = vst [vmem:[#allocation2 + $0x380] sm:$0xff] %v1018
      %1035 = vst [vmem:[#allocation2 + $0x3c8] sm:$0xff] %v1019
      %1036 = vst [vmem:[#allocation2 + $0x410] sm:$0xff] %v1020
      %1037 = vst [vmem:[#allocation2 + $0x458] sm:$0xff] %v1021
      %v1038 = vld [vmem:[#allocation2 + $0x28] sm:$0x80]
      %v1039 = vsel %vm535, 0, %v1038
      %1040 = vst [vmem:[#allocation2 + $0x28] sm:$0x80] %v1039
      %v1041 = vld [vmem:[#allocation2 + $0x70] sm:$0x80]
      %v1042 = vsel %vm535, 0, %v1041
      %1043 = vst [vmem:[#allocation2 + $0x70] sm:$0x80] %v1042
      %v1044 = vld [vmem:[#allocation2 + $0xb8] sm:$0x80]
      %v1045 = vsel %vm535, 0, %v1044
      %1046 = vst [vmem:[#allocation2 + $0xb8] sm:$0x80] %v1045
      %v1047 = vld [vmem:[#allocation2 + $0x100] sm:$0x80]
      %v1048 = vsel %vm535, 0, %v1047
      %1049 = vst [vmem:[#allocation2 + $0x100] sm:$0x80] %v1048
      %v1050 = vld [vmem:[#allocation2 + $0x148] sm:$0x80]
      %v1051 = vsel %vm535, 0, %v1050
      %1052 = vst [vmem:[#allocation2 + $0x148] sm:$0x80] %v1051
      %v1053 = vld [vmem:[#allocation2 + $0x190] sm:$0x80]
      %v1054 = vsel %vm535, 0, %v1053
      %1055 = vst [vmem:[#allocation2 + $0x190] sm:$0x80] %v1054
      %v1056 = vld [vmem:[#allocation2 + $0x1d8] sm:$0x80]
      %v1057 = vsel %vm535, 0, %v1056
      %1058 = vst [vmem:[#allocation2 + $0x1d8] sm:$0x80] %v1057
      %v1059 = vld [vmem:[#allocation2 + $0x220] sm:$0x80]
      %v1060 = vsel %vm535, 0, %v1059
      %1061 = vst [vmem:[#allocation2 + $0x220] sm:$0x80] %v1060
      %v1062 = vld [vmem:[#allocation2 + $0x268] sm:$0x80]
      %v1063 = vsel %vm535, 0, %v1062
      %1064 = vst [vmem:[#allocation2 + $0x268] sm:$0x80] %v1063
      %v1065 = vld [vmem:[#allocation2 + $0x2b0] sm:$0x80]
      %v1066 = vsel %vm535, 0, %v1065
      %1067 = vst [vmem:[#allocation2 + $0x2b0] sm:$0x80] %v1066
      %v1068 = vld [vmem:[#allocation2 + $0x2f8] sm:$0x80]
      %v1069 = vsel %vm535, 0, %v1068
      %1070 = vst [vmem:[#allocation2 + $0x2f8] sm:$0x80] %v1069
      %v1071 = vld [vmem:[#allocation2 + $0x340] sm:$0x80]
      %v1072 = vsel %vm535, 0, %v1071
      %1073 = vst [vmem:[#allocation2 + $0x340] sm:$0x80] %v1072
      %v1074 = vld [vmem:[#allocation2 + $0x388] sm:$0x80]
      %v1075 = vsel %vm535, 0, %v1074
      %1076 = vst [vmem:[#allocation2 + $0x388] sm:$0x80] %v1075
      %v1077 = vld [vmem:[#allocation2 + $0x3d0] sm:$0x80]
      %v1078 = vsel %vm535, 0, %v1077
      %1079 = vst [vmem:[#allocation2 + $0x3d0] sm:$0x80] %v1078
      %v1080 = vld [vmem:[#allocation2 + $0x418] sm:$0x80]
      %v1081 = vsel %vm535, 0, %v1080
      %1082 = vst [vmem:[#allocation2 + $0x418] sm:$0x80] %v1081
      %v1083 = vld [vmem:[#allocation2 + $0x460] sm:$0x80]
      %v1084 = vsel %vm535, 0, %v1083
      %1085 = vst [vmem:[#allocation2 + $0x460] sm:$0x80] %v1084
      %v1086 = vld [vmem:[#allocation3] sm:$0xff]
      %v1087 = vld [vmem:[#allocation3 + $0x8] sm:$0xff]
      %v1088 = vld [vmem:[#allocation3 + $0x10] sm:$0xff]
      %v1089 = vld [vmem:[#allocation3 + $0x18] sm:$0xff]
      %v1090 = vld [vmem:[#allocation3 + $0x20] sm:$0xff]
      %v1091 = vld [vmem:[#allocation3 + $0x28] sm:$0xff]
      %v1092 = vld [vmem:[#allocation3 + $0x30] sm:$0xff]
      %v1093 = vld [vmem:[#allocation3 + $0x38] sm:$0xff]
      %v1094 = vld [vmem:[#allocation3 + $0x40] sm:$0xff]
      %v1095 = vld [vmem:[#allocation3 + $0x48] sm:$0xff]
      %v1096 = vld [vmem:[#allocation3 + $0x50] sm:$0xff]
      %v1097 = vld [vmem:[#allocation3 + $0x58] sm:$0xff]
      %v1098 = vld [vmem:[#allocation3 + $0x60] sm:$0xff]
      %v1099 = vld [vmem:[#allocation3 + $0x68] sm:$0xff]
      %v1100 = vld [vmem:[#allocation3 + $0x70] sm:$0xff]
      %v1101 = vld [vmem:[#allocation3 + $0x78] sm:$0xff]
      %v1103 = vshrl.u32 %v1086, 16
      %v1105 = vshll.u32 %v1086, 16
      %v1107 = vrot.slane %v1105, 1
      %v1108 = vor.u32 %v1103, %v1107
      %v1110 = vshrl.u32 %v1087, 16
      %v1112 = vshll.u32 %v1087, 16
      %v1114 = vrot.slane %v1112, 1
      %v1115 = vor.u32 %v1110, %v1114
      %v1117 = vshrl.u32 %v1088, 16
      %v1119 = vshll.u32 %v1088, 16
      %v1121 = vrot.slane %v1119, 1
      %v1122 = vor.u32 %v1117, %v1121
      %v1124 = vshrl.u32 %v1089, 16
      %v1126 = vshll.u32 %v1089, 16
      %v1128 = vrot.slane %v1126, 1
      %v1129 = vor.u32 %v1124, %v1128
      %v1131 = vshrl.u32 %v1090, 16
      %v1133 = vshll.u32 %v1090, 16
      %v1135 = vrot.slane %v1133, 1
      %v1136 = vor.u32 %v1131, %v1135
      %v1138 = vshrl.u32 %v1091, 16
      %v1140 = vshll.u32 %v1091, 16
      %v1142 = vrot.slane %v1140, 1
      %v1143 = vor.u32 %v1138, %v1142
      %v1145 = vshrl.u32 %v1092, 16
      %v1147 = vshll.u32 %v1092, 16
      %v1149 = vrot.slane %v1147, 1
      %v1150 = vor.u32 %v1145, %v1149
      %v1152 = vshrl.u32 %v1093, 16
      %v1154 = vshll.u32 %v1093, 16
      %v1156 = vrot.slane %v1154, 1
      %v1157 = vor.u32 %v1152, %v1156
      %v1159 = vshrl.u32 %v1094, 16
      %v1161 = vshll.u32 %v1094, 16
      %v1163 = vrot.slane %v1161, 1
      %v1164 = vor.u32 %v1159, %v1163
      %v1166 = vshrl.u32 %v1095, 16
      %v1168 = vshll.u32 %v1095, 16
      %v1170 = vrot.slane %v1168, 1
      %v1171 = vor.u32 %v1166, %v1170
      %v1173 = vshrl.u32 %v1096, 16
      %v1175 = vshll.u32 %v1096, 16
      %v1177 = vrot.slane %v1175, 1
      %v1178 = vor.u32 %v1173, %v1177
      %v1180 = vshrl.u32 %v1097, 16
      %v1182 = vshll.u32 %v1097, 16
      %v1184 = vrot.slane %v1182, 1
      %v1185 = vor.u32 %v1180, %v1184
      %v1187 = vshrl.u32 %v1098, 16
      %v1189 = vshll.u32 %v1098, 16
      %v1191 = vrot.slane %v1189, 1
      %v1192 = vor.u32 %v1187, %v1191
      %v1194 = vshrl.u32 %v1099, 16
      %v1196 = vshll.u32 %v1099, 16
      %v1198 = vrot.slane %v1196, 1
      %v1199 = vor.u32 %v1194, %v1198
      %v1201 = vshrl.u32 %v1100, 16
      %v1203 = vshll.u32 %v1100, 16
      %v1205 = vrot.slane %v1203, 1
      %v1206 = vor.u32 %v1201, %v1205
      %v1208 = vshrl.u32 %v1101, 16
      %v1210 = vshll.u32 %v1101, 16
      %v1212 = vrot.slane %v1210, 1
      %v1213 = vor.u32 %v1208, %v1212
      %v1230 = vld [vmem:[#allocation2 + $0x28] sm:$0xff]
      %v1231 = vsel %vm720, %v1108, %v1230
      %1232 = vst [vmem:[#allocation2 + $0x28] sm:$0xff] %v1231
      %v1233 = vld [vmem:[#allocation2 + $0x70] sm:$0xff]
      %v1234 = vsel %vm720, %v1115, %v1233
      %1235 = vst [vmem:[#allocation2 + $0x70] sm:$0xff] %v1234
      %v1236 = vld [vmem:[#allocation2 + $0xb8] sm:$0xff]
      %v1237 = vsel %vm720, %v1122, %v1236
      %1238 = vst [vmem:[#allocation2 + $0xb8] sm:$0xff] %v1237
      %v1239 = vld [vmem:[#allocation2 + $0x100] sm:$0xff]
      %v1240 = vsel %vm720, %v1129, %v1239
      %1241 = vst [vmem:[#allocation2 + $0x100] sm:$0xff] %v1240
      %v1242 = vld [vmem:[#allocation2 + $0x148] sm:$0xff]
      %v1243 = vsel %vm720, %v1136, %v1242
      %1244 = vst [vmem:[#allocation2 + $0x148] sm:$0xff] %v1243
      %v1245 = vld [vmem:[#allocation2 + $0x190] sm:$0xff]
      %v1246 = vsel %vm720, %v1143, %v1245
      %1247 = vst [vmem:[#allocation2 + $0x190] sm:$0xff] %v1246
      %v1248 = vld [vmem:[#allocation2 + $0x1d8] sm:$0xff]
      %v1249 = vsel %vm720, %v1150, %v1248
      %1250 = vst [vmem:[#allocation2 + $0x1d8] sm:$0xff] %v1249
      %v1251 = vld [vmem:[#allocation2 + $0x220] sm:$0xff]
      %v1252 = vsel %vm720, %v1157, %v1251
      %1253 = vst [vmem:[#allocation2 + $0x220] sm:$0xff] %v1252
      %v1254 = vld [vmem:[#allocation2 + $0x268] sm:$0xff]
      %v1255 = vsel %vm720, %v1164, %v1254
      %1256 = vst [vmem:[#allocation2 + $0x268] sm:$0xff] %v1255
      %v1257 = vld [vmem:[#allocation2 + $0x2b0] sm:$0xff]
      %v1258 = vsel %vm720, %v1171, %v1257
      %1259 = vst [vmem:[#allocation2 + $0x2b0] sm:$0xff] %v1258
      %v1260 = vld [vmem:[#allocation2 + $0x2f8] sm:$0xff]
      %v1261 = vsel %vm720, %v1178, %v1260
      %1262 = vst [vmem:[#allocation2 + $0x2f8] sm:$0xff] %v1261
      %v1263 = vld [vmem:[#allocation2 + $0x340] sm:$0xff]
      %v1264 = vsel %vm720, %v1185, %v1263
      %1265 = vst [vmem:[#allocation2 + $0x340] sm:$0xff] %v1264
      %v1266 = vld [vmem:[#allocation2 + $0x388] sm:$0xff]
      %v1267 = vsel %vm720, %v1192, %v1266
      %1268 = vst [vmem:[#allocation2 + $0x388] sm:$0xff] %v1267
      %v1269 = vld [vmem:[#allocation2 + $0x3d0] sm:$0xff]
      %v1270 = vsel %vm720, %v1199, %v1269
      %1271 = vst [vmem:[#allocation2 + $0x3d0] sm:$0xff] %v1270
      %v1272 = vld [vmem:[#allocation2 + $0x418] sm:$0xff]
      %v1273 = vsel %vm720, %v1206, %v1272
      %1274 = vst [vmem:[#allocation2 + $0x418] sm:$0xff] %v1273
      %v1275 = vld [vmem:[#allocation2 + $0x460] sm:$0xff]
      %v1276 = vsel %vm720, %v1213, %v1275
      %1277 = vst [vmem:[#allocation2 + $0x460] sm:$0xff] %v1276
      %s1278 = scalar_lea.vmem [#allocation2], 1080
      %1279 = vst [vmem:[%s1278 + $0x30] sm:$0xff] 0
      %v1280 = vld [vmem:[#allocation2 + $0x30] sm:$0x1]
      %v1281 = vsel %vm268, 0, %v1280
      %1282 = vst [vmem:[#allocation2 + $0x30] sm:$0x1] %v1281
      %v1283 = vld [vmem:[#allocation2 + $0x78] sm:$0x1]
      %v1284 = vsel %vm268, 0, %v1283
      %1285 = vst [vmem:[#allocation2 + $0x78] sm:$0x1] %v1284
      %v1286 = vld [vmem:[#allocation2 + $0xc0] sm:$0x1]
      %v1287 = vsel %vm268, 0, %v1286
      %1288 = vst [vmem:[#allocation2 + $0xc0] sm:$0x1] %v1287
      %v1289 = vld [vmem:[#allocation2 + $0x108] sm:$0x1]
      %v1290 = vsel %vm268, 0, %v1289
      %1291 = vst [vmem:[#allocation2 + $0x108] sm:$0x1] %v1290
      %v1292 = vld [vmem:[#allocation2 + $0x150] sm:$0x1]
      %v1293 = vsel %vm268, 0, %v1292
      %1294 = vst [vmem:[#allocation2 + $0x150] sm:$0x1] %v1293
      %v1295 = vld [vmem:[#allocation2 + $0x198] sm:$0x1]
      %v1296 = vsel %vm268, 0, %v1295
      %1297 = vst [vmem:[#allocation2 + $0x198] sm:$0x1] %v1296
      %v1298 = vld [vmem:[#allocation2 + $0x1e0] sm:$0x1]
      %v1299 = vsel %vm268, 0, %v1298
      %1300 = vst [vmem:[#allocation2 + $0x1e0] sm:$0x1] %v1299
      %v1301 = vld [vmem:[#allocation2 + $0x228] sm:$0x1]
      %v1302 = vsel %vm268, 0, %v1301
      %1303 = vst [vmem:[#allocation2 + $0x228] sm:$0x1] %v1302
      %v1304 = vld [vmem:[#allocation2 + $0x270] sm:$0x1]
      %v1305 = vsel %vm268, 0, %v1304
      %1306 = vst [vmem:[#allocation2 + $0x270] sm:$0x1] %v1305
      %v1307 = vld [vmem:[#allocation2 + $0x2b8] sm:$0x1]
      %v1308 = vsel %vm268, 0, %v1307
      %1309 = vst [vmem:[#allocation2 + $0x2b8] sm:$0x1] %v1308
      %v1310 = vld [vmem:[#allocation2 + $0x300] sm:$0x1]
      %v1311 = vsel %vm268, 0, %v1310
      %1312 = vst [vmem:[#allocation2 + $0x300] sm:$0x1] %v1311
      %v1313 = vld [vmem:[#allocation2 + $0x348] sm:$0x1]
      %v1314 = vsel %vm268, 0, %v1313
      %1315 = vst [vmem:[#allocation2 + $0x348] sm:$0x1] %v1314
      %v1316 = vld [vmem:[#allocation2 + $0x390] sm:$0x1]
      %v1317 = vsel %vm268, 0, %v1316
      %1318 = vst [vmem:[#allocation2 + $0x390] sm:$0x1] %v1317
      %v1319 = vld [vmem:[#allocation2 + $0x3d8] sm:$0x1]
      %v1320 = vsel %vm268, 0, %v1319
      %1321 = vst [vmem:[#allocation2 + $0x3d8] sm:$0x1] %v1320
      %v1322 = vld [vmem:[#allocation2 + $0x420] sm:$0x1]
      %v1323 = vsel %vm268, 0, %v1322
      %1324 = vst [vmem:[#allocation2 + $0x420] sm:$0x1] %v1323
      %v1325 = vld [vmem:[#allocation2 + $0x468] sm:$0x1]
      %v1326 = vsel %vm268, 0, %v1325
      %1327 = vst [vmem:[#allocation2 + $0x468] sm:$0x1] %v1326
      %s1328 = scalar_lea.vmem [#allocation3], 8
      %v1329 = vld [vmem:[%s1328] sm:$0xff]
      %v1330 = vld [vmem:[%s1328 + $0x8] sm:$0xff]
      %v1331 = vld [vmem:[%s1328 + $0x10] sm:$0xff]
      %v1332 = vld [vmem:[%s1328 + $0x18] sm:$0xff]
      %v1333 = vld [vmem:[%s1328 + $0x20] sm:$0xff]
      %v1334 = vld [vmem:[%s1328 + $0x28] sm:$0xff]
      %v1335 = vld [vmem:[%s1328 + $0x30] sm:$0xff]
      %v1336 = vld [vmem:[%s1328 + $0x38] sm:$0xff]
      %v1337 = vld [vmem:[%s1328 + $0x40] sm:$0xff]
      %v1338 = vld [vmem:[%s1328 + $0x48] sm:$0xff]
      %v1339 = vld [vmem:[%s1328 + $0x50] sm:$0xff]
      %v1340 = vld [vmem:[%s1328 + $0x58] sm:$0xff]
      %v1341 = vld [vmem:[%s1328 + $0x60] sm:$0xff]
      %v1342 = vld [vmem:[%s1328 + $0x68] sm:$0xff]
      %v1343 = vld [vmem:[%s1328 + $0x70] sm:$0xff]
      %v1345 = vshrl.u32 %v1329, 16
      %v1347 = vrot.slane %v1345, 7
      %v1348 = vshll.u32 %v1329, 16
      %v1350 = vor.u32 %v1347, %v1348
      %v1352 = vshrl.u32 %v1330, 16
      %v1354 = vrot.slane %v1352, 7
      %v1355 = vshll.u32 %v1330, 16
      %v1357 = vor.u32 %v1354, %v1355
      %v1359 = vshrl.u32 %v1331, 16
      %v1361 = vrot.slane %v1359, 7
      %v1362 = vshll.u32 %v1331, 16
      %v1364 = vor.u32 %v1361, %v1362
      %v1366 = vshrl.u32 %v1332, 16
      %v1368 = vrot.slane %v1366, 7
      %v1369 = vshll.u32 %v1332, 16
      %v1371 = vor.u32 %v1368, %v1369
      %v1373 = vshrl.u32 %v1333, 16
      %v1375 = vrot.slane %v1373, 7
      %v1376 = vshll.u32 %v1333, 16
      %v1378 = vor.u32 %v1375, %v1376
      %v1380 = vshrl.u32 %v1334, 16
      %v1382 = vrot.slane %v1380, 7
      %v1383 = vshll.u32 %v1334, 16
      %v1385 = vor.u32 %v1382, %v1383
      %v1387 = vshrl.u32 %v1335, 16
      %v1389 = vrot.slane %v1387, 7
      %v1390 = vshll.u32 %v1335, 16
      %v1392 = vor.u32 %v1389, %v1390
      %v1394 = vshrl.u32 %v1336, 16
      %v1396 = vrot.slane %v1394, 7
      %v1397 = vshll.u32 %v1336, 16
      %v1399 = vor.u32 %v1396, %v1397
      %v1401 = vshrl.u32 %v1337, 16
      %v1403 = vrot.slane %v1401, 7
      %v1404 = vshll.u32 %v1337, 16
      %v1406 = vor.u32 %v1403, %v1404
      %v1408 = vshrl.u32 %v1338, 16
      %v1410 = vrot.slane %v1408, 7
      %v1411 = vshll.u32 %v1338, 16
      %v1413 = vor.u32 %v1410, %v1411
      %v1415 = vshrl.u32 %v1339, 16
      %v1417 = vrot.slane %v1415, 7
      %v1418 = vshll.u32 %v1339, 16
      %v1420 = vor.u32 %v1417, %v1418
      %v1422 = vshrl.u32 %v1340, 16
      %v1424 = vrot.slane %v1422, 7
      %v1425 = vshll.u32 %v1340, 16
      %v1427 = vor.u32 %v1424, %v1425
      %v1429 = vshrl.u32 %v1341, 16
      %v1431 = vrot.slane %v1429, 7
      %v1432 = vshll.u32 %v1341, 16
      %v1434 = vor.u32 %v1431, %v1432
      %v1436 = vshrl.u32 %v1342, 16
      %v1438 = vrot.slane %v1436, 7
      %v1439 = vshll.u32 %v1342, 16
      %v1441 = vor.u32 %v1438, %v1439
      %v1443 = vshrl.u32 %v1343, 16
      %v1445 = vrot.slane %v1443, 7
      %v1446 = vshll.u32 %v1343, 16
      %v1448 = vor.u32 %v1445, %v1446
      %v1464 = vld [vmem:[#allocation2 + $0x30] sm:$0xff]
      %v1465 = vsel %vm455, %v1350, %v1464
      %1466 = vst [vmem:[#allocation2 + $0x30] sm:$0xff] %v1465
      %v1467 = vld [vmem:[#allocation2 + $0x78] sm:$0xff]
      %v1468 = vsel %vm455, %v1357, %v1467
      %1469 = vst [vmem:[#allocation2 + $0x78] sm:$0xff] %v1468
      %v1470 = vld [vmem:[#allocation2 + $0xc0] sm:$0xff]
      %v1471 = vsel %vm455, %v1364, %v1470
      %1472 = vst [vmem:[#allocation2 + $0xc0] sm:$0xff] %v1471
      %v1473 = vld [vmem:[#allocation2 + $0x108] sm:$0xff]
      %v1474 = vsel %vm455, %v1371, %v1473
      %1475 = vst [vmem:[#allocation2 + $0x108] sm:$0xff] %v1474
      %v1476 = vld [vmem:[#allocation2 + $0x150] sm:$0xff]
      %v1477 = vsel %vm455, %v1378, %v1476
      %1478 = vst [vmem:[#allocation2 + $0x150] sm:$0xff] %v1477
      %v1479 = vld [vmem:[#allocation2 + $0x198] sm:$0xff]
      %v1480 = vsel %vm455, %v1385, %v1479
      %1481 = vst [vmem:[#allocation2 + $0x198] sm:$0xff] %v1480
      %v1482 = vld [vmem:[#allocation2 + $0x1e0] sm:$0xff]
      %v1483 = vsel %vm455, %v1392, %v1482
      %1484 = vst [vmem:[#allocation2 + $0x1e0] sm:$0xff] %v1483
      %v1485 = vld [vmem:[#allocation2 + $0x228] sm:$0xff]
      %v1486 = vsel %vm455, %v1399, %v1485
      %1487 = vst [vmem:[#allocation2 + $0x228] sm:$0xff] %v1486
      %v1488 = vld [vmem:[#allocation2 + $0x270] sm:$0xff]
      %v1489 = vsel %vm455, %v1406, %v1488
      %1490 = vst [vmem:[#allocation2 + $0x270] sm:$0xff] %v1489
      %v1491 = vld [vmem:[#allocation2 + $0x2b8] sm:$0xff]
      %v1492 = vsel %vm455, %v1413, %v1491
      %1493 = vst [vmem:[#allocation2 + $0x2b8] sm:$0xff] %v1492
      %v1494 = vld [vmem:[#allocation2 + $0x300] sm:$0xff]
      %v1495 = vsel %vm455, %v1420, %v1494
      %1496 = vst [vmem:[#allocation2 + $0x300] sm:$0xff] %v1495
      %v1497 = vld [vmem:[#allocation2 + $0x348] sm:$0xff]
      %v1498 = vsel %vm455, %v1427, %v1497
      %1499 = vst [vmem:[#allocation2 + $0x348] sm:$0xff] %v1498
      %v1500 = vld [vmem:[#allocation2 + $0x390] sm:$0xff]
      %v1501 = vsel %vm455, %v1434, %v1500
      %1502 = vst [vmem:[#allocation2 + $0x390] sm:$0xff] %v1501
      %v1503 = vld [vmem:[#allocation2 + $0x3d8] sm:$0xff]
      %v1504 = vsel %vm455, %v1441, %v1503
      %1505 = vst [vmem:[#allocation2 + $0x3d8] sm:$0xff] %v1504
      %v1506 = vld [vmem:[#allocation2 + $0x420] sm:$0xff]
      %v1507 = vsel %vm455, %v1448, %v1506
      %1508 = vst [vmem:[#allocation2 + $0x420] sm:$0xff] %v1507
      %1509 = vst [vmem:[%s1278 + $0x38] sm:$0xff] 0
      %v1510 = vld [vmem:[%s1328] sm:$0xff]
      %v1511 = vld [vmem:[%s1328 + $0x8] sm:$0xff]
      %v1512 = vld [vmem:[%s1328 + $0x10] sm:$0xff]
      %v1513 = vld [vmem:[%s1328 + $0x18] sm:$0xff]
      %v1514 = vld [vmem:[%s1328 + $0x20] sm:$0xff]
      %v1515 = vld [vmem:[%s1328 + $0x28] sm:$0xff]
      %v1516 = vld [vmem:[%s1328 + $0x30] sm:$0xff]
      %v1517 = vld [vmem:[%s1328 + $0x38] sm:$0xff]
      %v1518 = vld [vmem:[%s1328 + $0x40] sm:$0xff]
      %v1519 = vld [vmem:[%s1328 + $0x48] sm:$0xff]
      %v1520 = vld [vmem:[%s1328 + $0x50] sm:$0xff]
      %v1521 = vld [vmem:[%s1328 + $0x58] sm:$0xff]
      %v1522 = vld [vmem:[%s1328 + $0x60] sm:$0xff]
      %v1523 = vld [vmem:[%s1328 + $0x68] sm:$0xff]
      %v1524 = vld [vmem:[%s1328 + $0x70] sm:$0xff]
      %1525 = vst [vmem:[#allocation2 + $0x38] sm:$0xff] %v1510
      %1526 = vst [vmem:[#allocation2 + $0x80] sm:$0xff] %v1511
      %1527 = vst [vmem:[#allocation2 + $0xc8] sm:$0xff] %v1512
      %1528 = vst [vmem:[#allocation2 + $0x110] sm:$0xff] %v1513
      %1529 = vst [vmem:[#allocation2 + $0x158] sm:$0xff] %v1514
      %1530 = vst [vmem:[#allocation2 + $0x1a0] sm:$0xff] %v1515
      %1531 = vst [vmem:[#allocation2 + $0x1e8] sm:$0xff] %v1516
      %1532 = vst [vmem:[#allocation2 + $0x230] sm:$0xff] %v1517
      %1533 = vst [vmem:[#allocation2 + $0x278] sm:$0xff] %v1518
      %1534 = vst [vmem:[#allocation2 + $0x2c0] sm:$0xff] %v1519
      %1535 = vst [vmem:[#allocation2 + $0x308] sm:$0xff] %v1520
      %1536 = vst [vmem:[#allocation2 + $0x350] sm:$0xff] %v1521
      %1537 = vst [vmem:[#allocation2 + $0x398] sm:$0xff] %v1522
      %1538 = vst [vmem:[#allocation2 + $0x3e0] sm:$0xff] %v1523
      %1539 = vst [vmem:[#allocation2 + $0x428] sm:$0xff] %v1524
      %1540 = vst [vmem:[%s1278 + $0x40] sm:$0xff] 0
      %v1541 = vld [vmem:[#allocation2 + $0x40] sm:$0x80]
      %v1542 = vsel %vm535, 0, %v1541
      %1543 = vst [vmem:[#allocation2 + $0x40] sm:$0x80] %v1542
      %v1544 = vld [vmem:[#allocation2 + $0x88] sm:$0x80]
      %v1545 = vsel %vm535, 0, %v1544
      %1546 = vst [vmem:[#allocation2 + $0x88] sm:$0x80] %v1545
      %v1547 = vld [vmem:[#allocation2 + $0xd0] sm:$0x80]
      %v1548 = vsel %vm535, 0, %v1547
      %1549 = vst [vmem:[#allocation2 + $0xd0] sm:$0x80] %v1548
      %v1550 = vld [vmem:[#allocation2 + $0x118] sm:$0x80]
      %v1551 = vsel %vm535, 0, %v1550
      %1552 = vst [vmem:[#allocation2 + $0x118] sm:$0x80] %v1551
      %v1553 = vld [vmem:[#allocation2 + $0x160] sm:$0x80]
      %v1554 = vsel %vm535, 0, %v1553
      %1555 = vst [vmem:[#allocation2 + $0x160] sm:$0x80] %v1554
      %v1556 = vld [vmem:[#allocation2 + $0x1a8] sm:$0x80]
      %v1557 = vsel %vm535, 0, %v1556
      %1558 = vst [vmem:[#allocation2 + $0x1a8] sm:$0x80] %v1557
      %v1559 = vld [vmem:[#allocation2 + $0x1f0] sm:$0x80]
      %v1560 = vsel %vm535, 0, %v1559
      %1561 = vst [vmem:[#allocation2 + $0x1f0] sm:$0x80] %v1560
      %v1562 = vld [vmem:[#allocation2 + $0x238] sm:$0x80]
      %v1563 = vsel %vm535, 0, %v1562
      %1564 = vst [vmem:[#allocation2 + $0x238] sm:$0x80] %v1563
      %v1565 = vld [vmem:[#allocation2 + $0x280] sm:$0x80]
      %v1566 = vsel %vm535, 0, %v1565
      %1567 = vst [vmem:[#allocation2 + $0x280] sm:$0x80] %v1566
      %v1568 = vld [vmem:[#allocation2 + $0x2c8] sm:$0x80]
      %v1569 = vsel %vm535, 0, %v1568
      %1570 = vst [vmem:[#allocation2 + $0x2c8] sm:$0x80] %v1569
      %v1571 = vld [vmem:[#allocation2 + $0x310] sm:$0x80]
      %v1572 = vsel %vm535, 0, %v1571
      %1573 = vst [vmem:[#allocation2 + $0x310] sm:$0x80] %v1572
      %v1574 = vld [vmem:[#allocation2 + $0x358] sm:$0x80]
      %v1575 = vsel %vm535, 0, %v1574
      %1576 = vst [vmem:[#allocation2 + $0x358] sm:$0x80] %v1575
      %v1577 = vld [vmem:[#allocation2 + $0x3a0] sm:$0x80]
      %v1578 = vsel %vm535, 0, %v1577
      %1579 = vst [vmem:[#allocation2 + $0x3a0] sm:$0x80] %v1578
      %v1580 = vld [vmem:[#allocation2 + $0x3e8] sm:$0x80]
      %v1581 = vsel %vm535, 0, %v1580
      %1582 = vst [vmem:[#allocation2 + $0x3e8] sm:$0x80] %v1581
      %v1583 = vld [vmem:[#allocation2 + $0x430] sm:$0x80]
      %v1584 = vsel %vm535, 0, %v1583
      %1585 = vst [vmem:[#allocation2 + $0x430] sm:$0x80] %v1584
      %v1586 = vld [vmem:[#allocation2 + $0x478] sm:$0x80]
      %v1587 = vsel %vm535, 0, %v1586
      %1588 = vst [vmem:[#allocation2 + $0x478] sm:$0x80] %v1587
      %v1589 = vld [vmem:[%s1328] sm:$0xff]
      %v1590 = vld [vmem:[%s1328 + $0x8] sm:$0xff]
      %v1591 = vld [vmem:[%s1328 + $0x10] sm:$0xff]
      %v1592 = vld [vmem:[%s1328 + $0x18] sm:$0xff]
      %v1593 = vld [vmem:[%s1328 + $0x20] sm:$0xff]
      %v1594 = vld [vmem:[%s1328 + $0x28] sm:$0xff]
      %v1595 = vld [vmem:[%s1328 + $0x30] sm:$0xff]
      %v1596 = vld [vmem:[%s1328 + $0x38] sm:$0xff]
      %v1597 = vld [vmem:[%s1328 + $0x40] sm:$0xff]
      %v1598 = vld [vmem:[%s1328 + $0x48] sm:$0xff]
      %v1599 = vld [vmem:[%s1328 + $0x50] sm:$0xff]
      %v1600 = vld [vmem:[%s1328 + $0x58] sm:$0xff]
      %v1601 = vld [vmem:[%s1328 + $0x60] sm:$0xff]
      %v1602 = vld [vmem:[%s1328 + $0x68] sm:$0xff]
      %v1603 = vld [vmem:[%s1328 + $0x70] sm:$0xff]
      %v1605 = vshrl.u32 %v1589, 16
      %v1607 = vshll.u32 %v1589, 16
      %v1609 = vrot.slane %v1607, 1
      %v1610 = vor.u32 %v1605, %v1609
      %v1612 = vshrl.u32 %v1590, 16
      %v1614 = vshll.u32 %v1590, 16
      %v1616 = vrot.slane %v1614, 1
      %v1617 = vor.u32 %v1612, %v1616
      %v1619 = vshrl.u32 %v1591, 16
      %v1621 = vshll.u32 %v1591, 16
      %v1623 = vrot.slane %v1621, 1
      %v1624 = vor.u32 %v1619, %v1623
      %v1626 = vshrl.u32 %v1592, 16
      %v1628 = vshll.u32 %v1592, 16
      %v1630 = vrot.slane %v1628, 1
      %v1631 = vor.u32 %v1626, %v1630
      %v1633 = vshrl.u32 %v1593, 16
      %v1635 = vshll.u32 %v1593, 16
      %v1637 = vrot.slane %v1635, 1
      %v1638 = vor.u32 %v1633, %v1637
      %v1640 = vshrl.u32 %v1594, 16
      %v1642 = vshll.u32 %v1594, 16
      %v1644 = vrot.slane %v1642, 1
      %v1645 = vor.u32 %v1640, %v1644
      %v1647 = vshrl.u32 %v1595, 16
      %v1649 = vshll.u32 %v1595, 16
      %v1651 = vrot.slane %v1649, 1
      %v1652 = vor.u32 %v1647, %v1651
      %v1654 = vshrl.u32 %v1596, 16
      %v1656 = vshll.u32 %v1596, 16
      %v1658 = vrot.slane %v1656, 1
      %v1659 = vor.u32 %v1654, %v1658
      %v1661 = vshrl.u32 %v1597, 16
      %v1663 = vshll.u32 %v1597, 16
      %v1665 = vrot.slane %v1663, 1
      %v1666 = vor.u32 %v1661, %v1665
      %v1668 = vshrl.u32 %v1598, 16
      %v1670 = vshll.u32 %v1598, 16
      %v1672 = vrot.slane %v1670, 1
      %v1673 = vor.u32 %v1668, %v1672
      %v1675 = vshrl.u32 %v1599, 16
      %v1677 = vshll.u32 %v1599, 16
      %v1679 = vrot.slane %v1677, 1
      %v1680 = vor.u32 %v1675, %v1679
      %v1682 = vshrl.u32 %v1600, 16
      %v1684 = vshll.u32 %v1600, 16
      %v1686 = vrot.slane %v1684, 1
      %v1687 = vor.u32 %v1682, %v1686
      %v1689 = vshrl.u32 %v1601, 16
      %v1691 = vshll.u32 %v1601, 16
      %v1693 = vrot.slane %v1691, 1
      %v1694 = vor.u32 %v1689, %v1693
      %v1696 = vshrl.u32 %v1602, 16
      %v1698 = vshll.u32 %v1602, 16
      %v1700 = vrot.slane %v1698, 1
      %v1701 = vor.u32 %v1696, %v1700
      %v1703 = vshrl.u32 %v1603, 16
      %v1705 = vshll.u32 %v1603, 16
      %v1707 = vrot.slane %v1705, 1
      %v1708 = vor.u32 %v1703, %v1707
      %v1724 = vld [vmem:[#allocation2 + $0x40] sm:$0xff]
      %v1725 = vsel %vm720, %v1610, %v1724
      %1726 = vst [vmem:[#allocation2 + $0x40] sm:$0xff] %v1725
      %v1727 = vld [vmem:[#allocation2 + $0x88] sm:$0xff]
      %v1728 = vsel %vm720, %v1617, %v1727
      %1729 = vst [vmem:[#allocation2 + $0x88] sm:$0xff] %v1728
      %v1730 = vld [vmem:[#allocation2 + $0xd0] sm:$0xff]
      %v1731 = vsel %vm720, %v1624, %v1730
      %1732 = vst [vmem:[#allocation2 + $0xd0] sm:$0xff] %v1731
      %v1733 = vld [vmem:[#allocation2 + $0x118] sm:$0xff]
      %v1734 = vsel %vm720, %v1631, %v1733
      %1735 = vst [vmem:[#allocation2 + $0x118] sm:$0xff] %v1734
      %v1736 = vld [vmem:[#allocation2 + $0x160] sm:$0xff]
      %v1737 = vsel %vm720, %v1638, %v1736
      %1738 = vst [vmem:[#allocation2 + $0x160] sm:$0xff] %v1737
      %v1739 = vld [vmem:[#allocation2 + $0x1a8] sm:$0xff]
      %v1740 = vsel %vm720, %v1645, %v1739
      %1741 = vst [vmem:[#allocation2 + $0x1a8] sm:$0xff] %v1740
      %v1742 = vld [vmem:[#allocation2 + $0x1f0] sm:$0xff]
      %v1743 = vsel %vm720, %v1652, %v1742
      %1744 = vst [vmem:[#allocation2 + $0x1f0] sm:$0xff] %v1743
      %v1745 = vld [vmem:[#allocation2 + $0x238] sm:$0xff]
      %v1746 = vsel %vm720, %v1659, %v1745
      %1747 = vst [vmem:[#allocation2 + $0x238] sm:$0xff] %v1746
      %v1748 = vld [vmem:[#allocation2 + $0x280] sm:$0xff]
      %v1749 = vsel %vm720, %v1666, %v1748
      %1750 = vst [vmem:[#allocation2 + $0x280] sm:$0xff] %v1749
      %v1751 = vld [vmem:[#allocation2 + $0x2c8] sm:$0xff]
      %v1752 = vsel %vm720, %v1673, %v1751
      %1753 = vst [vmem:[#allocation2 + $0x2c8] sm:$0xff] %v1752
      %v1754 = vld [vmem:[#allocation2 + $0x310] sm:$0xff]
      %v1755 = vsel %vm720, %v1680, %v1754
      %1756 = vst [vmem:[#allocation2 + $0x310] sm:$0xff] %v1755
      %v1757 = vld [vmem:[#allocation2 + $0x358] sm:$0xff]
      %v1758 = vsel %vm720, %v1687, %v1757
      %1759 = vst [vmem:[#allocation2 + $0x358] sm:$0xff] %v1758
      %v1760 = vld [vmem:[#allocation2 + $0x3a0] sm:$0xff]
      %v1761 = vsel %vm720, %v1694, %v1760
      %1762 = vst [vmem:[#allocation2 + $0x3a0] sm:$0xff] %v1761
      %v1763 = vld [vmem:[#allocation2 + $0x3e8] sm:$0xff]
      %v1764 = vsel %vm720, %v1701, %v1763
      %1765 = vst [vmem:[#allocation2 + $0x3e8] sm:$0xff] %v1764
      %v1766 = vld [vmem:[#allocation2 + $0x430] sm:$0xff]
      %v1767 = vsel %vm720, %v1708, %v1766
      %1768 = vst [vmem:[#allocation2 + $0x430] sm:$0xff] %v1767
      %v1769 = vld [vmem:[#allocation2] sm:$0xff]
      %v1770 = vld [vmem:[#allocation2 + $0x8] sm:$0xff]
      %v1771 = vld [vmem:[#allocation2 + $0x10] sm:$0xff]
      %v1772 = vld [vmem:[#allocation2 + $0x18] sm:$0xff]
      %v1773 = vld [vmem:[#allocation2 + $0x20] sm:$0xff]
      %v1774 = vld [vmem:[#allocation2 + $0x28] sm:$0xff]
      %v1775 = vld [vmem:[#allocation2 + $0x30] sm:$0xff]
      %v1776 = vld [vmem:[#allocation2 + $0x38] sm:$0xff]
      %v1777 = vld [vmem:[#allocation2 + $0x40] sm:$0xff]
      %v1778 = vld [vmem:[#allocation2 + $0x48] sm:$0xff]
      %v1779 = vld [vmem:[#allocation2 + $0x50] sm:$0xff]
      %v1780 = vld [vmem:[#allocation2 + $0x58] sm:$0xff]
      %v1781 = vld [vmem:[#allocation2 + $0x60] sm:$0xff]
      %v1782 = vld [vmem:[#allocation2 + $0x68] sm:$0xff]
      %v1783 = vld [vmem:[#allocation2 + $0x70] sm:$0xff]
      %v1784 = vld [vmem:[#allocation2 + $0x78] sm:$0xff]
      %v1785 = vld [vmem:[#allocation2 + $0x80] sm:$0xff]
      %v1786 = vld [vmem:[#allocation2 + $0x88] sm:$0xff]
      %v1787 = vld [vmem:[#allocation2 + $0x90] sm:$0xff]
      %v1788 = vld [vmem:[#allocation2 + $0x98] sm:$0xff]
      %v1789 = vld [vmem:[#allocation2 + $0xa0] sm:$0xff]
      %v1790 = vld [vmem:[#allocation2 + $0xa8] sm:$0xff]
      %v1791 = vld [vmem:[#allocation2 + $0xb0] sm:$0xff]
      %v1792 = vld [vmem:[#allocation2 + $0xb8] sm:$0xff]
      %v1793 = vld [vmem:[#allocation2 + $0xc0] sm:$0xff]
      %v1794 = vld [vmem:[#allocation2 + $0xc8] sm:$0xff]
      %v1795 = vld [vmem:[#allocation2 + $0xd0] sm:$0xff]
      %v1796 = vld [vmem:[#allocation2 + $0xd8] sm:$0xff]
      %v1797 = vld [vmem:[#allocation2 + $0xe0] sm:$0xff]
      %v1798 = vld [vmem:[#allocation2 + $0xe8] sm:$0xff]
      %v1799 = vld [vmem:[#allocation2 + $0xf0] sm:$0xff]
      %v1800 = vld [vmem:[#allocation2 + $0xf8] sm:$0xff]
      %v1801 = vld [vmem:[#allocation2 + $0x100] sm:$0xff]
      %v1802 = vld [vmem:[#allocation2 + $0x108] sm:$0xff]
      %v1803 = vld [vmem:[#allocation2 + $0x110] sm:$0xff]
      %v1804 = vld [vmem:[#allocation2 + $0x118] sm:$0xff]
      %v1805 = vld [vmem:[#allocation2 + $0x120] sm:$0xff]
      %v1806 = vld [vmem:[#allocation2 + $0x128] sm:$0xff]
      %v1807 = vld [vmem:[#allocation2 + $0x130] sm:$0xff]
      %v1808 = vld [vmem:[#allocation2 + $0x138] sm:$0xff]
      %v1809 = vld [vmem:[#allocation2 + $0x140] sm:$0xff]
      %v1810 = vld [vmem:[#allocation2 + $0x148] sm:$0xff]
      %v1811 = vld [vmem:[#allocation2 + $0x150] sm:$0xff]
      %v1812 = vld [vmem:[#allocation2 + $0x158] sm:$0xff]
      %v1813 = vld [vmem:[#allocation2 + $0x160] sm:$0xff]
      %v1814 = vld [vmem:[#allocation2 + $0x168] sm:$0xff]
      %v1815 = vld [vmem:[#allocation2 + $0x170] sm:$0xff]
      %v1816 = vld [vmem:[#allocation2 + $0x178] sm:$0xff]
      %v1817 = vld [vmem:[#allocation2 + $0x180] sm:$0xff]
      %v1818 = vld [vmem:[#allocation2 + $0x188] sm:$0xff]
      %v1819 = vld [vmem:[#allocation2 + $0x190] sm:$0xff]
      %v1820 = vld [vmem:[#allocation2 + $0x198] sm:$0xff]
      %v1821 = vld [vmem:[#allocation2 + $0x1a0] sm:$0xff]
      %v1822 = vld [vmem:[#allocation2 + $0x1a8] sm:$0xff]
      %v1823 = vld [vmem:[#allocation2 + $0x1b0] sm:$0xff]
      %v1824 = vld [vmem:[#allocation2 + $0x1b8] sm:$0xff]
      %v1825 = vld [vmem:[#allocation2 + $0x1c0] sm:$0xff]
      %v1826 = vld [vmem:[#allocation2 + $0x1c8] sm:$0xff]
      %v1827 = vld [vmem:[#allocation2 + $0x1d0] sm:$0xff]
      %v1828 = vld [vmem:[#allocation2 + $0x1d8] sm:$0xff]
      %v1829 = vld [vmem:[#allocation2 + $0x1e0] sm:$0xff]
      %v1830 = vld [vmem:[#allocation2 + $0x1e8] sm:$0xff]
      %v1831 = vld [vmem:[#allocation2 + $0x1f0] sm:$0xff]
      %v1832 = vld [vmem:[#allocation2 + $0x1f8] sm:$0xff]
      %v1833 = vld [vmem:[#allocation2 + $0x200] sm:$0xff]
      %v1834 = vld [vmem:[#allocation2 + $0x208] sm:$0xff]
      %v1835 = vld [vmem:[#allocation2 + $0x210] sm:$0xff]
      %v1836 = vld [vmem:[#allocation2 + $0x218] sm:$0xff]
      %v1837 = vld [vmem:[#allocation2 + $0x220] sm:$0xff]
      %v1838 = vld [vmem:[#allocation2 + $0x228] sm:$0xff]
      %v1839 = vld [vmem:[#allocation2 + $0x230] sm:$0xff]
      %v1840 = vld [vmem:[#allocation2 + $0x238] sm:$0xff]
      %v1841 = vld [vmem:[#allocation2 + $0x240] sm:$0xff]
      %v1842 = vld [vmem:[#allocation2 + $0x248] sm:$0xff]
      %v1843 = vld [vmem:[#allocation2 + $0x250] sm:$0xff]
      %v1844 = vld [vmem:[#allocation2 + $0x258] sm:$0xff]
      %v1845 = vld [vmem:[#allocation2 + $0x260] sm:$0xff]
      %v1846 = vld [vmem:[#allocation2 + $0x268] sm:$0xff]
      %v1847 = vld [vmem:[#allocation2 + $0x270] sm:$0xff]
      %v1848 = vld [vmem:[#allocation2 + $0x278] sm:$0xff]
      %v1849 = vld [vmem:[#allocation2 + $0x280] sm:$0xff]
      %v1850 = vld [vmem:[#allocation2 + $0x288] sm:$0xff]
      %v1851 = vld [vmem:[#allocation2 + $0x290] sm:$0xff]
      %v1852 = vld [vmem:[#allocation2 + $0x298] sm:$0xff]
      %v1853 = vld [vmem:[#allocation2 + $0x2a0] sm:$0xff]
      %v1854 = vld [vmem:[#allocation2 + $0x2a8] sm:$0xff]
      %v1855 = vld [vmem:[#allocation2 + $0x2b0] sm:$0xff]
      %v1856 = vld [vmem:[#allocation2 + $0x2b8] sm:$0xff]
      %v1857 = vld [vmem:[#allocation2 + $0x2c0] sm:$0xff]
      %v1858 = vld [vmem:[#allocation2 + $0x2c8] sm:$0xff]
      %v1859 = vld [vmem:[#allocation2 + $0x2d0] sm:$0xff]
      %v1860 = vld [vmem:[#allocation2 + $0x2d8] sm:$0xff]
      %v1861 = vld [vmem:[#allocation2 + $0x2e0] sm:$0xff]
      %v1862 = vld [vmem:[#allocation2 + $0x2e8] sm:$0xff]
      %v1863 = vld [vmem:[#allocation2 + $0x2f0] sm:$0xff]
      %v1864 = vld [vmem:[#allocation2 + $0x2f8] sm:$0xff]
      %v1865 = vld [vmem:[#allocation2 + $0x300] sm:$0xff]
      %v1866 = vld [vmem:[#allocation2 + $0x308] sm:$0xff]
      %v1867 = vld [vmem:[#allocation2 + $0x310] sm:$0xff]
      %v1868 = vld [vmem:[#allocation2 + $0x318] sm:$0xff]
      %v1869 = vld [vmem:[#allocation2 + $0x320] sm:$0xff]
      %v1870 = vld [vmem:[#allocation2 + $0x328] sm:$0xff]
      %v1871 = vld [vmem:[#allocation2 + $0x330] sm:$0xff]
      %v1872 = vld [vmem:[#allocation2 + $0x338] sm:$0xff]
      %v1873 = vld [vmem:[#allocation2 + $0x340] sm:$0xff]
      %v1874 = vld [vmem:[#allocation2 + $0x348] sm:$0xff]
      %v1875 = vld [vmem:[#allocation2 + $0x350] sm:$0xff]
      %v1876 = vld [vmem:[#allocation2 + $0x358] sm:$0xff]
      %v1877 = vld [vmem:[#allocation2 + $0x360] sm:$0xff]
      %v1878 = vld [vmem:[#allocation2 + $0x368] sm:$0xff]
      %v1879 = vld [vmem:[#allocation2 + $0x370] sm:$0xff]
      %v1880 = vld [vmem:[#allocation2 + $0x378] sm:$0xff]
      %v1881 = vld [vmem:[#allocation2 + $0x380] sm:$0xff]
      %v1882 = vld [vmem:[#allocation2 + $0x388] sm:$0xff]
      %v1883 = vld [vmem:[#allocation2 + $0x390] sm:$0xff]
      %v1884 = vld [vmem:[#allocation2 + $0x398] sm:$0xff]
      %v1885 = vld [vmem:[#allocation2 + $0x3a0] sm:$0xff]
      %v1886 = vld [vmem:[#allocation2 + $0x3a8] sm:$0xff]
      %v1887 = vld [vmem:[#allocation2 + $0x3b0] sm:$0xff]
      %v1888 = vld [vmem:[#allocation2 + $0x3b8] sm:$0xff]
      %v1889 = vld [vmem:[#allocation2 + $0x3c0] sm:$0xff]
      %v1890 = vld [vmem:[#allocation2 + $0x3c8] sm:$0xff]
      %v1891 = vld [vmem:[#allocation2 + $0x3d0] sm:$0xff]
      %v1892 = vld [vmem:[#allocation2 + $0x3d8] sm:$0xff]
      %v1893 = vld [vmem:[#allocation2 + $0x3e0] sm:$0xff]
      %v1894 = vld [vmem:[#allocation2 + $0x3e8] sm:$0xff]
      %v1895 = vld [vmem:[#allocation2 + $0x3f0] sm:$0xff]
      %v1896 = vld [vmem:[#allocation2 + $0x3f8] sm:$0xff]
      %v1897 = vld [vmem:[#allocation2 + $0x400] sm:$0xff]
      %v1898 = vld [vmem:[#allocation2 + $0x408] sm:$0xff]
      %v1899 = vld [vmem:[#allocation2 + $0x410] sm:$0xff]
      %v1900 = vld [vmem:[#allocation2 + $0x418] sm:$0xff]
      %v1901 = vld [vmem:[#allocation2 + $0x420] sm:$0xff]
      %v1902 = vld [vmem:[#allocation2 + $0x428] sm:$0xff]
      %v1903 = vld [vmem:[#allocation2 + $0x430] sm:$0xff]
      %v1904 = vld [vmem:[#allocation2 + $0x438] sm:$0xff]
      %v1905 = vld [vmem:[#allocation2 + $0x440] sm:$0xff]
      %v1906 = vld [vmem:[#allocation2 + $0x448] sm:$0xff]
      %v1907 = vld [vmem:[#allocation2 + $0x450] sm:$0xff]
      %v1908 = vld [vmem:[#allocation2 + $0x458] sm:$0xff]
      %v1909 = vld [vmem:[#allocation2 + $0x460] sm:$0xff]
      %v1910 = vld [vmem:[#allocation2 + $0x468] sm:$0xff]
      %v1911 = vld [vmem:[#allocation2 + $0x470] sm:$0xff]
      %v1912 = vld [vmem:[#allocation2 + $0x478] sm:$0xff]
      %v1913 = vld [vmem:[%s1] sm:$0xf]
      %v1914 = vld [vmem:[%s1 + $0x4] sm:$0xf]
      %v1915 = vld [vmem:[%s1 + $0x8] sm:$0xf]
      %v1916 = vld [vmem:[%s1 + $0xc] sm:$0xf]
      %v1917 = vld [vmem:[%s1 + $0x10] sm:$0xf]
      %v1918 = vld [vmem:[%s1 + $0x14] sm:$0xf]
      %v1919 = vld [vmem:[%s1 + $0x18] sm:$0xf]
      %v1920 = vld [vmem:[%s1 + $0x1c] sm:$0xf]
      %v1921 = vld [vmem:[%s1 + $0x20] sm:$0xf]
      %v1922 = vld [vmem:[%s1 + $0x24] sm:$0xf]
      %v1923 = vld [vmem:[%s1 + $0x28] sm:$0xf]
      %v1924 = vld [vmem:[%s1 + $0x2c] sm:$0xf]
      %v1925 = vld [vmem:[%s1 + $0x30] sm:$0xf]
      %v1926 = vld [vmem:[%s1 + $0x34] sm:$0xf]
      %v1927 = vld [vmem:[%s1 + $0x38] sm:$0xf]
      %v1928 = vld [vmem:[%s1 + $0x3c] sm:$0xf]
      %v1929 = vld [vmem:[%s1 + $0x40] sm:$0xf]
      %v1930 = vld [vmem:[%s1 + $0x44] sm:$0xf]
      %v1931 = vld [vmem:[%s1 + $0x48] sm:$0xf]
      %v1932 = vld [vmem:[%s1 + $0x4c] sm:$0xf]
      %v1933 = vld [vmem:[%s1 + $0x50] sm:$0xf]
      %v1934 = vld [vmem:[%s1 + $0x54] sm:$0xf]
      %v1935 = vld [vmem:[%s1 + $0x58] sm:$0xf]
      %v1936 = vld [vmem:[%s1 + $0x5c] sm:$0xf]
      %v1937 = vld [vmem:[%s1 + $0x60] sm:$0xf]
      %v1938 = vld [vmem:[%s1 + $0x64] sm:$0xf]
      %v1939 = vld [vmem:[%s1 + $0x68] sm:$0xf]
      %v1940 = vld [vmem:[%s1 + $0x6c] sm:$0xf]
      %v1941 = vld [vmem:[%s1 + $0x70] sm:$0xf]
      %v1942 = vld [vmem:[%s1 + $0x74] sm:$0xf]
      %v1943 = vld [vmem:[%s1 + $0x78] sm:$0xf]
      %v1944 = vld [vmem:[%s1 + $0x7c] sm:$0xf]
      %v1945 = vld [vmem:[%s1 + $0x80] sm:$0xf]
      %v1946 = vld [vmem:[%s1 + $0x84] sm:$0xf]
      %v1947 = vld [vmem:[%s1 + $0x88] sm:$0xf]
      %v1948 = vld [vmem:[%s1 + $0x8c] sm:$0xf]
      %v1949 = vld [vmem:[%s1 + $0x90] sm:$0xf]
      %v1950 = vld [vmem:[%s1 + $0x94] sm:$0xf]
      %v1951 = vld [vmem:[%s1 + $0x98] sm:$0xf]
      %v1952 = vld [vmem:[%s1 + $0x9c] sm:$0xf]
      %v1953 = vld [vmem:[%s1 + $0xa0] sm:$0xf]
      %v1954 = vld [vmem:[%s1 + $0xa4] sm:$0xf]
      %v1955 = vld [vmem:[%s1 + $0xa8] sm:$0xf]
      %v1956 = vld [vmem:[%s1 + $0xac] sm:$0xf]
      %v1957 = vld [vmem:[%s1 + $0xb0] sm:$0xf]
      %v1958 = vld [vmem:[%s1 + $0xb4] sm:$0xf]
      %v1959 = vld [vmem:[%s1 + $0xb8] sm:$0xf]
      %v1960 = vld [vmem:[%s1 + $0xbc] sm:$0xf]
      %v1961 = vld [vmem:[%s1 + $0xc0] sm:$0xf]
      %v1962 = vld [vmem:[%s1 + $0xc4] sm:$0xf]
      %v1963 = vld [vmem:[%s1 + $0xc8] sm:$0xf]
      %v1964 = vld [vmem:[%s1 + $0xcc] sm:$0xf]
      %v1965 = vld [vmem:[%s1 + $0xd0] sm:$0xf]
      %v1966 = vld [vmem:[%s1 + $0xd4] sm:$0xf]
      %v1967 = vld [vmem:[%s1 + $0xd8] sm:$0xf]
      %v1968 = vld [vmem:[%s1 + $0xdc] sm:$0xf]
      %v1969 = vld [vmem:[%s1 + $0xe0] sm:$0xf]
      %v1970 = vld [vmem:[%s1 + $0xe4] sm:$0xf]
      %v1971 = vld [vmem:[%s1 + $0xe8] sm:$0xf]
      %v1972 = vld [vmem:[%s1 + $0xec] sm:$0xf]
      %v1973 = vld [vmem:[%s1 + $0xf0] sm:$0xf]
      %v1974 = vld [vmem:[%s1 + $0xf4] sm:$0xf]
      %v1975 = vld [vmem:[%s1 + $0xf8] sm:$0xf]
      %v1976 = vld [vmem:[%s1 + $0xfc] sm:$0xf]
      %v1977 = vld [vmem:[%s1 + $0x100] sm:$0xf]
      %v1978 = vld [vmem:[%s1 + $0x104] sm:$0xf]
      %v1979 = vld [vmem:[%s1 + $0x108] sm:$0xf]
      %v1980 = vld [vmem:[%s1 + $0x10c] sm:$0xf]
      %v1981 = vld [vmem:[%s1 + $0x110] sm:$0xf]
      %v1982 = vld [vmem:[%s1 + $0x114] sm:$0xf]
      %v1983 = vld [vmem:[%s1 + $0x118] sm:$0xf]
      %v1984 = vld [vmem:[%s1 + $0x11c] sm:$0xf]
      %v1985 = vld [vmem:[%s1 + $0x120] sm:$0xf]
      %v1986 = vld [vmem:[%s1 + $0x124] sm:$0xf]
      %v1987 = vld [vmem:[%s1 + $0x128] sm:$0xf]
      %v1988 = vld [vmem:[%s1 + $0x12c] sm:$0xf]
      %v1989 = vld [vmem:[%s1 + $0x130] sm:$0xf]
      %v1990 = vld [vmem:[%s1 + $0x134] sm:$0xf]
      %v1991 = vld [vmem:[%s1 + $0x138] sm:$0xf]
      %v1992 = vld [vmem:[%s1 + $0x13c] sm:$0xf]
      %v1993 = vld [vmem:[%s1 + $0x140] sm:$0xf]
      %v1994 = vld [vmem:[%s1 + $0x144] sm:$0xf]
      %v1995 = vld [vmem:[%s1 + $0x148] sm:$0xf]
      %v1996 = vld [vmem:[%s1 + $0x14c] sm:$0xf]
      %v1997 = vld [vmem:[%s1 + $0x150] sm:$0xf]
      %v1998 = vld [vmem:[%s1 + $0x154] sm:$0xf]
      %v1999 = vld [vmem:[%s1 + $0x158] sm:$0xf]
      %v2000 = vld [vmem:[%s1 + $0x15c] sm:$0xf]
      %v2001 = vld [vmem:[%s1 + $0x160] sm:$0xf]
      %v2002 = vld [vmem:[%s1 + $0x164] sm:$0xf]
      %v2003 = vld [vmem:[%s1 + $0x168] sm:$0xf]
      %v2004 = vld [vmem:[%s1 + $0x16c] sm:$0xf]
      %v2005 = vld [vmem:[%s1 + $0x170] sm:$0xf]
      %v2006 = vld [vmem:[%s1 + $0x174] sm:$0xf]
      %v2007 = vld [vmem:[%s1 + $0x178] sm:$0xf]
      %v2008 = vld [vmem:[%s1 + $0x17c] sm:$0xf]
      %v2009 = vld [vmem:[%s1 + $0x180] sm:$0xf]
      %v2010 = vld [vmem:[%s1 + $0x184] sm:$0xf]
      %v2011 = vld [vmem:[%s1 + $0x188] sm:$0xf]
      %v2012 = vld [vmem:[%s1 + $0x18c] sm:$0xf]
      %v2013 = vld [vmem:[%s1 + $0x190] sm:$0xf]
      %v2014 = vld [vmem:[%s1 + $0x194] sm:$0xf]
      %v2015 = vld [vmem:[%s1 + $0x198] sm:$0xf]
      %v2016 = vld [vmem:[%s1 + $0x19c] sm:$0xf]
      %v2017 = vld [vmem:[%s1 + $0x1a0] sm:$0xf]
      %v2018 = vld [vmem:[%s1 + $0x1a4] sm:$0xf]
      %v2019 = vld [vmem:[%s1 + $0x1a8] sm:$0xf]
      %v2020 = vld [vmem:[%s1 + $0x1ac] sm:$0xf]
      %v2021 = vld [vmem:[%s1 + $0x1b0] sm:$0xf]
      %v2022 = vld [vmem:[%s1 + $0x1b4] sm:$0xf]
      %v2023 = vld [vmem:[%s1 + $0x1b8] sm:$0xf]
      %v2024 = vld [vmem:[%s1 + $0x1bc] sm:$0xf]
      %v2025 = vld [vmem:[%s1 + $0x1c0] sm:$0xf]
      %v2026 = vld [vmem:[%s1 + $0x1c4] sm:$0xf]
      %v2027 = vld [vmem:[%s1 + $0x1c8] sm:$0xf]
      %v2028 = vld [vmem:[%s1 + $0x1cc] sm:$0xf]
      %v2029 = vld [vmem:[%s1 + $0x1d0] sm:$0xf]
      %v2030 = vld [vmem:[%s1 + $0x1d4] sm:$0xf]
      %v2031 = vld [vmem:[%s1 + $0x1d8] sm:$0xf]
      %v2032 = vld [vmem:[%s1 + $0x1dc] sm:$0xf]
      %v2033 = vld [vmem:[%s1 + $0x1e0] sm:$0xf]
      %v2034 = vld [vmem:[%s1 + $0x1e4] sm:$0xf]
      %v2035 = vld [vmem:[%s1 + $0x1e8] sm:$0xf]
      %v2036 = vld [vmem:[%s1 + $0x1ec] sm:$0xf]
      %v2037 = vld [vmem:[%s1 + $0x1f0] sm:$0xf]
      %v2038 = vld [vmem:[%s1 + $0x1f4] sm:$0xf]
      %v2039 = vld [vmem:[%s1 + $0x1f8] sm:$0xf]
      %v2040 = vld [vmem:[%s1 + $0x1fc] sm:$0xf]
      %v2041 = vld [vmem:[%s1 + $0x200] sm:$0xf]
      %v2042 = vld [vmem:[%s1 + $0x204] sm:$0xf]
      %v2043 = vld [vmem:[%s1 + $0x208] sm:$0xf]
      %v2044 = vld [vmem:[%s1 + $0x20c] sm:$0xf]
      %v2045 = vld [vmem:[%s1 + $0x210] sm:$0xf]
      %v2046 = vld [vmem:[%s1 + $0x214] sm:$0xf]
      %v2047 = vld [vmem:[%s1 + $0x218] sm:$0xf]
      %v2048 = vld [vmem:[%s1 + $0x21c] sm:$0xf]
      %v2049 = vld [vmem:[%s1 + $0x220] sm:$0xf]
      %v2050 = vld [vmem:[%s1 + $0x224] sm:$0xf]
      %v2051 = vld [vmem:[%s1 + $0x228] sm:$0xf]
      %v2052 = vld [vmem:[%s1 + $0x22c] sm:$0xf]
      %v2053 = vld [vmem:[%s1 + $0x230] sm:$0xf]
      %v2054 = vld [vmem:[%s1 + $0x234] sm:$0xf]
      %v2055 = vld [vmem:[%s1 + $0x238] sm:$0xf]
      %v2056 = vld [vmem:[%s1 + $0x23c] sm:$0xf]
      %v2201 = vunpack.c.l.b16 %v1913
      %v2202 = vunpack.c.l.b16 %v1914
      %v2203 = vunpack.c.l.b16 %v1915
      %v2204 = vunpack.c.l.b16 %v1916
      %v2205 = vunpack.c.l.b16 %v1917
      %v2206 = vunpack.c.l.b16 %v1918
      %v2207 = vunpack.c.l.b16 %v1919
      %v2208 = vunpack.c.l.b16 %v1920
      %v2209 = vunpack.c.l.b16 %v1921
      %v2210 = vunpack.c.l.b16 %v1922
      %v2211 = vunpack.c.l.b16 %v1923
      %v2212 = vunpack.c.l.b16 %v1924
      %v2213 = vunpack.c.l.b16 %v1925
      %v2214 = vunpack.c.l.b16 %v1926
      %v2215 = vunpack.c.l.b16 %v1927
      %v2216 = vunpack.c.l.b16 %v1928
      %v2217 = vunpack.c.l.b16 %v1929
      %v2218 = vunpack.c.l.b16 %v1930
      %v2219 = vunpack.c.l.b16 %v1931
      %v2220 = vunpack.c.l.b16 %v1932
      %v2221 = vunpack.c.l.b16 %v1933
      %v2222 = vunpack.c.l.b16 %v1934
      %v2223 = vunpack.c.l.b16 %v1935
      %v2224 = vunpack.c.l.b16 %v1936
      %v2225 = vunpack.c.l.b16 %v1937
      %v2226 = vunpack.c.l.b16 %v1938
      %v2227 = vunpack.c.l.b16 %v1939
      %v2228 = vunpack.c.l.b16 %v1940
      %v2229 = vunpack.c.l.b16 %v1941
      %v2230 = vunpack.c.l.b16 %v1942
      %v2231 = vunpack.c.l.b16 %v1943
      %v2232 = vunpack.c.l.b16 %v1944
      %v2233 = vunpack.c.l.b16 %v1945
      %v2234 = vunpack.c.l.b16 %v1946
      %v2235 = vunpack.c.l.b16 %v1947
      %v2236 = vunpack.c.l.b16 %v1948
      %v2237 = vunpack.c.l.b16 %v1949
      %v2238 = vunpack.c.l.b16 %v1950
      %v2239 = vunpack.c.l.b16 %v1951
      %v2240 = vunpack.c.l.b16 %v1952
      %v2241 = vunpack.c.l.b16 %v1953
      %v2242 = vunpack.c.l.b16 %v1954
      %v2243 = vunpack.c.l.b16 %v1955
      %v2244 = vunpack.c.l.b16 %v1956
      %v2245 = vunpack.c.l.b16 %v1957
      %v2246 = vunpack.c.l.b16 %v1958
      %v2247 = vunpack.c.l.b16 %v1959
      %v2248 = vunpack.c.l.b16 %v1960
      %v2249 = vunpack.c.l.b16 %v1961
      %v2250 = vunpack.c.l.b16 %v1962
      %v2251 = vunpack.c.l.b16 %v1963
      %v2252 = vunpack.c.l.b16 %v1964
      %v2253 = vunpack.c.l.b16 %v1965
      %v2254 = vunpack.c.l.b16 %v1966
      %v2255 = vunpack.c.l.b16 %v1967
      %v2256 = vunpack.c.l.b16 %v1968
      %v2257 = vunpack.c.l.b16 %v1969
      %v2258 = vunpack.c.l.b16 %v1970
      %v2259 = vunpack.c.l.b16 %v1971
      %v2260 = vunpack.c.l.b16 %v1972
      %v2261 = vunpack.c.l.b16 %v1973
      %v2262 = vunpack.c.l.b16 %v1974
      %v2263 = vunpack.c.l.b16 %v1975
      %v2264 = vunpack.c.l.b16 %v1976
      %v2265 = vunpack.c.l.b16 %v1977
      %v2266 = vunpack.c.l.b16 %v1978
      %v2267 = vunpack.c.l.b16 %v1979
      %v2268 = vunpack.c.l.b16 %v1980
      %v2269 = vunpack.c.l.b16 %v1981
      %v2270 = vunpack.c.l.b16 %v1982
      %v2271 = vunpack.c.l.b16 %v1983
      %v2272 = vunpack.c.l.b16 %v1984
      %v2273 = vunpack.c.l.b16 %v1985
      %v2274 = vunpack.c.l.b16 %v1986
      %v2275 = vunpack.c.l.b16 %v1987
      %v2276 = vunpack.c.l.b16 %v1988
      %v2277 = vunpack.c.l.b16 %v1989
      %v2278 = vunpack.c.l.b16 %v1990
      %v2279 = vunpack.c.l.b16 %v1991
      %v2280 = vunpack.c.l.b16 %v1992
      %v2281 = vunpack.c.l.b16 %v1993
      %v2282 = vunpack.c.l.b16 %v1994
      %v2283 = vunpack.c.l.b16 %v1995
      %v2284 = vunpack.c.l.b16 %v1996
      %v2285 = vunpack.c.l.b16 %v1997
      %v2286 = vunpack.c.l.b16 %v1998
      %v2287 = vunpack.c.l.b16 %v1999
      %v2288 = vunpack.c.l.b16 %v2000
      %v2289 = vunpack.c.l.b16 %v2001
      %v2290 = vunpack.c.l.b16 %v2002
      %v2291 = vunpack.c.l.b16 %v2003
      %v2292 = vunpack.c.l.b16 %v2004
      %v2293 = vunpack.c.l.b16 %v2005
      %v2294 = vunpack.c.l.b16 %v2006
      %v2295 = vunpack.c.l.b16 %v2007
      %v2296 = vunpack.c.l.b16 %v2008
      %v2297 = vunpack.c.l.b16 %v2009
      %v2298 = vunpack.c.l.b16 %v2010
      %v2299 = vunpack.c.l.b16 %v2011
      %v2300 = vunpack.c.l.b16 %v2012
      %v2301 = vunpack.c.l.b16 %v2013
      %v2302 = vunpack.c.l.b16 %v2014
      %v2303 = vunpack.c.l.b16 %v2015
      %v2304 = vunpack.c.l.b16 %v2016
      %v2305 = vunpack.c.l.b16 %v2017
      %v2306 = vunpack.c.l.b16 %v2018
      %v2307 = vunpack.c.l.b16 %v2019
      %v2308 = vunpack.c.l.b16 %v2020
      %v2309 = vunpack.c.l.b16 %v2021
      %v2310 = vunpack.c.l.b16 %v2022
      %v2311 = vunpack.c.l.b16 %v2023
      %v2312 = vunpack.c.l.b16 %v2024
      %v2313 = vunpack.c.l.b16 %v2025
      %v2314 = vunpack.c.l.b16 %v2026
      %v2315 = vunpack.c.l.b16 %v2027
      %v2316 = vunpack.c.l.b16 %v2028
      %v2317 = vunpack.c.l.b16 %v2029
      %v2318 = vunpack.c.l.b16 %v2030
      %v2319 = vunpack.c.l.b16 %v2031
      %v2320 = vunpack.c.l.b16 %v2032
      %v2321 = vunpack.c.l.b16 %v2033
      %v2322 = vunpack.c.l.b16 %v2034
      %v2323 = vunpack.c.l.b16 %v2035
      %v2324 = vunpack.c.l.b16 %v2036
      %v2325 = vunpack.c.l.b16 %v2037
      %v2326 = vunpack.c.l.b16 %v2038
      %v2327 = vunpack.c.l.b16 %v2039
      %v2328 = vunpack.c.l.b16 %v2040
      %v2329 = vunpack.c.l.b16 %v2041
      %v2330 = vunpack.c.l.b16 %v2042
      %v2331 = vunpack.c.l.b16 %v2043
      %v2332 = vunpack.c.l.b16 %v2044
      %v2333 = vunpack.c.l.b16 %v2045
      %v2334 = vunpack.c.l.b16 %v2046
      %v2335 = vunpack.c.l.b16 %v2047
      %v2336 = vunpack.c.l.b16 %v2048
      %v2337 = vunpack.c.l.b16 %v2049
      %v2338 = vunpack.c.l.b16 %v2050
      %v2339 = vunpack.c.l.b16 %v2051
      %v2340 = vunpack.c.l.b16 %v2052
      %v2341 = vunpack.c.l.b16 %v2053
      %v2342 = vunpack.c.l.b16 %v2054
      %v2343 = vunpack.c.l.b16 %v2055
      %v2344 = vunpack.c.l.b16 %v2056
      %v2345 = vpack.c.b16 %v2202, %v2201
      %v2346 = vpack.c.b16 %v2204, %v2203
      %v2347 = vpack.c.b16 %v2206, %v2205
      %v2348 = vpack.c.b16 %v2208, %v2207
      %v2349 = vpack.c.b16 %v2210, %v2209
      %v2350 = vpack.c.b16 %v2212, %v2211
      %v2351 = vpack.c.b16 %v2214, %v2213
      %v2352 = vpack.c.b16 %v2216, %v2215
      %v2353 = vpack.c.b16 %v2218, %v2217
      %v2354 = vpack.c.b16 %v2220, %v2219
      %v2355 = vpack.c.b16 %v2222, %v2221
      %v2356 = vpack.c.b16 %v2224, %v2223
      %v2357 = vpack.c.b16 %v2226, %v2225
      %v2358 = vpack.c.b16 %v2228, %v2227
      %v2359 = vpack.c.b16 %v2230, %v2229
      %v2360 = vpack.c.b16 %v2232, %v2231
      %v2361 = vpack.c.b16 %v2234, %v2233
      %v2362 = vpack.c.b16 %v2236, %v2235
      %v2363 = vpack.c.b16 %v2238, %v2237
      %v2364 = vpack.c.b16 %v2240, %v2239
      %v2365 = vpack.c.b16 %v2242, %v2241
      %v2366 = vpack.c.b16 %v2244, %v2243
      %v2367 = vpack.c.b16 %v2246, %v2245
      %v2368 = vpack.c.b16 %v2248, %v2247
      %v2369 = vpack.c.b16 %v2250, %v2249
      %v2370 = vpack.c.b16 %v2252, %v2251
      %v2371 = vpack.c.b16 %v2254, %v2253
      %v2372 = vpack.c.b16 %v2256, %v2255
      %v2373 = vpack.c.b16 %v2258, %v2257
      %v2374 = vpack.c.b16 %v2260, %v2259
      %v2375 = vpack.c.b16 %v2262, %v2261
      %v2376 = vpack.c.b16 %v2264, %v2263
      %v2377 = vpack.c.b16 %v2266, %v2265
      %v2378 = vpack.c.b16 %v2268, %v2267
      %v2379 = vpack.c.b16 %v2270, %v2269
      %v2380 = vpack.c.b16 %v2272, %v2271
      %v2381 = vpack.c.b16 %v2274, %v2273
      %v2382 = vpack.c.b16 %v2276, %v2275
      %v2383 = vpack.c.b16 %v2278, %v2277
      %v2384 = vpack.c.b16 %v2280, %v2279
      %v2385 = vpack.c.b16 %v2282, %v2281
      %v2386 = vpack.c.b16 %v2284, %v2283
      %v2387 = vpack.c.b16 %v2286, %v2285
      %v2388 = vpack.c.b16 %v2288, %v2287
      %v2389 = vpack.c.b16 %v2290, %v2289
      %v2390 = vpack.c.b16 %v2292, %v2291
      %v2391 = vpack.c.b16 %v2294, %v2293
      %v2392 = vpack.c.b16 %v2296, %v2295
      %v2393 = vpack.c.b16 %v2298, %v2297
      %v2394 = vpack.c.b16 %v2300, %v2299
      %v2395 = vpack.c.b16 %v2302, %v2301
      %v2396 = vpack.c.b16 %v2304, %v2303
      %v2397 = vpack.c.b16 %v2306, %v2305
      %v2398 = vpack.c.b16 %v2308, %v2307
      %v2399 = vpack.c.b16 %v2310, %v2309
      %v2400 = vpack.c.b16 %v2312, %v2311
      %v2401 = vpack.c.b16 %v2314, %v2313
      %v2402 = vpack.c.b16 %v2316, %v2315
      %v2403 = vpack.c.b16 %v2318, %v2317
      %v2404 = vpack.c.b16 %v2320, %v2319
      %v2405 = vpack.c.b16 %v2322, %v2321
      %v2406 = vpack.c.b16 %v2324, %v2323
      %v2407 = vpack.c.b16 %v2326, %v2325
      %v2408 = vpack.c.b16 %v2328, %v2327
      %v2409 = vpack.c.b16 %v2330, %v2329
      %v2410 = vpack.c.b16 %v2332, %v2331
      %v2411 = vpack.c.b16 %v2334, %v2333
      %v2412 = vpack.c.b16 %v2336, %v2335
      %v2413 = vpack.c.b16 %v2338, %v2337
      %v2414 = vpack.c.b16 %v2340, %v2339
      %v2415 = vpack.c.b16 %v2342, %v2341
      %v2416 = vpack.c.b16 %v2344, %v2343
      %2489 = vmatprep.subr.bf16.mxu0 0
      %2490 = vmatpush1.bf16.msra.mxu0 %v2345
      %2491 = vmatprep.subr.bf16.mxu0 0
      %2492 = vmatpush1.bf16.msra.mxu0 %v2346
      %2493 = vmatprep.subr.bf16.mxu0 0
      %2494 = vmatpush1.bf16.msra.mxu0 %v2347
      %2495 = vmatprep.subr.bf16.mxu0 0
      %2496 = vmatpush1.bf16.msra.mxu0 %v2348
      %2497 = vmatprep.subr.bf16.mxu0 0
      %2498 = vmatpush1.bf16.msra.mxu0 %v2349
      %2499 = vmatprep.subr.bf16.mxu0 0
      %2500 = vmatpush1.bf16.msra.mxu0 %v2350
      %2501 = vmatprep.subr.bf16.mxu0 0
      %2502 = vmatpush1.bf16.msra.mxu0 %v2351
      %2503 = vmatprep.subr.bf16.mxu0 0
      %2504 = vmatpush1.bf16.msra.mxu0 %v2352
      %2505 = vmatprep.subr.bf16.mxu0 0
      %2506 = vmatpush1.bf16.msra.mxu0 %v2353
      %2507 = vmatprep.subr.bf16.mxu0 0
      %2508 = vmatpush1.bf16.msra.mxu0 %v2354
      %2509 = vmatprep.subr.bf16.mxu0 0
      %2510 = vmatpush1.bf16.msra.mxu0 %v2355
      %2511 = vmatprep.subr.bf16.mxu0 0
      %2512 = vmatpush1.bf16.msra.mxu0 %v2356
      %2513 = vmatprep.subr.bf16.mxu0 0
      %2514 = vmatpush1.bf16.msra.mxu0 %v2357
      %2515 = vmatprep.subr.bf16.mxu0 0
      %2516 = vmatpush1.bf16.msra.mxu0 %v2358
      %2517 = vmatprep.subr.bf16.mxu0 0
      %2518 = vmatpush1.bf16.msra.mxu0 %v2359
      %2519 = vmatprep.subr.bf16.mxu0 0
      %2520 = vmatpush1.bf16.msra.mxu0 %v2360
      %2521 = vmatprep.mubr.bf16.mxu0 %v1770
      %2522 = vmatmul.mubr.bf16.gmra.mrb[0].mxu0 %v1769
      %v2523 = vpop.f32.mrb[0].mxu0
      %v2524 = vadd.f32 0.0, %v2523
      %v2525 = vpop.f32.mrb[0].mxu0
      %v2526 = vpop.f32.mrb[0].mxu0
      %v2527 = vadd.f32 0.0, %v2526
      %v2528 = vpop.f32.mrb[0].mxu0
      %2529 = vmatprep.mubr.bf16.mxu0 %v1779
      %2530 = vmatmul.mubr.bf16.gmra.mrb[0].mxu0 %v1778
      %v2531 = vpop.f32.mrb[0].mxu0
      %v2532 = vadd.f32 0.0, %v2531
      %v2533 = vpop.f32.mrb[0].mxu0
      %v2534 = vpop.f32.mrb[0].mxu0
      %v2535 = vadd.f32 0.0, %v2534
      %v2536 = vpop.f32.mrb[0].mxu0
      %2537 = vmatprep.mubr.bf16.mxu0 %v1788
      %2538 = vmatmul.mubr.bf16.gmra.mrb[0].mxu0 %v1787
      %v2539 = vpop.f32.mrb[0].mxu0
      %v2540 = vadd.f32 0.0, %v2539
      %v2541 = vpop.f32.mrb[0].mxu0
      %v2542 = vpop.f32.mrb[0].mxu0
      %v2543 = vadd.f32 0.0, %v2542
      %v2544 = vpop.f32.mrb[0].mxu0
      %2545 = vmatprep.mubr.bf16.mxu0 %v1797
      %2546 = vmatmul.mubr.bf16.gmra.mrb[0].mxu0 %v1796
      %v2547 = vpop.f32.mrb[0].mxu0
      %v2548 = vadd.f32 0.0, %v2547
      %v2549 = vpop.f32.mrb[0].mxu0
      %v2550 = vpop.f32.mrb[0].mxu0
      %v2551 = vadd.f32 0.0, %v2550
      %v2552 = vpop.f32.mrb[0].mxu0
      %2553 = vmatprep.mubr.bf16.mxu0 %v1806
      %2554 = vmatmul.mubr.bf16.gmra.mrb[0].mxu0 %v1805
      %v2555 = vpop.f32.mrb[0].mxu0
      %v2556 = vadd.f32 0.0, %v2555
      %v2557 = vpop.f32.mrb[0].mxu0
      %v2558 = vpop.f32.mrb[0].mxu0
      %v2559 = vadd.f32 0.0, %v2558
      %v2560 = vpop.f32.mrb[0].mxu0
      %2561 = vmatprep.mubr.bf16.mxu0 %v1815
      %2562 = vmatmul.mubr.bf16.gmra.mrb[0].mxu0 %v1814
      %v2563 = vpop.f32.mrb[0].mxu0
      %v2564 = vadd.f32 0.0, %v2563
      %v2565 = vpop.f32.mrb[0].mxu0
      %v2566 = vpop.f32.mrb[0].mxu0
      %v2567 = vadd.f32 0.0, %v2566
      %v2568 = vpop.f32.mrb[0].mxu0
      %2569 = vmatprep.mubr.bf16.mxu0 %v1824
      %2570 = vmatmul.mubr.bf16.gmra.mrb[0].mxu0 %v1823
      %v2571 = vpop.f32.mrb[0].mxu0
      %v2572 = vadd.f32 0.0, %v2571
      %v2573 = vpop.f32.mrb[0].mxu0
      %v2574 = vpop.f32.mrb[0].mxu0
      %v2575 = vadd.f32 0.0, %v2574
      %v2576 = vpop.f32.mrb[0].mxu0
      %2577 = vmatprep.mubr.bf16.mxu0 %v1833
      %2578 = vmatmul.mubr.bf16.gmra.mrb[0].mxu0 %v1832
      %v2579 = vpop.f32.mrb[0].mxu0
      %v2580 = vadd.f32 0.0, %v2579
      %v2581 = vpop.f32.mrb[0].mxu0
      %v2582 = vpop.f32.mrb[0].mxu0
      %v2583 = vadd.f32 0.0, %v2582
      %v2584 = vpop.f32.mrb[0].mxu0
      %2585 = vmatprep.mubr.bf16.mxu0 %v1842
      %2586 = vmatmul.mubr.bf16.gmra.mrb[0].mxu0 %v1841
      %v2587 = vpop.f32.mrb[0].mxu0
      %v2588 = vadd.f32 0.0, %v2587
      %v2589 = vpop.f32.mrb[0].mxu0
      %v2590 = vpop.f32.mrb[0].mxu0
      %v2591 = vadd.f32 0.0, %v2590
      %v2592 = vpop.f32.mrb[0].mxu0
      %2593 = vmatprep.mubr.bf16.mxu0 %v1851
      %2594 = vmatmul.mubr.bf16.gmra.mrb[0].mxu0 %v1850
      %v2595 = vpop.f32.mrb[0].mxu0
      %v2596 = vadd.f32 0.0, %v2595
      %v2597 = vpop.f32.mrb[0].mxu0
      %v2598 = vpop.f32.mrb[0].mxu0
      %v2599 = vadd.f32 0.0, %v2598
      %v2600 = vpop.f32.mrb[0].mxu0
      %2601 = vmatprep.mubr.bf16.mxu0 %v1860
      %2602 = vmatmul.mubr.bf16.gmra.mrb[0].mxu0 %v1859
      %v2603 = vpop.f32.mrb[0].mxu0
      %v2604 = vadd.f32 0.0, %v2603
      %v2605 = vpop.f32.mrb[0].mxu0
      %v2606 = vpop.f32.mrb[0].mxu0
      %v2607 = vadd.f32 0.0, %v2606
      %v2608 = vpop.f32.mrb[0].mxu0
      %2609 = vmatprep.mubr.bf16.mxu0 %v1869
      %2610 = vmatmul.mubr.bf16.gmra.mrb[0].mxu0 %v1868
      %v2611 = vpop.f32.mrb[0].mxu0
      %v2612 = vadd.f32 0.0, %v2611
      %v2613 = vpop.f32.mrb[0].mxu0
      %v2614 = vpop.f32.mrb[0].mxu0
      %v2615 = vadd.f32 0.0, %v2614
      %v2616 = vpop.f32.mrb[0].mxu0
      %2617 = vmatprep.mubr.bf16.mxu0 %v1878
      %2618 = vmatmul.mubr.bf16.gmra.mrb[0].mxu0 %v1877
      %v2619 = vpop.f32.mrb[0].mxu0
      %v2620 = vadd.f32 0.0, %v2619
      %v2621 = vpop.f32.mrb[0].mxu0
      %v2622 = vpop.f32.mrb[0].mxu0
      %v2623 = vadd.f32 0.0, %v2622
      %v2624 = vpop.f32.mrb[0].mxu0
      %2625 = vmatprep.mubr.bf16.mxu0 %v1887
      %2626 = vmatmul.mubr.bf16.gmra.mrb[0].mxu0 %v1886
      %v2627 = vpop.f32.mrb[0].mxu0
      %v2628 = vadd.f32 0.0, %v2627
      %v2629 = vpop.f32.mrb[0].mxu0
      %v2630 = vpop.f32.mrb[0].mxu0
      %v2631 = vadd.f32 0.0, %v2630
      %v2632 = vpop.f32.mrb[0].mxu0
      %2633 = vmatprep.mubr.bf16.mxu0 %v1896
      %2634 = vmatmul.mubr.bf16.gmra.mrb[0].mxu0 %v1895
      %v2635 = vpop.f32.mrb[0].mxu0
      %v2636 = vadd.f32 0.0, %v2635
      %v2637 = vpop.f32.mrb[0].mxu0
      %v2638 = vpop.f32.mrb[0].mxu0
      %v2639 = vadd.f32 0.0, %v2638
      %v2640 = vpop.f32.mrb[0].mxu0
      %2641 = vmatprep.mubr.bf16.mxu0 %v1905
      %2642 = vmatmul.mubr.bf16.gmra.mrb[0].mxu0 %v1904
      %v2643 = vpop.f32.mrb[0].mxu0
      %v2644 = vadd.f32 0.0, %v2643
      %v2645 = vpop.f32.mrb[0].mxu0
      %v2646 = vpop.f32.mrb[0].mxu0
      %v2647 = vadd.f32 0.0, %v2646
      %v2648 = vpop.f32.mrb[0].mxu0
      %2649 = vdwg.mxu0
      %2650 = vmatprep.subr.bf16.mxu0 0
      %2651 = vmatpush1.bf16.msra.mxu0 %v2361
      %2652 = vmatprep.subr.bf16.mxu0 0
      %2653 = vmatpush1.bf16.msra.mxu0 %v2362
      %2654 = vmatprep.subr.bf16.mxu0 0
      %2655 = vmatpush1.bf16.msra.mxu0 %v2363
      %2656 = vmatprep.subr.bf16.mxu0 0
      %2657 = vmatpush1.bf16.msra.mxu0 %v2364
      %2658 = vmatprep.subr.bf16.mxu0 0
      %2659 = vmatpush1.bf16.msra.mxu0 %v2365
      %2660 = vmatprep.subr.bf16.mxu0 0
      %2661 = vmatpush1.bf16.msra.mxu0 %v2366
      %2662 = vmatprep.subr.bf16.mxu0 0
      %2663 = vmatpush1.bf16.msra.mxu0 %v2367
      %2664 = vmatprep.subr.bf16.mxu0 0
      %2665 = vmatpush1.bf16.msra.mxu0 %v2368
      %2666 = vmatprep.subr.bf16.mxu0 0
      %2667 = vmatpush1.bf16.msra.mxu0 %v2369
      %2668 = vmatprep.subr.bf16.mxu0 0
      %2669 = vmatpush1.bf16.msra.mxu0 %v2370
      %2670 = vmatprep.subr.bf16.mxu0 0
      %2671 = vmatpush1.bf16.msra.mxu0 %v2371
      %2672 = vmatprep.subr.bf16.mxu0 0
      %2673 = vmatpush1.bf16.msra.mxu0 %v2372
      %2674 = vmatprep.subr.bf16.mxu0 0
      %2675 = vmatpush1.bf16.msra.mxu0 %v2373
      %2676 = vmatprep.subr.bf16.mxu0 0
      %2677 = vmatpush1.bf16.msra.mxu0 %v2374
      %2678 = vmatprep.subr.bf16.mxu0 0
      %2679 = vmatpush1.bf16.msra.mxu0 %v2375
      %2680 = vmatprep.subr.bf16.mxu0 0
      %2681 = vmatpush1.bf16.msra.mxu0 %v2376
      %2682 = vmatprep.mubr.bf16.mxu0 %v1772
      %2683 = vmatmul.mubr.bf16.gmra.mrb[0].mxu0 %v1771
      %v2684 = vpop.f32.mrb[0].mxu0
      %v2685 = vadd.f32 %v2524, %v2684
      %v2686 = vpop.f32.mrb[0].mxu0
      %v2687 = vpop.f32.mrb[0].mxu0
      %v2688 = vadd.f32 %v2527, %v2687
      %v2689 = vpop.f32.mrb[0].mxu0
      %2690 = vmatprep.mubr.bf16.mxu0 %v1781
      %2691 = vmatmul.mubr.bf16.gmra.mrb[0].mxu0 %v1780
      %v2692 = vpop.f32.mrb[0].mxu0
      %v2693 = vadd.f32 %v2532, %v2692
      %v2694 = vpop.f32.mrb[0].mxu0
      %v2695 = vpop.f32.mrb[0].mxu0
      %v2696 = vadd.f32 %v2535, %v2695
      %v2697 = vpop.f32.mrb[0].mxu0
      %2698 = vmatprep.mubr.bf16.mxu0 %v1790
      %2699 = vmatmul.mubr.bf16.gmra.mrb[0].mxu0 %v1789
      %v2700 = vpop.f32.mrb[0].mxu0
      %v2701 = vadd.f32 %v2540, %v2700
      %v2702 = vpop.f32.mrb[0].mxu0
      %v2703 = vpop.f32.mrb[0].mxu0
      %v2704 = vadd.f32 %v2543, %v2703
      %v2705 = vpop.f32.mrb[0].mxu0
      %2706 = vmatprep.mubr.bf16.mxu0 %v1799
      %2707 = vmatmul.mubr.bf16.gmra.mrb[0].mxu0 %v1798
      %v2708 = vpop.f32.mrb[0].mxu0
      %v2709 = vadd.f32 %v2548, %v2708
      %v2710 = vpop.f32.mrb[0].mxu0
      %v2711 = vpop.f32.mrb[0].mxu0
      %v2712 = vadd.f32 %v2551, %v2711
      %v2713 = vpop.f32.mrb[0].mxu0
      %2714 = vmatprep.mubr.bf16.mxu0 %v1808
      %2715 = vmatmul.mubr.bf16.gmra.mrb[0].mxu0 %v1807
      %v2716 = vpop.f32.mrb[0].mxu0
      %v2717 = vadd.f32 %v2556, %v2716
      %v2718 = vpop.f32.mrb[0].mxu0
      %v2719 = vpop.f32.mrb[0].mxu0
      %v2720 = vadd.f32 %v2559, %v2719
      %v2721 = vpop.f32.mrb[0].mxu0
      %2722 = vmatprep.mubr.bf16.mxu0 %v1817
      %2723 = vmatmul.mubr.bf16.gmra.mrb[0].mxu0 %v1816
      %v2724 = vpop.f32.mrb[0].mxu0
      %v2725 = vadd.f32 %v2564, %v2724
      %v2726 = vpop.f32.mrb[0].mxu0
      %v2727 = vpop.f32.mrb[0].mxu0
      %v2728 = vadd.f32 %v2567, %v2727
      %v2729 = vpop.f32.mrb[0].mxu0
      %2730 = vmatprep.mubr.bf16.mxu0 %v1826
      %2731 = vmatmul.mubr.bf16.gmra.mrb[0].mxu0 %v1825
      %v2732 = vpop.f32.mrb[0].mxu0
      %v2733 = vadd.f32 %v2572, %v2732
      %v2734 = vpop.f32.mrb[0].mxu0
      %v2735 = vpop.f32.mrb[0].mxu0
      %v2736 = vadd.f32 %v2575, %v2735
      %v2737 = vpop.f32.mrb[0].mxu0
      %2738 = vmatprep.mubr.bf16.mxu0 %v1835
      %2739 = vmatmul.mubr.bf16.gmra.mrb[0].mxu0 %v1834
      %v2740 = vpop.f32.mrb[0].mxu0
      %v2741 = vadd.f32 %v2580, %v2740
      %v2742 = vpop.f32.mrb[0].mxu0
      %v2743 = vpop.f32.mrb[0].mxu0
      %v2744 = vadd.f32 %v2583, %v2743
      %v2745 = vpop.f32.mrb[0].mxu0
      %2746 = vmatprep.mubr.bf16.mxu0 %v1844
      %2747 = vmatmul.mubr.bf16.gmra.mrb[0].mxu0 %v1843
      %v2748 = vpop.f32.mrb[0].mxu0
      %v2749 = vadd.f32 %v2588, %v2748
      %v2750 = vpop.f32.mrb[0].mxu0
      %v2751 = vpop.f32.mrb[0].mxu0
      %v2752 = vadd.f32 %v2591, %v2751
      %v2753 = vpop.f32.mrb[0].mxu0
      %2754 = vmatprep.mubr.bf16.mxu0 %v1853
      %2755 = vmatmul.mubr.bf16.gmra.mrb[0].mxu0 %v1852
      %v2756 = vpop.f32.mrb[0].mxu0
      %v2757 = vadd.f32 %v2596, %v2756
      %v2758 = vpop.f32.mrb[0].mxu0
      %v2759 = vpop.f32.mrb[0].mxu0
      %v2760 = vadd.f32 %v2599, %v2759
      %v2761 = vpop.f32.mrb[0].mxu0
      %2762 = vmatprep.mubr.bf16.mxu0 %v1862
      %2763 = vmatmul.mubr.bf16.gmra.mrb[0].mxu0 %v1861
      %v2764 = vpop.f32.mrb[0].mxu0
      %v2765 = vadd.f32 %v2604, %v2764
      %v2766 = vpop.f32.mrb[0].mxu0
      %v2767 = vpop.f32.mrb[0].mxu0
      %v2768 = vadd.f32 %v2607, %v2767
      %v2769 = vpop.f32.mrb[0].mxu0
      %2770 = vmatprep.mubr.bf16.mxu0 %v1871
      %2771 = vmatmul.mubr.bf16.gmra.mrb[0].mxu0 %v1870
      %v2772 = vpop.f32.mrb[0].mxu0
      %v2773 = vadd.f32 %v2612, %v2772
      %v2774 = vpop.f32.mrb[0].mxu0
      %v2775 = vpop.f32.mrb[0].mxu0
      %v2776 = vadd.f32 %v2615, %v2775
      %v2777 = vpop.f32.mrb[0].mxu0
      %2778 = vmatprep.mubr.bf16.mxu0 %v1880
      %2779 = vmatmul.mubr.bf16.gmra.mrb[0].mxu0 %v1879
      %v2780 = vpop.f32.mrb[0].mxu0
      %v2781 = vadd.f32 %v2620, %v2780
      %v2782 = vpop.f32.mrb[0].mxu0
      %v2783 = vpop.f32.mrb[0].mxu0
      %v2784 = vadd.f32 %v2623, %v2783
      %v2785 = vpop.f32.mrb[0].mxu0
      %2786 = vmatprep.mubr.bf16.mxu0 %v1889
      %2787 = vmatmul.mubr.bf16.gmra.mrb[0].mxu0 %v1888
      %v2788 = vpop.f32.mrb[0].mxu0
      %v2789 = vadd.f32 %v2628, %v2788
      %v2790 = vpop.f32.mrb[0].mxu0
      %v2791 = vpop.f32.mrb[0].mxu0
      %v2792 = vadd.f32 %v2631, %v2791
      %v2793 = vpop.f32.mrb[0].mxu0
      %2794 = vmatprep.mubr.bf16.mxu0 %v1898
      %2795 = vmatmul.mubr.bf16.gmra.mrb[0].mxu0 %v1897
      %v2796 = vpop.f32.mrb[0].mxu0
      %v2797 = vadd.f32 %v2636, %v2796
      %v2798 = vpop.f32.mrb[0].mxu0
      %v2799 = vpop.f32.mrb[0].mxu0
      %v2800 = vadd.f32 %v2639, %v2799
      %v2801 = vpop.f32.mrb[0].mxu0
      %2802 = vmatprep.mubr.bf16.mxu0 %v1907
      %2803 = vmatmul.mubr.bf16.gmra.mrb[0].mxu0 %v1906
      %v2804 = vpop.f32.mrb[0].mxu0
      %v2805 = vadd.f32 %v2644, %v2804
      %v2806 = vpop.f32.mrb[0].mxu0
      %v2807 = vpop.f32.mrb[0].mxu0
      %v2808 = vadd.f32 %v2647, %v2807
      %v2809 = vpop.f32.mrb[0].mxu0
      %2810 = vdwg.mxu0
      %2811 = vmatprep.subr.bf16.mxu0 0
      %2812 = vmatpush1.bf16.msra.mxu0 %v2377
      %2813 = vmatprep.subr.bf16.mxu0 0
      %2814 = vmatpush1.bf16.msra.mxu0 %v2378
      %2815 = vmatprep.subr.bf16.mxu0 0
      %2816 = vmatpush1.bf16.msra.mxu0 %v2379
      %2817 = vmatprep.subr.bf16.mxu0 0
      %2818 = vmatpush1.bf16.msra.mxu0 %v2380
      %2819 = vmatprep.subr.bf16.mxu0 0
      %2820 = vmatpush1.bf16.msra.mxu0 %v2381
      %2821 = vmatprep.subr.bf16.mxu0 0
      %2822 = vmatpush1.bf16.msra.mxu0 %v2382
      %2823 = vmatprep.subr.bf16.mxu0 0
      %2824 = vmatpush1.bf16.msra.mxu0 %v2383
      %2825 = vmatprep.subr.bf16.mxu0 0
      %2826 = vmatpush1.bf16.msra.mxu0 %v2384
      %2827 = vmatprep.subr.bf16.mxu0 0
      %2828 = vmatpush1.bf16.msra.mxu0 %v2385
      %2829 = vmatprep.subr.bf16.mxu0 0
      %2830 = vmatpush1.bf16.msra.mxu0 %v2386
      %2831 = vmatprep.subr.bf16.mxu0 0
      %2832 = vmatpush1.bf16.msra.mxu0 %v2387
      %2833 = vmatprep.subr.bf16.mxu0 0
      %2834 = vmatpush1.bf16.msra.mxu0 %v2388
      %2835 = vmatprep.subr.bf16.mxu0 0
      %2836 = vmatpush1.bf16.msra.mxu0 %v2389
      %2837 = vmatprep.subr.bf16.mxu0 0
      %2838 = vmatpush1.bf16.msra.mxu0 %v2390
      %2839 = vmatprep.subr.bf16.mxu0 0
      %2840 = vmatpush1.bf16.msra.mxu0 %v2391
      %2841 = vmatprep.subr.bf16.mxu0 0
      %2842 = vmatpush1.bf16.msra.mxu0 %v2392
      %2843 = vmatprep.mubr.bf16.mxu0 %v1774
      %2844 = vmatmul.mubr.bf16.gmra.mrb[0].mxu0 %v1773
      %v2845 = vpop.f32.mrb[0].mxu0
      %v2846 = vadd.f32 %v2685, %v2845
      %v2847 = vpop.f32.mrb[0].mxu0
      %v2848 = vpop.f32.mrb[0].mxu0
      %v2849 = vadd.f32 %v2688, %v2848
      %v2850 = vpop.f32.mrb[0].mxu0
      %2851 = vmatprep.mubr.bf16.mxu0 %v1783
      %2852 = vmatmul.mubr.bf16.gmra.mrb[0].mxu0 %v1782
      %v2853 = vpop.f32.mrb[0].mxu0
      %v2854 = vadd.f32 %v2693, %v2853
      %v2855 = vpop.f32.mrb[0].mxu0
      %v2856 = vpop.f32.mrb[0].mxu0
      %v2857 = vadd.f32 %v2696, %v2856
      %v2858 = vpop.f32.mrb[0].mxu0
      %2859 = vmatprep.mubr.bf16.mxu0 %v1792
      %2860 = vmatmul.mubr.bf16.gmra.mrb[0].mxu0 %v1791
      %v2861 = vpop.f32.mrb[0].mxu0
      %v2862 = vadd.f32 %v2701, %v2861
      %v2863 = vpop.f32.mrb[0].mxu0
      %v2864 = vpop.f32.mrb[0].mxu0
      %v2865 = vadd.f32 %v2704, %v2864
      %v2866 = vpop.f32.mrb[0].mxu0
      %2867 = vmatprep.mubr.bf16.mxu0 %v1801
      %2868 = vmatmul.mubr.bf16.gmra.mrb[0].mxu0 %v1800
      %v2869 = vpop.f32.mrb[0].mxu0
      %v2870 = vadd.f32 %v2709, %v2869
      %v2871 = vpop.f32.mrb[0].mxu0
      %v2872 = vpop.f32.mrb[0].mxu0
      %v2873 = vadd.f32 %v2712, %v2872
      %v2874 = vpop.f32.mrb[0].mxu0
      %2875 = vmatprep.mubr.bf16.mxu0 %v1810
      %2876 = vmatmul.mubr.bf16.gmra.mrb[0].mxu0 %v1809
      %v2877 = vpop.f32.mrb[0].mxu0
      %v2878 = vadd.f32 %v2717, %v2877
      %v2879 = vpop.f32.mrb[0].mxu0
      %v2880 = vpop.f32.mrb[0].mxu0
      %v2881 = vadd.f32 %v2720, %v2880
      %v2882 = vpop.f32.mrb[0].mxu0
      %2883 = vmatprep.mubr.bf16.mxu0 %v1819
      %2884 = vmatmul.mubr.bf16.gmra.mrb[0].mxu0 %v1818
      %v2885 = vpop.f32.mrb[0].mxu0
      %v2886 = vadd.f32 %v2725, %v2885
      %v2887 = vpop.f32.mrb[0].mxu0
      %v2888 = vpop.f32.mrb[0].mxu0
      %v2889 = vadd.f32 %v2728, %v2888
      %v2890 = vpop.f32.mrb[0].mxu0
      %2891 = vmatprep.mubr.bf16.mxu0 %v1828
      %2892 = vmatmul.mubr.bf16.gmra.mrb[0].mxu0 %v1827
      %v2893 = vpop.f32.mrb[0].mxu0
      %v2894 = vadd.f32 %v2733, %v2893
      %v2895 = vpop.f32.mrb[0].mxu0
      %v2896 = vpop.f32.mrb[0].mxu0
      %v2897 = vadd.f32 %v2736, %v2896
      %v2898 = vpop.f32.mrb[0].mxu0
      %2899 = vmatprep.mubr.bf16.mxu0 %v1837
      %2900 = vmatmul.mubr.bf16.gmra.mrb[0].mxu0 %v1836
      %v2901 = vpop.f32.mrb[0].mxu0
      %v2902 = vadd.f32 %v2741, %v2901
      %v2903 = vpop.f32.mrb[0].mxu0
      %v2904 = vpop.f32.mrb[0].mxu0
      %v2905 = vadd.f32 %v2744, %v2904
      %v2906 = vpop.f32.mrb[0].mxu0
      %2907 = vmatprep.mubr.bf16.mxu0 %v1846
      %2908 = vmatmul.mubr.bf16.gmra.mrb[0].mxu0 %v1845
      %v2909 = vpop.f32.mrb[0].mxu0
      %v2910 = vadd.f32 %v2749, %v2909
      %v2911 = vpop.f32.mrb[0].mxu0
      %v2912 = vpop.f32.mrb[0].mxu0
      %v2913 = vadd.f32 %v2752, %v2912
      %v2914 = vpop.f32.mrb[0].mxu0
      %2915 = vmatprep.mubr.bf16.mxu0 %v1855
      %2916 = vmatmul.mubr.bf16.gmra.mrb[0].mxu0 %v1854
      %v2917 = vpop.f32.mrb[0].mxu0
      %v2918 = vadd.f32 %v2757, %v2917
      %v2919 = vpop.f32.mrb[0].mxu0
      %v2920 = vpop.f32.mrb[0].mxu0
      %v2921 = vadd.f32 %v2760, %v2920
      %v2922 = vpop.f32.mrb[0].mxu0
      %2923 = vmatprep.mubr.bf16.mxu0 %v1864
      %2924 = vmatmul.mubr.bf16.gmra.mrb[0].mxu0 %v1863
      %v2925 = vpop.f32.mrb[0].mxu0
      %v2926 = vadd.f32 %v2765, %v2925
      %v2927 = vpop.f32.mrb[0].mxu0
      %v2928 = vpop.f32.mrb[0].mxu0
      %v2929 = vadd.f32 %v2768, %v2928
      %v2930 = vpop.f32.mrb[0].mxu0
      %2931 = vmatprep.mubr.bf16.mxu0 %v1873
      %2932 = vmatmul.mubr.bf16.gmra.mrb[0].mxu0 %v1872
      %v2933 = vpop.f32.mrb[0].mxu0
      %v2934 = vadd.f32 %v2773, %v2933
      %v2935 = vpop.f32.mrb[0].mxu0
      %v2936 = vpop.f32.mrb[0].mxu0
      %v2937 = vadd.f32 %v2776, %v2936
      %v2938 = vpop.f32.mrb[0].mxu0
      %2939 = vmatprep.mubr.bf16.mxu0 %v1882
      %2940 = vmatmul.mubr.bf16.gmra.mrb[0].mxu0 %v1881
      %v2941 = vpop.f32.mrb[0].mxu0
      %v2942 = vadd.f32 %v2781, %v2941
      %v2943 = vpop.f32.mrb[0].mxu0
      %v2944 = vpop.f32.mrb[0].mxu0
      %v2945 = vadd.f32 %v2784, %v2944
      %v2946 = vpop.f32.mrb[0].mxu0
      %2947 = vmatprep.mubr.bf16.mxu0 %v1891
      %2948 = vmatmul.mubr.bf16.gmra.mrb[0].mxu0 %v1890
      %v2949 = vpop.f32.mrb[0].mxu0
      %v2950 = vadd.f32 %v2789, %v2949
      %v2951 = vpop.f32.mrb[0].mxu0
      %v2952 = vpop.f32.mrb[0].mxu0
      %v2953 = vadd.f32 %v2792, %v2952
      %v2954 = vpop.f32.mrb[0].mxu0
      %2955 = vmatprep.mubr.bf16.mxu0 %v1900
      %2956 = vmatmul.mubr.bf16.gmra.mrb[0].mxu0 %v1899
      %v2957 = vpop.f32.mrb[0].mxu0
      %v2958 = vadd.f32 %v2797, %v2957
      %v2959 = vpop.f32.mrb[0].mxu0
      %v2960 = vpop.f32.mrb[0].mxu0
      %v2961 = vadd.f32 %v2800, %v2960
      %v2962 = vpop.f32.mrb[0].mxu0
      %2963 = vmatprep.mubr.bf16.mxu0 %v1909
      %2964 = vmatmul.mubr.bf16.gmra.mrb[0].mxu0 %v1908
      %v2965 = vpop.f32.mrb[0].mxu0
      %v2966 = vadd.f32 %v2805, %v2965
      %v2967 = vpop.f32.mrb[0].mxu0
      %v2968 = vpop.f32.mrb[0].mxu0
      %v2969 = vadd.f32 %v2808, %v2968
      %v2970 = vpop.f32.mrb[0].mxu0
      %2971 = vdwg.mxu0
      %2972 = vmatprep.subr.bf16.mxu0 0
      %2973 = vmatpush1.bf16.msra.mxu0 %v2393
      %2974 = vmatprep.subr.bf16.mxu0 0
      %2975 = vmatpush1.bf16.msra.mxu0 %v2394
      %2976 = vmatprep.subr.bf16.mxu0 0
      %2977 = vmatpush1.bf16.msra.mxu0 %v2395
      %2978 = vmatprep.subr.bf16.mxu0 0
      %2979 = vmatpush1.bf16.msra.mxu0 %v2396
      %2980 = vmatprep.subr.bf16.mxu0 0
      %2981 = vmatpush1.bf16.msra.mxu0 %v2397
      %2982 = vmatprep.subr.bf16.mxu0 0
      %2983 = vmatpush1.bf16.msra.mxu0 %v2398
      %2984 = vmatprep.subr.bf16.mxu0 0
      %2985 = vmatpush1.bf16.msra.mxu0 %v2399
      %2986 = vmatprep.subr.bf16.mxu0 0
      %2987 = vmatpush1.bf16.msra.mxu0 %v2400
      %2988 = vmatprep.subr.bf16.mxu0 0
      %2989 = vmatpush1.bf16.msra.mxu0 %v2401
      %2990 = vmatprep.subr.bf16.mxu0 0
      %2991 = vmatpush1.bf16.msra.mxu0 %v2402
      %2992 = vmatprep.subr.bf16.mxu0 0
      %2993 = vmatpush1.bf16.msra.mxu0 %v2403
      %2994 = vmatprep.subr.bf16.mxu0 0
      %2995 = vmatpush1.bf16.msra.mxu0 %v2404
      %2996 = vmatprep.subr.bf16.mxu0 0
      %2997 = vmatpush1.bf16.msra.mxu0 %v2405
      %2998 = vmatprep.subr.bf16.mxu0 0
      %2999 = vmatpush1.bf16.msra.mxu0 %v2406
      %3000 = vmatprep.subr.bf16.mxu0 0
      %3001 = vmatpush1.bf16.msra.mxu0 %v2407
      %3002 = vmatprep.subr.bf16.mxu0 0
      %3003 = vmatpush1.bf16.msra.mxu0 %v2408
      %3004 = vmatprep.mubr.bf16.mxu0 %v1776
      %3005 = vmatmul.mubr.bf16.gmra.mrb[0].mxu0 %v1775
      %v3006 = vpop.f32.mrb[0].mxu0
      %v3007 = vadd.f32 %v2846, %v3006
      %v3008 = vpop.f32.mrb[0].mxu0
      %v3009 = vpop.f32.mrb[0].mxu0
      %v3010 = vadd.f32 %v2849, %v3009
      %v3011 = vpop.f32.mrb[0].mxu0
      %3012 = vmatprep.mubr.bf16.mxu0 %v1785
      %3013 = vmatmul.mubr.bf16.gmra.mrb[0].mxu0 %v1784
      %v3014 = vpop.f32.mrb[0].mxu0
      %v3015 = vadd.f32 %v2854, %v3014
      %v3016 = vpop.f32.mrb[0].mxu0
      %v3017 = vpop.f32.mrb[0].mxu0
      %v3018 = vadd.f32 %v2857, %v3017
      %v3019 = vpop.f32.mrb[0].mxu0
      %3020 = vmatprep.mubr.bf16.mxu0 %v1794
      %3021 = vmatmul.mubr.bf16.gmra.mrb[0].mxu0 %v1793
      %v3022 = vpop.f32.mrb[0].mxu0
      %v3023 = vadd.f32 %v2862, %v3022
      %v3024 = vpop.f32.mrb[0].mxu0
      %v3025 = vpop.f32.mrb[0].mxu0
      %v3026 = vadd.f32 %v2865, %v3025
      %v3027 = vpop.f32.mrb[0].mxu0
      %3028 = vmatprep.mubr.bf16.mxu0 %v1803
      %3029 = vmatmul.mubr.bf16.gmra.mrb[0].mxu0 %v1802
      %v3030 = vpop.f32.mrb[0].mxu0
      %v3031 = vadd.f32 %v2870, %v3030
      %v3032 = vpop.f32.mrb[0].mxu0
      %v3033 = vpop.f32.mrb[0].mxu0
      %v3034 = vadd.f32 %v2873, %v3033
      %v3035 = vpop.f32.mrb[0].mxu0
      %3036 = vmatprep.mubr.bf16.mxu0 %v1812
      %3037 = vmatmul.mubr.bf16.gmra.mrb[0].mxu0 %v1811
      %v3038 = vpop.f32.mrb[0].mxu0
      %v3039 = vadd.f32 %v2878, %v3038
      %v3040 = vpop.f32.mrb[0].mxu0
      %v3041 = vpop.f32.mrb[0].mxu0
      %v3042 = vadd.f32 %v2881, %v3041
      %v3043 = vpop.f32.mrb[0].mxu0
      %3044 = vmatprep.mubr.bf16.mxu0 %v1821
      %3045 = vmatmul.mubr.bf16.gmra.mrb[0].mxu0 %v1820
      %v3046 = vpop.f32.mrb[0].mxu0
      %v3047 = vadd.f32 %v2886, %v3046
      %v3048 = vpop.f32.mrb[0].mxu0
      %v3049 = vpop.f32.mrb[0].mxu0
      %v3050 = vadd.f32 %v2889, %v3049
      %v3051 = vpop.f32.mrb[0].mxu0
      %3052 = vmatprep.mubr.bf16.mxu0 %v1830
      %3053 = vmatmul.mubr.bf16.gmra.mrb[0].mxu0 %v1829
      %v3054 = vpop.f32.mrb[0].mxu0
      %v3055 = vadd.f32 %v2894, %v3054
      %v3056 = vpop.f32.mrb[0].mxu0
      %v3057 = vpop.f32.mrb[0].mxu0
      %v3058 = vadd.f32 %v2897, %v3057
      %v3059 = vpop.f32.mrb[0].mxu0
      %3060 = vmatprep.mubr.bf16.mxu0 %v1839
      %3061 = vmatmul.mubr.bf16.gmra.mrb[0].mxu0 %v1838
      %v3062 = vpop.f32.mrb[0].mxu0
      %v3063 = vadd.f32 %v2902, %v3062
      %v3064 = vpop.f32.mrb[0].mxu0
      %v3065 = vpop.f32.mrb[0].mxu0
      %v3066 = vadd.f32 %v2905, %v3065
      %v3067 = vpop.f32.mrb[0].mxu0
      %3068 = vmatprep.mubr.bf16.mxu0 %v1848
      %3069 = vmatmul.mubr.bf16.gmra.mrb[0].mxu0 %v1847
      %v3070 = vpop.f32.mrb[0].mxu0
      %v3071 = vadd.f32 %v2910, %v3070
      %v3072 = vpop.f32.mrb[0].mxu0
      %v3073 = vpop.f32.mrb[0].mxu0
      %v3074 = vadd.f32 %v2913, %v3073
      %v3075 = vpop.f32.mrb[0].mxu0
      %3076 = vmatprep.mubr.bf16.mxu0 %v1857
      %3077 = vmatmul.mubr.bf16.gmra.mrb[0].mxu0 %v1856
      %v3078 = vpop.f32.mrb[0].mxu0
      %v3079 = vadd.f32 %v2918, %v3078
      %v3080 = vpop.f32.mrb[0].mxu0
      %v3081 = vpop.f32.mrb[0].mxu0
      %v3082 = vadd.f32 %v2921, %v3081
      %v3083 = vpop.f32.mrb[0].mxu0
      %3084 = vmatprep.mubr.bf16.mxu0 %v1866
      %3085 = vmatmul.mubr.bf16.gmra.mrb[0].mxu0 %v1865
      %v3086 = vpop.f32.mrb[0].mxu0
      %v3087 = vadd.f32 %v2926, %v3086
      %v3088 = vpop.f32.mrb[0].mxu0
      %v3089 = vpop.f32.mrb[0].mxu0
      %v3090 = vadd.f32 %v2929, %v3089
      %v3091 = vpop.f32.mrb[0].mxu0
      %3092 = vmatprep.mubr.bf16.mxu0 %v1875
      %3093 = vmatmul.mubr.bf16.gmra.mrb[0].mxu0 %v1874
      %v3094 = vpop.f32.mrb[0].mxu0
      %v3095 = vadd.f32 %v2934, %v3094
      %v3096 = vpop.f32.mrb[0].mxu0
      %v3097 = vpop.f32.mrb[0].mxu0
      %v3098 = vadd.f32 %v2937, %v3097
      %v3099 = vpop.f32.mrb[0].mxu0
      %3100 = vmatprep.mubr.bf16.mxu0 %v1884
      %3101 = vmatmul.mubr.bf16.gmra.mrb[0].mxu0 %v1883
      %v3102 = vpop.f32.mrb[0].mxu0
      %v3103 = vadd.f32 %v2942, %v3102
      %v3104 = vpop.f32.mrb[0].mxu0
      %v3105 = vpop.f32.mrb[0].mxu0
      %v3106 = vadd.f32 %v2945, %v3105
      %v3107 = vpop.f32.mrb[0].mxu0
      %3108 = vmatprep.mubr.bf16.mxu0 %v1893
      %3109 = vmatmul.mubr.bf16.gmra.mrb[0].mxu0 %v1892
      %v3110 = vpop.f32.mrb[0].mxu0
      %v3111 = vadd.f32 %v2950, %v3110
      %v3112 = vpop.f32.mrb[0].mxu0
      %v3113 = vpop.f32.mrb[0].mxu0
      %v3114 = vadd.f32 %v2953, %v3113
      %v3115 = vpop.f32.mrb[0].mxu0
      %3116 = vmatprep.mubr.bf16.mxu0 %v1902
      %3117 = vmatmul.mubr.bf16.gmra.mrb[0].mxu0 %v1901
      %v3118 = vpop.f32.mrb[0].mxu0
      %v3119 = vadd.f32 %v2958, %v3118
      %v3120 = vpop.f32.mrb[0].mxu0
      %v3121 = vpop.f32.mrb[0].mxu0
      %v3122 = vadd.f32 %v2961, %v3121
      %v3123 = vpop.f32.mrb[0].mxu0
      %3124 = vmatprep.mubr.bf16.mxu0 %v1911
      %3125 = vmatmul.mubr.bf16.gmra.mrb[0].mxu0 %v1910
      %v3126 = vpop.f32.mrb[0].mxu0
      %v3127 = vadd.f32 %v2966, %v3126
      %v3128 = vpop.f32.mrb[0].mxu0
      %v3129 = vpop.f32.mrb[0].mxu0
      %v3130 = vadd.f32 %v2969, %v3129
      %v3131 = vpop.f32.mrb[0].mxu0
      %3132 = vdwg.mxu0
      %3133 = vmatprep.subr.bf16.mxu0 0
      %3134 = vmatpush1.bf16.msra.mxu0 %v2409
      %3135 = vmatprep.subr.bf16.mxu0 0
      %3136 = vmatpush1.bf16.msra.mxu0 %v2410
      %3137 = vmatprep.subr.bf16.mxu0 0
      %3138 = vmatpush1.bf16.msra.mxu0 %v2411
      %3139 = vmatprep.subr.bf16.mxu0 0
      %3140 = vmatpush1.bf16.msra.mxu0 %v2412
      %3141 = vmatprep.subr.bf16.mxu0 0
      %3142 = vmatpush1.bf16.msra.mxu0 %v2413
      %3143 = vmatprep.subr.bf16.mxu0 0
      %3144 = vmatpush1.bf16.msra.mxu0 %v2414
      %3145 = vmatprep.subr.bf16.mxu0 0
      %3146 = vmatpush1.bf16.msra.mxu0 %v2415
      %3147 = vmatprep.subr.bf16.mxu0 0
      %3148 = vmatpush1.bf16.msra.mxu0 %v2416
      %3149 = vmatprep.subr.bf16.mxu0 0
      %3150 = vmatpush1.bf16.msra.mxu0 0
      %3151 = vmatprep.subr.bf16.mxu0 0
      %3152 = vmatpush1.bf16.msra.mxu0 0
      %3153 = vmatprep.subr.bf16.mxu0 0
      %3154 = vmatpush1.bf16.msra.mxu0 0
      %3155 = vmatprep.subr.bf16.mxu0 0
      %3156 = vmatpush1.bf16.msra.mxu0 0
      %3157 = vmatprep.subr.bf16.mxu0 0
      %3158 = vmatpush1.bf16.msra.mxu0 0
      %3159 = vmatprep.subr.bf16.mxu0 0
      %3160 = vmatpush1.bf16.msra.mxu0 0
      %3161 = vmatprep.subr.bf16.mxu0 0
      %3162 = vmatpush1.bf16.msra.mxu0 0
      %3163 = vmatprep.subr.bf16.mxu0 0
      %3164 = vmatpush1.bf16.msra.mxu0 0
      %3165 = vmatprep.mubr.bf16.mxu0 0
      %3166 = vmatmul.mubr.bf16.gmra.mrb[0].mxu0 %v1777
      %v3167 = vpop.f32.mrb[0].mxu0
      %v3168 = vadd.f32 %v3007, %v3167
      %v3169 = vpop.f32.mrb[0].mxu0
      %v3170 = vpop.f32.mrb[0].mxu0
      %v3171 = vadd.f32 %v3010, %v3170
      %v3172 = vpop.f32.mrb[0].mxu0
      %3173 = vmatprep.mubr.bf16.mxu0 0
      %3174 = vmatmul.mubr.bf16.gmra.mrb[0].mxu0 %v1786
      %v3175 = vpop.f32.mrb[0].mxu0
      %v3176 = vadd.f32 %v3015, %v3175
      %v3177 = vpop.f32.mrb[0].mxu0
      %v3178 = vpop.f32.mrb[0].mxu0
      %v3179 = vadd.f32 %v3018, %v3178
      %v3180 = vpop.f32.mrb[0].mxu0
      %3181 = vmatprep.mubr.bf16.mxu0 0
      %3182 = vmatmul.mubr.bf16.gmra.mrb[0].mxu0 %v1795
      %v3183 = vpop.f32.mrb[0].mxu0
      %v3184 = vadd.f32 %v3023, %v3183
      %v3185 = vpop.f32.mrb[0].mxu0
      %v3186 = vpop.f32.mrb[0].mxu0
      %v3187 = vadd.f32 %v3026, %v3186
      %v3188 = vpop.f32.mrb[0].mxu0
      %3189 = vmatprep.mubr.bf16.mxu0 0
      %3190 = vmatmul.mubr.bf16.gmra.mrb[0].mxu0 %v1804
      %v3191 = vpop.f32.mrb[0].mxu0
      %v3192 = vadd.f32 %v3031, %v3191
      %v3193 = vpop.f32.mrb[0].mxu0
      %v3194 = vpop.f32.mrb[0].mxu0
      %v3195 = vadd.f32 %v3034, %v3194
      %v3196 = vpop.f32.mrb[0].mxu0
      %3197 = vmatprep.mubr.bf16.mxu0 0
      %3198 = vmatmul.mubr.bf16.gmra.mrb[0].mxu0 %v1813
      %v3199 = vpop.f32.mrb[0].mxu0
      %v3200 = vadd.f32 %v3039, %v3199
      %v3201 = vpop.f32.mrb[0].mxu0
      %v3202 = vpop.f32.mrb[0].mxu0
      %v3203 = vadd.f32 %v3042, %v3202
      %v3204 = vpop.f32.mrb[0].mxu0
      %3205 = vmatprep.mubr.bf16.mxu0 0
      %3206 = vmatmul.mubr.bf16.gmra.mrb[0].mxu0 %v1822
      %v3207 = vpop.f32.mrb[0].mxu0
      %v3208 = vadd.f32 %v3047, %v3207
      %v3209 = vpop.f32.mrb[0].mxu0
      %v3210 = vpop.f32.mrb[0].mxu0
      %v3211 = vadd.f32 %v3050, %v3210
      %v3212 = vpop.f32.mrb[0].mxu0
      %3213 = vmatprep.mubr.bf16.mxu0 0
      %3214 = vmatmul.mubr.bf16.gmra.mrb[0].mxu0 %v1831
      %v3215 = vpop.f32.mrb[0].mxu0
      %v3216 = vadd.f32 %v3055, %v3215
      %v3217 = vpop.f32.mrb[0].mxu0
      %v3218 = vpop.f32.mrb[0].mxu0
      %v3219 = vadd.f32 %v3058, %v3218
      %v3220 = vpop.f32.mrb[0].mxu0
      %3221 = vmatprep.mubr.bf16.mxu0 0
      %3222 = vmatmul.mubr.bf16.gmra.mrb[0].mxu0 %v1840
      %v3223 = vpop.f32.mrb[0].mxu0
      %v3224 = vadd.f32 %v3063, %v3223
      %v3225 = vpop.f32.mrb[0].mxu0
      %v3226 = vpop.f32.mrb[0].mxu0
      %v3227 = vadd.f32 %v3066, %v3226
      %v3228 = vpop.f32.mrb[0].mxu0
      %3229 = vmatprep.mubr.bf16.mxu0 0
      %3230 = vmatmul.mubr.bf16.gmra.mrb[0].mxu0 %v1849
      %v3231 = vpop.f32.mrb[0].mxu0
      %v3232 = vadd.f32 %v3071, %v3231
      %v3233 = vpop.f32.mrb[0].mxu0
      %v3234 = vpop.f32.mrb[0].mxu0
      %v3235 = vadd.f32 %v3074, %v3234
      %v3236 = vpop.f32.mrb[0].mxu0
      %3237 = vmatprep.mubr.bf16.mxu0 0
      %3238 = vmatmul.mubr.bf16.gmra.mrb[0].mxu0 %v1858
      %v3239 = vpop.f32.mrb[0].mxu0
      %v3240 = vadd.f32 %v3079, %v3239
      %v3241 = vpop.f32.mrb[0].mxu0
      %v3242 = vpop.f32.mrb[0].mxu0
      %v3243 = vadd.f32 %v3082, %v3242
      %v3244 = vpop.f32.mrb[0].mxu0
      %3245 = vmatprep.mubr.bf16.mxu0 0
      %3246 = vmatmul.mubr.bf16.gmra.mrb[0].mxu0 %v1867
      %v3247 = vpop.f32.mrb[0].mxu0
      %v3248 = vadd.f32 %v3087, %v3247
      %v3249 = vpop.f32.mrb[0].mxu0
      %v3250 = vpop.f32.mrb[0].mxu0
      %v3251 = vadd.f32 %v3090, %v3250
      %v3252 = vpop.f32.mrb[0].mxu0
      %3253 = vmatprep.mubr.bf16.mxu0 0
      %3254 = vmatmul.mubr.bf16.gmra.mrb[0].mxu0 %v1876
      %v3255 = vpop.f32.mrb[0].mxu0
      %v3256 = vadd.f32 %v3095, %v3255
      %v3257 = vpop.f32.mrb[0].mxu0
      %v3258 = vpop.f32.mrb[0].mxu0
      %v3259 = vadd.f32 %v3098, %v3258
      %v3260 = vpop.f32.mrb[0].mxu0
      %3261 = vmatprep.mubr.bf16.mxu0 0
      %3262 = vmatmul.mubr.bf16.gmra.mrb[0].mxu0 %v1885
      %v3263 = vpop.f32.mrb[0].mxu0
      %v3264 = vadd.f32 %v3103, %v3263
      %v3265 = vpop.f32.mrb[0].mxu0
      %v3266 = vpop.f32.mrb[0].mxu0
      %v3267 = vadd.f32 %v3106, %v3266
      %v3268 = vpop.f32.mrb[0].mxu0
      %3269 = vmatprep.mubr.bf16.mxu0 0
      %3270 = vmatmul.mubr.bf16.gmra.mrb[0].mxu0 %v1894
      %v3271 = vpop.f32.mrb[0].mxu0
      %v3272 = vadd.f32 %v3111, %v3271
      %v3273 = vpop.f32.mrb[0].mxu0
      %v3274 = vpop.f32.mrb[0].mxu0
      %v3275 = vadd.f32 %v3114, %v3274
      %v3276 = vpop.f32.mrb[0].mxu0
      %3277 = vmatprep.mubr.bf16.mxu0 0
      %3278 = vmatmul.mubr.bf16.gmra.mrb[0].mxu0 %v1903
      %v3279 = vpop.f32.mrb[0].mxu0
      %v3280 = vadd.f32 %v3119, %v3279
      %v3281 = vpop.f32.mrb[0].mxu0
      %v3282 = vpop.f32.mrb[0].mxu0
      %v3283 = vadd.f32 %v3122, %v3282
      %v3284 = vpop.f32.mrb[0].mxu0
      %3285 = vmatprep.mubr.bf16.mxu0 0
      %3286 = vmatmul.mubr.bf16.gmra.mrb[0].mxu0 %v1912
      %v3287 = vpop.f32.mrb[0].mxu0
      %v3288 = vadd.f32 %v3127, %v3287
      %v3289 = vpop.f32.mrb[0].mxu0
      %v3290 = vpop.f32.mrb[0].mxu0
      %v3291 = vadd.f32 %v3130, %v3290
      %v3292 = vpop.f32.mrb[0].mxu0
      %3293 = vdwg.mxu0
      %v3294 = vpack.c.bf16 %v3171, %v3168
      %v3295 = vpack.c.bf16 %v3179, %v3176
      %v3296 = vpack.c.bf16 %v3187, %v3184
      %v3297 = vpack.c.bf16 %v3195, %v3192
      %v3298 = vpack.c.bf16 %v3203, %v3200
      %v3299 = vpack.c.bf16 %v3211, %v3208
      %v3300 = vpack.c.bf16 %v3219, %v3216
      %v3301 = vpack.c.bf16 %v3227, %v3224
      %v3302 = vpack.c.bf16 %v3235, %v3232
      %v3303 = vpack.c.bf16 %v3243, %v3240
      %v3304 = vpack.c.bf16 %v3251, %v3248
      %v3305 = vpack.c.bf16 %v3259, %v3256
      %v3306 = vpack.c.bf16 %v3267, %v3264
      %v3307 = vpack.c.bf16 %v3275, %v3272
      %v3308 = vpack.c.bf16 %v3283, %v3280
      %v3309 = vpack.c.bf16 %v3291, %v3288
      %v3326 = vunpack.c.l.b16 %v3294
      %v3327 = vunpack.c.h.b16 %v3294
      %v3328 = vunpack.c.l.b16 %v3295
      %v3329 = vunpack.c.h.b16 %v3295
      %v3330 = vunpack.c.l.b16 %v3296
      %v3331 = vunpack.c.h.b16 %v3296
      %v3332 = vunpack.c.l.b16 %v3297
      %v3333 = vunpack.c.h.b16 %v3297
      %v3334 = vunpack.c.l.b16 %v3298
      %v3335 = vunpack.c.h.b16 %v3298
      %v3336 = vunpack.c.l.b16 %v3299
      %v3337 = vunpack.c.h.b16 %v3299
      %v3338 = vunpack.c.l.b16 %v3300
      %v3339 = vunpack.c.h.b16 %v3300
      %v3340 = vunpack.c.l.b16 %v3301
      %v3341 = vunpack.c.h.b16 %v3301
      %v3342 = vunpack.c.l.b16 %v3302
      %v3343 = vunpack.c.h.b16 %v3302
      %v3344 = vunpack.c.l.b16 %v3303
      %v3345 = vunpack.c.h.b16 %v3303
      %v3346 = vunpack.c.l.b16 %v3304
      %v3347 = vunpack.c.h.b16 %v3304
      %v3348 = vunpack.c.l.b16 %v3305
      %v3349 = vunpack.c.h.b16 %v3305
      %v3350 = vunpack.c.l.b16 %v3306
      %v3351 = vunpack.c.h.b16 %v3306
      %v3352 = vunpack.c.l.b16 %v3307
      %v3353 = vunpack.c.h.b16 %v3307
      %v3354 = vunpack.c.l.b16 %v3308
      %v3355 = vunpack.c.h.b16 %v3308
      %v3356 = vunpack.c.l.b16 %v3309
      %v3357 = vunpack.c.h.b16 %v3309
      %v3358 = vpack.c.b16 %v3326, %v3326
      %v3359 = vpack.c.b16 %v3327, %v3327
      %v3360 = vpack.c.b16 %v3328, %v3328
      %v3361 = vpack.c.b16 %v3329, %v3329
      %v3362 = vpack.c.b16 %v3330, %v3330
      %v3363 = vpack.c.b16 %v3331, %v3331
      %v3364 = vpack.c.b16 %v3332, %v3332
      %v3365 = vpack.c.b16 %v3333, %v3333
      %v3366 = vpack.c.b16 %v3334, %v3334
      %v3367 = vpack.c.b16 %v3335, %v3335
      %v3368 = vpack.c.b16 %v3336, %v3336
      %v3369 = vpack.c.b16 %v3337, %v3337
      %v3370 = vpack.c.b16 %v3338, %v3338
      %v3371 = vpack.c.b16 %v3339, %v3339
      %v3372 = vpack.c.b16 %v3340, %v3340
      %v3373 = vpack.c.b16 %v3341, %v3341
      %v3374 = vpack.c.b16 %v3342, %v3342
      %v3375 = vpack.c.b16 %v3343, %v3343
      %v3376 = vpack.c.b16 %v3344, %v3344
      %v3377 = vpack.c.b16 %v3345, %v3345
      %v3378 = vpack.c.b16 %v3346, %v3346
      %v3379 = vpack.c.b16 %v3347, %v3347
      %v3380 = vpack.c.b16 %v3348, %v3348
      %v3381 = vpack.c.b16 %v3349, %v3349
      %v3382 = vpack.c.b16 %v3350, %v3350
      %v3383 = vpack.c.b16 %v3351, %v3351
      %v3384 = vpack.c.b16 %v3352, %v3352
      %v3385 = vpack.c.b16 %v3353, %v3353
      %v3386 = vpack.c.b16 %v3354, %v3354
      %v3387 = vpack.c.b16 %v3355, %v3355
      %v3388 = vpack.c.b16 %v3356, %v3356
      %v3389 = vpack.c.b16 %v3357, %v3357
      %vm3422 = vcmask 60416
      %3423 = vst.msk [vmem:[%s177] sm:$0xf] %vm3422, %v3358
      %3424 = vst.msk [vmem:[%s177 + $0x4] sm:$0xf] %vm3422, %v3359
      %3425 = vst.msk [vmem:[%s177 + $0x8] sm:$0xf] %vm3422, %v3360
      %3426 = vst.msk [vmem:[%s177 + $0xc] sm:$0xf] %vm3422, %v3361
      %3427 = vst.msk [vmem:[%s177 + $0x10] sm:$0xf] %vm3422, %v3362
      %3428 = vst.msk [vmem:[%s177 + $0x14] sm:$0xf] %vm3422, %v3363
      %3429 = vst.msk [vmem:[%s177 + $0x18] sm:$0xf] %vm3422, %v3364
      %3430 = vst.msk [vmem:[%s177 + $0x1c] sm:$0xf] %vm3422, %v3365
      %3431 = vst.msk [vmem:[%s177 + $0x20] sm:$0xf] %vm3422, %v3366
      %3432 = vst.msk [vmem:[%s177 + $0x24] sm:$0xf] %vm3422, %v3367
      %3433 = vst.msk [vmem:[%s177 + $0x28] sm:$0xf] %vm3422, %v3368
      %3434 = vst.msk [vmem:[%s177 + $0x2c] sm:$0xf] %vm3422, %v3369
      %3435 = vst.msk [vmem:[%s177 + $0x30] sm:$0xf] %vm3422, %v3370
      %3436 = vst.msk [vmem:[%s177 + $0x34] sm:$0xf] %vm3422, %v3371
      %3437 = vst.msk [vmem:[%s177 + $0x38] sm:$0xf] %vm3422, %v3372
      %3438 = vst.msk [vmem:[%s177 + $0x3c] sm:$0xf] %vm3422, %v3373
      %3439 = vst.msk [vmem:[%s177 + $0x40] sm:$0xf] %vm3422, %v3374
      %3440 = vst.msk [vmem:[%s177 + $0x44] sm:$0xf] %vm3422, %v3375
      %3441 = vst.msk [vmem:[%s177 + $0x48] sm:$0xf] %vm3422, %v3376
      %3442 = vst.msk [vmem:[%s177 + $0x4c] sm:$0xf] %vm3422, %v3377
      %3443 = vst.msk [vmem:[%s177 + $0x50] sm:$0xf] %vm3422, %v3378
      %3444 = vst.msk [vmem:[%s177 + $0x54] sm:$0xf] %vm3422, %v3379
      %3445 = vst.msk [vmem:[%s177 + $0x58] sm:$0xf] %vm3422, %v3380
      %3446 = vst.msk [vmem:[%s177 + $0x5c] sm:$0xf] %vm3422, %v3381
      %3447 = vst.msk [vmem:[%s177 + $0x60] sm:$0xf] %vm3422, %v3382
      %3448 = vst.msk [vmem:[%s177 + $0x64] sm:$0xf] %vm3422, %v3383
      %3449 = vst.msk [vmem:[%s177 + $0x68] sm:$0xf] %vm3422, %v3384
      %3450 = vst.msk [vmem:[%s177 + $0x6c] sm:$0xf] %vm3422, %v3385
      %3451 = vst.msk [vmem:[%s177 + $0x70] sm:$0xf] %vm3422, %v3386
      %3452 = vst.msk [vmem:[%s177 + $0x74] sm:$0xf] %vm3422, %v3387
      %3453 = vst.msk [vmem:[%s177 + $0x78] sm:$0xf] %vm3422, %v3388
      %3454 = vst.msk [vmem:[%s177 + $0x7c] sm:$0xf] %vm3422, %v3389
      %vm3455 = vcmask 64512
      %v3456 = vsel %vm3455, %v3168, 0.0
      %v3457 = vsel %vm3455, %v3171, 0.0
      %v3458 = vadd.f32 %v3456, %v3457
      %v3459 = vsel %vm3455, %v3176, 0.0
      %v3460 = vadd.f32 %v3458, %v3459
      %v3461 = vsel %vm3455, %v3179, 0.0
      %v3462 = vadd.f32 %v3460, %v3461
      %v3463 = vsel %vm3455, %v3184, 0.0
      %v3464 = vadd.f32 %v3462, %v3463
      %v3465 = vsel %vm3455, %v3187, 0.0
      %v3466 = vadd.f32 %v3464, %v3465
      %v3467 = vsel %vm3455, %v3192, 0.0
      %v3468 = vadd.f32 %v3466, %v3467
      %v3469 = vsel %vm3455, %v3195, 0.0
      %v3470 = vadd.f32 %v3468, %v3469
      %v3471 = vsel %vm3455, %v3200, 0.0
      %v3472 = vadd.f32 %v3470, %v3471
      %v3473 = vsel %vm3455, %v3203, 0.0
      %v3474 = vadd.f32 %v3472, %v3473
      %v3475 = vsel %vm3455, %v3208, 0.0
      %v3476 = vadd.f32 %v3474, %v3475
      %v3477 = vsel %vm3455, %v3211, 0.0
      %v3478 = vadd.f32 %v3476, %v3477
      %v3479 = vsel %vm3455, %v3216, 0.0
      %v3480 = vadd.f32 %v3478, %v3479
      %v3481 = vsel %vm3455, %v3219, 0.0
      %v3482 = vadd.f32 %v3480, %v3481
      %v3483 = vsel %vm3455, %v3224, 0.0
      %v3484 = vadd.f32 %v3482, %v3483
      %v3485 = vsel %vm3455, %v3227, 0.0
      %v3486 = vadd.f32 %v3484, %v3485
      %v3487 = vsel %vm3455, %v3232, 0.0
      %v3488 = vadd.f32 %v3486, %v3487
      %v3489 = vsel %vm3455, %v3235, 0.0
      %v3490 = vadd.f32 %v3488, %v3489
      %v3491 = vsel %vm3455, %v3240, 0.0
      %v3492 = vadd.f32 %v3490, %v3491
      %v3493 = vsel %vm3455, %v3243, 0.0
      %v3494 = vadd.f32 %v3492, %v3493
      %v3495 = vsel %vm3455, %v3248, 0.0
      %v3496 = vadd.f32 %v3494, %v3495
      %v3497 = vsel %vm3455, %v3251, 0.0
      %v3498 = vadd.f32 %v3496, %v3497
      %v3499 = vsel %vm3455, %v3256, 0.0
      %v3500 = vadd.f32 %v3498, %v3499
      %v3501 = vsel %vm3455, %v3259, 0.0
      %v3502 = vadd.f32 %v3500, %v3501
      %v3503 = vsel %vm3455, %v3264, 0.0
      %v3504 = vadd.f32 %v3502, %v3503
      %v3505 = vsel %vm3455, %v3267, 0.0
      %v3506 = vadd.f32 %v3504, %v3505
      %v3507 = vsel %vm3455, %v3272, 0.0
      %v3508 = vadd.f32 %v3506, %v3507
      %v3509 = vsel %vm3455, %v3275, 0.0
      %v3510 = vadd.f32 %v3508, %v3509
      %v3511 = vsel %vm3455, %v3280, 0.0
      %v3512 = vadd.f32 %v3510, %v3511
      %v3513 = vsel %vm3455, %v3283, 0.0
      %v3514 = vadd.f32 %v3512, %v3513
      %v3515 = vsel %vm3455, %v3288, 0.0
      %v3516 = vadd.f32 %v3514, %v3515
      %v3517 = vsel %vm3455, %v3291, 0.0
      %v3518 = vadd.f32 %v3516, %v3517
      %v3519 = vrot.slane %v3518, 4
      %v3520 = vadd.f32 %v3518, %v3519
      %v3521 = vrot.slane %v3520, 2
      %v3522 = vadd.f32 %v3520, %v3521
      %v3523 = vrot.slane %v3522, 1
      %v3524 = vadd.f32 %v3522, %v3523
      %vm3525 = vcmask 57344
      %3526 = vst.msk [vmem:[%s181] sm:$0x1] %vm3525, %v3524
      %v3527 = vmul.f32 %v3168, %v3168
      %v3528 = vmul.f32 %v3171, %v3171
      %v3529 = vmul.f32 %v3176, %v3176
      %v3530 = vmul.f32 %v3179, %v3179
      %v3531 = vmul.f32 %v3184, %v3184
      %v3532 = vmul.f32 %v3187, %v3187
      %v3533 = vmul.f32 %v3192, %v3192
      %v3534 = vmul.f32 %v3195, %v3195
      %v3535 = vmul.f32 %v3200, %v3200
      %v3536 = vmul.f32 %v3203, %v3203
      %v3537 = vmul.f32 %v3208, %v3208
      %v3538 = vmul.f32 %v3211, %v3211
      %v3539 = vmul.f32 %v3216, %v3216
      %v3540 = vmul.f32 %v3219, %v3219
      %v3541 = vmul.f32 %v3224, %v3224
      %v3542 = vmul.f32 %v3227, %v3227
      %v3543 = vmul.f32 %v3232, %v3232
      %v3544 = vmul.f32 %v3235, %v3235
      %v3545 = vmul.f32 %v3240, %v3240
      %v3546 = vmul.f32 %v3243, %v3243
      %v3547 = vmul.f32 %v3248, %v3248
      %v3548 = vmul.f32 %v3251, %v3251
      %v3549 = vmul.f32 %v3256, %v3256
      %v3550 = vmul.f32 %v3259, %v3259
      %v3551 = vmul.f32 %v3264, %v3264
      %v3552 = vmul.f32 %v3267, %v3267
      %v3553 = vmul.f32 %v3272, %v3272
      %v3554 = vmul.f32 %v3275, %v3275
      %v3555 = vmul.f32 %v3280, %v3280
      %v3556 = vmul.f32 %v3283, %v3283
      %v3557 = vmul.f32 %v3288, %v3288
      %v3558 = vmul.f32 %v3291, %v3291
      %v3559 = vsel %vm3455, %v3527, 0.0
      %v3560 = vsel %vm3455, %v3528, 0.0
      %v3561 = vadd.f32 %v3559, %v3560
      %v3562 = vsel %vm3455, %v3529, 0.0
      %v3563 = vadd.f32 %v3561, %v3562
      %v3564 = vsel %vm3455, %v3530, 0.0
      %v3565 = vadd.f32 %v3563, %v3564
      %v3566 = vsel %vm3455, %v3531, 0.0
      %v3567 = vadd.f32 %v3565, %v3566
      %v3568 = vsel %vm3455, %v3532, 0.0
      %v3569 = vadd.f32 %v3567, %v3568
      %v3570 = vsel %vm3455, %v3533, 0.0
      %v3571 = vadd.f32 %v3569, %v3570
      %v3572 = vsel %vm3455, %v3534, 0.0
      %v3573 = vadd.f32 %v3571, %v3572
      %v3574 = vsel %vm3455, %v3535, 0.0
      %v3575 = vadd.f32 %v3573, %v3574
      %v3576 = vsel %vm3455, %v3536, 0.0
      %v3577 = vadd.f32 %v3575, %v3576
      %v3578 = vsel %vm3455, %v3537, 0.0
      %v3579 = vadd.f32 %v3577, %v3578
      %v3580 = vsel %vm3455, %v3538, 0.0
      %v3581 = vadd.f32 %v3579, %v3580
      %v3582 = vsel %vm3455, %v3539, 0.0
      %v3583 = vadd.f32 %v3581, %v3582
      %v3584 = vsel %vm3455, %v3540, 0.0
      %v3585 = vadd.f32 %v3583, %v3584
      %v3586 = vsel %vm3455, %v3541, 0.0
      %v3587 = vadd.f32 %v3585, %v3586
      %v3588 = vsel %vm3455, %v3542, 0.0
      %v3589 = vadd.f32 %v3587, %v3588
      %v3590 = vsel %vm3455, %v3543, 0.0
      %v3591 = vadd.f32 %v3589, %v3590
      %v3592 = vsel %vm3455, %v3544, 0.0
      %v3593 = vadd.f32 %v3591, %v3592
      %v3594 = vsel %vm3455, %v3545, 0.0
      %v3595 = vadd.f32 %v3593, %v3594
      %v3596 = vsel %vm3455, %v3546, 0.0
      %v3597 = vadd.f32 %v3595, %v3596
      %v3598 = vsel %vm3455, %v3547, 0.0
      %v3599 = vadd.f32 %v3597, %v3598
      %v3600 = vsel %vm3455, %v3548, 0.0
      %v3601 = vadd.f32 %v3599, %v3600
      %v3602 = vsel %vm3455, %v3549, 0.0
      %v3603 = vadd.f32 %v3601, %v3602
      %v3604 = vsel %vm3455, %v3550, 0.0
      %v3605 = vadd.f32 %v3603, %v3604
      %v3606 = vsel %vm3455, %v3551, 0.0
      %v3607 = vadd.f32 %v3605, %v3606
      %v3608 = vsel %vm3455, %v3552, 0.0
      %v3609 = vadd.f32 %v3607, %v3608
      %v3610 = vsel %vm3455, %v3553, 0.0
      %v3611 = vadd.f32 %v3609, %v3610
      %v3612 = vsel %vm3455, %v3554, 0.0
      %v3613 = vadd.f32 %v3611, %v3612
      %v3614 = vsel %vm3455, %v3555, 0.0
      %v3615 = vadd.f32 %v3613, %v3614
      %v3616 = vsel %vm3455, %v3556, 0.0
      %v3617 = vadd.f32 %v3615, %v3616
      %v3618 = vsel %vm3455, %v3557, 0.0
      %v3619 = vadd.f32 %v3617, %v3618
      %v3620 = vsel %vm3455, %v3558, 0.0
      %v3621 = vadd.f32 %v3619, %v3620
      %v3622 = vrot.slane %v3621, 4
      %v3623 = vadd.f32 %v3621, %v3622
      %v3624 = vrot.slane %v3623, 2
      %v3625 = vadd.f32 %v3623, %v3624
      %v3626 = vrot.slane %v3625, 1
      %v3627 = vadd.f32 %v3625, %v3626
      %3628 = vst.msk [vmem:[%s181 + $0x1] sm:$0x1] %vm3525, %v3627
      %p3629 = scmp.lt.s32.totalorder %s15, 1
      %s3630 = scalar_select %p3629, %s15, 1
      %s3631 = smul.addr %s3630, 32
      %s3632 = smul.addr %s3631, 4
      %s3633 = scalar_lea.vmem %s2, %s3632
      %p3634 = scmp.lt.s32.totalorder %s15, 1
      %s3635 = scalar_select %p3634, %s15, 1
      %s3636 = smul.addr %s3635, 2
      %s3637 = scalar_lea.vmem %s3, %s3636
      // Predicated region
      $region29: #{basic_block_forward.2} parent=27 // pred_check
        %p3638 = pneg %p80
      $region30: #{basic_block_forward.2} parent=27 // pred_check_branch
        %3640 = sbr.rel (%p3638) target = $region32
      $region31: #{basic_block_forward.2} parent=27 // pred_region
        _
      $region32: #{basic_block_forward.2} parent=27 // pred_fallthru
        _
      // Predicated region
      $region33: #{basic_block_forward.2} parent=27 // pred_check
        %p3641 = pneg %p106
      $region34: #{basic_block_forward.2} parent=27 // pred_check_branch
        %3643 = sbr.rel (%p3641) target = $region36
      $region35: #{basic_block_forward.2} parent=27 // pred_region
        _
      $region36: #{basic_block_forward.2} parent=27 // pred_fallthru
        _
    $region28: #{basic_block_forward.2} parent=5 // pred_fallthru
      _
    %p3644 = scmp.le.s32.totalorder 2, %s10
    // Predicated region
    $region37: #{basic_block_forward.2} parent=5 // pred_check
      %p3645 = pneg %p3644
    $region38: #{basic_block_forward.2} parent=5 // pred_check_branch
      %3647 = sbr.rel (%p3645) target = $region40
    $region39: #{basic_block_forward.2} parent=5 // pred_region
      %s3648 = ssub.s32 %s10, 2
      // Predicated region
      $region41: #{basic_block_forward.2} parent=39 // pred_check
        %p3649 = pneg %p86
      $region42: #{basic_block_forward.2} parent=39 // pred_check_branch
        %3651 = sbr.rel (%p3649) target = $region44
      $region43: #{basic_block_forward.2} parent=39 // pred_region
        %p3652 = scmp.lt.s32.totalorder %s16, 1
        %s3653 = scalar_select %p3652, %s16, 1
        %s3654 = smul.addr %s3653, 32
        %s3655 = smul.addr %s3654, 4
        %s3656 = scalar_lea.vmem %s2, %s3655
      $region44: #{basic_block_forward.2} parent=39 // pred_fallthru
        _
      // Predicated region
      $region45: #{basic_block_forward.2} parent=39 // pred_check
        %p3657 = pneg %p112
      $region46: #{basic_block_forward.2} parent=39 // pred_check_branch
        %3659 = sbr.rel (%p3657) target = $region48
      $region47: #{basic_block_forward.2} parent=39 // pred_region
        %p3660 = scmp.lt.s32.totalorder %s16, 1
        %s3661 = scalar_select %p3660, %s16, 1
        %s3662 = smul.addr %s3661, 2
        %s3663 = scalar_lea.vmem %s3, %s3662
      $region48: #{basic_block_forward.2} parent=39 // pred_fallthru
        _
    $region40: #{basic_block_forward.2} parent=5 // pred_fallthru
      _
  $region6: #{basic_block_forward.2} parent=0 // loop_footer
    %s14 = sadd.s32 1, %s10
  $region7: #{basic_block_forward.2} parent=0 // loop_footer_branch
    %9 = sbr.rel target = $region3
  $region8: #{basic_block_forward.2} parent=0 // loop_exit
    _

// kernel: basic_block_forward.3
$region0: #{basic_block_forward.3}
  #allocation0 [shape = 'u32[]', space=smem, size = 0x4, offset = 0x4, fixed_abs, tag = 'smem constant byte address 0x4 - core index']
  #allocation1 [shape = 'u32[144,128]{1,0:T(1,128)}', space=vmem, size = 0x12000, scoped, tag = 'internal scratch']
  #allocation2 [shape = 'bf16[1,16,16,1156]{3,2,1,0:T(16,128)(2,1)}', space=vmem, size = 0xa0000, scoped, tag = 'scratch operand']
  #allocation3 [shape = 'bf16[1,16,16,128]{3,2,1,0:T(16,128)(2,1)}', space=vmem, size = 0x10000, scoped, tag = 'scratch operand']
  %s0 = inlined_call_operand.vmem [shape: bf16[2,16,16,8], index: 0, kind: input, shape index: {}]
  %s1 = inlined_call_operand.vmem [shape: f32[2,16,16,4], index: 1, kind: input, shape index: {}]
  %s2 = inlined_call_operand.vmem [shape: bf16[1156,8], index: 2, kind: input, shape index: {}]
  %s3 = inlined_call_operand.vmem [shape: f32[1,8], index: 3, kind: input, shape index: {}]
  %s4 = inlined_call_operand.vmem [shape: f32[1,8], index: 4, kind: input, shape index: {}]
  %s5 = inlined_call_operand.vmem [shape: f32[2,16,16,8], index: 5, kind: output, shape index: {}]
  %s6 = sld [smem:[#allocation0]]
  $region53: #{basic_block_forward.3} parent=0
    _
  %s8 = ssub.s32 1, %s6
  %s9 = scalar_select 0, %s8, %s6
  loop: start=0, step=1, limit=4
  $region2: #{basic_block_forward.3} parent=0 // loop_pre_header
    _
  $region3: #{basic_block_forward.3} parent=0 // loop_header
    %s11 = sphi 0, %s15
    %p12 = scmp.ge.s32.totalorder %s11, 4
    %s21 = sphi 0, %s23
    %s24 = sphi 0, %s21
    %s25 = sphi 0, %s24
    %s41 = sphi 0, %s25
    %s47 = sphi 0, %s49
    %s50 = sphi 0, %s47
    %s51 = sphi 0, %s50
    %s67 = sphi 0, %s51
    %s71 = sphi 0, %s71
    %s73 = sphi 0, %s71
    %s74 = sphi 0, %s73
    %s88 = sphi 0, %s74
    %s92 = sphi 0, %s92
    %s94 = sphi 0, %s92
    %s95 = sphi 0, %s94
    %s109 = sphi 0, %s95
    %s113 = sphi 0, %s113
    %s115 = sphi 0, %s113
    %s116 = sphi 0, %s115
    %s130 = sphi 0, %s116
    %s136 = sphi 0, %s138
    %s139 = sphi 0, %s136
    %s140 = sphi 0, %s139
    %s156 = sphi 0, %s140
  $region4: #{basic_block_forward.3} parent=0 // loop_header_branch
    %14 = sbr.rel (%p12) target = $region8
  $region5: #{basic_block_forward.3} parent=0 // loop_body
    %s16 = ssub.s32 %s11, 1
    %s17 = ssub.s32 %s11, 2
    %s18 = sadd.s32 %s11, 1
    %s19 = ssub.s32 %s11, %s18
    %p20 = scmp.eq.s32.totalorder %s19, 0
    %s22 = sadd.s32 %s21, 1
    %s23 = scalar_select %p20, %s21, %s22
    %p26 = pneg %p20
    %p27 = scmp.eq.s32.totalorder %s11, 1
    %p28 = por %p26, %p27
    %p29 = scmp.ne.s32.totalorder %s21, %s24
    %p30 = scmp.eq.s32.totalorder %s11, 0
    %p31 = por %p29, %p30
    %p32 = scmp.ne.s32.totalorder %s21, %s24
    %p33 = scmp.eq.s32.totalorder %s16, 1
    %p34 = por %p32, %p33
    %p35 = scmp.ne.s32.totalorder %s24, %s25
    %p36 = scmp.eq.s32.totalorder %s16, 0
    %p37 = por %p35, %p36
    %p38 = scmp.ne.s32.totalorder %s24, %s25
    %p39 = scmp.eq.s32.totalorder %s17, 1
    %p40 = por %p38, %p39
    %p42 = scmp.ne.s32.totalorder %s25, %s41
    %p43 = scmp.eq.s32.totalorder %s17, 0
    %p44 = por %p42, %p43
    %s45 = ssub.s32 %s11, %s18
    %p46 = scmp.eq.s32.totalorder %s45, 0
    %s48 = sadd.s32 %s47, 1
    %s49 = scalar_select %p46, %s47, %s48
    %p52 = pneg %p46
    %p53 = scmp.eq.s32.totalorder %s11, 1
    %p54 = por %p52, %p53
    %p55 = scmp.ne.s32.totalorder %s47, %s50
    %p56 = scmp.eq.s32.totalorder %s11, 0
    %p57 = por %p55, %p56
    %p58 = scmp.ne.s32.totalorder %s47, %s50
    %p59 = scmp.eq.s32.totalorder %s16, 1
    %p60 = por %p58, %p59
    %p61 = scmp.ne.s32.totalorder %s50, %s51
    %p62 = scmp.eq.s32.totalorder %s16, 0
    %p63 = por %p61, %p62
    %p64 = scmp.ne.s32.totalorder %s50, %s51
    %p65 = scmp.eq.s32.totalorder %s17, 1
    %p66 = por %p64, %p65
    %p68 = scmp.ne.s32.totalorder %s51, %s67
    %p69 = scmp.eq.s32.totalorder %s17, 0
    %p70 = por %p68, %p69
    %s72 = sadd.s32 %s71, 1
    %p75 = scmp.eq.s32.totalorder %s11, 1
    %p76 = scmp.ne.s32.totalorder %s71, %s73
    %p77 = scmp.eq.s32.totalorder %s11, 0
    %p78 = por %p76, %p77
    %p79 = scmp.ne.s32.totalorder %s71, %s73
    %p80 = scmp.eq.s32.totalorder %s16, 1
    %p81 = por %p79, %p80
    %p82 = scmp.ne.s32.totalorder %s73, %s74
    %p83 = scmp.eq.s32.totalorder %s16, 0
    %p84 = por %p82, %p83
    %p85 = scmp.ne.s32.totalorder %s73, %s74
    %p86 = scmp.eq.s32.totalorder %s17, 1
    %p87 = por %p85, %p86
    %p89 = scmp.ne.s32.totalorder %s74, %s88
    %p90 = scmp.eq.s32.totalorder %s17, 0
    %p91 = por %p89, %p90
    %s93 = sadd.s32 %s92, 1
    %p96 = scmp.eq.s32.totalorder %s11, 1
    %p97 = scmp.ne.s32.totalorder %s92, %s94
    %p98 = scmp.eq.s32.totalorder %s11, 0
    %p99 = por %p97, %p98
    %p100 = scmp.ne.s32.totalorder %s92, %s94
    %p101 = scmp.eq.s32.totalorder %s16, 1
    %p102 = por %p100, %p101
    %p103 = scmp.ne.s32.totalorder %s94, %s95
    %p104 = scmp.eq.s32.totalorder %s16, 0
    %p105 = por %p103, %p104
    %p106 = scmp.ne.s32.totalorder %s94, %s95
    %p107 = scmp.eq.s32.totalorder %s17, 1
    %p108 = por %p106, %p107
    %p110 = scmp.ne.s32.totalorder %s95, %s109
    %p111 = scmp.eq.s32.totalorder %s17, 0
    %p112 = por %p110, %p111
    %s114 = sadd.s32 %s113, 1
    %p117 = scmp.eq.s32.totalorder %s11, 1
    %p118 = scmp.ne.s32.totalorder %s113, %s115
    %p119 = scmp.eq.s32.totalorder %s11, 0
    %p120 = por %p118, %p119
    %p121 = scmp.ne.s32.totalorder %s113, %s115
    %p122 = scmp.eq.s32.totalorder %s16, 1
    %p123 = por %p121, %p122
    %p124 = scmp.ne.s32.totalorder %s115, %s116
    %p125 = scmp.eq.s32.totalorder %s16, 0
    %p126 = por %p124, %p125
    %p127 = scmp.ne.s32.totalorder %s115, %s116
    %p128 = scmp.eq.s32.totalorder %s17, 1
    %p129 = por %p127, %p128
    %p131 = scmp.ne.s32.totalorder %s116, %s130
    %p132 = scmp.eq.s32.totalorder %s17, 0
    %p133 = por %p131, %p132
    %s134 = ssub.s32 %s11, %s18
    %p135 = scmp.eq.s32.totalorder %s134, 0
    %s137 = sadd.s32 %s136, 1
    %s138 = scalar_select %p135, %s136, %s137
    %p141 = pneg %p135
    %p142 = scmp.eq.s32.totalorder %s11, 1
    %p143 = por %p141, %p142
    %p144 = scmp.ne.s32.totalorder %s136, %s139
    %p145 = scmp.eq.s32.totalorder %s11, 0
    %p146 = por %p144, %p145
    %p147 = scmp.ne.s32.totalorder %s136, %s139
    %p148 = scmp.eq.s32.totalorder %s16, 1
    %p149 = por %p147, %p148
    %p150 = scmp.ne.s32.totalorder %s139, %s140
    %p151 = scmp.eq.s32.totalorder %s16, 0
    %p152 = por %p150, %p151
    %p153 = scmp.ne.s32.totalorder %s139, %s140
    %p154 = scmp.eq.s32.totalorder %s17, 1
    %p155 = por %p153, %p154
    %p157 = scmp.ne.s32.totalorder %s140, %s156
    %p158 = scmp.eq.s32.totalorder %s17, 0
    %p159 = por %p157, %p158
    %p160 = scmp.le.s32.totalorder 1, %s11
    %p161 = scmp.lt.s32.totalorder %s11, 3
    %p162 = pnand %p160, %p161
    %p163 = pneg %p162
    // Predicated region
    $region9: #{basic_block_forward.3} parent=5 // pred_check
      _
    $region10: #{basic_block_forward.3} parent=5 // pred_check_branch
      %165 = sbr.rel (%p162) target = $region12
    $region11: #{basic_block_forward.3} parent=5 // pred_region
      %s166 = ssub.s32 %s11, 1
      // Predicated region
      $region13: #{basic_block_forward.3} parent=11 // pred_check
        %p167 = pneg %p84
      $region14: #{basic_block_forward.3} parent=11 // pred_check_branch
        %169 = sbr.rel (%p167) target = $region16
      $region15: #{basic_block_forward.3} parent=11 // pred_region
        _
      $region16: #{basic_block_forward.3} parent=11 // pred_fallthru
        _
      // Predicated region
      $region17: #{basic_block_forward.3} parent=11 // pred_check
        %p170 = pneg %p105
      $region18: #{basic_block_forward.3} parent=11 // pred_check_branch
        %172 = sbr.rel (%p170) target = $region20
      $region19: #{basic_block_forward.3} parent=11 // pred_region
        _
      $region20: #{basic_block_forward.3} parent=11 // pred_fallthru
        _
      // Predicated region
      $region21: #{basic_block_forward.3} parent=11 // pred_check
        %p173 = pneg %p126
      $region22: #{basic_block_forward.3} parent=11 // pred_check_branch
        %175 = sbr.rel (%p173) target = $region24
      $region23: #{basic_block_forward.3} parent=11 // pred_region
        _
      $region24: #{basic_block_forward.3} parent=11 // pred_fallthru
        _
    $region12: #{basic_block_forward.3} parent=5 // pred_fallthru
      _
    %p176 = scmp.lt.s32.totalorder %s11, 2
    // Predicated region
    $region25: #{basic_block_forward.3} parent=5 // pred_check
      %p177 = pneg %p176
    $region26: #{basic_block_forward.3} parent=5 // pred_check_branch
      %179 = sbr.rel (%p177) target = $region28
    $region27: #{basic_block_forward.3} parent=5 // pred_region
      // Predicated region
      $region29: #{basic_block_forward.3} parent=27 // pred_check
        %p180 = pneg %p31
      $region30: #{basic_block_forward.3} parent=27 // pred_check_branch
        %182 = sbr.rel (%p180) target = $region32
      $region31: #{basic_block_forward.3} parent=27 // pred_region
        %p183 = scmp.lt.s32.totalorder %s11, 1
        %s184 = scalar_select %p183, %s11, 1
        %s185 = smul.addr %s184, 32
        %s186 = smul.addr %s185, 4
        %s187 = scalar_lea.vmem %s0, %s186
      $region32: #{basic_block_forward.3} parent=27 // pred_fallthru
        _
      // Predicated region
      $region33: #{basic_block_forward.3} parent=27 // pred_check
        %p188 = pneg %p57
      $region34: #{basic_block_forward.3} parent=27 // pred_check_branch
        %190 = sbr.rel (%p188) target = $region36
      $region35: #{basic_block_forward.3} parent=27 // pred_region
        %p191 = scmp.lt.s32.totalorder %s11, 1
        %s192 = scalar_select %p191, %s11, 1
        %s193 = smul.addr %s192, 32
        %s194 = smul.addr %s193, 8
        %s195 = scalar_lea.vmem %s1, %s194
      $region36: #{basic_block_forward.3} parent=27 // pred_fallthru
        _
    $region28: #{basic_block_forward.3} parent=5 // pred_fallthru
      _
    %p196 = scmp.le.s32.totalorder 1, %s11
    %p197 = scmp.lt.s32.totalorder %s11, 3
    %p198 = pnand %p196, %p197
    %p199 = pneg %p198
    // Predicated region
    $region37: #{basic_block_forward.3} parent=5 // pred_check
      _
    $region38: #{basic_block_forward.3} parent=5 // pred_check_branch
      %201 = sbr.rel (%p198) target = $region40
    $region39: #{basic_block_forward.3} parent=5 // pred_region
      %s202 = ssub.s32 %s11, 1
      %p203 = scmp.lt.s32.totalorder %s16, 1
      %s204 = scalar_select %p203, %s16, 1
      %s205 = smul.addr %s204, 32
      %s206 = smul.addr %s205, 4
      %s207 = scalar_lea.vmem %s0, %s206
      %p208 = pneg %p37
      %p209 = pneg %p34
      %p210 = scmp.lt.s32.totalorder %s16, 1
      %s211 = scalar_select %p210, %s16, 1
      %s212 = smul.addr %s211, 32
      %s213 = smul.addr %s212, 8
      %s214 = scalar_lea.vmem %s1, %s213
      %p215 = pneg %p63
      %p216 = pneg %p60
      %p217 = pneg %p84
      %p218 = pneg %p81
      %p219 = pneg %p105
      %p220 = pneg %p102
      %p221 = pneg %p126
      %p222 = pneg %p123
      %p223 = pneg %p152
      %p224 = pneg %p149
      %p225 = scmp.lt.s32.totalorder %s16, 1
      %s226 = scalar_select %p225, %s16, 1
      %s227 = smul.addr %s226, 32
      %s228 = smul.addr %s227, 8
      %s229 = scalar_lea.vmem %s5, %s228
      %p230 = scmp.lt.s32.totalorder %s16, 1
      %s231 = scalar_select %p230, %s16, 1
      %s232 = smul.addr %s231, 32
      %s233 = smul.addr %s232, 4
      %s234 = scalar_lea.vmem %s0, %s233
      %p235 = scmp.lt.s32.totalorder %s16, 1
      %s236 = scalar_select %p235, %s16, 1
      %s237 = smul.addr %s236, 32
      %s238 = smul.addr %s237, 8
      %s239 = scalar_lea.vmem %s1, %s238
      %p240 = scmp.lt.s32.totalorder %s16, 1
      %s241 = scalar_select %p240, %s16, 1
      %s242 = smul.addr %s241, 32
      %s243 = smul.addr %s242, 8
      %s244 = scalar_lea.vmem %s5, %s243
      %v246 = vld [vmem:[%s3] sm:$0x1]
      %v247 = vld [vmem:[%s4] sm:$0x1]
      %v248 = vld [vmem:[%s234] sm:$0xf]
      %v249 = vld [vmem:[%s234 + $0x4] sm:$0xf]
      %v250 = vld [vmem:[%s234 + $0x8] sm:$0xf]
      %v251 = vld [vmem:[%s234 + $0xc] sm:$0xf]
      %v252 = vld [vmem:[%s234 + $0x10] sm:$0xf]
      %v253 = vld [vmem:[%s234 + $0x14] sm:$0xf]
      %v254 = vld [vmem:[%s234 + $0x18] sm:$0xf]
      %v255 = vld [vmem:[%s234 + $0x1c] sm:$0xf]
      %v256 = vld [vmem:[%s234 + $0x20] sm:$0xf]
      %v257 = vld [vmem:[%s234 + $0x24] sm:$0xf]
      %v258 = vld [vmem:[%s234 + $0x28] sm:$0xf]
      %v259 = vld [vmem:[%s234 + $0x2c] sm:$0xf]
      %v260 = vld [vmem:[%s234 + $0x30] sm:$0xf]
      %v261 = vld [vmem:[%s234 + $0x34] sm:$0xf]
      %v262 = vld [vmem:[%s234 + $0x38] sm:$0xf]
      %v263 = vld [vmem:[%s234 + $0x3c] sm:$0xf]
      %v264 = vld [vmem:[%s234 + $0x40] sm:$0xf]
      %v265 = vld [vmem:[%s234 + $0x44] sm:$0xf]
      %v266 = vld [vmem:[%s234 + $0x48] sm:$0xf]
      %v267 = vld [vmem:[%s234 + $0x4c] sm:$0xf]
      %v268 = vld [vmem:[%s234 + $0x50] sm:$0xf]
      %v269 = vld [vmem:[%s234 + $0x54] sm:$0xf]
      %v270 = vld [vmem:[%s234 + $0x58] sm:$0xf]
      %v271 = vld [vmem:[%s234 + $0x5c] sm:$0xf]
      %v272 = vld [vmem:[%s234 + $0x60] sm:$0xf]
      %v273 = vld [vmem:[%s234 + $0x64] sm:$0xf]
      %v274 = vld [vmem:[%s234 + $0x68] sm:$0xf]
      %v275 = vld [vmem:[%s234 + $0x6c] sm:$0xf]
      %v276 = vld [vmem:[%s234 + $0x70] sm:$0xf]
      %v277 = vld [vmem:[%s234 + $0x74] sm:$0xf]
      %v278 = vld [vmem:[%s234 + $0x78] sm:$0xf]
      %v279 = vld [vmem:[%s234 + $0x7c] sm:$0xf]
      %v280 = vunpack.c.l.bf16 %v248
      %v281 = vunpack.c.l.bf16 %v249
      %v282 = vunpack.c.l.bf16 %v250
      %v283 = vunpack.c.l.bf16 %v251
      %v284 = vunpack.c.l.bf16 %v252
      %v285 = vunpack.c.l.bf16 %v253
      %v286 = vunpack.c.l.bf16 %v254
      %v287 = vunpack.c.l.bf16 %v255
      %v288 = vunpack.c.l.bf16 %v256
      %v289 = vunpack.c.l.bf16 %v257
      %v290 = vunpack.c.l.bf16 %v258
      %v291 = vunpack.c.l.bf16 %v259
      %v292 = vunpack.c.l.bf16 %v260
      %v293 = vunpack.c.l.bf16 %v261
      %v294 = vunpack.c.l.bf16 %v262
      %v295 = vunpack.c.l.bf16 %v263
      %v296 = vunpack.c.l.bf16 %v264
      %v297 = vunpack.c.l.bf16 %v265
      %v298 = vunpack.c.l.bf16 %v266
      %v299 = vunpack.c.l.bf16 %v267
      %v300 = vunpack.c.l.bf16 %v268
      %v301 = vunpack.c.l.bf16 %v269
      %v302 = vunpack.c.l.bf16 %v270
      %v303 = vunpack.c.l.bf16 %v271
      %v304 = vunpack.c.l.bf16 %v272
      %v305 = vunpack.c.l.bf16 %v273
      %v306 = vunpack.c.l.bf16 %v274
      %v307 = vunpack.c.l.bf16 %v275
      %v308 = vunpack.c.l.bf16 %v276
      %v309 = vunpack.c.l.bf16 %v277
      %v310 = vunpack.c.l.bf16 %v278
      %v311 = vunpack.c.l.bf16 %v279
      %v313 = vlaneseq
      %v314 = vshrl.u32 %v313, 7
      %v315 = vsub.s32 0, %v314
      %v316 = vrot.slane %v246, %v315
      %v318 = vmul.f32 %v280, %v316
      %v319 = vmul.f32 %v281, %v316
      %v320 = vmul.f32 %v282, %v316
      %v321 = vmul.f32 %v283, %v316
      %v322 = vmul.f32 %v284, %v316
      %v323 = vmul.f32 %v285, %v316
      %v324 = vmul.f32 %v286, %v316
      %v325 = vmul.f32 %v287, %v316
      %v326 = vmul.f32 %v288, %v316
      %v327 = vmul.f32 %v289, %v316
      %v328 = vmul.f32 %v290, %v316
      %v329 = vmul.f32 %v291, %v316
      %v330 = vmul.f32 %v292, %v316
      %v331 = vmul.f32 %v293, %v316
      %v332 = vmul.f32 %v294, %v316
      %v333 = vmul.f32 %v295, %v316
      %v334 = vmul.f32 %v296, %v316
      %v335 = vmul.f32 %v297, %v316
      %v336 = vmul.f32 %v298, %v316
      %v337 = vmul.f32 %v299, %v316
      %v338 = vmul.f32 %v300, %v316
      %v339 = vmul.f32 %v301, %v316
      %v340 = vmul.f32 %v302, %v316
      %v341 = vmul.f32 %v303, %v316
      %v342 = vmul.f32 %v304, %v316
      %v343 = vmul.f32 %v305, %v316
      %v344 = vmul.f32 %v306, %v316
      %v345 = vmul.f32 %v307, %v316
      %v346 = vmul.f32 %v308, %v316
      %v347 = vmul.f32 %v309, %v316
      %v348 = vmul.f32 %v310, %v316
      %v349 = vmul.f32 %v311, %v316
      %v351 = vlaneseq
      %v352 = vshrl.u32 %v351, 7
      %v353 = vsub.s32 0, %v352
      %v354 = vrot.slane %v247, %v353
      %v356 = vadd.f32 %v318, %v354
      %v357 = vadd.f32 %v319, %v354
      %v358 = vadd.f32 %v320, %v354
      %v359 = vadd.f32 %v321, %v354
      %v360 = vadd.f32 %v322, %v354
      %v361 = vadd.f32 %v323, %v354
      %v362 = vadd.f32 %v324, %v354
      %v363 = vadd.f32 %v325, %v354
      %v364 = vadd.f32 %v326, %v354
      %v365 = vadd.f32 %v327, %v354
      %v366 = vadd.f32 %v328, %v354
      %v367 = vadd.f32 %v329, %v354
      %v368 = vadd.f32 %v330, %v354
      %v369 = vadd.f32 %v331, %v354
      %v370 = vadd.f32 %v332, %v354
      %v371 = vadd.f32 %v333, %v354
      %v372 = vadd.f32 %v334, %v354
      %v373 = vadd.f32 %v335, %v354
      %v374 = vadd.f32 %v336, %v354
      %v375 = vadd.f32 %v337, %v354
      %v376 = vadd.f32 %v338, %v354
      %v377 = vadd.f32 %v339, %v354
      %v378 = vadd.f32 %v340, %v354
      %v379 = vadd.f32 %v341, %v354
      %v380 = vadd.f32 %v342, %v354
      %v381 = vadd.f32 %v343, %v354
      %v382 = vadd.f32 %v344, %v354
      %v383 = vadd.f32 %v345, %v354
      %v384 = vadd.f32 %v346, %v354
      %v385 = vadd.f32 %v347, %v354
      %v386 = vadd.f32 %v348, %v354
      %v387 = vadd.f32 %v349, %v354
      %v388 = vmax.f32 %v356, 0.0
      %v389 = vmax.f32 %v357, 0.0
      %v390 = vmax.f32 %v358, 0.0
      %v391 = vmax.f32 %v359, 0.0
      %v392 = vmax.f32 %v360, 0.0
      %v393 = vmax.f32 %v361, 0.0
      %v394 = vmax.f32 %v362, 0.0
      %v395 = vmax.f32 %v363, 0.0
      %v396 = vmax.f32 %v364, 0.0
      %v397 = vmax.f32 %v365, 0.0
      %v398 = vmax.f32 %v366, 0.0
      %v399 = vmax.f32 %v367, 0.0
      %v400 = vmax.f32 %v368, 0.0
      %v401 = vmax.f32 %v369, 0.0
      %v402 = vmax.f32 %v370, 0.0
      %v403 = vmax.f32 %v371, 0.0
      %v404 = vmax.f32 %v372, 0.0
      %v405 = vmax.f32 %v373, 0.0
      %v406 = vmax.f32 %v374, 0.0
      %v407 = vmax.f32 %v375, 0.0
      %v408 = vmax.f32 %v376, 0.0
      %v409 = vmax.f32 %v377, 0.0
      %v410 = vmax.f32 %v378, 0.0
      %v411 = vmax.f32 %v379, 0.0
      %v412 = vmax.f32 %v380, 0.0
      %v413 = vmax.f32 %v381, 0.0
      %v414 = vmax.f32 %v382, 0.0
      %v415 = vmax.f32 %v383, 0.0
      %v416 = vmax.f32 %v384, 0.0
      %v417 = vmax.f32 %v385, 0.0
      %v418 = vmax.f32 %v386, 0.0
      %v419 = vmax.f32 %v387, 0.0
      %v420 = vpack.c.bf16 %v389, %v388
      %v421 = vpack.c.bf16 %v391, %v390
      %v422 = vpack.c.bf16 %v393, %v392
      %v423 = vpack.c.bf16 %v395, %v394
      %v424 = vpack.c.bf16 %v397, %v396
      %v425 = vpack.c.bf16 %v399, %v398
      %v426 = vpack.c.bf16 %v401, %v400
      %v427 = vpack.c.bf16 %v403, %v402
      %v428 = vpack.c.bf16 %v405, %v404
      %v429 = vpack.c.bf16 %v407, %v406
      %v430 = vpack.c.bf16 %v409, %v408
      %v431 = vpack.c.bf16 %v411, %v410
      %v432 = vpack.c.bf16 %v413, %v412
      %v433 = vpack.c.bf16 %v415, %v414
      %v434 = vpack.c.bf16 %v417, %v416
      %v435 = vpack.c.bf16 %v419, %v418
      %vm436 = vcmask 64512
      %437 = vst.msk [vmem:[#allocation3] sm:$0xff] %vm436, %v420
      %438 = vst.msk [vmem:[#allocation3 + $0x8] sm:$0xff] %vm436, %v421
      %439 = vst.msk [vmem:[#allocation3 + $0x10] sm:$0xff] %vm436, %v422
      %440 = vst.msk [vmem:[#allocation3 + $0x18] sm:$0xff] %vm436, %v423
      %441 = vst.msk [vmem:[#allocation3 + $0x20] sm:$0xff] %vm436, %v424
      %442 = vst.msk [vmem:[#allocation3 + $0x28] sm:$0xff] %vm436, %v425
      %443 = vst.msk [vmem:[#allocation3 + $0x30] sm:$0xff] %vm436, %v426
      %444 = vst.msk [vmem:[#allocation3 + $0x38] sm:$0xff] %vm436, %v427
      %445 = vst.msk [vmem:[#allocation3 + $0x40] sm:$0xff] %vm436, %v428
      %446 = vst.msk [vmem:[#allocation3 + $0x48] sm:$0xff] %vm436, %v429
      %447 = vst.msk [vmem:[#allocation3 + $0x50] sm:$0xff] %vm436, %v430
      %448 = vst.msk [vmem:[#allocation3 + $0x58] sm:$0xff] %vm436, %v431
      %449 = vst.msk [vmem:[#allocation3 + $0x60] sm:$0xff] %vm436, %v432
      %450 = vst.msk [vmem:[#allocation3 + $0x68] sm:$0xff] %vm436, %v433
      %451 = vst.msk [vmem:[#allocation3 + $0x70] sm:$0xff] %vm436, %v434
      %452 = vst.msk [vmem:[#allocation3 + $0x78] sm:$0xff] %vm436, %v435
      %vm453 = vcmask 1047616
      %454 = vst.msk [vmem:[#allocation3] sm:$0xff] %vm453, 0
      %455 = vst.msk [vmem:[#allocation3 + $0x8] sm:$0xff] %vm453, 0
      %456 = vst.msk [vmem:[#allocation3 + $0x10] sm:$0xff] %vm453, 0
      %457 = vst.msk [vmem:[#allocation3 + $0x18] sm:$0xff] %vm453, 0
      %458 = vst.msk [vmem:[#allocation3 + $0x20] sm:$0xff] %vm453, 0
      %459 = vst.msk [vmem:[#allocation3 + $0x28] sm:$0xff] %vm453, 0
      %460 = vst.msk [vmem:[#allocation3 + $0x30] sm:$0xff] %vm453, 0
      %461 = vst.msk [vmem:[#allocation3 + $0x38] sm:$0xff] %vm453, 0
      %462 = vst.msk [vmem:[#allocation3 + $0x40] sm:$0xff] %vm453, 0
      %463 = vst.msk [vmem:[#allocation3 + $0x48] sm:$0xff] %vm453, 0
      %464 = vst.msk [vmem:[#allocation3 + $0x50] sm:$0xff] %vm453, 0
      %465 = vst.msk [vmem:[#allocation3 + $0x58] sm:$0xff] %vm453, 0
      %466 = vst.msk [vmem:[#allocation3 + $0x60] sm:$0xff] %vm453, 0
      %467 = vst.msk [vmem:[#allocation3 + $0x68] sm:$0xff] %vm453, 0
      %468 = vst.msk [vmem:[#allocation3 + $0x70] sm:$0xff] %vm453, 0
      %469 = vst.msk [vmem:[#allocation3 + $0x78] sm:$0xff] %vm453, 0
      %470 = vst [vmem:[#allocation2] sm:$0xff] 0
      %vm471 = vcmask 1040384
      %vm472 = vsmask.f32 256
      %vm473 = vmand %vm471, %vm472
      %v474 = vld [vmem:[#allocation2] sm:$0x1]
      %v475 = vsel %vm473, 0, %v474
      %476 = vst [vmem:[#allocation2] sm:$0x1] %v475
      %v477 = vld [vmem:[#allocation2 + $0x50] sm:$0x1]
      %v478 = vsel %vm473, 0, %v477
      %479 = vst [vmem:[#allocation2 + $0x50] sm:$0x1] %v478
      %v480 = vld [vmem:[#allocation2 + $0xa0] sm:$0x1]
      %v481 = vsel %vm473, 0, %v480
      %482 = vst [vmem:[#allocation2 + $0xa0] sm:$0x1] %v481
      %v483 = vld [vmem:[#allocation2 + $0xf0] sm:$0x1]
      %v484 = vsel %vm473, 0, %v483
      %485 = vst [vmem:[#allocation2 + $0xf0] sm:$0x1] %v484
      %v486 = vld [vmem:[#allocation2 + $0x140] sm:$0x1]
      %v487 = vsel %vm473, 0, %v486
      %488 = vst [vmem:[#allocation2 + $0x140] sm:$0x1] %v487
      %v489 = vld [vmem:[#allocation2 + $0x190] sm:$0x1]
      %v490 = vsel %vm473, 0, %v489
      %491 = vst [vmem:[#allocation2 + $0x190] sm:$0x1] %v490
      %v492 = vld [vmem:[#allocation2 + $0x1e0] sm:$0x1]
      %v493 = vsel %vm473, 0, %v492
      %494 = vst [vmem:[#allocation2 + $0x1e0] sm:$0x1] %v493
      %v495 = vld [vmem:[#allocation2 + $0x230] sm:$0x1]
      %v496 = vsel %vm473, 0, %v495
      %497 = vst [vmem:[#allocation2 + $0x230] sm:$0x1] %v496
      %v498 = vld [vmem:[#allocation2 + $0x280] sm:$0x1]
      %v499 = vsel %vm473, 0, %v498
      %500 = vst [vmem:[#allocation2 + $0x280] sm:$0x1] %v499
      %v501 = vld [vmem:[#allocation2 + $0x2d0] sm:$0x1]
      %v502 = vsel %vm473, 0, %v501
      %503 = vst [vmem:[#allocation2 + $0x2d0] sm:$0x1] %v502
      %v504 = vld [vmem:[#allocation2 + $0x320] sm:$0x1]
      %v505 = vsel %vm473, 0, %v504
      %506 = vst [vmem:[#allocation2 + $0x320] sm:$0x1] %v505
      %v507 = vld [vmem:[#allocation2 + $0x370] sm:$0x1]
      %v508 = vsel %vm473, 0, %v507
      %509 = vst [vmem:[#allocation2 + $0x370] sm:$0x1] %v508
      %v510 = vld [vmem:[#allocation2 + $0x3c0] sm:$0x1]
      %v511 = vsel %vm473, 0, %v510
      %512 = vst [vmem:[#allocation2 + $0x3c0] sm:$0x1] %v511
      %v513 = vld [vmem:[#allocation2 + $0x410] sm:$0x1]
      %v514 = vsel %vm473, 0, %v513
      %515 = vst [vmem:[#allocation2 + $0x410] sm:$0x1] %v514
      %v516 = vld [vmem:[#allocation2 + $0x460] sm:$0x1]
      %v517 = vsel %vm473, 0, %v516
      %518 = vst [vmem:[#allocation2 + $0x460] sm:$0x1] %v517
      %v519 = vld [vmem:[#allocation2 + $0x4b0] sm:$0x1]
      %v520 = vsel %vm473, 0, %v519
      %521 = vst [vmem:[#allocation2 + $0x4b0] sm:$0x1] %v520
      %v522 = vld [vmem:[#allocation3] sm:$0xff]
      %v523 = vld [vmem:[#allocation3 + $0x8] sm:$0xff]
      %v524 = vld [vmem:[#allocation3 + $0x10] sm:$0xff]
      %v525 = vld [vmem:[#allocation3 + $0x18] sm:$0xff]
      %v526 = vld [vmem:[#allocation3 + $0x20] sm:$0xff]
      %v527 = vld [vmem:[#allocation3 + $0x28] sm:$0xff]
      %v528 = vld [vmem:[#allocation3 + $0x30] sm:$0xff]
      %v529 = vld [vmem:[#allocation3 + $0x38] sm:$0xff]
      %v530 = vld [vmem:[#allocation3 + $0x40] sm:$0xff]
      %v531 = vld [vmem:[#allocation3 + $0x48] sm:$0xff]
      %v532 = vld [vmem:[#allocation3 + $0x50] sm:$0xff]
      %v533 = vld [vmem:[#allocation3 + $0x58] sm:$0xff]
      %v534 = vld [vmem:[#allocation3 + $0x60] sm:$0xff]
      %v535 = vld [vmem:[#allocation3 + $0x68] sm:$0xff]
      %v536 = vld [vmem:[#allocation3 + $0x70] sm:$0xff]
      %v538 = vshrl.u32 %v522, 16
      %v540 = vrot.slane %v538, 7
      %v541 = vshll.u32 %v522, 16
      %v543 = vor.u32 %v540, %v541
      %v545 = vshrl.u32 %v523, 16
      %v547 = vrot.slane %v545, 7
      %v548 = vshll.u32 %v523, 16
      %v550 = vor.u32 %v547, %v548
      %v552 = vshrl.u32 %v524, 16
      %v554 = vrot.slane %v552, 7
      %v555 = vshll.u32 %v524, 16
      %v557 = vor.u32 %v554, %v555
      %v559 = vshrl.u32 %v525, 16
      %v561 = vrot.slane %v559, 7
      %v562 = vshll.u32 %v525, 16
      %v564 = vor.u32 %v561, %v562
      %v566 = vshrl.u32 %v526, 16
      %v568 = vrot.slane %v566, 7
      %v569 = vshll.u32 %v526, 16
      %v571 = vor.u32 %v568, %v569
      %v573 = vshrl.u32 %v527, 16
      %v575 = vrot.slane %v573, 7
      %v576 = vshll.u32 %v527, 16
      %v578 = vor.u32 %v575, %v576
      %v580 = vshrl.u32 %v528, 16
      %v582 = vrot.slane %v580, 7
      %v583 = vshll.u32 %v528, 16
      %v585 = vor.u32 %v582, %v583
      %v587 = vshrl.u32 %v529, 16
      %v589 = vrot.slane %v587, 7
      %v590 = vshll.u32 %v529, 16
      %v592 = vor.u32 %v589, %v590
      %v594 = vshrl.u32 %v530, 16
      %v596 = vrot.slane %v594, 7
      %v597 = vshll.u32 %v530, 16
      %v599 = vor.u32 %v596, %v597
      %v601 = vshrl.u32 %v531, 16
      %v603 = vrot.slane %v601, 7
      %v604 = vshll.u32 %v531, 16
      %v606 = vor.u32 %v603, %v604
      %v608 = vshrl.u32 %v532, 16
      %v610 = vrot.slane %v608, 7
      %v611 = vshll.u32 %v532, 16
      %v613 = vor.u32 %v610, %v611
      %v615 = vshrl.u32 %v533, 16
      %v617 = vrot.slane %v615, 7
      %v618 = vshll.u32 %v533, 16
      %v620 = vor.u32 %v617, %v618
      %v622 = vshrl.u32 %v534, 16
      %v624 = vrot.slane %v622, 7
      %v625 = vshll.u32 %v534, 16
      %v627 = vor.u32 %v624, %v625
      %v629 = vshrl.u32 %v535, 16
      %v631 = vrot.slane %v629, 7
      %v632 = vshll.u32 %v535, 16
      %v634 = vor.u32 %v631, %v632
      %v636 = vshrl.u32 %v536, 16
      %v638 = vrot.slane %v636, 7
      %v639 = vshll.u32 %v536, 16
      %v641 = vor.u32 %v638, %v639
      %s657 = scalar_lea.vmem [#allocation2], 80
      %vm658 = vcmask 1047552
      %vm659 = vsmask.f32 7938
      %vm660 = vmand %vm658, %vm659
      %v661 = vld [vmem:[%s657] sm:$0xff]
      %v662 = vsel %vm660, %v543, %v661
      %663 = vst [vmem:[%s657] sm:$0xff] %v662
      %v664 = vld [vmem:[%s657 + $0x50] sm:$0xff]
      %v665 = vsel %vm660, %v550, %v664
      %666 = vst [vmem:[%s657 + $0x50] sm:$0xff] %v665
      %v667 = vld [vmem:[%s657 + $0xa0] sm:$0xff]
      %v668 = vsel %vm660, %v557, %v667
      %669 = vst [vmem:[%s657 + $0xa0] sm:$0xff] %v668
      %v670 = vld [vmem:[%s657 + $0xf0] sm:$0xff]
      %v671 = vsel %vm660, %v564, %v670
      %672 = vst [vmem:[%s657 + $0xf0] sm:$0xff] %v671
      %v673 = vld [vmem:[%s657 + $0x140] sm:$0xff]
      %v674 = vsel %vm660, %v571, %v673
      %675 = vst [vmem:[%s657 + $0x140] sm:$0xff] %v674
      %v676 = vld [vmem:[%s657 + $0x190] sm:$0xff]
      %v677 = vsel %vm660, %v578, %v676
      %678 = vst [vmem:[%s657 + $0x190] sm:$0xff] %v677
      %v679 = vld [vmem:[%s657 + $0x1e0] sm:$0xff]
      %v680 = vsel %vm660, %v585, %v679
      %681 = vst [vmem:[%s657 + $0x1e0] sm:$0xff] %v680
      %v682 = vld [vmem:[%s657 + $0x230] sm:$0xff]
      %v683 = vsel %vm660, %v592, %v682
      %684 = vst [vmem:[%s657 + $0x230] sm:$0xff] %v683
      %v685 = vld [vmem:[%s657 + $0x280] sm:$0xff]
      %v686 = vsel %vm660, %v599, %v685
      %687 = vst [vmem:[%s657 + $0x280] sm:$0xff] %v686
      %v688 = vld [vmem:[%s657 + $0x2d0] sm:$0xff]
      %v689 = vsel %vm660, %v606, %v688
      %690 = vst [vmem:[%s657 + $0x2d0] sm:$0xff] %v689
      %v691 = vld [vmem:[%s657 + $0x320] sm:$0xff]
      %v692 = vsel %vm660, %v613, %v691
      %693 = vst [vmem:[%s657 + $0x320] sm:$0xff] %v692
      %v694 = vld [vmem:[%s657 + $0x370] sm:$0xff]
      %v695 = vsel %vm660, %v620, %v694
      %696 = vst [vmem:[%s657 + $0x370] sm:$0xff] %v695
      %v697 = vld [vmem:[%s657 + $0x3c0] sm:$0xff]
      %v698 = vsel %vm660, %v627, %v697
      %699 = vst [vmem:[%s657 + $0x3c0] sm:$0xff] %v698
      %v700 = vld [vmem:[%s657 + $0x410] sm:$0xff]
      %v701 = vsel %vm660, %v634, %v700
      %702 = vst [vmem:[%s657 + $0x410] sm:$0xff] %v701
      %v703 = vld [vmem:[%s657 + $0x460] sm:$0xff]
      %v704 = vsel %vm660, %v641, %v703
      %705 = vst [vmem:[%s657 + $0x460] sm:$0xff] %v704
      %706 = vst [vmem:[#allocation2 + $0x8] sm:$0xff] 0
      %v707 = vld [vmem:[#allocation3] sm:$0xff]
      %v708 = vld [vmem:[#allocation3 + $0x8] sm:$0xff]
      %v709 = vld [vmem:[#allocation3 + $0x10] sm:$0xff]
      %v710 = vld [vmem:[#allocation3 + $0x18] sm:$0xff]
      %v711 = vld [vmem:[#allocation3 + $0x20] sm:$0xff]
      %v712 = vld [vmem:[#allocation3 + $0x28] sm:$0xff]
      %v713 = vld [vmem:[#allocation3 + $0x30] sm:$0xff]
      %v714 = vld [vmem:[#allocation3 + $0x38] sm:$0xff]
      %v715 = vld [vmem:[#allocation3 + $0x40] sm:$0xff]
      %v716 = vld [vmem:[#allocation3 + $0x48] sm:$0xff]
      %v717 = vld [vmem:[#allocation3 + $0x50] sm:$0xff]
      %v718 = vld [vmem:[#allocation3 + $0x58] sm:$0xff]
      %v719 = vld [vmem:[#allocation3 + $0x60] sm:$0xff]
      %v720 = vld [vmem:[#allocation3 + $0x68] sm:$0xff]
      %v721 = vld [vmem:[#allocation3 + $0x70] sm:$0xff]
      %722 = vst [vmem:[%s657 + $0x8] sm:$0xff] %v707
      %723 = vst [vmem:[%s657 + $0x58] sm:$0xff] %v708
      %724 = vst [vmem:[%s657 + $0xa8] sm:$0xff] %v709
      %725 = vst [vmem:[%s657 + $0xf8] sm:$0xff] %v710
      %726 = vst [vmem:[%s657 + $0x148] sm:$0xff] %v711
      %727 = vst [vmem:[%s657 + $0x198] sm:$0xff] %v712
      %728 = vst [vmem:[%s657 + $0x1e8] sm:$0xff] %v713
      %729 = vst [vmem:[%s657 + $0x238] sm:$0xff] %v714
      %730 = vst [vmem:[%s657 + $0x288] sm:$0xff] %v715
      %731 = vst [vmem:[%s657 + $0x2d8] sm:$0xff] %v716
      %732 = vst [vmem:[%s657 + $0x328] sm:$0xff] %v717
      %733 = vst [vmem:[%s657 + $0x378] sm:$0xff] %v718
      %734 = vst [vmem:[%s657 + $0x3c8] sm:$0xff] %v719
      %735 = vst [vmem:[%s657 + $0x418] sm:$0xff] %v720
      %736 = vst [vmem:[%s657 + $0x468] sm:$0xff] %v721
      %737 = vst [vmem:[#allocation2 + $0x10] sm:$0xff] 0
      %vm738 = vcmask 1047559
      %vm739 = vsmask.f32 7966
      %vm740 = vmand %vm738, %vm739
      %v741 = vld [vmem:[#allocation2 + $0x10] sm:$0x80]
      %v742 = vsel %vm740, 0, %v741
      %743 = vst [vmem:[#allocation2 + $0x10] sm:$0x80] %v742
      %v744 = vld [vmem:[#allocation2 + $0x60] sm:$0x80]
      %v745 = vsel %vm740, 0, %v744
      %746 = vst [vmem:[#allocation2 + $0x60] sm:$0x80] %v745
      %v747 = vld [vmem:[#allocation2 + $0xb0] sm:$0x80]
      %v748 = vsel %vm740, 0, %v747
      %749 = vst [vmem:[#allocation2 + $0xb0] sm:$0x80] %v748
      %v750 = vld [vmem:[#allocation2 + $0x100] sm:$0x80]
      %v751 = vsel %vm740, 0, %v750
      %752 = vst [vmem:[#allocation2 + $0x100] sm:$0x80] %v751
      %v753 = vld [vmem:[#allocation2 + $0x150] sm:$0x80]
      %v754 = vsel %vm740, 0, %v753
      %755 = vst [vmem:[#allocation2 + $0x150] sm:$0x80] %v754
      %v756 = vld [vmem:[#allocation2 + $0x1a0] sm:$0x80]
      %v757 = vsel %vm740, 0, %v756
      %758 = vst [vmem:[#allocation2 + $0x1a0] sm:$0x80] %v757
      %v759 = vld [vmem:[#allocation2 + $0x1f0] sm:$0x80]
      %v760 = vsel %vm740, 0, %v759
      %761 = vst [vmem:[#allocation2 + $0x1f0] sm:$0x80] %v760
      %v762 = vld [vmem:[#allocation2 + $0x240] sm:$0x80]
      %v763 = vsel %vm740, 0, %v762
      %764 = vst [vmem:[#allocation2 + $0x240] sm:$0x80] %v763
      %v765 = vld [vmem:[#allocation2 + $0x290] sm:$0x80]
      %v766 = vsel %vm740, 0, %v765
      %767 = vst [vmem:[#allocation2 + $0x290] sm:$0x80] %v766
      %v768 = vld [vmem:[#allocation2 + $0x2e0] sm:$0x80]
      %v769 = vsel %vm740, 0, %v768
      %770 = vst [vmem:[#allocation2 + $0x2e0] sm:$0x80] %v769
      %v771 = vld [vmem:[#allocation2 + $0x330] sm:$0x80]
      %v772 = vsel %vm740, 0, %v771
      %773 = vst [vmem:[#allocation2 + $0x330] sm:$0x80] %v772
      %v774 = vld [vmem:[#allocation2 + $0x380] sm:$0x80]
      %v775 = vsel %vm740, 0, %v774
      %776 = vst [vmem:[#allocation2 + $0x380] sm:$0x80] %v775
      %v777 = vld [vmem:[#allocation2 + $0x3d0] sm:$0x80]
      %v778 = vsel %vm740, 0, %v777
      %779 = vst [vmem:[#allocation2 + $0x3d0] sm:$0x80] %v778
      %v780 = vld [vmem:[#allocation2 + $0x420] sm:$0x80]
      %v781 = vsel %vm740, 0, %v780
      %782 = vst [vmem:[#allocation2 + $0x420] sm:$0x80] %v781
      %v783 = vld [vmem:[#allocation2 + $0x470] sm:$0x80]
      %v784 = vsel %vm740, 0, %v783
      %785 = vst [vmem:[#allocation2 + $0x470] sm:$0x80] %v784
      %v786 = vld [vmem:[#allocation2 + $0x4c0] sm:$0x80]
      %v787 = vsel %vm740, 0, %v786
      %788 = vst [vmem:[#allocation2 + $0x4c0] sm:$0x80] %v787
      %v789 = vld [vmem:[#allocation3] sm:$0xff]
      %v790 = vld [vmem:[#allocation3 + $0x8] sm:$0xff]
      %v791 = vld [vmem:[#allocation3 + $0x10] sm:$0xff]
      %v792 = vld [vmem:[#allocation3 + $0x18] sm:$0xff]
      %v793 = vld [vmem:[#allocation3 + $0x20] sm:$0xff]
      %v794 = vld [vmem:[#allocation3 + $0x28] sm:$0xff]
      %v795 = vld [vmem:[#allocation3 + $0x30] sm:$0xff]
      %v796 = vld [vmem:[#allocation3 + $0x38] sm:$0xff]
      %v797 = vld [vmem:[#allocation3 + $0x40] sm:$0xff]
      %v798 = vld [vmem:[#allocation3 + $0x48] sm:$0xff]
      %v799 = vld [vmem:[#allocation3 + $0x50] sm:$0xff]
      %v800 = vld [vmem:[#allocation3 + $0x58] sm:$0xff]
      %v801 = vld [vmem:[#allocation3 + $0x60] sm:$0xff]
      %v802 = vld [vmem:[#allocation3 + $0x68] sm:$0xff]
      %v803 = vld [vmem:[#allocation3 + $0x70] sm:$0xff]
      %v805 = vshrl.u32 %v789, 16
      %v807 = vshll.u32 %v789, 16
      %v809 = vrot.slane %v807, 1
      %v810 = vor.u32 %v805, %v809
      %v812 = vshrl.u32 %v790, 16
      %v814 = vshll.u32 %v790, 16
      %v816 = vrot.slane %v814, 1
      %v817 = vor.u32 %v812, %v816
      %v819 = vshrl.u32 %v791, 16
      %v821 = vshll.u32 %v791, 16
      %v823 = vrot.slane %v821, 1
      %v824 = vor.u32 %v819, %v823
      %v826 = vshrl.u32 %v792, 16
      %v828 = vshll.u32 %v792, 16
      %v830 = vrot.slane %v828, 1
      %v831 = vor.u32 %v826, %v830
      %v833 = vshrl.u32 %v793, 16
      %v835 = vshll.u32 %v793, 16
      %v837 = vrot.slane %v835, 1
      %v838 = vor.u32 %v833, %v837
      %v840 = vshrl.u32 %v794, 16
      %v842 = vshll.u32 %v794, 16
      %v844 = vrot.slane %v842, 1
      %v845 = vor.u32 %v840, %v844
      %v847 = vshrl.u32 %v795, 16
      %v849 = vshll.u32 %v795, 16
      %v851 = vrot.slane %v849, 1
      %v852 = vor.u32 %v847, %v851
      %v854 = vshrl.u32 %v796, 16
      %v856 = vshll.u32 %v796, 16
      %v858 = vrot.slane %v856, 1
      %v859 = vor.u32 %v854, %v858
      %v861 = vshrl.u32 %v797, 16
      %v863 = vshll.u32 %v797, 16
      %v865 = vrot.slane %v863, 1
      %v866 = vor.u32 %v861, %v865
      %v868 = vshrl.u32 %v798, 16
      %v870 = vshll.u32 %v798, 16
      %v872 = vrot.slane %v870, 1
      %v873 = vor.u32 %v868, %v872
      %v875 = vshrl.u32 %v799, 16
      %v877 = vshll.u32 %v799, 16
      %v879 = vrot.slane %v877, 1
      %v880 = vor.u32 %v875, %v879
      %v882 = vshrl.u32 %v800, 16
      %v884 = vshll.u32 %v800, 16
      %v886 = vrot.slane %v884, 1
      %v887 = vor.u32 %v882, %v886
      %v889 = vshrl.u32 %v801, 16
      %v891 = vshll.u32 %v801, 16
      %v893 = vrot.slane %v891, 1
      %v894 = vor.u32 %v889, %v893
      %v896 = vshrl.u32 %v802, 16
      %v898 = vshll.u32 %v802, 16
      %v900 = vrot.slane %v898, 1
      %v901 = vor.u32 %v896, %v900
      %v903 = vshrl.u32 %v803, 16
      %v905 = vshll.u32 %v803, 16
      %v907 = vrot.slane %v905, 1
      %v908 = vor.u32 %v903, %v907
      %vm924 = vsmask.f32 7424
      %vm925 = vmand %vm658, %vm924
      %v926 = vld [vmem:[%s657 + $0x10] sm:$0xff]
      %v927 = vsel %vm925, %v810, %v926
      %928 = vst [vmem:[%s657 + $0x10] sm:$0xff] %v927
      %v929 = vld [vmem:[%s657 + $0x60] sm:$0xff]
      %v930 = vsel %vm925, %v817, %v929
      %931 = vst [vmem:[%s657 + $0x60] sm:$0xff] %v930
      %v932 = vld [vmem:[%s657 + $0xb0] sm:$0xff]
      %v933 = vsel %vm925, %v824, %v932
      %934 = vst [vmem:[%s657 + $0xb0] sm:$0xff] %v933
      %v935 = vld [vmem:[%s657 + $0x100] sm:$0xff]
      %v936 = vsel %vm925, %v831, %v935
      %937 = vst [vmem:[%s657 + $0x100] sm:$0xff] %v936
      %v938 = vld [vmem:[%s657 + $0x150] sm:$0xff]
      %v939 = vsel %vm925, %v838, %v938
      %940 = vst [vmem:[%s657 + $0x150] sm:$0xff] %v939
      %v941 = vld [vmem:[%s657 + $0x1a0] sm:$0xff]
      %v942 = vsel %vm925, %v845, %v941
      %943 = vst [vmem:[%s657 + $0x1a0] sm:$0xff] %v942
      %v944 = vld [vmem:[%s657 + $0x1f0] sm:$0xff]
      %v945 = vsel %vm925, %v852, %v944
      %946 = vst [vmem:[%s657 + $0x1f0] sm:$0xff] %v945
      %v947 = vld [vmem:[%s657 + $0x240] sm:$0xff]
      %v948 = vsel %vm925, %v859, %v947
      %949 = vst [vmem:[%s657 + $0x240] sm:$0xff] %v948
      %v950 = vld [vmem:[%s657 + $0x290] sm:$0xff]
      %v951 = vsel %vm925, %v866, %v950
      %952 = vst [vmem:[%s657 + $0x290] sm:$0xff] %v951
      %v953 = vld [vmem:[%s657 + $0x2e0] sm:$0xff]
      %v954 = vsel %vm925, %v873, %v953
      %955 = vst [vmem:[%s657 + $0x2e0] sm:$0xff] %v954
      %v956 = vld [vmem:[%s657 + $0x330] sm:$0xff]
      %v957 = vsel %vm925, %v880, %v956
      %958 = vst [vmem:[%s657 + $0x330] sm:$0xff] %v957
      %v959 = vld [vmem:[%s657 + $0x380] sm:$0xff]
      %v960 = vsel %vm925, %v887, %v959
      %961 = vst [vmem:[%s657 + $0x380] sm:$0xff] %v960
      %v962 = vld [vmem:[%s657 + $0x3d0] sm:$0xff]
      %v963 = vsel %vm925, %v894, %v962
      %964 = vst [vmem:[%s657 + $0x3d0] sm:$0xff] %v963
      %v965 = vld [vmem:[%s657 + $0x420] sm:$0xff]
      %v966 = vsel %vm925, %v901, %v965
      %967 = vst [vmem:[%s657 + $0x420] sm:$0xff] %v966
      %v968 = vld [vmem:[%s657 + $0x470] sm:$0xff]
      %v969 = vsel %vm925, %v908, %v968
      %970 = vst [vmem:[%s657 + $0x470] sm:$0xff] %v969
      %v971 = vld [vmem:[#allocation2 + $0x18] sm:$0x1]
      %v972 = vsel %vm473, 0, %v971
      %973 = vst [vmem:[#allocation2 + $0x18] sm:$0x1] %v972
      %v974 = vld [vmem:[#allocation2 + $0x68] sm:$0x1]
      %v975 = vsel %vm473, 0, %v974
      %976 = vst [vmem:[#allocation2 + $0x68] sm:$0x1] %v975
      %v977 = vld [vmem:[#allocation2 + $0xb8] sm:$0x1]
      %v978 = vsel %vm473, 0, %v977
      %979 = vst [vmem:[#allocation2 + $0xb8] sm:$0x1] %v978
      %v980 = vld [vmem:[#allocation2 + $0x108] sm:$0x1]
      %v981 = vsel %vm473, 0, %v980
      %982 = vst [vmem:[#allocation2 + $0x108] sm:$0x1] %v981
      %v983 = vld [vmem:[#allocation2 + $0x158] sm:$0x1]
      %v984 = vsel %vm473, 0, %v983
      %985 = vst [vmem:[#allocation2 + $0x158] sm:$0x1] %v984
      %v986 = vld [vmem:[#allocation2 + $0x1a8] sm:$0x1]
      %v987 = vsel %vm473, 0, %v986
      %988 = vst [vmem:[#allocation2 + $0x1a8] sm:$0x1] %v987
      %v989 = vld [vmem:[#allocation2 + $0x1f8] sm:$0x1]
      %v990 = vsel %vm473, 0, %v989
      %991 = vst [vmem:[#allocation2 + $0x1f8] sm:$0x1] %v990
      %v992 = vld [vmem:[#allocation2 + $0x248] sm:$0x1]
      %v993 = vsel %vm473, 0, %v992
      %994 = vst [vmem:[#allocation2 + $0x248] sm:$0x1] %v993
      %v995 = vld [vmem:[#allocation2 + $0x298] sm:$0x1]
      %v996 = vsel %vm473, 0, %v995
      %997 = vst [vmem:[#allocation2 + $0x298] sm:$0x1] %v996
      %v998 = vld [vmem:[#allocation2 + $0x2e8] sm:$0x1]
      %v999 = vsel %vm473, 0, %v998
      %1000 = vst [vmem:[#allocation2 + $0x2e8] sm:$0x1] %v999
      %v1001 = vld [vmem:[#allocation2 + $0x338] sm:$0x1]
      %v1002 = vsel %vm473, 0, %v1001
      %1003 = vst [vmem:[#allocation2 + $0x338] sm:$0x1] %v1002
      %v1004 = vld [vmem:[#allocation2 + $0x388] sm:$0x1]
      %v1005 = vsel %vm473, 0, %v1004
      %1006 = vst [vmem:[#allocation2 + $0x388] sm:$0x1] %v1005
      %v1007 = vld [vmem:[#allocation2 + $0x3d8] sm:$0x1]
      %v1008 = vsel %vm473, 0, %v1007
      %1009 = vst [vmem:[#allocation2 + $0x3d8] sm:$0x1] %v1008
      %v1010 = vld [vmem:[#allocation2 + $0x428] sm:$0x1]
      %v1011 = vsel %vm473, 0, %v1010
      %1012 = vst [vmem:[#allocation2 + $0x428] sm:$0x1] %v1011
      %v1013 = vld [vmem:[#allocation2 + $0x478] sm:$0x1]
      %v1014 = vsel %vm473, 0, %v1013
      %1015 = vst [vmem:[#allocation2 + $0x478] sm:$0x1] %v1014
      %v1016 = vld [vmem:[#allocation2 + $0x4c8] sm:$0x1]
      %v1017 = vsel %vm473, 0, %v1016
      %1018 = vst [vmem:[#allocation2 + $0x4c8] sm:$0x1] %v1017
      %v1019 = vld [vmem:[#allocation3] sm:$0xff]
      %v1020 = vld [vmem:[#allocation3 + $0x8] sm:$0xff]
      %v1021 = vld [vmem:[#allocation3 + $0x10] sm:$0xff]
      %v1022 = vld [vmem:[#allocation3 + $0x18] sm:$0xff]
      %v1023 = vld [vmem:[#allocation3 + $0x20] sm:$0xff]
      %v1024 = vld [vmem:[#allocation3 + $0x28] sm:$0xff]
      %v1025 = vld [vmem:[#allocation3 + $0x30] sm:$0xff]
      %v1026 = vld [vmem:[#allocation3 + $0x38] sm:$0xff]
      %v1027 = vld [vmem:[#allocation3 + $0x40] sm:$0xff]
      %v1028 = vld [vmem:[#allocation3 + $0x48] sm:$0xff]
      %v1029 = vld [vmem:[#allocation3 + $0x50] sm:$0xff]
      %v1030 = vld [vmem:[#allocation3 + $0x58] sm:$0xff]
      %v1031 = vld [vmem:[#allocation3 + $0x60] sm:$0xff]
      %v1032 = vld [vmem:[#allocation3 + $0x68] sm:$0xff]
      %v1033 = vld [vmem:[#allocation3 + $0x70] sm:$0xff]
      %v1034 = vld [vmem:[#allocation3 + $0x78] sm:$0xff]
      %v1036 = vshrl.u32 %v1019, 16
      %v1038 = vrot.slane %v1036, 7
      %v1039 = vshll.u32 %v1019, 16
      %v1041 = vor.u32 %v1038, %v1039
      %v1043 = vshrl.u32 %v1020, 16
      %v1045 = vrot.slane %v1043, 7
      %v1046 = vshll.u32 %v1020, 16
      %v1048 = vor.u32 %v1045, %v1046
      %v1050 = vshrl.u32 %v1021, 16
      %v1052 = vrot.slane %v1050, 7
      %v1053 = vshll.u32 %v1021, 16
      %v1055 = vor.u32 %v1052, %v1053
      %v1057 = vshrl.u32 %v1022, 16
      %v1059 = vrot.slane %v1057, 7
      %v1060 = vshll.u32 %v1022, 16
      %v1062 = vor.u32 %v1059, %v1060
      %v1064 = vshrl.u32 %v1023, 16
      %v1066 = vrot.slane %v1064, 7
      %v1067 = vshll.u32 %v1023, 16
      %v1069 = vor.u32 %v1066, %v1067
      %v1071 = vshrl.u32 %v1024, 16
      %v1073 = vrot.slane %v1071, 7
      %v1074 = vshll.u32 %v1024, 16
      %v1076 = vor.u32 %v1073, %v1074
      %v1078 = vshrl.u32 %v1025, 16
      %v1080 = vrot.slane %v1078, 7
      %v1081 = vshll.u32 %v1025, 16
      %v1083 = vor.u32 %v1080, %v1081
      %v1085 = vshrl.u32 %v1026, 16
      %v1087 = vrot.slane %v1085, 7
      %v1088 = vshll.u32 %v1026, 16
      %v1090 = vor.u32 %v1087, %v1088
      %v1092 = vshrl.u32 %v1027, 16
      %v1094 = vrot.slane %v1092, 7
      %v1095 = vshll.u32 %v1027, 16
      %v1097 = vor.u32 %v1094, %v1095
      %v1099 = vshrl.u32 %v1028, 16
      %v1101 = vrot.slane %v1099, 7
      %v1102 = vshll.u32 %v1028, 16
      %v1104 = vor.u32 %v1101, %v1102
      %v1106 = vshrl.u32 %v1029, 16
      %v1108 = vrot.slane %v1106, 7
      %v1109 = vshll.u32 %v1029, 16
      %v1111 = vor.u32 %v1108, %v1109
      %v1113 = vshrl.u32 %v1030, 16
      %v1115 = vrot.slane %v1113, 7
      %v1116 = vshll.u32 %v1030, 16
      %v1118 = vor.u32 %v1115, %v1116
      %v1120 = vshrl.u32 %v1031, 16
      %v1122 = vrot.slane %v1120, 7
      %v1123 = vshll.u32 %v1031, 16
      %v1125 = vor.u32 %v1122, %v1123
      %v1127 = vshrl.u32 %v1032, 16
      %v1129 = vrot.slane %v1127, 7
      %v1130 = vshll.u32 %v1032, 16
      %v1132 = vor.u32 %v1129, %v1130
      %v1134 = vshrl.u32 %v1033, 16
      %v1136 = vrot.slane %v1134, 7
      %v1137 = vshll.u32 %v1033, 16
      %v1139 = vor.u32 %v1136, %v1137
      %v1141 = vshrl.u32 %v1034, 16
      %v1143 = vrot.slane %v1141, 7
      %v1144 = vshll.u32 %v1034, 16
      %v1146 = vor.u32 %v1143, %v1144
      %v1163 = vld [vmem:[#allocation2 + $0x18] sm:$0xff]
      %v1164 = vsel %vm660, %v1041, %v1163
      %1165 = vst [vmem:[#allocation2 + $0x18] sm:$0xff] %v1164
      %v1166 = vld [vmem:[#allocation2 + $0x68] sm:$0xff]
      %v1167 = vsel %vm660, %v1048, %v1166
      %1168 = vst [vmem:[#allocation2 + $0x68] sm:$0xff] %v1167
      %v1169 = vld [vmem:[#allocation2 + $0xb8] sm:$0xff]
      %v1170 = vsel %vm660, %v1055, %v1169
      %1171 = vst [vmem:[#allocation2 + $0xb8] sm:$0xff] %v1170
      %v1172 = vld [vmem:[#allocation2 + $0x108] sm:$0xff]
      %v1173 = vsel %vm660, %v1062, %v1172
      %1174 = vst [vmem:[#allocation2 + $0x108] sm:$0xff] %v1173
      %v1175 = vld [vmem:[#allocation2 + $0x158] sm:$0xff]
      %v1176 = vsel %vm660, %v1069, %v1175
      %1177 = vst [vmem:[#allocation2 + $0x158] sm:$0xff] %v1176
      %v1178 = vld [vmem:[#allocation2 + $0x1a8] sm:$0xff]
      %v1179 = vsel %vm660, %v1076, %v1178
      %1180 = vst [vmem:[#allocation2 + $0x1a8] sm:$0xff] %v1179
      %v1181 = vld [vmem:[#allocation2 + $0x1f8] sm:$0xff]
      %v1182 = vsel %vm660, %v1083, %v1181
      %1183 = vst [vmem:[#allocation2 + $0x1f8] sm:$0xff] %v1182
      %v1184 = vld [vmem:[#allocation2 + $0x248] sm:$0xff]
      %v1185 = vsel %vm660, %v1090, %v1184
      %1186 = vst [vmem:[#allocation2 + $0x248] sm:$0xff] %v1185
      %v1187 = vld [vmem:[#allocation2 + $0x298] sm:$0xff]
      %v1188 = vsel %vm660, %v1097, %v1187
      %1189 = vst [vmem:[#allocation2 + $0x298] sm:$0xff] %v1188
      %v1190 = vld [vmem:[#allocation2 + $0x2e8] sm:$0xff]
      %v1191 = vsel %vm660, %v1104, %v1190
      %1192 = vst [vmem:[#allocation2 + $0x2e8] sm:$0xff] %v1191
      %v1193 = vld [vmem:[#allocation2 + $0x338] sm:$0xff]
      %v1194 = vsel %vm660, %v1111, %v1193
      %1195 = vst [vmem:[#allocation2 + $0x338] sm:$0xff] %v1194
      %v1196 = vld [vmem:[#allocation2 + $0x388] sm:$0xff]
      %v1197 = vsel %vm660, %v1118, %v1196
      %1198 = vst [vmem:[#allocation2 + $0x388] sm:$0xff] %v1197
      %v1199 = vld [vmem:[#allocation2 + $0x3d8] sm:$0xff]
      %v1200 = vsel %vm660, %v1125, %v1199
      %1201 = vst [vmem:[#allocation2 + $0x3d8] sm:$0xff] %v1200
      %v1202 = vld [vmem:[#allocation2 + $0x428] sm:$0xff]
      %v1203 = vsel %vm660, %v1132, %v1202
      %1204 = vst [vmem:[#allocation2 + $0x428] sm:$0xff] %v1203
      %v1205 = vld [vmem:[#allocation2 + $0x478] sm:$0xff]
      %v1206 = vsel %vm660, %v1139, %v1205
      %1207 = vst [vmem:[#allocation2 + $0x478] sm:$0xff] %v1206
      %v1208 = vld [vmem:[#allocation2 + $0x4c8] sm:$0xff]
      %v1209 = vsel %vm660, %v1146, %v1208
      %1210 = vst [vmem:[#allocation2 + $0x4c8] sm:$0xff] %v1209
      %v1211 = vld [vmem:[#allocation3] sm:$0xff]
      %v1212 = vld [vmem:[#allocation3 + $0x8] sm:$0xff]
      %v1213 = vld [vmem:[#allocation3 + $0x10] sm:$0xff]
      %v1214 = vld [vmem:[#allocation3 + $0x18] sm:$0xff]
      %v1215 = vld [vmem:[#allocation3 + $0x20] sm:$0xff]
      %v1216 = vld [vmem:[#allocation3 + $0x28] sm:$0xff]
      %v1217 = vld [vmem:[#allocation3 + $0x30] sm:$0xff]
      %v1218 = vld [vmem:[#allocation3 + $0x38] sm:$0xff]
      %v1219 = vld [vmem:[#allocation3 + $0x40] sm:$0xff]
      %v1220 = vld [vmem:[#allocation3 + $0x48] sm:$0xff]
      %v1221 = vld [vmem:[#allocation3 + $0x50] sm:$0xff]
      %v1222 = vld [vmem:[#allocation3 + $0x58] sm:$0xff]
      %v1223 = vld [vmem:[#allocation3 + $0x60] sm:$0xff]
      %v1224 = vld [vmem:[#allocation3 + $0x68] sm:$0xff]
      %v1225 = vld [vmem:[#allocation3 + $0x70] sm:$0xff]
      %v1226 = vld [vmem:[#allocation3 + $0x78] sm:$0xff]
      %1227 = vst [vmem:[#allocation2 + $0x20] sm:$0xff] %v1211
      %1228 = vst [vmem:[#allocation2 + $0x70] sm:$0xff] %v1212
      %1229 = vst [vmem:[#allocation2 + $0xc0] sm:$0xff] %v1213
      %1230 = vst [vmem:[#allocation2 + $0x110] sm:$0xff] %v1214
      %1231 = vst [vmem:[#allocation2 + $0x160] sm:$0xff] %v1215
      %1232 = vst [vmem:[#allocation2 + $0x1b0] sm:$0xff] %v1216
      %1233 = vst [vmem:[#allocation2 + $0x200] sm:$0xff] %v1217
      %1234 = vst [vmem:[#allocation2 + $0x250] sm:$0xff] %v1218
      %1235 = vst [vmem:[#allocation2 + $0x2a0] sm:$0xff] %v1219
      %1236 = vst [vmem:[#allocation2 + $0x2f0] sm:$0xff] %v1220
      %1237 = vst [vmem:[#allocation2 + $0x340] sm:$0xff] %v1221
      %1238 = vst [vmem:[#allocation2 + $0x390] sm:$0xff] %v1222
      %1239 = vst [vmem:[#allocation2 + $0x3e0] sm:$0xff] %v1223
      %1240 = vst [vmem:[#allocation2 + $0x430] sm:$0xff] %v1224
      %1241 = vst [vmem:[#allocation2 + $0x480] sm:$0xff] %v1225
      %1242 = vst [vmem:[#allocation2 + $0x4d0] sm:$0xff] %v1226
      %v1243 = vld [vmem:[#allocation2 + $0x28] sm:$0x80]
      %v1244 = vsel %vm740, 0, %v1243
      %1245 = vst [vmem:[#allocation2 + $0x28] sm:$0x80] %v1244
      %v1246 = vld [vmem:[#allocation2 + $0x78] sm:$0x80]
      %v1247 = vsel %vm740, 0, %v1246
      %1248 = vst [vmem:[#allocation2 + $0x78] sm:$0x80] %v1247
      %v1249 = vld [vmem:[#allocation2 + $0xc8] sm:$0x80]
      %v1250 = vsel %vm740, 0, %v1249
      %1251 = vst [vmem:[#allocation2 + $0xc8] sm:$0x80] %v1250
      %v1252 = vld [vmem:[#allocation2 + $0x118] sm:$0x80]
      %v1253 = vsel %vm740, 0, %v1252
      %1254 = vst [vmem:[#allocation2 + $0x118] sm:$0x80] %v1253
      %v1255 = vld [vmem:[#allocation2 + $0x168] sm:$0x80]
      %v1256 = vsel %vm740, 0, %v1255
      %1257 = vst [vmem:[#allocation2 + $0x168] sm:$0x80] %v1256
      %v1258 = vld [vmem:[#allocation2 + $0x1b8] sm:$0x80]
      %v1259 = vsel %vm740, 0, %v1258
      %1260 = vst [vmem:[#allocation2 + $0x1b8] sm:$0x80] %v1259
      %v1261 = vld [vmem:[#allocation2 + $0x208] sm:$0x80]
      %v1262 = vsel %vm740, 0, %v1261
      %1263 = vst [vmem:[#allocation2 + $0x208] sm:$0x80] %v1262
      %v1264 = vld [vmem:[#allocation2 + $0x258] sm:$0x80]
      %v1265 = vsel %vm740, 0, %v1264
      %1266 = vst [vmem:[#allocation2 + $0x258] sm:$0x80] %v1265
      %v1267 = vld [vmem:[#allocation2 + $0x2a8] sm:$0x80]
      %v1268 = vsel %vm740, 0, %v1267
      %1269 = vst [vmem:[#allocation2 + $0x2a8] sm:$0x80] %v1268
      %v1270 = vld [vmem:[#allocation2 + $0x2f8] sm:$0x80]
      %v1271 = vsel %vm740, 0, %v1270
      %1272 = vst [vmem:[#allocation2 + $0x2f8] sm:$0x80] %v1271
      %v1273 = vld [vmem:[#allocation2 + $0x348] sm:$0x80]
      %v1274 = vsel %vm740, 0, %v1273
      %1275 = vst [vmem:[#allocation2 + $0x348] sm:$0x80] %v1274
      %v1276 = vld [vmem:[#allocation2 + $0x398] sm:$0x80]
      %v1277 = vsel %vm740, 0, %v1276
      %1278 = vst [vmem:[#allocation2 + $0x398] sm:$0x80] %v1277
      %v1279 = vld [vmem:[#allocation2 + $0x3e8] sm:$0x80]
      %v1280 = vsel %vm740, 0, %v1279
      %1281 = vst [vmem:[#allocation2 + $0x3e8] sm:$0x80] %v1280
      %v1282 = vld [vmem:[#allocation2 + $0x438] sm:$0x80]
      %v1283 = vsel %vm740, 0, %v1282
      %1284 = vst [vmem:[#allocation2 + $0x438] sm:$0x80] %v1283
      %v1285 = vld [vmem:[#allocation2 + $0x488] sm:$0x80]
      %v1286 = vsel %vm740, 0, %v1285
      %1287 = vst [vmem:[#allocation2 + $0x488] sm:$0x80] %v1286
      %v1288 = vld [vmem:[#allocation2 + $0x4d8] sm:$0x80]
      %v1289 = vsel %vm740, 0, %v1288
      %1290 = vst [vmem:[#allocation2 + $0x4d8] sm:$0x80] %v1289
      %v1291 = vld [vmem:[#allocation3] sm:$0xff]
      %v1292 = vld [vmem:[#allocation3 + $0x8] sm:$0xff]
      %v1293 = vld [vmem:[#allocation3 + $0x10] sm:$0xff]
      %v1294 = vld [vmem:[#allocation3 + $0x18] sm:$0xff]
      %v1295 = vld [vmem:[#allocation3 + $0x20] sm:$0xff]
      %v1296 = vld [vmem:[#allocation3 + $0x28] sm:$0xff]
      %v1297 = vld [vmem:[#allocation3 + $0x30] sm:$0xff]
      %v1298 = vld [vmem:[#allocation3 + $0x38] sm:$0xff]
      %v1299 = vld [vmem:[#allocation3 + $0x40] sm:$0xff]
      %v1300 = vld [vmem:[#allocation3 + $0x48] sm:$0xff]
      %v1301 = vld [vmem:[#allocation3 + $0x50] sm:$0xff]
      %v1302 = vld [vmem:[#allocation3 + $0x58] sm:$0xff]
      %v1303 = vld [vmem:[#allocation3 + $0x60] sm:$0xff]
      %v1304 = vld [vmem:[#allocation3 + $0x68] sm:$0xff]
      %v1305 = vld [vmem:[#allocation3 + $0x70] sm:$0xff]
      %v1306 = vld [vmem:[#allocation3 + $0x78] sm:$0xff]
      %v1308 = vshrl.u32 %v1291, 16
      %v1310 = vshll.u32 %v1291, 16
      %v1312 = vrot.slane %v1310, 1
      %v1313 = vor.u32 %v1308, %v1312
      %v1315 = vshrl.u32 %v1292, 16
      %v1317 = vshll.u32 %v1292, 16
      %v1319 = vrot.slane %v1317, 1
      %v1320 = vor.u32 %v1315, %v1319
      %v1322 = vshrl.u32 %v1293, 16
      %v1324 = vshll.u32 %v1293, 16
      %v1326 = vrot.slane %v1324, 1
      %v1327 = vor.u32 %v1322, %v1326
      %v1329 = vshrl.u32 %v1294, 16
      %v1331 = vshll.u32 %v1294, 16
      %v1333 = vrot.slane %v1331, 1
      %v1334 = vor.u32 %v1329, %v1333
      %v1336 = vshrl.u32 %v1295, 16
      %v1338 = vshll.u32 %v1295, 16
      %v1340 = vrot.slane %v1338, 1
      %v1341 = vor.u32 %v1336, %v1340
      %v1343 = vshrl.u32 %v1296, 16
      %v1345 = vshll.u32 %v1296, 16
      %v1347 = vrot.slane %v1345, 1
      %v1348 = vor.u32 %v1343, %v1347
      %v1350 = vshrl.u32 %v1297, 16
      %v1352 = vshll.u32 %v1297, 16
      %v1354 = vrot.slane %v1352, 1
      %v1355 = vor.u32 %v1350, %v1354
      %v1357 = vshrl.u32 %v1298, 16
      %v1359 = vshll.u32 %v1298, 16
      %v1361 = vrot.slane %v1359, 1
      %v1362 = vor.u32 %v1357, %v1361
      %v1364 = vshrl.u32 %v1299, 16
      %v1366 = vshll.u32 %v1299, 16
      %v1368 = vrot.slane %v1366, 1
      %v1369 = vor.u32 %v1364, %v1368
      %v1371 = vshrl.u32 %v1300, 16
      %v1373 = vshll.u32 %v1300, 16
      %v1375 = vrot.slane %v1373, 1
      %v1376 = vor.u32 %v1371, %v1375
      %v1378 = vshrl.u32 %v1301, 16
      %v1380 = vshll.u32 %v1301, 16
      %v1382 = vrot.slane %v1380, 1
      %v1383 = vor.u32 %v1378, %v1382
      %v1385 = vshrl.u32 %v1302, 16
      %v1387 = vshll.u32 %v1302, 16
      %v1389 = vrot.slane %v1387, 1
      %v1390 = vor.u32 %v1385, %v1389
      %v1392 = vshrl.u32 %v1303, 16
      %v1394 = vshll.u32 %v1303, 16
      %v1396 = vrot.slane %v1394, 1
      %v1397 = vor.u32 %v1392, %v1396
      %v1399 = vshrl.u32 %v1304, 16
      %v1401 = vshll.u32 %v1304, 16
      %v1403 = vrot.slane %v1401, 1
      %v1404 = vor.u32 %v1399, %v1403
      %v1406 = vshrl.u32 %v1305, 16
      %v1408 = vshll.u32 %v1305, 16
      %v1410 = vrot.slane %v1408, 1
      %v1411 = vor.u32 %v1406, %v1410
      %v1413 = vshrl.u32 %v1306, 16
      %v1415 = vshll.u32 %v1306, 16
      %v1417 = vrot.slane %v1415, 1
      %v1418 = vor.u32 %v1413, %v1417
      %v1435 = vld [vmem:[#allocation2 + $0x28] sm:$0xff]
      %v1436 = vsel %vm925, %v1313, %v1435
      %1437 = vst [vmem:[#allocation2 + $0x28] sm:$0xff] %v1436
      %v1438 = vld [vmem:[#allocation2 + $0x78] sm:$0xff]
      %v1439 = vsel %vm925, %v1320, %v1438
      %1440 = vst [vmem:[#allocation2 + $0x78] sm:$0xff] %v1439
      %v1441 = vld [vmem:[#allocation2 + $0xc8] sm:$0xff]
      %v1442 = vsel %vm925, %v1327, %v1441
      %1443 = vst [vmem:[#allocation2 + $0xc8] sm:$0xff] %v1442
      %v1444 = vld [vmem:[#allocation2 + $0x118] sm:$0xff]
      %v1445 = vsel %vm925, %v1334, %v1444
      %1446 = vst [vmem:[#allocation2 + $0x118] sm:$0xff] %v1445
      %v1447 = vld [vmem:[#allocation2 + $0x168] sm:$0xff]
      %v1448 = vsel %vm925, %v1341, %v1447
      %1449 = vst [vmem:[#allocation2 + $0x168] sm:$0xff] %v1448
      %v1450 = vld [vmem:[#allocation2 + $0x1b8] sm:$0xff]
      %v1451 = vsel %vm925, %v1348, %v1450
      %1452 = vst [vmem:[#allocation2 + $0x1b8] sm:$0xff] %v1451
      %v1453 = vld [vmem:[#allocation2 + $0x208] sm:$0xff]
      %v1454 = vsel %vm925, %v1355, %v1453
      %1455 = vst [vmem:[#allocation2 + $0x208] sm:$0xff] %v1454
      %v1456 = vld [vmem:[#allocation2 + $0x258] sm:$0xff]
      %v1457 = vsel %vm925, %v1362, %v1456
      %1458 = vst [vmem:[#allocation2 + $0x258] sm:$0xff] %v1457
      %v1459 = vld [vmem:[#allocation2 + $0x2a8] sm:$0xff]
      %v1460 = vsel %vm925, %v1369, %v1459
      %1461 = vst [vmem:[#allocation2 + $0x2a8] sm:$0xff] %v1460
      %v1462 = vld [vmem:[#allocation2 + $0x2f8] sm:$0xff]
      %v1463 = vsel %vm925, %v1376, %v1462
      %1464 = vst [vmem:[#allocation2 + $0x2f8] sm:$0xff] %v1463
      %v1465 = vld [vmem:[#allocation2 + $0x348] sm:$0xff]
      %v1466 = vsel %vm925, %v1383, %v1465
      %1467 = vst [vmem:[#allocation2 + $0x348] sm:$0xff] %v1466
      %v1468 = vld [vmem:[#allocation2 + $0x398] sm:$0xff]
      %v1469 = vsel %vm925, %v1390, %v1468
      %1470 = vst [vmem:[#allocation2 + $0x398] sm:$0xff] %v1469
      %v1471 = vld [vmem:[#allocation2 + $0x3e8] sm:$0xff]
      %v1472 = vsel %vm925, %v1397, %v1471
      %1473 = vst [vmem:[#allocation2 + $0x3e8] sm:$0xff] %v1472
      %v1474 = vld [vmem:[#allocation2 + $0x438] sm:$0xff]
      %v1475 = vsel %vm925, %v1404, %v1474
      %1476 = vst [vmem:[#allocation2 + $0x438] sm:$0xff] %v1475
      %v1477 = vld [vmem:[#allocation2 + $0x488] sm:$0xff]
      %v1478 = vsel %vm925, %v1411, %v1477
      %1479 = vst [vmem:[#allocation2 + $0x488] sm:$0xff] %v1478
      %v1480 = vld [vmem:[#allocation2 + $0x4d8] sm:$0xff]
      %v1481 = vsel %vm925, %v1418, %v1480
      %1482 = vst [vmem:[#allocation2 + $0x4d8] sm:$0xff] %v1481
      %s1483 = scalar_lea.vmem [#allocation2], 1200
      %1484 = vst [vmem:[%s1483 + $0x30] sm:$0xff] 0
      %v1485 = vld [vmem:[#allocation2 + $0x30] sm:$0x1]
      %v1486 = vsel %vm473, 0, %v1485
      %1487 = vst [vmem:[#allocation2 + $0x30] sm:$0x1] %v1486
      %v1488 = vld [vmem:[#allocation2 + $0x80] sm:$0x1]
      %v1489 = vsel %vm473, 0, %v1488
      %1490 = vst [vmem:[#allocation2 + $0x80] sm:$0x1] %v1489
      %v1491 = vld [vmem:[#allocation2 + $0xd0] sm:$0x1]
      %v1492 = vsel %vm473, 0, %v1491
      %1493 = vst [vmem:[#allocation2 + $0xd0] sm:$0x1] %v1492
      %v1494 = vld [vmem:[#allocation2 + $0x120] sm:$0x1]
      %v1495 = vsel %vm473, 0, %v1494
      %1496 = vst [vmem:[#allocation2 + $0x120] sm:$0x1] %v1495
      %v1497 = vld [vmem:[#allocation2 + $0x170] sm:$0x1]
      %v1498 = vsel %vm473, 0, %v1497
      %1499 = vst [vmem:[#allocation2 + $0x170] sm:$0x1] %v1498
      %v1500 = vld [vmem:[#allocation2 + $0x1c0] sm:$0x1]
      %v1501 = vsel %vm473, 0, %v1500
      %1502 = vst [vmem:[#allocation2 + $0x1c0] sm:$0x1] %v1501
      %v1503 = vld [vmem:[#allocation2 + $0x210] sm:$0x1]
      %v1504 = vsel %vm473, 0, %v1503
      %1505 = vst [vmem:[#allocation2 + $0x210] sm:$0x1] %v1504
      %v1506 = vld [vmem:[#allocation2 + $0x260] sm:$0x1]
      %v1507 = vsel %vm473, 0, %v1506
      %1508 = vst [vmem:[#allocation2 + $0x260] sm:$0x1] %v1507
      %v1509 = vld [vmem:[#allocation2 + $0x2b0] sm:$0x1]
      %v1510 = vsel %vm473, 0, %v1509
      %1511 = vst [vmem:[#allocation2 + $0x2b0] sm:$0x1] %v1510
      %v1512 = vld [vmem:[#allocation2 + $0x300] sm:$0x1]
      %v1513 = vsel %vm473, 0, %v1512
      %1514 = vst [vmem:[#allocation2 + $0x300] sm:$0x1] %v1513
      %v1515 = vld [vmem:[#allocation2 + $0x350] sm:$0x1]
      %v1516 = vsel %vm473, 0, %v1515
      %1517 = vst [vmem:[#allocation2 + $0x350] sm:$0x1] %v1516
      %v1518 = vld [vmem:[#allocation2 + $0x3a0] sm:$0x1]
      %v1519 = vsel %vm473, 0, %v1518
      %1520 = vst [vmem:[#allocation2 + $0x3a0] sm:$0x1] %v1519
      %v1521 = vld [vmem:[#allocation2 + $0x3f0] sm:$0x1]
      %v1522 = vsel %vm473, 0, %v1521
      %1523 = vst [vmem:[#allocation2 + $0x3f0] sm:$0x1] %v1522
      %v1524 = vld [vmem:[#allocation2 + $0x440] sm:$0x1]
      %v1525 = vsel %vm473, 0, %v1524
      %1526 = vst [vmem:[#allocation2 + $0x440] sm:$0x1] %v1525
      %v1527 = vld [vmem:[#allocation2 + $0x490] sm:$0x1]
      %v1528 = vsel %vm473, 0, %v1527
      %1529 = vst [vmem:[#allocation2 + $0x490] sm:$0x1] %v1528
      %v1530 = vld [vmem:[#allocation2 + $0x4e0] sm:$0x1]
      %v1531 = vsel %vm473, 0, %v1530
      %1532 = vst [vmem:[#allocation2 + $0x4e0] sm:$0x1] %v1531
      %s1533 = scalar_lea.vmem [#allocation3], 8
      %v1534 = vld [vmem:[%s1533] sm:$0xff]
      %v1535 = vld [vmem:[%s1533 + $0x8] sm:$0xff]
      %v1536 = vld [vmem:[%s1533 + $0x10] sm:$0xff]
      %v1537 = vld [vmem:[%s1533 + $0x18] sm:$0xff]
      %v1538 = vld [vmem:[%s1533 + $0x20] sm:$0xff]
      %v1539 = vld [vmem:[%s1533 + $0x28] sm:$0xff]
      %v1540 = vld [vmem:[%s1533 + $0x30] sm:$0xff]
      %v1541 = vld [vmem:[%s1533 + $0x38] sm:$0xff]
      %v1542 = vld [vmem:[%s1533 + $0x40] sm:$0xff]
      %v1543 = vld [vmem:[%s1533 + $0x48] sm:$0xff]
      %v1544 = vld [vmem:[%s1533 + $0x50] sm:$0xff]
      %v1545 = vld [vmem:[%s1533 + $0x58] sm:$0xff]
      %v1546 = vld [vmem:[%s1533 + $0x60] sm:$0xff]
      %v1547 = vld [vmem:[%s1533 + $0x68] sm:$0xff]
      %v1548 = vld [vmem:[%s1533 + $0x70] sm:$0xff]
      %v1550 = vshrl.u32 %v1534, 16
      %v1552 = vrot.slane %v1550, 7
      %v1553 = vshll.u32 %v1534, 16
      %v1555 = vor.u32 %v1552, %v1553
      %v1557 = vshrl.u32 %v1535, 16
      %v1559 = vrot.slane %v1557, 7
      %v1560 = vshll.u32 %v1535, 16
      %v1562 = vor.u32 %v1559, %v1560
      %v1564 = vshrl.u32 %v1536, 16
      %v1566 = vrot.slane %v1564, 7
      %v1567 = vshll.u32 %v1536, 16
      %v1569 = vor.u32 %v1566, %v1567
      %v1571 = vshrl.u32 %v1537, 16
      %v1573 = vrot.slane %v1571, 7
      %v1574 = vshll.u32 %v1537, 16
      %v1576 = vor.u32 %v1573, %v1574
      %v1578 = vshrl.u32 %v1538, 16
      %v1580 = vrot.slane %v1578, 7
      %v1581 = vshll.u32 %v1538, 16
      %v1583 = vor.u32 %v1580, %v1581
      %v1585 = vshrl.u32 %v1539, 16
      %v1587 = vrot.slane %v1585, 7
      %v1588 = vshll.u32 %v1539, 16
      %v1590 = vor.u32 %v1587, %v1588
      %v1592 = vshrl.u32 %v1540, 16
      %v1594 = vrot.slane %v1592, 7
      %v1595 = vshll.u32 %v1540, 16
      %v1597 = vor.u32 %v1594, %v1595
      %v1599 = vshrl.u32 %v1541, 16
      %v1601 = vrot.slane %v1599, 7
      %v1602 = vshll.u32 %v1541, 16
      %v1604 = vor.u32 %v1601, %v1602
      %v1606 = vshrl.u32 %v1542, 16
      %v1608 = vrot.slane %v1606, 7
      %v1609 = vshll.u32 %v1542, 16
      %v1611 = vor.u32 %v1608, %v1609
      %v1613 = vshrl.u32 %v1543, 16
      %v1615 = vrot.slane %v1613, 7
      %v1616 = vshll.u32 %v1543, 16
      %v1618 = vor.u32 %v1615, %v1616
      %v1620 = vshrl.u32 %v1544, 16
      %v1622 = vrot.slane %v1620, 7
      %v1623 = vshll.u32 %v1544, 16
      %v1625 = vor.u32 %v1622, %v1623
      %v1627 = vshrl.u32 %v1545, 16
      %v1629 = vrot.slane %v1627, 7
      %v1630 = vshll.u32 %v1545, 16
      %v1632 = vor.u32 %v1629, %v1630
      %v1634 = vshrl.u32 %v1546, 16
      %v1636 = vrot.slane %v1634, 7
      %v1637 = vshll.u32 %v1546, 16
      %v1639 = vor.u32 %v1636, %v1637
      %v1641 = vshrl.u32 %v1547, 16
      %v1643 = vrot.slane %v1641, 7
      %v1644 = vshll.u32 %v1547, 16
      %v1646 = vor.u32 %v1643, %v1644
      %v1648 = vshrl.u32 %v1548, 16
      %v1650 = vrot.slane %v1648, 7
      %v1651 = vshll.u32 %v1548, 16
      %v1653 = vor.u32 %v1650, %v1651
      %v1669 = vld [vmem:[#allocation2 + $0x30] sm:$0xff]
      %v1670 = vsel %vm660, %v1555, %v1669
      %1671 = vst [vmem:[#allocation2 + $0x30] sm:$0xff] %v1670
      %v1672 = vld [vmem:[#allocation2 + $0x80] sm:$0xff]
      %v1673 = vsel %vm660, %v1562, %v1672
      %1674 = vst [vmem:[#allocation2 + $0x80] sm:$0xff] %v1673
      %v1675 = vld [vmem:[#allocation2 + $0xd0] sm:$0xff]
      %v1676 = vsel %vm660, %v1569, %v1675
      %1677 = vst [vmem:[#allocation2 + $0xd0] sm:$0xff] %v1676
      %v1678 = vld [vmem:[#allocation2 + $0x120] sm:$0xff]
      %v1679 = vsel %vm660, %v1576, %v1678
      %1680 = vst [vmem:[#allocation2 + $0x120] sm:$0xff] %v1679
      %v1681 = vld [vmem:[#allocation2 + $0x170] sm:$0xff]
      %v1682 = vsel %vm660, %v1583, %v1681
      %1683 = vst [vmem:[#allocation2 + $0x170] sm:$0xff] %v1682
      %v1684 = vld [vmem:[#allocation2 + $0x1c0] sm:$0xff]
      %v1685 = vsel %vm660, %v1590, %v1684
      %1686 = vst [vmem:[#allocation2 + $0x1c0] sm:$0xff] %v1685
      %v1687 = vld [vmem:[#allocation2 + $0x210] sm:$0xff]
      %v1688 = vsel %vm660, %v1597, %v1687
      %1689 = vst [vmem:[#allocation2 + $0x210] sm:$0xff] %v1688
      %v1690 = vld [vmem:[#allocation2 + $0x260] sm:$0xff]
      %v1691 = vsel %vm660, %v1604, %v1690
      %1692 = vst [vmem:[#allocation2 + $0x260] sm:$0xff] %v1691
      %v1693 = vld [vmem:[#allocation2 + $0x2b0] sm:$0xff]
      %v1694 = vsel %vm660, %v1611, %v1693
      %1695 = vst [vmem:[#allocation2 + $0x2b0] sm:$0xff] %v1694
      %v1696 = vld [vmem:[#allocation2 + $0x300] sm:$0xff]
      %v1697 = vsel %vm660, %v1618, %v1696
      %1698 = vst [vmem:[#allocation2 + $0x300] sm:$0xff] %v1697
      %v1699 = vld [vmem:[#allocation2 + $0x350] sm:$0xff]
      %v1700 = vsel %vm660, %v1625, %v1699
      %1701 = vst [vmem:[#allocation2 + $0x350] sm:$0xff] %v1700
      %v1702 = vld [vmem:[#allocation2 + $0x3a0] sm:$0xff]
      %v1703 = vsel %vm660, %v1632, %v1702
      %1704 = vst [vmem:[#allocation2 + $0x3a0] sm:$0xff] %v1703
      %v1705 = vld [vmem:[#allocation2 + $0x3f0] sm:$0xff]
      %v1706 = vsel %vm660, %v1639, %v1705
      %1707 = vst [vmem:[#allocation2 + $0x3f0] sm:$0xff] %v1706
      %v1708 = vld [vmem:[#allocation2 + $0x440] sm:$0xff]
      %v1709 = vsel %vm660, %v1646, %v1708
      %1710 = vst [vmem:[#allocation2 + $0x440] sm:$0xff] %v1709
      %v1711 = vld [vmem:[#allocation2 + $0x490] sm:$0xff]
      %v1712 = vsel %vm660, %v1653, %v1711
      %1713 = vst [vmem:[#allocation2 + $0x490] sm:$0xff] %v1712
      %1714 = vst [vmem:[%s1483 + $0x38] sm:$0xff] 0
      %v1715 = vld [vmem:[%s1533] sm:$0xff]
      %v1716 = vld [vmem:[%s1533 + $0x8] sm:$0xff]
      %v1717 = vld [vmem:[%s1533 + $0x10] sm:$0xff]
      %v1718 = vld [vmem:[%s1533 + $0x18] sm:$0xff]
      %v1719 = vld [vmem:[%s1533 + $0x20] sm:$0xff]
      %v1720 = vld [vmem:[%s1533 + $0x28] sm:$0xff]
      %v1721 = vld [vmem:[%s1533 + $0x30] sm:$0xff]
      %v1722 = vld [vmem:[%s1533 + $0x38] sm:$0xff]
      %v1723 = vld [vmem:[%s1533 + $0x40] sm:$0xff]
      %v1724 = vld [vmem:[%s1533 + $0x48] sm:$0xff]
      %v1725 = vld [vmem:[%s1533 + $0x50] sm:$0xff]
      %v1726 = vld [vmem:[%s1533 + $0x58] sm:$0xff]
      %v1727 = vld [vmem:[%s1533 + $0x60] sm:$0xff]
      %v1728 = vld [vmem:[%s1533 + $0x68] sm:$0xff]
      %v1729 = vld [vmem:[%s1533 + $0x70] sm:$0xff]
      %1730 = vst [vmem:[#allocation2 + $0x38] sm:$0xff] %v1715
      %1731 = vst [vmem:[#allocation2 + $0x88] sm:$0xff] %v1716
      %1732 = vst [vmem:[#allocation2 + $0xd8] sm:$0xff] %v1717
      %1733 = vst [vmem:[#allocation2 + $0x128] sm:$0xff] %v1718
      %1734 = vst [vmem:[#allocation2 + $0x178] sm:$0xff] %v1719
      %1735 = vst [vmem:[#allocation2 + $0x1c8] sm:$0xff] %v1720
      %1736 = vst [vmem:[#allocation2 + $0x218] sm:$0xff] %v1721
      %1737 = vst [vmem:[#allocation2 + $0x268] sm:$0xff] %v1722
      %1738 = vst [vmem:[#allocation2 + $0x2b8] sm:$0xff] %v1723
      %1739 = vst [vmem:[#allocation2 + $0x308] sm:$0xff] %v1724
      %1740 = vst [vmem:[#allocation2 + $0x358] sm:$0xff] %v1725
      %1741 = vst [vmem:[#allocation2 + $0x3a8] sm:$0xff] %v1726
      %1742 = vst [vmem:[#allocation2 + $0x3f8] sm:$0xff] %v1727
      %1743 = vst [vmem:[#allocation2 + $0x448] sm:$0xff] %v1728
      %1744 = vst [vmem:[#allocation2 + $0x498] sm:$0xff] %v1729
      %1745 = vst [vmem:[%s1483 + $0x40] sm:$0xff] 0
      %v1746 = vld [vmem:[#allocation2 + $0x40] sm:$0x80]
      %v1747 = vsel %vm740, 0, %v1746
      %1748 = vst [vmem:[#allocation2 + $0x40] sm:$0x80] %v1747
      %v1749 = vld [vmem:[#allocation2 + $0x90] sm:$0x80]
      %v1750 = vsel %vm740, 0, %v1749
      %1751 = vst [vmem:[#allocation2 + $0x90] sm:$0x80] %v1750
      %v1752 = vld [vmem:[#allocation2 + $0xe0] sm:$0x80]
      %v1753 = vsel %vm740, 0, %v1752
      %1754 = vst [vmem:[#allocation2 + $0xe0] sm:$0x80] %v1753
      %v1755 = vld [vmem:[#allocation2 + $0x130] sm:$0x80]
      %v1756 = vsel %vm740, 0, %v1755
      %1757 = vst [vmem:[#allocation2 + $0x130] sm:$0x80] %v1756
      %v1758 = vld [vmem:[#allocation2 + $0x180] sm:$0x80]
      %v1759 = vsel %vm740, 0, %v1758
      %1760 = vst [vmem:[#allocation2 + $0x180] sm:$0x80] %v1759
      %v1761 = vld [vmem:[#allocation2 + $0x1d0] sm:$0x80]
      %v1762 = vsel %vm740, 0, %v1761
      %1763 = vst [vmem:[#allocation2 + $0x1d0] sm:$0x80] %v1762
      %v1764 = vld [vmem:[#allocation2 + $0x220] sm:$0x80]
      %v1765 = vsel %vm740, 0, %v1764
      %1766 = vst [vmem:[#allocation2 + $0x220] sm:$0x80] %v1765
      %v1767 = vld [vmem:[#allocation2 + $0x270] sm:$0x80]
      %v1768 = vsel %vm740, 0, %v1767
      %1769 = vst [vmem:[#allocation2 + $0x270] sm:$0x80] %v1768
      %v1770 = vld [vmem:[#allocation2 + $0x2c0] sm:$0x80]
      %v1771 = vsel %vm740, 0, %v1770
      %1772 = vst [vmem:[#allocation2 + $0x2c0] sm:$0x80] %v1771
      %v1773 = vld [vmem:[#allocation2 + $0x310] sm:$0x80]
      %v1774 = vsel %vm740, 0, %v1773
      %1775 = vst [vmem:[#allocation2 + $0x310] sm:$0x80] %v1774
      %v1776 = vld [vmem:[#allocation2 + $0x360] sm:$0x80]
      %v1777 = vsel %vm740, 0, %v1776
      %1778 = vst [vmem:[#allocation2 + $0x360] sm:$0x80] %v1777
      %v1779 = vld [vmem:[#allocation2 + $0x3b0] sm:$0x80]
      %v1780 = vsel %vm740, 0, %v1779
      %1781 = vst [vmem:[#allocation2 + $0x3b0] sm:$0x80] %v1780
      %v1782 = vld [vmem:[#allocation2 + $0x400] sm:$0x80]
      %v1783 = vsel %vm740, 0, %v1782
      %1784 = vst [vmem:[#allocation2 + $0x400] sm:$0x80] %v1783
      %v1785 = vld [vmem:[#allocation2 + $0x450] sm:$0x80]
      %v1786 = vsel %vm740, 0, %v1785
      %1787 = vst [vmem:[#allocation2 + $0x450] sm:$0x80] %v1786
      %v1788 = vld [vmem:[#allocation2 + $0x4a0] sm:$0x80]
      %v1789 = vsel %vm740, 0, %v1788
      %1790 = vst [vmem:[#allocation2 + $0x4a0] sm:$0x80] %v1789
      %v1791 = vld [vmem:[#allocation2 + $0x4f0] sm:$0x80]
      %v1792 = vsel %vm740, 0, %v1791
      %1793 = vst [vmem:[#allocation2 + $0x4f0] sm:$0x80] %v1792
      %v1794 = vld [vmem:[%s1533] sm:$0xff]
      %v1795 = vld [vmem:[%s1533 + $0x8] sm:$0xff]
      %v1796 = vld [vmem:[%s1533 + $0x10] sm:$0xff]
      %v1797 = vld [vmem:[%s1533 + $0x18] sm:$0xff]
      %v1798 = vld [vmem:[%s1533 + $0x20] sm:$0xff]
      %v1799 = vld [vmem:[%s1533 + $0x28] sm:$0xff]
      %v1800 = vld [vmem:[%s1533 + $0x30] sm:$0xff]
      %v1801 = vld [vmem:[%s1533 + $0x38] sm:$0xff]
      %v1802 = vld [vmem:[%s1533 + $0x40] sm:$0xff]
      %v1803 = vld [vmem:[%s1533 + $0x48] sm:$0xff]
      %v1804 = vld [vmem:[%s1533 + $0x50] sm:$0xff]
      %v1805 = vld [vmem:[%s1533 + $0x58] sm:$0xff]
      %v1806 = vld [vmem:[%s1533 + $0x60] sm:$0xff]
      %v1807 = vld [vmem:[%s1533 + $0x68] sm:$0xff]
      %v1808 = vld [vmem:[%s1533 + $0x70] sm:$0xff]
      %v1810 = vshrl.u32 %v1794, 16
      %v1812 = vshll.u32 %v1794, 16
      %v1814 = vrot.slane %v1812, 1
      %v1815 = vor.u32 %v1810, %v1814
      %v1817 = vshrl.u32 %v1795, 16
      %v1819 = vshll.u32 %v1795, 16
      %v1821 = vrot.slane %v1819, 1
      %v1822 = vor.u32 %v1817, %v1821
      %v1824 = vshrl.u32 %v1796, 16
      %v1826 = vshll.u32 %v1796, 16
      %v1828 = vrot.slane %v1826, 1
      %v1829 = vor.u32 %v1824, %v1828
      %v1831 = vshrl.u32 %v1797, 16
      %v1833 = vshll.u32 %v1797, 16
      %v1835 = vrot.slane %v1833, 1
      %v1836 = vor.u32 %v1831, %v1835
      %v1838 = vshrl.u32 %v1798, 16
      %v1840 = vshll.u32 %v1798, 16
      %v1842 = vrot.slane %v1840, 1
      %v1843 = vor.u32 %v1838, %v1842
      %v1845 = vshrl.u32 %v1799, 16
      %v1847 = vshll.u32 %v1799, 16
      %v1849 = vrot.slane %v1847, 1
      %v1850 = vor.u32 %v1845, %v1849
      %v1852 = vshrl.u32 %v1800, 16
      %v1854 = vshll.u32 %v1800, 16
      %v1856 = vrot.slane %v1854, 1
      %v1857 = vor.u32 %v1852, %v1856
      %v1859 = vshrl.u32 %v1801, 16
      %v1861 = vshll.u32 %v1801, 16
      %v1863 = vrot.slane %v1861, 1
      %v1864 = vor.u32 %v1859, %v1863
      %v1866 = vshrl.u32 %v1802, 16
      %v1868 = vshll.u32 %v1802, 16
      %v1870 = vrot.slane %v1868, 1
      %v1871 = vor.u32 %v1866, %v1870
      %v1873 = vshrl.u32 %v1803, 16
      %v1875 = vshll.u32 %v1803, 16
      %v1877 = vrot.slane %v1875, 1
      %v1878 = vor.u32 %v1873, %v1877
      %v1880 = vshrl.u32 %v1804, 16
      %v1882 = vshll.u32 %v1804, 16
      %v1884 = vrot.slane %v1882, 1
      %v1885 = vor.u32 %v1880, %v1884
      %v1887 = vshrl.u32 %v1805, 16
      %v1889 = vshll.u32 %v1805, 16
      %v1891 = vrot.slane %v1889, 1
      %v1892 = vor.u32 %v1887, %v1891
      %v1894 = vshrl.u32 %v1806, 16
      %v1896 = vshll.u32 %v1806, 16
      %v1898 = vrot.slane %v1896, 1
      %v1899 = vor.u32 %v1894, %v1898
      %v1901 = vshrl.u32 %v1807, 16
      %v1903 = vshll.u32 %v1807, 16
      %v1905 = vrot.slane %v1903, 1
      %v1906 = vor.u32 %v1901, %v1905
      %v1908 = vshrl.u32 %v1808, 16
      %v1910 = vshll.u32 %v1808, 16
      %v1912 = vrot.slane %v1910, 1
      %v1913 = vor.u32 %v1908, %v1912
      %v1929 = vld [vmem:[#allocation2 + $0x40] sm:$0xff]
      %v1930 = vsel %vm925, %v1815, %v1929
      %1931 = vst [vmem:[#allocation2 + $0x40] sm:$0xff] %v1930
      %v1932 = vld [vmem:[#allocation2 + $0x90] sm:$0xff]
      %v1933 = vsel %vm925, %v1822, %v1932
      %1934 = vst [vmem:[#allocation2 + $0x90] sm:$0xff] %v1933
      %v1935 = vld [vmem:[#allocation2 + $0xe0] sm:$0xff]
      %v1936 = vsel %vm925, %v1829, %v1935
      %1937 = vst [vmem:[#allocation2 + $0xe0] sm:$0xff] %v1936
      %v1938 = vld [vmem:[#allocation2 + $0x130] sm:$0xff]
      %v1939 = vsel %vm925, %v1836, %v1938
      %1940 = vst [vmem:[#allocation2 + $0x130] sm:$0xff] %v1939
      %v1941 = vld [vmem:[#allocation2 + $0x180] sm:$0xff]
      %v1942 = vsel %vm925, %v1843, %v1941
      %1943 = vst [vmem:[#allocation2 + $0x180] sm:$0xff] %v1942
      %v1944 = vld [vmem:[#allocation2 + $0x1d0] sm:$0xff]
      %v1945 = vsel %vm925, %v1850, %v1944
      %1946 = vst [vmem:[#allocation2 + $0x1d0] sm:$0xff] %v1945
      %v1947 = vld [vmem:[#allocation2 + $0x220] sm:$0xff]
      %v1948 = vsel %vm925, %v1857, %v1947
      %1949 = vst [vmem:[#allocation2 + $0x220] sm:$0xff] %v1948
      %v1950 = vld [vmem:[#allocation2 + $0x270] sm:$0xff]
      %v1951 = vsel %vm925, %v1864, %v1950
      %1952 = vst [vmem:[#allocation2 + $0x270] sm:$0xff] %v1951
      %v1953 = vld [vmem:[#allocation2 + $0x2c0] sm:$0xff]
      %v1954 = vsel %vm925, %v1871, %v1953
      %1955 = vst [vmem:[#allocation2 + $0x2c0] sm:$0xff] %v1954
      %v1956 = vld [vmem:[#allocation2 + $0x310] sm:$0xff]
      %v1957 = vsel %vm925, %v1878, %v1956
      %1958 = vst [vmem:[#allocation2 + $0x310] sm:$0xff] %v1957
      %v1959 = vld [vmem:[#allocation2 + $0x360] sm:$0xff]
      %v1960 = vsel %vm925, %v1885, %v1959
      %1961 = vst [vmem:[#allocation2 + $0x360] sm:$0xff] %v1960
      %v1962 = vld [vmem:[#allocation2 + $0x3b0] sm:$0xff]
      %v1963 = vsel %vm925, %v1892, %v1962
      %1964 = vst [vmem:[#allocation2 + $0x3b0] sm:$0xff] %v1963
      %v1965 = vld [vmem:[#allocation2 + $0x400] sm:$0xff]
      %v1966 = vsel %vm925, %v1899, %v1965
      %1967 = vst [vmem:[#allocation2 + $0x400] sm:$0xff] %v1966
      %v1968 = vld [vmem:[#allocation2 + $0x450] sm:$0xff]
      %v1969 = vsel %vm925, %v1906, %v1968
      %1970 = vst [vmem:[#allocation2 + $0x450] sm:$0xff] %v1969
      %v1971 = vld [vmem:[#allocation2 + $0x4a0] sm:$0xff]
      %v1972 = vsel %vm925, %v1913, %v1971
      %1973 = vst [vmem:[#allocation2 + $0x4a0] sm:$0xff] %v1972
      %v1974 = vld [vmem:[%s239] sm:$0xff]
      %v1975 = vld [vmem:[%s239 + $0x8] sm:$0xff]
      %v1976 = vld [vmem:[%s239 + $0x10] sm:$0xff]
      %v1977 = vld [vmem:[%s239 + $0x18] sm:$0xff]
      %v1978 = vld [vmem:[%s239 + $0x20] sm:$0xff]
      %v1979 = vld [vmem:[%s239 + $0x28] sm:$0xff]
      %v1980 = vld [vmem:[%s239 + $0x30] sm:$0xff]
      %v1981 = vld [vmem:[%s239 + $0x38] sm:$0xff]
      %v1982 = vld [vmem:[%s239 + $0x40] sm:$0xff]
      %v1983 = vld [vmem:[%s239 + $0x48] sm:$0xff]
      %v1984 = vld [vmem:[%s239 + $0x50] sm:$0xff]
      %v1985 = vld [vmem:[%s239 + $0x58] sm:$0xff]
      %v1986 = vld [vmem:[%s239 + $0x60] sm:$0xff]
      %v1987 = vld [vmem:[%s239 + $0x68] sm:$0xff]
      %v1988 = vld [vmem:[%s239 + $0x70] sm:$0xff]
      %v1989 = vld [vmem:[%s239 + $0x78] sm:$0xff]
      %v1990 = vld [vmem:[%s239 + $0x80] sm:$0xff]
      %v1991 = vld [vmem:[%s239 + $0x88] sm:$0xff]
      %v1992 = vld [vmem:[%s239 + $0x90] sm:$0xff]
      %v1993 = vld [vmem:[%s239 + $0x98] sm:$0xff]
      %v1994 = vld [vmem:[%s239 + $0xa0] sm:$0xff]
      %v1995 = vld [vmem:[%s239 + $0xa8] sm:$0xff]
      %v1996 = vld [vmem:[%s239 + $0xb0] sm:$0xff]
      %v1997 = vld [vmem:[%s239 + $0xb8] sm:$0xff]
      %v1998 = vld [vmem:[%s239 + $0xc0] sm:$0xff]
      %v1999 = vld [vmem:[%s239 + $0xc8] sm:$0xff]
      %v2000 = vld [vmem:[%s239 + $0xd0] sm:$0xff]
      %v2001 = vld [vmem:[%s239 + $0xd8] sm:$0xff]
      %v2002 = vld [vmem:[%s239 + $0xe0] sm:$0xff]
      %v2003 = vld [vmem:[%s239 + $0xe8] sm:$0xff]
      %v2004 = vld [vmem:[%s239 + $0xf0] sm:$0xff]
      %v2005 = vld [vmem:[%s239 + $0xf8] sm:$0xff]
      %v2006 = vpack.c.bf16 %v1975, %v1974
      %v2007 = vpack.c.bf16 %v1977, %v1976
      %v2008 = vpack.c.bf16 %v1979, %v1978
      %v2009 = vpack.c.bf16 %v1981, %v1980
      %v2010 = vpack.c.bf16 %v1983, %v1982
      %v2011 = vpack.c.bf16 %v1985, %v1984
      %v2012 = vpack.c.bf16 %v1987, %v1986
      %v2013 = vpack.c.bf16 %v1989, %v1988
      %v2014 = vpack.c.bf16 %v1991, %v1990
      %v2015 = vpack.c.bf16 %v1993, %v1992
      %v2016 = vpack.c.bf16 %v1995, %v1994
      %v2017 = vpack.c.bf16 %v1997, %v1996
      %v2018 = vpack.c.bf16 %v1999, %v1998
      %v2019 = vpack.c.bf16 %v2001, %v2000
      %v2020 = vpack.c.bf16 %v2003, %v2002
      %v2021 = vpack.c.bf16 %v2005, %v2004
      %vm2022 = vcmask 31744
      %2023 = vst.msk [vmem:[#allocation2 + $0x48] sm:$0xff] %vm2022, %v2006
      %2024 = vst.msk [vmem:[#allocation2 + $0x98] sm:$0xff] %vm2022, %v2007
      %2025 = vst.msk [vmem:[#allocation2 + $0xe8] sm:$0xff] %vm2022, %v2008
      %2026 = vst.msk [vmem:[#allocation2 + $0x138] sm:$0xff] %vm2022, %v2009
      %2027 = vst.msk [vmem:[#allocation2 + $0x188] sm:$0xff] %vm2022, %v2010
      %2028 = vst.msk [vmem:[#allocation2 + $0x1d8] sm:$0xff] %vm2022, %v2011
      %2029 = vst.msk [vmem:[#allocation2 + $0x228] sm:$0xff] %vm2022, %v2012
      %2030 = vst.msk [vmem:[#allocation2 + $0x278] sm:$0xff] %vm2022, %v2013
      %2031 = vst.msk [vmem:[#allocation2 + $0x2c8] sm:$0xff] %vm2022, %v2014
      %2032 = vst.msk [vmem:[#allocation2 + $0x318] sm:$0xff] %vm2022, %v2015
      %2033 = vst.msk [vmem:[#allocation2 + $0x368] sm:$0xff] %vm2022, %v2016
      %2034 = vst.msk [vmem:[#allocation2 + $0x3b8] sm:$0xff] %vm2022, %v2017
      %2035 = vst.msk [vmem:[#allocation2 + $0x408] sm:$0xff] %vm2022, %v2018
      %2036 = vst.msk [vmem:[#allocation2 + $0x458] sm:$0xff] %vm2022, %v2019
      %2037 = vst.msk [vmem:[#allocation2 + $0x4a8] sm:$0xff] %vm2022, %v2020
      %2038 = vst.msk [vmem:[#allocation2 + $0x4f8] sm:$0xff] %vm2022, %v2021
      %v2039 = vld [vmem:[#allocation2] sm:$0xff]
      %v2040 = vld [vmem:[#allocation2 + $0x8] sm:$0xff]
      %v2041 = vld [vmem:[#allocation2 + $0x10] sm:$0xff]
      %v2042 = vld [vmem:[#allocation2 + $0x18] sm:$0xff]
      %v2043 = vld [vmem:[#allocation2 + $0x20] sm:$0xff]
      %v2044 = vld [vmem:[#allocation2 + $0x28] sm:$0xff]
      %v2045 = vld [vmem:[#allocation2 + $0x30] sm:$0xff]
      %v2046 = vld [vmem:[#allocation2 + $0x38] sm:$0xff]
      %v2047 = vld [vmem:[#allocation2 + $0x40] sm:$0xff]
      %v2048 = vld [vmem:[#allocation2 + $0x48] sm:$0xff]
      %v2049 = vld [vmem:[#allocation2 + $0x50] sm:$0xff]
      %v2050 = vld [vmem:[#allocation2 + $0x58] sm:$0xff]
      %v2051 = vld [vmem:[#allocation2 + $0x60] sm:$0xff]
      %v2052 = vld [vmem:[#allocation2 + $0x68] sm:$0xff]
      %v2053 = vld [vmem:[#allocation2 + $0x70] sm:$0xff]
      %v2054 = vld [vmem:[#allocation2 + $0x78] sm:$0xff]
      %v2055 = vld [vmem:[#allocation2 + $0x80] sm:$0xff]
      %v2056 = vld [vmem:[#allocation2 + $0x88] sm:$0xff]
      %v2057 = vld [vmem:[#allocation2 + $0x90] sm:$0xff]
      %v2058 = vld [vmem:[#allocation2 + $0x98] sm:$0xff]
      %v2059 = vld [vmem:[#allocation2 + $0xa0] sm:$0xff]
      %v2060 = vld [vmem:[#allocation2 + $0xa8] sm:$0xff]
      %v2061 = vld [vmem:[#allocation2 + $0xb0] sm:$0xff]
      %v2062 = vld [vmem:[#allocation2 + $0xb8] sm:$0xff]
      %v2063 = vld [vmem:[#allocation2 + $0xc0] sm:$0xff]
      %v2064 = vld [vmem:[#allocation2 + $0xc8] sm:$0xff]
      %v2065 = vld [vmem:[#allocation2 + $0xd0] sm:$0xff]
      %v2066 = vld [vmem:[#allocation2 + $0xd8] sm:$0xff]
      %v2067 = vld [vmem:[#allocation2 + $0xe0] sm:$0xff]
      %v2068 = vld [vmem:[#allocation2 + $0xe8] sm:$0xff]
      %v2069 = vld [vmem:[#allocation2 + $0xf0] sm:$0xff]
      %v2070 = vld [vmem:[#allocation2 + $0xf8] sm:$0xff]
      %v2071 = vld [vmem:[#allocation2 + $0x100] sm:$0xff]
      %v2072 = vld [vmem:[#allocation2 + $0x108] sm:$0xff]
      %v2073 = vld [vmem:[#allocation2 + $0x110] sm:$0xff]
      %v2074 = vld [vmem:[#allocation2 + $0x118] sm:$0xff]
      %v2075 = vld [vmem:[#allocation2 + $0x120] sm:$0xff]
      %v2076 = vld [vmem:[#allocation2 + $0x128] sm:$0xff]
      %v2077 = vld [vmem:[#allocation2 + $0x130] sm:$0xff]
      %v2078 = vld [vmem:[#allocation2 + $0x138] sm:$0xff]
      %v2079 = vld [vmem:[#allocation2 + $0x140] sm:$0xff]
      %v2080 = vld [vmem:[#allocation2 + $0x148] sm:$0xff]
      %v2081 = vld [vmem:[#allocation2 + $0x150] sm:$0xff]
      %v2082 = vld [vmem:[#allocation2 + $0x158] sm:$0xff]
      %v2083 = vld [vmem:[#allocation2 + $0x160] sm:$0xff]
      %v2084 = vld [vmem:[#allocation2 + $0x168] sm:$0xff]
      %v2085 = vld [vmem:[#allocation2 + $0x170] sm:$0xff]
      %v2086 = vld [vmem:[#allocation2 + $0x178] sm:$0xff]
      %v2087 = vld [vmem:[#allocation2 + $0x180] sm:$0xff]
      %v2088 = vld [vmem:[#allocation2 + $0x188] sm:$0xff]
      %v2089 = vld [vmem:[#allocation2 + $0x190] sm:$0xff]
      %v2090 = vld [vmem:[#allocation2 + $0x198] sm:$0xff]
      %v2091 = vld [vmem:[#allocation2 + $0x1a0] sm:$0xff]
      %v2092 = vld [vmem:[#allocation2 + $0x1a8] sm:$0xff]
      %v2093 = vld [vmem:[#allocation2 + $0x1b0] sm:$0xff]
      %v2094 = vld [vmem:[#allocation2 + $0x1b8] sm:$0xff]
      %v2095 = vld [vmem:[#allocation2 + $0x1c0] sm:$0xff]
      %v2096 = vld [vmem:[#allocation2 + $0x1c8] sm:$0xff]
      %v2097 = vld [vmem:[#allocation2 + $0x1d0] sm:$0xff]
      %v2098 = vld [vmem:[#allocation2 + $0x1d8] sm:$0xff]
      %v2099 = vld [vmem:[#allocation2 + $0x1e0] sm:$0xff]
      %v2100 = vld [vmem:[#allocation2 + $0x1e8] sm:$0xff]
      %v2101 = vld [vmem:[#allocation2 + $0x1f0] sm:$0xff]
      %v2102 = vld [vmem:[#allocation2 + $0x1f8] sm:$0xff]
      %v2103 = vld [vmem:[#allocation2 + $0x200] sm:$0xff]
      %v2104 = vld [vmem:[#allocation2 + $0x208] sm:$0xff]
      %v2105 = vld [vmem:[#allocation2 + $0x210] sm:$0xff]
      %v2106 = vld [vmem:[#allocation2 + $0x218] sm:$0xff]
      %v2107 = vld [vmem:[#allocation2 + $0x220] sm:$0xff]
      %v2108 = vld [vmem:[#allocation2 + $0x228] sm:$0xff]
      %v2109 = vld [vmem:[#allocation2 + $0x230] sm:$0xff]
      %v2110 = vld [vmem:[#allocation2 + $0x238] sm:$0xff]
      %v2111 = vld [vmem:[#allocation2 + $0x240] sm:$0xff]
      %v2112 = vld [vmem:[#allocation2 + $0x248] sm:$0xff]
      %v2113 = vld [vmem:[#allocation2 + $0x250] sm:$0xff]
      %v2114 = vld [vmem:[#allocation2 + $0x258] sm:$0xff]
      %v2115 = vld [vmem:[#allocation2 + $0x260] sm:$0xff]
      %v2116 = vld [vmem:[#allocation2 + $0x268] sm:$0xff]
      %v2117 = vld [vmem:[#allocation2 + $0x270] sm:$0xff]
      %v2118 = vld [vmem:[#allocation2 + $0x278] sm:$0xff]
      %v2119 = vld [vmem:[#allocation2 + $0x280] sm:$0xff]
      %v2120 = vld [vmem:[#allocation2 + $0x288] sm:$0xff]
      %v2121 = vld [vmem:[#allocation2 + $0x290] sm:$0xff]
      %v2122 = vld [vmem:[#allocation2 + $0x298] sm:$0xff]
      %v2123 = vld [vmem:[#allocation2 + $0x2a0] sm:$0xff]
      %v2124 = vld [vmem:[#allocation2 + $0x2a8] sm:$0xff]
      %v2125 = vld [vmem:[#allocation2 + $0x2b0] sm:$0xff]
      %v2126 = vld [vmem:[#allocation2 + $0x2b8] sm:$0xff]
      %v2127 = vld [vmem:[#allocation2 + $0x2c0] sm:$0xff]
      %v2128 = vld [vmem:[#allocation2 + $0x2c8] sm:$0xff]
      %v2129 = vld [vmem:[#allocation2 + $0x2d0] sm:$0xff]
      %v2130 = vld [vmem:[#allocation2 + $0x2d8] sm:$0xff]
      %v2131 = vld [vmem:[#allocation2 + $0x2e0] sm:$0xff]
      %v2132 = vld [vmem:[#allocation2 + $0x2e8] sm:$0xff]
      %v2133 = vld [vmem:[#allocation2 + $0x2f0] sm:$0xff]
      %v2134 = vld [vmem:[#allocation2 + $0x2f8] sm:$0xff]
      %v2135 = vld [vmem:[#allocation2 + $0x300] sm:$0xff]
      %v2136 = vld [vmem:[#allocation2 + $0x308] sm:$0xff]
      %v2137 = vld [vmem:[#allocation2 + $0x310] sm:$0xff]
      %v2138 = vld [vmem:[#allocation2 + $0x318] sm:$0xff]
      %v2139 = vld [vmem:[#allocation2 + $0x320] sm:$0xff]
      %v2140 = vld [vmem:[#allocation2 + $0x328] sm:$0xff]
      %v2141 = vld [vmem:[#allocation2 + $0x330] sm:$0xff]
      %v2142 = vld [vmem:[#allocation2 + $0x338] sm:$0xff]
      %v2143 = vld [vmem:[#allocation2 + $0x340] sm:$0xff]
      %v2144 = vld [vmem:[#allocation2 + $0x348] sm:$0xff]
      %v2145 = vld [vmem:[#allocation2 + $0x350] sm:$0xff]
      %v2146 = vld [vmem:[#allocation2 + $0x358] sm:$0xff]
      %v2147 = vld [vmem:[#allocation2 + $0x360] sm:$0xff]
      %v2148 = vld [vmem:[#allocation2 + $0x368] sm:$0xff]
      %v2149 = vld [vmem:[#allocation2 + $0x370] sm:$0xff]
      %v2150 = vld [vmem:[#allocation2 + $0x378] sm:$0xff]
      %v2151 = vld [vmem:[#allocation2 + $0x380] sm:$0xff]
      %v2152 = vld [vmem:[#allocation2 + $0x388] sm:$0xff]
      %v2153 = vld [vmem:[#allocation2 + $0x390] sm:$0xff]
      %v2154 = vld [vmem:[#allocation2 + $0x398] sm:$0xff]
      %v2155 = vld [vmem:[#allocation2 + $0x3a0] sm:$0xff]
      %v2156 = vld [vmem:[#allocation2 + $0x3a8] sm:$0xff]
      %v2157 = vld [vmem:[#allocation2 + $0x3b0] sm:$0xff]
      %v2158 = vld [vmem:[#allocation2 + $0x3b8] sm:$0xff]
      %v2159 = vld [vmem:[#allocation2 + $0x3c0] sm:$0xff]
      %v2160 = vld [vmem:[#allocation2 + $0x3c8] sm:$0xff]
      %v2161 = vld [vmem:[#allocation2 + $0x3d0] sm:$0xff]
      %v2162 = vld [vmem:[#allocation2 + $0x3d8] sm:$0xff]
      %v2163 = vld [vmem:[#allocation2 + $0x3e0] sm:$0xff]
      %v2164 = vld [vmem:[#allocation2 + $0x3e8] sm:$0xff]
      %v2165 = vld [vmem:[#allocation2 + $0x3f0] sm:$0xff]
      %v2166 = vld [vmem:[#allocation2 + $0x3f8] sm:$0xff]
      %v2167 = vld [vmem:[#allocation2 + $0x400] sm:$0xff]
      %v2168 = vld [vmem:[#allocation2 + $0x408] sm:$0xff]
      %v2169 = vld [vmem:[#allocation2 + $0x410] sm:$0xff]
      %v2170 = vld [vmem:[#allocation2 + $0x418] sm:$0xff]
      %v2171 = vld [vmem:[#allocation2 + $0x420] sm:$0xff]
      %v2172 = vld [vmem:[#allocation2 + $0x428] sm:$0xff]
      %v2173 = vld [vmem:[#allocation2 + $0x430] sm:$0xff]
      %v2174 = vld [vmem:[#allocation2 + $0x438] sm:$0xff]
      %v2175 = vld [vmem:[#allocation2 + $0x440] sm:$0xff]
      %v2176 = vld [vmem:[#allocation2 + $0x448] sm:$0xff]
      %v2177 = vld [vmem:[#allocation2 + $0x450] sm:$0xff]
      %v2178 = vld [vmem:[#allocation2 + $0x458] sm:$0xff]
      %v2179 = vld [vmem:[#allocation2 + $0x460] sm:$0xff]
      %v2180 = vld [vmem:[#allocation2 + $0x468] sm:$0xff]
      %v2181 = vld [vmem:[#allocation2 + $0x470] sm:$0xff]
      %v2182 = vld [vmem:[#allocation2 + $0x478] sm:$0xff]
      %v2183 = vld [vmem:[#allocation2 + $0x480] sm:$0xff]
      %v2184 = vld [vmem:[#allocation2 + $0x488] sm:$0xff]
      %v2185 = vld [vmem:[#allocation2 + $0x490] sm:$0xff]
      %v2186 = vld [vmem:[#allocation2 + $0x498] sm:$0xff]
      %v2187 = vld [vmem:[#allocation2 + $0x4a0] sm:$0xff]
      %v2188 = vld [vmem:[#allocation2 + $0x4a8] sm:$0xff]
      %v2189 = vld [vmem:[#allocation2 + $0x4b0] sm:$0xff]
      %v2190 = vld [vmem:[#allocation2 + $0x4b8] sm:$0xff]
      %v2191 = vld [vmem:[#allocation2 + $0x4c0] sm:$0xff]
      %v2192 = vld [vmem:[#allocation2 + $0x4c8] sm:$0xff]
      %v2193 = vld [vmem:[#allocation2 + $0x4d0] sm:$0xff]
      %v2194 = vld [vmem:[#allocation2 + $0x4d8] sm:$0xff]
      %v2195 = vld [vmem:[#allocation2 + $0x4e0] sm:$0xff]
      %v2196 = vld [vmem:[#allocation2 + $0x4e8] sm:$0xff]
      %v2197 = vld [vmem:[#allocation2 + $0x4f0] sm:$0xff]
      %v2198 = vld [vmem:[#allocation2 + $0x4f8] sm:$0xff]
      %v2199 = vld [vmem:[%s2] sm:$0xf]
      %v2200 = vld [vmem:[%s2 + $0x4] sm:$0xf]
      %v2201 = vld [vmem:[%s2 + $0x8] sm:$0xf]
      %v2202 = vld [vmem:[%s2 + $0xc] sm:$0xf]
      %v2203 = vld [vmem:[%s2 + $0x10] sm:$0xf]
      %v2204 = vld [vmem:[%s2 + $0x14] sm:$0xf]
      %v2205 = vld [vmem:[%s2 + $0x18] sm:$0xf]
      %v2206 = vld [vmem:[%s2 + $0x1c] sm:$0xf]
      %v2207 = vld [vmem:[%s2 + $0x20] sm:$0xf]
      %v2208 = vld [vmem:[%s2 + $0x24] sm:$0xf]
      %v2209 = vld [vmem:[%s2 + $0x28] sm:$0xf]
      %v2210 = vld [vmem:[%s2 + $0x2c] sm:$0xf]
      %v2211 = vld [vmem:[%s2 + $0x30] sm:$0xf]
      %v2212 = vld [vmem:[%s2 + $0x34] sm:$0xf]
      %v2213 = vld [vmem:[%s2 + $0x38] sm:$0xf]
      %v2214 = vld [vmem:[%s2 + $0x3c] sm:$0xf]
      %v2215 = vld [vmem:[%s2 + $0x40] sm:$0xf]
      %v2216 = vld [vmem:[%s2 + $0x44] sm:$0xf]
      %v2217 = vld [vmem:[%s2 + $0x48] sm:$0xf]
      %v2218 = vld [vmem:[%s2 + $0x4c] sm:$0xf]
      %v2219 = vld [vmem:[%s2 + $0x50] sm:$0xf]
      %v2220 = vld [vmem:[%s2 + $0x54] sm:$0xf]
      %v2221 = vld [vmem:[%s2 + $0x58] sm:$0xf]
      %v2222 = vld [vmem:[%s2 + $0x5c] sm:$0xf]
      %v2223 = vld [vmem:[%s2 + $0x60] sm:$0xf]
      %v2224 = vld [vmem:[%s2 + $0x64] sm:$0xf]
      %v2225 = vld [vmem:[%s2 + $0x68] sm:$0xf]
      %v2226 = vld [vmem:[%s2 + $0x6c] sm:$0xf]
      %v2227 = vld [vmem:[%s2 + $0x70] sm:$0xf]
      %v2228 = vld [vmem:[%s2 + $0x74] sm:$0xf]
      %v2229 = vld [vmem:[%s2 + $0x78] sm:$0xf]
      %v2230 = vld [vmem:[%s2 + $0x7c] sm:$0xf]
      %v2231 = vld [vmem:[%s2 + $0x80] sm:$0xf]
      %v2232 = vld [vmem:[%s2 + $0x84] sm:$0xf]
      %v2233 = vld [vmem:[%s2 + $0x88] sm:$0xf]
      %v2234 = vld [vmem:[%s2 + $0x8c] sm:$0xf]
      %v2235 = vld [vmem:[%s2 + $0x90] sm:$0xf]
      %v2236 = vld [vmem:[%s2 + $0x94] sm:$0xf]
      %v2237 = vld [vmem:[%s2 + $0x98] sm:$0xf]
      %v2238 = vld [vmem:[%s2 + $0x9c] sm:$0xf]
      %v2239 = vld [vmem:[%s2 + $0xa0] sm:$0xf]
      %v2240 = vld [vmem:[%s2 + $0xa4] sm:$0xf]
      %v2241 = vld [vmem:[%s2 + $0xa8] sm:$0xf]
      %v2242 = vld [vmem:[%s2 + $0xac] sm:$0xf]
      %v2243 = vld [vmem:[%s2 + $0xb0] sm:$0xf]
      %v2244 = vld [vmem:[%s2 + $0xb4] sm:$0xf]
      %v2245 = vld [vmem:[%s2 + $0xb8] sm:$0xf]
      %v2246 = vld [vmem:[%s2 + $0xbc] sm:$0xf]
      %v2247 = vld [vmem:[%s2 + $0xc0] sm:$0xf]
      %v2248 = vld [vmem:[%s2 + $0xc4] sm:$0xf]
      %v2249 = vld [vmem:[%s2 + $0xc8] sm:$0xf]
      %v2250 = vld [vmem:[%s2 + $0xcc] sm:$0xf]
      %v2251 = vld [vmem:[%s2 + $0xd0] sm:$0xf]
      %v2252 = vld [vmem:[%s2 + $0xd4] sm:$0xf]
      %v2253 = vld [vmem:[%s2 + $0xd8] sm:$0xf]
      %v2254 = vld [vmem:[%s2 + $0xdc] sm:$0xf]
      %v2255 = vld [vmem:[%s2 + $0xe0] sm:$0xf]
      %v2256 = vld [vmem:[%s2 + $0xe4] sm:$0xf]
      %v2257 = vld [vmem:[%s2 + $0xe8] sm:$0xf]
      %v2258 = vld [vmem:[%s2 + $0xec] sm:$0xf]
      %v2259 = vld [vmem:[%s2 + $0xf0] sm:$0xf]
      %v2260 = vld [vmem:[%s2 + $0xf4] sm:$0xf]
      %v2261 = vld [vmem:[%s2 + $0xf8] sm:$0xf]
      %v2262 = vld [vmem:[%s2 + $0xfc] sm:$0xf]
      %v2263 = vld [vmem:[%s2 + $0x100] sm:$0xf]
      %v2264 = vld [vmem:[%s2 + $0x104] sm:$0xf]
      %v2265 = vld [vmem:[%s2 + $0x108] sm:$0xf]
      %v2266 = vld [vmem:[%s2 + $0x10c] sm:$0xf]
      %v2267 = vld [vmem:[%s2 + $0x110] sm:$0xf]
      %v2268 = vld [vmem:[%s2 + $0x114] sm:$0xf]
      %v2269 = vld [vmem:[%s2 + $0x118] sm:$0xf]
      %v2270 = vld [vmem:[%s2 + $0x11c] sm:$0xf]
      %v2271 = vld [vmem:[%s2 + $0x120] sm:$0xf]
      %v2272 = vld [vmem:[%s2 + $0x124] sm:$0xf]
      %v2273 = vld [vmem:[%s2 + $0x128] sm:$0xf]
      %v2274 = vld [vmem:[%s2 + $0x12c] sm:$0xf]
      %v2275 = vld [vmem:[%s2 + $0x130] sm:$0xf]
      %v2276 = vld [vmem:[%s2 + $0x134] sm:$0xf]
      %v2277 = vld [vmem:[%s2 + $0x138] sm:$0xf]
      %v2278 = vld [vmem:[%s2 + $0x13c] sm:$0xf]
      %v2279 = vld [vmem:[%s2 + $0x140] sm:$0xf]
      %v2280 = vld [vmem:[%s2 + $0x144] sm:$0xf]
      %v2281 = vld [vmem:[%s2 + $0x148] sm:$0xf]
      %v2282 = vld [vmem:[%s2 + $0x14c] sm:$0xf]
      %v2283 = vld [vmem:[%s2 + $0x150] sm:$0xf]
      %v2284 = vld [vmem:[%s2 + $0x154] sm:$0xf]
      %v2285 = vld [vmem:[%s2 + $0x158] sm:$0xf]
      %v2286 = vld [vmem:[%s2 + $0x15c] sm:$0xf]
      %v2287 = vld [vmem:[%s2 + $0x160] sm:$0xf]
      %v2288 = vld [vmem:[%s2 + $0x164] sm:$0xf]
      %v2289 = vld [vmem:[%s2 + $0x168] sm:$0xf]
      %v2290 = vld [vmem:[%s2 + $0x16c] sm:$0xf]
      %v2291 = vld [vmem:[%s2 + $0x170] sm:$0xf]
      %v2292 = vld [vmem:[%s2 + $0x174] sm:$0xf]
      %v2293 = vld [vmem:[%s2 + $0x178] sm:$0xf]
      %v2294 = vld [vmem:[%s2 + $0x17c] sm:$0xf]
      %v2295 = vld [vmem:[%s2 + $0x180] sm:$0xf]
      %v2296 = vld [vmem:[%s2 + $0x184] sm:$0xf]
      %v2297 = vld [vmem:[%s2 + $0x188] sm:$0xf]
      %v2298 = vld [vmem:[%s2 + $0x18c] sm:$0xf]
      %v2299 = vld [vmem:[%s2 + $0x190] sm:$0xf]
      %v2300 = vld [vmem:[%s2 + $0x194] sm:$0xf]
      %v2301 = vld [vmem:[%s2 + $0x198] sm:$0xf]
      %v2302 = vld [vmem:[%s2 + $0x19c] sm:$0xf]
      %v2303 = vld [vmem:[%s2 + $0x1a0] sm:$0xf]
      %v2304 = vld [vmem:[%s2 + $0x1a4] sm:$0xf]
      %v2305 = vld [vmem:[%s2 + $0x1a8] sm:$0xf]
      %v2306 = vld [vmem:[%s2 + $0x1ac] sm:$0xf]
      %v2307 = vld [vmem:[%s2 + $0x1b0] sm:$0xf]
      %v2308 = vld [vmem:[%s2 + $0x1b4] sm:$0xf]
      %v2309 = vld [vmem:[%s2 + $0x1b8] sm:$0xf]
      %v2310 = vld [vmem:[%s2 + $0x1bc] sm:$0xf]
      %v2311 = vld [vmem:[%s2 + $0x1c0] sm:$0xf]
      %v2312 = vld [vmem:[%s2 + $0x1c4] sm:$0xf]
      %v2313 = vld [vmem:[%s2 + $0x1c8] sm:$0xf]
      %v2314 = vld [vmem:[%s2 + $0x1cc] sm:$0xf]
      %v2315 = vld [vmem:[%s2 + $0x1d0] sm:$0xf]
      %v2316 = vld [vmem:[%s2 + $0x1d4] sm:$0xf]
      %v2317 = vld [vmem:[%s2 + $0x1d8] sm:$0xf]
      %v2318 = vld [vmem:[%s2 + $0x1dc] sm:$0xf]
      %v2319 = vld [vmem:[%s2 + $0x1e0] sm:$0xf]
      %v2320 = vld [vmem:[%s2 + $0x1e4] sm:$0xf]
      %v2321 = vld [vmem:[%s2 + $0x1e8] sm:$0xf]
      %v2322 = vld [vmem:[%s2 + $0x1ec] sm:$0xf]
      %v2323 = vld [vmem:[%s2 + $0x1f0] sm:$0xf]
      %v2324 = vld [vmem:[%s2 + $0x1f4] sm:$0xf]
      %v2325 = vld [vmem:[%s2 + $0x1f8] sm:$0xf]
      %v2326 = vld [vmem:[%s2 + $0x1fc] sm:$0xf]
      %v2327 = vld [vmem:[%s2 + $0x200] sm:$0xf]
      %v2328 = vld [vmem:[%s2 + $0x204] sm:$0xf]
      %v2329 = vld [vmem:[%s2 + $0x208] sm:$0xf]
      %v2330 = vld [vmem:[%s2 + $0x20c] sm:$0xf]
      %v2331 = vld [vmem:[%s2 + $0x210] sm:$0xf]
      %v2332 = vld [vmem:[%s2 + $0x214] sm:$0xf]
      %v2333 = vld [vmem:[%s2 + $0x218] sm:$0xf]
      %v2334 = vld [vmem:[%s2 + $0x21c] sm:$0xf]
      %v2335 = vld [vmem:[%s2 + $0x220] sm:$0xf]
      %v2336 = vld [vmem:[%s2 + $0x224] sm:$0xf]
      %v2337 = vld [vmem:[%s2 + $0x228] sm:$0xf]
      %v2338 = vld [vmem:[%s2 + $0x22c] sm:$0xf]
      %v2339 = vld [vmem:[%s2 + $0x230] sm:$0xf]
      %v2340 = vld [vmem:[%s2 + $0x234] sm:$0xf]
      %v2341 = vld [vmem:[%s2 + $0x238] sm:$0xf]
      %v2342 = vld [vmem:[%s2 + $0x23c] sm:$0xf]
      %v2343 = vld [vmem:[%s2 + $0x240] sm:$0x3]
      %v2489 = vunpack.c.l.b16 %v2199
      %v2490 = vunpack.c.l.b16 %v2200
      %v2491 = vunpack.c.l.b16 %v2201
      %v2492 = vunpack.c.l.b16 %v2202
      %v2493 = vunpack.c.l.b16 %v2203
      %v2494 = vunpack.c.l.b16 %v2204
      %v2495 = vunpack.c.l.b16 %v2205
      %v2496 = vunpack.c.l.b16 %v2206
      %v2497 = vunpack.c.l.b16 %v2207
      %v2498 = vunpack.c.l.b16 %v2208
      %v2499 = vunpack.c.l.b16 %v2209
      %v2500 = vunpack.c.l.b16 %v2210
      %v2501 = vunpack.c.l.b16 %v2211
      %v2502 = vunpack.c.l.b16 %v2212
      %v2503 = vunpack.c.l.b16 %v2213
      %v2504 = vunpack.c.l.b16 %v2214
      %v2505 = vunpack.c.l.b16 %v2215
      %v2506 = vunpack.c.l.b16 %v2216
      %v2507 = vunpack.c.l.b16 %v2217
      %v2508 = vunpack.c.l.b16 %v2218
      %v2509 = vunpack.c.l.b16 %v2219
      %v2510 = vunpack.c.l.b16 %v2220
      %v2511 = vunpack.c.l.b16 %v2221
      %v2512 = vunpack.c.l.b16 %v2222
      %v2513 = vunpack.c.l.b16 %v2223
      %v2514 = vunpack.c.l.b16 %v2224
      %v2515 = vunpack.c.l.b16 %v2225
      %v2516 = vunpack.c.l.b16 %v2226
      %v2517 = vunpack.c.l.b16 %v2227
      %v2518 = vunpack.c.l.b16 %v2228
      %v2519 = vunpack.c.l.b16 %v2229
      %v2520 = vunpack.c.l.b16 %v2230
      %v2521 = vunpack.c.l.b16 %v2231
      %v2522 = vunpack.c.l.b16 %v2232
      %v2523 = vunpack.c.l.b16 %v2233
      %v2524 = vunpack.c.l.b16 %v2234
      %v2525 = vunpack.c.l.b16 %v2235
      %v2526 = vunpack.c.l.b16 %v2236
      %v2527 = vunpack.c.l.b16 %v2237
      %v2528 = vunpack.c.l.b16 %v2238
      %v2529 = vunpack.c.l.b16 %v2239
      %v2530 = vunpack.c.l.b16 %v2240
      %v2531 = vunpack.c.l.b16 %v2241
      %v2532 = vunpack.c.l.b16 %v2242
      %v2533 = vunpack.c.l.b16 %v2243
      %v2534 = vunpack.c.l.b16 %v2244
      %v2535 = vunpack.c.l.b16 %v2245
      %v2536 = vunpack.c.l.b16 %v2246
      %v2537 = vunpack.c.l.b16 %v2247
      %v2538 = vunpack.c.l.b16 %v2248
      %v2539 = vunpack.c.l.b16 %v2249
      %v2540 = vunpack.c.l.b16 %v2250
      %v2541 = vunpack.c.l.b16 %v2251
      %v2542 = vunpack.c.l.b16 %v2252
      %v2543 = vunpack.c.l.b16 %v2253
      %v2544 = vunpack.c.l.b16 %v2254
      %v2545 = vunpack.c.l.b16 %v2255
      %v2546 = vunpack.c.l.b16 %v2256
      %v2547 = vunpack.c.l.b16 %v2257
      %v2548 = vunpack.c.l.b16 %v2258
      %v2549 = vunpack.c.l.b16 %v2259
      %v2550 = vunpack.c.l.b16 %v2260
      %v2551 = vunpack.c.l.b16 %v2261
      %v2552 = vunpack.c.l.b16 %v2262
      %v2553 = vunpack.c.l.b16 %v2263
      %v2554 = vunpack.c.l.b16 %v2264
      %v2555 = vunpack.c.l.b16 %v2265
      %v2556 = vunpack.c.l.b16 %v2266
      %v2557 = vunpack.c.l.b16 %v2267
      %v2558 = vunpack.c.l.b16 %v2268
      %v2559 = vunpack.c.l.b16 %v2269
      %v2560 = vunpack.c.l.b16 %v2270
      %v2561 = vunpack.c.l.b16 %v2271
      %v2562 = vunpack.c.l.b16 %v2272
      %v2563 = vunpack.c.l.b16 %v2273
      %v2564 = vunpack.c.l.b16 %v2274
      %v2565 = vunpack.c.l.b16 %v2275
      %v2566 = vunpack.c.l.b16 %v2276
      %v2567 = vunpack.c.l.b16 %v2277
      %v2568 = vunpack.c.l.b16 %v2278
      %v2569 = vunpack.c.l.b16 %v2279
      %v2570 = vunpack.c.l.b16 %v2280
      %v2571 = vunpack.c.l.b16 %v2281
      %v2572 = vunpack.c.l.b16 %v2282
      %v2573 = vunpack.c.l.b16 %v2283
      %v2574 = vunpack.c.l.b16 %v2284
      %v2575 = vunpack.c.l.b16 %v2285
      %v2576 = vunpack.c.l.b16 %v2286
      %v2577 = vunpack.c.l.b16 %v2287
      %v2578 = vunpack.c.l.b16 %v2288
      %v2579 = vunpack.c.l.b16 %v2289
      %v2580 = vunpack.c.l.b16 %v2290
      %v2581 = vunpack.c.l.b16 %v2291
      %v2582 = vunpack.c.l.b16 %v2292
      %v2583 = vunpack.c.l.b16 %v2293
      %v2584 = vunpack.c.l.b16 %v2294
      %v2585 = vunpack.c.l.b16 %v2295
      %v2586 = vunpack.c.l.b16 %v2296
      %v2587 = vunpack.c.l.b16 %v2297
      %v2588 = vunpack.c.l.b16 %v2298
      %v2589 = vunpack.c.l.b16 %v2299
      %v2590 = vunpack.c.l.b16 %v2300
      %v2591 = vunpack.c.l.b16 %v2301
      %v2592 = vunpack.c.l.b16 %v2302
      %v2593 = vunpack.c.l.b16 %v2303
      %v2594 = vunpack.c.l.b16 %v2304
      %v2595 = vunpack.c.l.b16 %v2305
      %v2596 = vunpack.c.l.b16 %v2306
      %v2597 = vunpack.c.l.b16 %v2307
      %v2598 = vunpack.c.l.b16 %v2308
      %v2599 = vunpack.c.l.b16 %v2309
      %v2600 = vunpack.c.l.b16 %v2310
      %v2601 = vunpack.c.l.b16 %v2311
      %v2602 = vunpack.c.l.b16 %v2312
      %v2603 = vunpack.c.l.b16 %v2313
      %v2604 = vunpack.c.l.b16 %v2314
      %v2605 = vunpack.c.l.b16 %v2315
      %v2606 = vunpack.c.l.b16 %v2316
      %v2607 = vunpack.c.l.b16 %v2317
      %v2608 = vunpack.c.l.b16 %v2318
      %v2609 = vunpack.c.l.b16 %v2319
      %v2610 = vunpack.c.l.b16 %v2320
      %v2611 = vunpack.c.l.b16 %v2321
      %v2612 = vunpack.c.l.b16 %v2322
      %v2613 = vunpack.c.l.b16 %v2323
      %v2614 = vunpack.c.l.b16 %v2324
      %v2615 = vunpack.c.l.b16 %v2325
      %v2616 = vunpack.c.l.b16 %v2326
      %v2617 = vunpack.c.l.b16 %v2327
      %v2618 = vunpack.c.l.b16 %v2328
      %v2619 = vunpack.c.l.b16 %v2329
      %v2620 = vunpack.c.l.b16 %v2330
      %v2621 = vunpack.c.l.b16 %v2331
      %v2622 = vunpack.c.l.b16 %v2332
      %v2623 = vunpack.c.l.b16 %v2333
      %v2624 = vunpack.c.l.b16 %v2334
      %v2625 = vunpack.c.l.b16 %v2335
      %v2626 = vunpack.c.l.b16 %v2336
      %v2627 = vunpack.c.l.b16 %v2337
      %v2628 = vunpack.c.l.b16 %v2338
      %v2629 = vunpack.c.l.b16 %v2339
      %v2630 = vunpack.c.l.b16 %v2340
      %v2631 = vunpack.c.l.b16 %v2341
      %v2632 = vunpack.c.l.b16 %v2342
      %v2633 = vunpack.c.l.b16 %v2343
      %v2634 = vpack.c.b16 %v2490, %v2489
      %v2635 = vpack.c.b16 %v2492, %v2491
      %v2636 = vpack.c.b16 %v2494, %v2493
      %v2637 = vpack.c.b16 %v2496, %v2495
      %v2638 = vpack.c.b16 %v2498, %v2497
      %v2639 = vpack.c.b16 %v2500, %v2499
      %v2640 = vpack.c.b16 %v2502, %v2501
      %v2641 = vpack.c.b16 %v2504, %v2503
      %v2642 = vpack.c.b16 %v2506, %v2505
      %v2643 = vpack.c.b16 %v2508, %v2507
      %v2644 = vpack.c.b16 %v2510, %v2509
      %v2645 = vpack.c.b16 %v2512, %v2511
      %v2646 = vpack.c.b16 %v2514, %v2513
      %v2647 = vpack.c.b16 %v2516, %v2515
      %v2648 = vpack.c.b16 %v2518, %v2517
      %v2649 = vpack.c.b16 %v2520, %v2519
      %v2650 = vpack.c.b16 %v2522, %v2521
      %v2651 = vpack.c.b16 %v2524, %v2523
      %v2652 = vpack.c.b16 %v2526, %v2525
      %v2653 = vpack.c.b16 %v2528, %v2527
      %v2654 = vpack.c.b16 %v2530, %v2529
      %v2655 = vpack.c.b16 %v2532, %v2531
      %v2656 = vpack.c.b16 %v2534, %v2533
      %v2657 = vpack.c.b16 %v2536, %v2535
      %v2658 = vpack.c.b16 %v2538, %v2537
      %v2659 = vpack.c.b16 %v2540, %v2539
      %v2660 = vpack.c.b16 %v2542, %v2541
      %v2661 = vpack.c.b16 %v2544, %v2543
      %v2662 = vpack.c.b16 %v2546, %v2545
      %v2663 = vpack.c.b16 %v2548, %v2547
      %v2664 = vpack.c.b16 %v2550, %v2549
      %v2665 = vpack.c.b16 %v2552, %v2551
      %v2666 = vpack.c.b16 %v2554, %v2553
      %v2667 = vpack.c.b16 %v2556, %v2555
      %v2668 = vpack.c.b16 %v2558, %v2557
      %v2669 = vpack.c.b16 %v2560, %v2559
      %v2670 = vpack.c.b16 %v2562, %v2561
      %v2671 = vpack.c.b16 %v2564, %v2563
      %v2672 = vpack.c.b16 %v2566, %v2565
      %v2673 = vpack.c.b16 %v2568, %v2567
      %v2674 = vpack.c.b16 %v2570, %v2569
      %v2675 = vpack.c.b16 %v2572, %v2571
      %v2676 = vpack.c.b16 %v2574, %v2573
      %v2677 = vpack.c.b16 %v2576, %v2575
      %v2678 = vpack.c.b16 %v2578, %v2577
      %v2679 = vpack.c.b16 %v2580, %v2579
      %v2680 = vpack.c.b16 %v2582, %v2581
      %v2681 = vpack.c.b16 %v2584, %v2583
      %v2682 = vpack.c.b16 %v2586, %v2585
      %v2683 = vpack.c.b16 %v2588, %v2587
      %v2684 = vpack.c.b16 %v2590, %v2589
      %v2685 = vpack.c.b16 %v2592, %v2591
      %v2686 = vpack.c.b16 %v2594, %v2593
      %v2687 = vpack.c.b16 %v2596, %v2595
      %v2688 = vpack.c.b16 %v2598, %v2597
      %v2689 = vpack.c.b16 %v2600, %v2599
      %v2690 = vpack.c.b16 %v2602, %v2601
      %v2691 = vpack.c.b16 %v2604, %v2603
      %v2692 = vpack.c.b16 %v2606, %v2605
      %v2693 = vpack.c.b16 %v2608, %v2607
      %v2694 = vpack.c.b16 %v2610, %v2609
      %v2695 = vpack.c.b16 %v2612, %v2611
      %v2696 = vpack.c.b16 %v2614, %v2613
      %v2697 = vpack.c.b16 %v2616, %v2615
      %v2698 = vpack.c.b16 %v2618, %v2617
      %v2699 = vpack.c.b16 %v2620, %v2619
      %v2700 = vpack.c.b16 %v2622, %v2621
      %v2701 = vpack.c.b16 %v2624, %v2623
      %v2702 = vpack.c.b16 %v2626, %v2625
      %v2703 = vpack.c.b16 %v2628, %v2627
      %v2704 = vpack.c.b16 %v2630, %v2629
      %v2705 = vpack.c.b16 %v2632, %v2631
      %v2706 = vpack.c.b16 %v2633, %v2633
      %v2780 = vsel %vm2022, %v2048, 0
      %v2783 = vsel %vm2022, %v2058, 0
      %v2786 = vsel %vm2022, %v2068, 0
      %v2789 = vsel %vm2022, %v2078, 0
      %v2792 = vsel %vm2022, %v2088, 0
      %v2795 = vsel %vm2022, %v2098, 0
      %v2798 = vsel %vm2022, %v2108, 0
      %v2801 = vsel %vm2022, %v2118, 0
      %v2804 = vsel %vm2022, %v2128, 0
      %v2807 = vsel %vm2022, %v2138, 0
      %v2810 = vsel %vm2022, %v2148, 0
      %v2813 = vsel %vm2022, %v2158, 0
      %v2816 = vsel %vm2022, %v2168, 0
      %v2819 = vsel %vm2022, %v2178, 0
      %v2822 = vsel %vm2022, %v2188, 0
      %v2825 = vsel %vm2022, %v2198, 0
      %vm2827 = vcmask 1041408
      %v2829 = vsel %vm2827, %v2706, 0
      %2831 = vmatprep.subr.bf16.mxu0 0
      %2832 = vmatpush1.bf16.msra.mxu0 %v2634
      %2833 = vmatprep.subr.bf16.mxu0 0
      %2834 = vmatpush1.bf16.msra.mxu0 %v2635
      %2835 = vmatprep.subr.bf16.mxu0 0
      %2836 = vmatpush1.bf16.msra.mxu0 %v2636
      %2837 = vmatprep.subr.bf16.mxu0 0
      %2838 = vmatpush1.bf16.msra.mxu0 %v2637
      %2839 = vmatprep.subr.bf16.mxu0 0
      %2840 = vmatpush1.bf16.msra.mxu0 %v2638
      %2841 = vmatprep.subr.bf16.mxu0 0
      %2842 = vmatpush1.bf16.msra.mxu0 %v2639
      %2843 = vmatprep.subr.bf16.mxu0 0
      %2844 = vmatpush1.bf16.msra.mxu0 %v2640
      %2845 = vmatprep.subr.bf16.mxu0 0
      %2846 = vmatpush1.bf16.msra.mxu0 %v2641
      %2847 = vmatprep.subr.bf16.mxu0 0
      %2848 = vmatpush1.bf16.msra.mxu0 %v2642
      %2849 = vmatprep.subr.bf16.mxu0 0
      %2850 = vmatpush1.bf16.msra.mxu0 %v2643
      %2851 = vmatprep.subr.bf16.mxu0 0
      %2852 = vmatpush1.bf16.msra.mxu0 %v2644
      %2853 = vmatprep.subr.bf16.mxu0 0
      %2854 = vmatpush1.bf16.msra.mxu0 %v2645
      %2855 = vmatprep.subr.bf16.mxu0 0
      %2856 = vmatpush1.bf16.msra.mxu0 %v2646
      %2857 = vmatprep.subr.bf16.mxu0 0
      %2858 = vmatpush1.bf16.msra.mxu0 %v2647
      %2859 = vmatprep.subr.bf16.mxu0 0
      %2860 = vmatpush1.bf16.msra.mxu0 %v2648
      %2861 = vmatprep.subr.bf16.mxu0 0
      %2862 = vmatpush1.bf16.msra.mxu0 %v2649
      %2863 = vmatprep.mubr.bf16.mxu0 %v2040
      %2864 = vmatmul.mubr.bf16.gmra.mrb[0].mxu0 %v2039
      %v2865 = vpop.f32.mrb[0].mxu0
      %v2866 = vadd.f32 0.0, %v2865
      %v2867 = vpop.f32.mrb[0].mxu0
      %v2868 = vpop.f32.mrb[0].mxu0
      %v2869 = vadd.f32 0.0, %v2868
      %v2870 = vpop.f32.mrb[0].mxu0
      %2871 = vmatprep.mubr.bf16.mxu0 %v2050
      %2872 = vmatmul.mubr.bf16.gmra.mrb[0].mxu0 %v2049
      %v2873 = vpop.f32.mrb[0].mxu0
      %v2874 = vadd.f32 0.0, %v2873
      %v2875 = vpop.f32.mrb[0].mxu0
      %v2876 = vpop.f32.mrb[0].mxu0
      %v2877 = vadd.f32 0.0, %v2876
      %v2878 = vpop.f32.mrb[0].mxu0
      %2879 = vmatprep.mubr.bf16.mxu0 %v2060
      %2880 = vmatmul.mubr.bf16.gmra.mrb[0].mxu0 %v2059
      %v2881 = vpop.f32.mrb[0].mxu0
      %v2882 = vadd.f32 0.0, %v2881
      %v2883 = vpop.f32.mrb[0].mxu0
      %v2884 = vpop.f32.mrb[0].mxu0
      %v2885 = vadd.f32 0.0, %v2884
      %v2886 = vpop.f32.mrb[0].mxu0
      %2887 = vmatprep.mubr.bf16.mxu0 %v2070
      %2888 = vmatmul.mubr.bf16.gmra.mrb[0].mxu0 %v2069
      %v2889 = vpop.f32.mrb[0].mxu0
      %v2890 = vadd.f32 0.0, %v2889
      %v2891 = vpop.f32.mrb[0].mxu0
      %v2892 = vpop.f32.mrb[0].mxu0
      %v2893 = vadd.f32 0.0, %v2892
      %v2894 = vpop.f32.mrb[0].mxu0
      %2895 = vmatprep.mubr.bf16.mxu0 %v2080
      %2896 = vmatmul.mubr.bf16.gmra.mrb[0].mxu0 %v2079
      %v2897 = vpop.f32.mrb[0].mxu0
      %v2898 = vadd.f32 0.0, %v2897
      %v2899 = vpop.f32.mrb[0].mxu0
      %v2900 = vpop.f32.mrb[0].mxu0
      %v2901 = vadd.f32 0.0, %v2900
      %v2902 = vpop.f32.mrb[0].mxu0
      %2903 = vmatprep.mubr.bf16.mxu0 %v2090
      %2904 = vmatmul.mubr.bf16.gmra.mrb[0].mxu0 %v2089
      %v2905 = vpop.f32.mrb[0].mxu0
      %v2906 = vadd.f32 0.0, %v2905
      %v2907 = vpop.f32.mrb[0].mxu0
      %v2908 = vpop.f32.mrb[0].mxu0
      %v2909 = vadd.f32 0.0, %v2908
      %v2910 = vpop.f32.mrb[0].mxu0
      %2911 = vmatprep.mubr.bf16.mxu0 %v2100
      %2912 = vmatmul.mubr.bf16.gmra.mrb[0].mxu0 %v2099
      %v2913 = vpop.f32.mrb[0].mxu0
      %v2914 = vadd.f32 0.0, %v2913
      %v2915 = vpop.f32.mrb[0].mxu0
      %v2916 = vpop.f32.mrb[0].mxu0
      %v2917 = vadd.f32 0.0, %v2916
      %v2918 = vpop.f32.mrb[0].mxu0
      %2919 = vmatprep.mubr.bf16.mxu0 %v2110
      %2920 = vmatmul.mubr.bf16.gmra.mrb[0].mxu0 %v2109
      %v2921 = vpop.f32.mrb[0].mxu0
      %v2922 = vadd.f32 0.0, %v2921
      %v2923 = vpop.f32.mrb[0].mxu0
      %v2924 = vpop.f32.mrb[0].mxu0
      %v2925 = vadd.f32 0.0, %v2924
      %v2926 = vpop.f32.mrb[0].mxu0
      %2927 = vmatprep.mubr.bf16.mxu0 %v2120
      %2928 = vmatmul.mubr.bf16.gmra.mrb[0].mxu0 %v2119
      %v2929 = vpop.f32.mrb[0].mxu0
      %v2930 = vadd.f32 0.0, %v2929
      %v2931 = vpop.f32.mrb[0].mxu0
      %v2932 = vpop.f32.mrb[0].mxu0
      %v2933 = vadd.f32 0.0, %v2932
      %v2934 = vpop.f32.mrb[0].mxu0
      %2935 = vmatprep.mubr.bf16.mxu0 %v2130
      %2936 = vmatmul.mubr.bf16.gmra.mrb[0].mxu0 %v2129
      %v2937 = vpop.f32.mrb[0].mxu0
      %v2938 = vadd.f32 0.0, %v2937
      %v2939 = vpop.f32.mrb[0].mxu0
      %v2940 = vpop.f32.mrb[0].mxu0
      %v2941 = vadd.f32 0.0, %v2940
      %v2942 = vpop.f32.mrb[0].mxu0
      %2943 = vmatprep.mubr.bf16.mxu0 %v2140
      %2944 = vmatmul.mubr.bf16.gmra.mrb[0].mxu0 %v2139
      %v2945 = vpop.f32.mrb[0].mxu0
      %v2946 = vadd.f32 0.0, %v2945
      %v2947 = vpop.f32.mrb[0].mxu0
      %v2948 = vpop.f32.mrb[0].mxu0
      %v2949 = vadd.f32 0.0, %v2948
      %v2950 = vpop.f32.mrb[0].mxu0
      %2951 = vmatprep.mubr.bf16.mxu0 %v2150
      %2952 = vmatmul.mubr.bf16.gmra.mrb[0].mxu0 %v2149
      %v2953 = vpop.f32.mrb[0].mxu0
      %v2954 = vadd.f32 0.0, %v2953
      %v2955 = vpop.f32.mrb[0].mxu0
      %v2956 = vpop.f32.mrb[0].mxu0
      %v2957 = vadd.f32 0.0, %v2956
      %v2958 = vpop.f32.mrb[0].mxu0
      %2959 = vmatprep.mubr.bf16.mxu0 %v2160
      %2960 = vmatmul.mubr.bf16.gmra.mrb[0].mxu0 %v2159
      %v2961 = vpop.f32.mrb[0].mxu0
      %v2962 = vadd.f32 0.0, %v2961
      %v2963 = vpop.f32.mrb[0].mxu0
      %v2964 = vpop.f32.mrb[0].mxu0
      %v2965 = vadd.f32 0.0, %v2964
      %v2966 = vpop.f32.mrb[0].mxu0
      %2967 = vmatprep.mubr.bf16.mxu0 %v2170
      %2968 = vmatmul.mubr.bf16.gmra.mrb[0].mxu0 %v2169
      %v2969 = vpop.f32.mrb[0].mxu0
      %v2970 = vadd.f32 0.0, %v2969
      %v2971 = vpop.f32.mrb[0].mxu0
      %v2972 = vpop.f32.mrb[0].mxu0
      %v2973 = vadd.f32 0.0, %v2972
      %v2974 = vpop.f32.mrb[0].mxu0
      %2975 = vmatprep.mubr.bf16.mxu0 %v2180
      %2976 = vmatmul.mubr.bf16.gmra.mrb[0].mxu0 %v2179
      %v2977 = vpop.f32.mrb[0].mxu0
      %v2978 = vadd.f32 0.0, %v2977
      %v2979 = vpop.f32.mrb[0].mxu0
      %v2980 = vpop.f32.mrb[0].mxu0
      %v2981 = vadd.f32 0.0, %v2980
      %v2982 = vpop.f32.mrb[0].mxu0
      %2983 = vmatprep.mubr.bf16.mxu0 %v2190
      %2984 = vmatmul.mubr.bf16.gmra.mrb[0].mxu0 %v2189
      %v2985 = vpop.f32.mrb[0].mxu0
      %v2986 = vadd.f32 0.0, %v2985
      %v2987 = vpop.f32.mrb[0].mxu0
      %v2988 = vpop.f32.mrb[0].mxu0
      %v2989 = vadd.f32 0.0, %v2988
      %v2990 = vpop.f32.mrb[0].mxu0
      %2991 = vdwg.mxu0
      %2992 = vmatprep.subr.bf16.mxu0 0
      %2993 = vmatpush1.bf16.msra.mxu0 %v2650
      %2994 = vmatprep.subr.bf16.mxu0 0
      %2995 = vmatpush1.bf16.msra.mxu0 %v2651
      %2996 = vmatprep.subr.bf16.mxu0 0
      %2997 = vmatpush1.bf16.msra.mxu0 %v2652
      %2998 = vmatprep.subr.bf16.mxu0 0
      %2999 = vmatpush1.bf16.msra.mxu0 %v2653
      %3000 = vmatprep.subr.bf16.mxu0 0
      %3001 = vmatpush1.bf16.msra.mxu0 %v2654
      %3002 = vmatprep.subr.bf16.mxu0 0
      %3003 = vmatpush1.bf16.msra.mxu0 %v2655
      %3004 = vmatprep.subr.bf16.mxu0 0
      %3005 = vmatpush1.bf16.msra.mxu0 %v2656
      %3006 = vmatprep.subr.bf16.mxu0 0
      %3007 = vmatpush1.bf16.msra.mxu0 %v2657
      %3008 = vmatprep.subr.bf16.mxu0 0
      %3009 = vmatpush1.bf16.msra.mxu0 %v2658
      %3010 = vmatprep.subr.bf16.mxu0 0
      %3011 = vmatpush1.bf16.msra.mxu0 %v2659
      %3012 = vmatprep.subr.bf16.mxu0 0
      %3013 = vmatpush1.bf16.msra.mxu0 %v2660
      %3014 = vmatprep.subr.bf16.mxu0 0
      %3015 = vmatpush1.bf16.msra.mxu0 %v2661
      %3016 = vmatprep.subr.bf16.mxu0 0
      %3017 = vmatpush1.bf16.msra.mxu0 %v2662
      %3018 = vmatprep.subr.bf16.mxu0 0
      %3019 = vmatpush1.bf16.msra.mxu0 %v2663
      %3020 = vmatprep.subr.bf16.mxu0 0
      %3021 = vmatpush1.bf16.msra.mxu0 %v2664
      %3022 = vmatprep.subr.bf16.mxu0 0
      %3023 = vmatpush1.bf16.msra.mxu0 %v2665
      %3024 = vmatprep.mubr.bf16.mxu0 %v2042
      %3025 = vmatmul.mubr.bf16.gmra.mrb[0].mxu0 %v2041
      %v3026 = vpop.f32.mrb[0].mxu0
      %v3027 = vadd.f32 %v2866, %v3026
      %v3028 = vpop.f32.mrb[0].mxu0
      %v3029 = vpop.f32.mrb[0].mxu0
      %v3030 = vadd.f32 %v2869, %v3029
      %v3031 = vpop.f32.mrb[0].mxu0
      %3032 = vmatprep.mubr.bf16.mxu0 %v2052
      %3033 = vmatmul.mubr.bf16.gmra.mrb[0].mxu0 %v2051
      %v3034 = vpop.f32.mrb[0].mxu0
      %v3035 = vadd.f32 %v2874, %v3034
      %v3036 = vpop.f32.mrb[0].mxu0
      %v3037 = vpop.f32.mrb[0].mxu0
      %v3038 = vadd.f32 %v2877, %v3037
      %v3039 = vpop.f32.mrb[0].mxu0
      %3040 = vmatprep.mubr.bf16.mxu0 %v2062
      %3041 = vmatmul.mubr.bf16.gmra.mrb[0].mxu0 %v2061
      %v3042 = vpop.f32.mrb[0].mxu0
      %v3043 = vadd.f32 %v2882, %v3042
      %v3044 = vpop.f32.mrb[0].mxu0
      %v3045 = vpop.f32.mrb[0].mxu0
      %v3046 = vadd.f32 %v2885, %v3045
      %v3047 = vpop.f32.mrb[0].mxu0
      %3048 = vmatprep.mubr.bf16.mxu0 %v2072
      %3049 = vmatmul.mubr.bf16.gmra.mrb[0].mxu0 %v2071
      %v3050 = vpop.f32.mrb[0].mxu0
      %v3051 = vadd.f32 %v2890, %v3050
      %v3052 = vpop.f32.mrb[0].mxu0
      %v3053 = vpop.f32.mrb[0].mxu0
      %v3054 = vadd.f32 %v2893, %v3053
      %v3055 = vpop.f32.mrb[0].mxu0
      %3056 = vmatprep.mubr.bf16.mxu0 %v2082
      %3057 = vmatmul.mubr.bf16.gmra.mrb[0].mxu0 %v2081
      %v3058 = vpop.f32.mrb[0].mxu0
      %v3059 = vadd.f32 %v2898, %v3058
      %v3060 = vpop.f32.mrb[0].mxu0
      %v3061 = vpop.f32.mrb[0].mxu0
      %v3062 = vadd.f32 %v2901, %v3061
      %v3063 = vpop.f32.mrb[0].mxu0
      %3064 = vmatprep.mubr.bf16.mxu0 %v2092
      %3065 = vmatmul.mubr.bf16.gmra.mrb[0].mxu0 %v2091
      %v3066 = vpop.f32.mrb[0].mxu0
      %v3067 = vadd.f32 %v2906, %v3066
      %v3068 = vpop.f32.mrb[0].mxu0
      %v3069 = vpop.f32.mrb[0].mxu0
      %v3070 = vadd.f32 %v2909, %v3069
      %v3071 = vpop.f32.mrb[0].mxu0
      %3072 = vmatprep.mubr.bf16.mxu0 %v2102
      %3073 = vmatmul.mubr.bf16.gmra.mrb[0].mxu0 %v2101
      %v3074 = vpop.f32.mrb[0].mxu0
      %v3075 = vadd.f32 %v2914, %v3074
      %v3076 = vpop.f32.mrb[0].mxu0
      %v3077 = vpop.f32.mrb[0].mxu0
      %v3078 = vadd.f32 %v2917, %v3077
      %v3079 = vpop.f32.mrb[0].mxu0
      %3080 = vmatprep.mubr.bf16.mxu0 %v2112
      %3081 = vmatmul.mubr.bf16.gmra.mrb[0].mxu0 %v2111
      %v3082 = vpop.f32.mrb[0].mxu0
      %v3083 = vadd.f32 %v2922, %v3082
      %v3084 = vpop.f32.mrb[0].mxu0
      %v3085 = vpop.f32.mrb[0].mxu0
      %v3086 = vadd.f32 %v2925, %v3085
      %v3087 = vpop.f32.mrb[0].mxu0
      %3088 = vmatprep.mubr.bf16.mxu0 %v2122
      %3089 = vmatmul.mubr.bf16.gmra.mrb[0].mxu0 %v2121
      %v3090 = vpop.f32.mrb[0].mxu0
      %v3091 = vadd.f32 %v2930, %v3090
      %v3092 = vpop.f32.mrb[0].mxu0
      %v3093 = vpop.f32.mrb[0].mxu0
      %v3094 = vadd.f32 %v2933, %v3093
      %v3095 = vpop.f32.mrb[0].mxu0
      %3096 = vmatprep.mubr.bf16.mxu0 %v2132
      %3097 = vmatmul.mubr.bf16.gmra.mrb[0].mxu0 %v2131
      %v3098 = vpop.f32.mrb[0].mxu0
      %v3099 = vadd.f32 %v2938, %v3098
      %v3100 = vpop.f32.mrb[0].mxu0
      %v3101 = vpop.f32.mrb[0].mxu0
      %v3102 = vadd.f32 %v2941, %v3101
      %v3103 = vpop.f32.mrb[0].mxu0
      %3104 = vmatprep.mubr.bf16.mxu0 %v2142
      %3105 = vmatmul.mubr.bf16.gmra.mrb[0].mxu0 %v2141
      %v3106 = vpop.f32.mrb[0].mxu0
      %v3107 = vadd.f32 %v2946, %v3106
      %v3108 = vpop.f32.mrb[0].mxu0
      %v3109 = vpop.f32.mrb[0].mxu0
      %v3110 = vadd.f32 %v2949, %v3109
      %v3111 = vpop.f32.mrb[0].mxu0
      %3112 = vmatprep.mubr.bf16.mxu0 %v2152
      %3113 = vmatmul.mubr.bf16.gmra.mrb[0].mxu0 %v2151
      %v3114 = vpop.f32.mrb[0].mxu0
      %v3115 = vadd.f32 %v2954, %v3114
      %v3116 = vpop.f32.mrb[0].mxu0
      %v3117 = vpop.f32.mrb[0].mxu0
      %v3118 = vadd.f32 %v2957, %v3117
      %v3119 = vpop.f32.mrb[0].mxu0
      %3120 = vmatprep.mubr.bf16.mxu0 %v2162
      %3121 = vmatmul.mubr.bf16.gmra.mrb[0].mxu0 %v2161
      %v3122 = vpop.f32.mrb[0].mxu0
      %v3123 = vadd.f32 %v2962, %v3122
      %v3124 = vpop.f32.mrb[0].mxu0
      %v3125 = vpop.f32.mrb[0].mxu0
      %v3126 = vadd.f32 %v2965, %v3125
      %v3127 = vpop.f32.mrb[0].mxu0
      %3128 = vmatprep.mubr.bf16.mxu0 %v2172
      %3129 = vmatmul.mubr.bf16.gmra.mrb[0].mxu0 %v2171
      %v3130 = vpop.f32.mrb[0].mxu0
      %v3131 = vadd.f32 %v2970, %v3130
      %v3132 = vpop.f32.mrb[0].mxu0
      %v3133 = vpop.f32.mrb[0].mxu0
      %v3134 = vadd.f32 %v2973, %v3133
      %v3135 = vpop.f32.mrb[0].mxu0
      %3136 = vmatprep.mubr.bf16.mxu0 %v2182
      %3137 = vmatmul.mubr.bf16.gmra.mrb[0].mxu0 %v2181
      %v3138 = vpop.f32.mrb[0].mxu0
      %v3139 = vadd.f32 %v2978, %v3138
      %v3140 = vpop.f32.mrb[0].mxu0
      %v3141 = vpop.f32.mrb[0].mxu0
      %v3142 = vadd.f32 %v2981, %v3141
      %v3143 = vpop.f32.mrb[0].mxu0
      %3144 = vmatprep.mubr.bf16.mxu0 %v2192
      %3145 = vmatmul.mubr.bf16.gmra.mrb[0].mxu0 %v2191
      %v3146 = vpop.f32.mrb[0].mxu0
      %v3147 = vadd.f32 %v2986, %v3146
      %v3148 = vpop.f32.mrb[0].mxu0
      %v3149 = vpop.f32.mrb[0].mxu0
      %v3150 = vadd.f32 %v2989, %v3149
      %v3151 = vpop.f32.mrb[0].mxu0
      %3152 = vdwg.mxu0
      %3153 = vmatprep.subr.bf16.mxu0 0
      %3154 = vmatpush1.bf16.msra.mxu0 %v2666
      %3155 = vmatprep.subr.bf16.mxu0 0
      %3156 = vmatpush1.bf16.msra.mxu0 %v2667
      %3157 = vmatprep.subr.bf16.mxu0 0
      %3158 = vmatpush1.bf16.msra.mxu0 %v2668
      %3159 = vmatprep.subr.bf16.mxu0 0
      %3160 = vmatpush1.bf16.msra.mxu0 %v2669
      %3161 = vmatprep.subr.bf16.mxu0 0
      %3162 = vmatpush1.bf16.msra.mxu0 %v2670
      %3163 = vmatprep.subr.bf16.mxu0 0
      %3164 = vmatpush1.bf16.msra.mxu0 %v2671
      %3165 = vmatprep.subr.bf16.mxu0 0
      %3166 = vmatpush1.bf16.msra.mxu0 %v2672
      %3167 = vmatprep.subr.bf16.mxu0 0
      %3168 = vmatpush1.bf16.msra.mxu0 %v2673
      %3169 = vmatprep.subr.bf16.mxu0 0
      %3170 = vmatpush1.bf16.msra.mxu0 %v2674
      %3171 = vmatprep.subr.bf16.mxu0 0
      %3172 = vmatpush1.bf16.msra.mxu0 %v2675
      %3173 = vmatprep.subr.bf16.mxu0 0
      %3174 = vmatpush1.bf16.msra.mxu0 %v2676
      %3175 = vmatprep.subr.bf16.mxu0 0
      %3176 = vmatpush1.bf16.msra.mxu0 %v2677
      %3177 = vmatprep.subr.bf16.mxu0 0
      %3178 = vmatpush1.bf16.msra.mxu0 %v2678
      %3179 = vmatprep.subr.bf16.mxu0 0
      %3180 = vmatpush1.bf16.msra.mxu0 %v2679
      %3181 = vmatprep.subr.bf16.mxu0 0
      %3182 = vmatpush1.bf16.msra.mxu0 %v2680
      %3183 = vmatprep.subr.bf16.mxu0 0
      %3184 = vmatpush1.bf16.msra.mxu0 %v2681
      %3185 = vmatprep.mubr.bf16.mxu0 %v2044
      %3186 = vmatmul.mubr.bf16.gmra.mrb[0].mxu0 %v2043
      %v3187 = vpop.f32.mrb[0].mxu0
      %v3188 = vadd.f32 %v3027, %v3187
      %v3189 = vpop.f32.mrb[0].mxu0
      %v3190 = vpop.f32.mrb[0].mxu0
      %v3191 = vadd.f32 %v3030, %v3190
      %v3192 = vpop.f32.mrb[0].mxu0
      %3193 = vmatprep.mubr.bf16.mxu0 %v2054
      %3194 = vmatmul.mubr.bf16.gmra.mrb[0].mxu0 %v2053
      %v3195 = vpop.f32.mrb[0].mxu0
      %v3196 = vadd.f32 %v3035, %v3195
      %v3197 = vpop.f32.mrb[0].mxu0
      %v3198 = vpop.f32.mrb[0].mxu0
      %v3199 = vadd.f32 %v3038, %v3198
      %v3200 = vpop.f32.mrb[0].mxu0
      %3201 = vmatprep.mubr.bf16.mxu0 %v2064
      %3202 = vmatmul.mubr.bf16.gmra.mrb[0].mxu0 %v2063
      %v3203 = vpop.f32.mrb[0].mxu0
      %v3204 = vadd.f32 %v3043, %v3203
      %v3205 = vpop.f32.mrb[0].mxu0
      %v3206 = vpop.f32.mrb[0].mxu0
      %v3207 = vadd.f32 %v3046, %v3206
      %v3208 = vpop.f32.mrb[0].mxu0
      %3209 = vmatprep.mubr.bf16.mxu0 %v2074
      %3210 = vmatmul.mubr.bf16.gmra.mrb[0].mxu0 %v2073
      %v3211 = vpop.f32.mrb[0].mxu0
      %v3212 = vadd.f32 %v3051, %v3211
      %v3213 = vpop.f32.mrb[0].mxu0
      %v3214 = vpop.f32.mrb[0].mxu0
      %v3215 = vadd.f32 %v3054, %v3214
      %v3216 = vpop.f32.mrb[0].mxu0
      %3217 = vmatprep.mubr.bf16.mxu0 %v2084
      %3218 = vmatmul.mubr.bf16.gmra.mrb[0].mxu0 %v2083
      %v3219 = vpop.f32.mrb[0].mxu0
      %v3220 = vadd.f32 %v3059, %v3219
      %v3221 = vpop.f32.mrb[0].mxu0
      %v3222 = vpop.f32.mrb[0].mxu0
      %v3223 = vadd.f32 %v3062, %v3222
      %v3224 = vpop.f32.mrb[0].mxu0
      %3225 = vmatprep.mubr.bf16.mxu0 %v2094
      %3226 = vmatmul.mubr.bf16.gmra.mrb[0].mxu0 %v2093
      %v3227 = vpop.f32.mrb[0].mxu0
      %v3228 = vadd.f32 %v3067, %v3227
      %v3229 = vpop.f32.mrb[0].mxu0
      %v3230 = vpop.f32.mrb[0].mxu0
      %v3231 = vadd.f32 %v3070, %v3230
      %v3232 = vpop.f32.mrb[0].mxu0
      %3233 = vmatprep.mubr.bf16.mxu0 %v2104
      %3234 = vmatmul.mubr.bf16.gmra.mrb[0].mxu0 %v2103
      %v3235 = vpop.f32.mrb[0].mxu0
      %v3236 = vadd.f32 %v3075, %v3235
      %v3237 = vpop.f32.mrb[0].mxu0
      %v3238 = vpop.f32.mrb[0].mxu0
      %v3239 = vadd.f32 %v3078, %v3238
      %v3240 = vpop.f32.mrb[0].mxu0
      %3241 = vmatprep.mubr.bf16.mxu0 %v2114
      %3242 = vmatmul.mubr.bf16.gmra.mrb[0].mxu0 %v2113
      %v3243 = vpop.f32.mrb[0].mxu0
      %v3244 = vadd.f32 %v3083, %v3243
      %v3245 = vpop.f32.mrb[0].mxu0
      %v3246 = vpop.f32.mrb[0].mxu0
      %v3247 = vadd.f32 %v3086, %v3246
      %v3248 = vpop.f32.mrb[0].mxu0
      %3249 = vmatprep.mubr.bf16.mxu0 %v2124
      %3250 = vmatmul.mubr.bf16.gmra.mrb[0].mxu0 %v2123
      %v3251 = vpop.f32.mrb[0].mxu0
      %v3252 = vadd.f32 %v3091, %v3251
      %v3253 = vpop.f32.mrb[0].mxu0
      %v3254 = vpop.f32.mrb[0].mxu0
      %v3255 = vadd.f32 %v3094, %v3254
      %v3256 = vpop.f32.mrb[0].mxu0
      %3257 = vmatprep.mubr.bf16.mxu0 %v2134
      %3258 = vmatmul.mubr.bf16.gmra.mrb[0].mxu0 %v2133
      %v3259 = vpop.f32.mrb[0].mxu0
      %v3260 = vadd.f32 %v3099, %v3259
      %v3261 = vpop.f32.mrb[0].mxu0
      %v3262 = vpop.f32.mrb[0].mxu0
      %v3263 = vadd.f32 %v3102, %v3262
      %v3264 = vpop.f32.mrb[0].mxu0
      %3265 = vmatprep.mubr.bf16.mxu0 %v2144
      %3266 = vmatmul.mubr.bf16.gmra.mrb[0].mxu0 %v2143
      %v3267 = vpop.f32.mrb[0].mxu0
      %v3268 = vadd.f32 %v3107, %v3267
      %v3269 = vpop.f32.mrb[0].mxu0
      %v3270 = vpop.f32.mrb[0].mxu0
      %v3271 = vadd.f32 %v3110, %v3270
      %v3272 = vpop.f32.mrb[0].mxu0
      %3273 = vmatprep.mubr.bf16.mxu0 %v2154
      %3274 = vmatmul.mubr.bf16.gmra.mrb[0].mxu0 %v2153
      %v3275 = vpop.f32.mrb[0].mxu0
      %v3276 = vadd.f32 %v3115, %v3275
      %v3277 = vpop.f32.mrb[0].mxu0
      %v3278 = vpop.f32.mrb[0].mxu0
      %v3279 = vadd.f32 %v3118, %v3278
      %v3280 = vpop.f32.mrb[0].mxu0
      %3281 = vmatprep.mubr.bf16.mxu0 %v2164
      %3282 = vmatmul.mubr.bf16.gmra.mrb[0].mxu0 %v2163
      %v3283 = vpop.f32.mrb[0].mxu0
      %v3284 = vadd.f32 %v3123, %v3283
      %v3285 = vpop.f32.mrb[0].mxu0
      %v3286 = vpop.f32.mrb[0].mxu0
      %v3287 = vadd.f32 %v3126, %v3286
      %v3288 = vpop.f32.mrb[0].mxu0
      %3289 = vmatprep.mubr.bf16.mxu0 %v2174
      %3290 = vmatmul.mubr.bf16.gmra.mrb[0].mxu0 %v2173
      %v3291 = vpop.f32.mrb[0].mxu0
      %v3292 = vadd.f32 %v3131, %v3291
      %v3293 = vpop.f32.mrb[0].mxu0
      %v3294 = vpop.f32.mrb[0].mxu0
      %v3295 = vadd.f32 %v3134, %v3294
      %v3296 = vpop.f32.mrb[0].mxu0
      %3297 = vmatprep.mubr.bf16.mxu0 %v2184
      %3298 = vmatmul.mubr.bf16.gmra.mrb[0].mxu0 %v2183
      %v3299 = vpop.f32.mrb[0].mxu0
      %v3300 = vadd.f32 %v3139, %v3299
      %v3301 = vpop.f32.mrb[0].mxu0
      %v3302 = vpop.f32.mrb[0].mxu0
      %v3303 = vadd.f32 %v3142, %v3302
      %v3304 = vpop.f32.mrb[0].mxu0
      %3305 = vmatprep.mubr.bf16.mxu0 %v2194
      %3306 = vmatmul.mubr.bf16.gmra.mrb[0].mxu0 %v2193
      %v3307 = vpop.f32.mrb[0].mxu0
      %v3308 = vadd.f32 %v3147, %v3307
      %v3309 = vpop.f32.mrb[0].mxu0
      %v3310 = vpop.f32.mrb[0].mxu0
      %v3311 = vadd.f32 %v3150, %v3310
      %v3312 = vpop.f32.mrb[0].mxu0
      %3313 = vdwg.mxu0
      %3314 = vmatprep.subr.bf16.mxu0 0
      %3315 = vmatpush1.bf16.msra.mxu0 %v2682
      %3316 = vmatprep.subr.bf16.mxu0 0
      %3317 = vmatpush1.bf16.msra.mxu0 %v2683
      %3318 = vmatprep.subr.bf16.mxu0 0
      %3319 = vmatpush1.bf16.msra.mxu0 %v2684
      %3320 = vmatprep.subr.bf16.mxu0 0
      %3321 = vmatpush1.bf16.msra.mxu0 %v2685
      %3322 = vmatprep.subr.bf16.mxu0 0
      %3323 = vmatpush1.bf16.msra.mxu0 %v2686
      %3324 = vmatprep.subr.bf16.mxu0 0
      %3325 = vmatpush1.bf16.msra.mxu0 %v2687
      %3326 = vmatprep.subr.bf16.mxu0 0
      %3327 = vmatpush1.bf16.msra.mxu0 %v2688
      %3328 = vmatprep.subr.bf16.mxu0 0
      %3329 = vmatpush1.bf16.msra.mxu0 %v2689
      %3330 = vmatprep.subr.bf16.mxu0 0
      %3331 = vmatpush1.bf16.msra.mxu0 %v2690
      %3332 = vmatprep.subr.bf16.mxu0 0
      %3333 = vmatpush1.bf16.msra.mxu0 %v2691
      %3334 = vmatprep.subr.bf16.mxu0 0
      %3335 = vmatpush1.bf16.msra.mxu0 %v2692
      %3336 = vmatprep.subr.bf16.mxu0 0
      %3337 = vmatpush1.bf16.msra.mxu0 %v2693
      %3338 = vmatprep.subr.bf16.mxu0 0
      %3339 = vmatpush1.bf16.msra.mxu0 %v2694
      %3340 = vmatprep.subr.bf16.mxu0 0
      %3341 = vmatpush1.bf16.msra.mxu0 %v2695
      %3342 = vmatprep.subr.bf16.mxu0 0
      %3343 = vmatpush1.bf16.msra.mxu0 %v2696
      %3344 = vmatprep.subr.bf16.mxu0 0
      %3345 = vmatpush1.bf16.msra.mxu0 %v2697
      %3346 = vmatprep.mubr.bf16.mxu0 %v2046
      %3347 = vmatmul.mubr.bf16.gmra.mrb[0].mxu0 %v2045
      %v3348 = vpop.f32.mrb[0].mxu0
      %v3349 = vadd.f32 %v3188, %v3348
      %v3350 = vpop.f32.mrb[0].mxu0
      %v3351 = vpop.f32.mrb[0].mxu0
      %v3352 = vadd.f32 %v3191, %v3351
      %v3353 = vpop.f32.mrb[0].mxu0
      %3354 = vmatprep.mubr.bf16.mxu0 %v2056
      %3355 = vmatmul.mubr.bf16.gmra.mrb[0].mxu0 %v2055
      %v3356 = vpop.f32.mrb[0].mxu0
      %v3357 = vadd.f32 %v3196, %v3356
      %v3358 = vpop.f32.mrb[0].mxu0
      %v3359 = vpop.f32.mrb[0].mxu0
      %v3360 = vadd.f32 %v3199, %v3359
      %v3361 = vpop.f32.mrb[0].mxu0
      %3362 = vmatprep.mubr.bf16.mxu0 %v2066
      %3363 = vmatmul.mubr.bf16.gmra.mrb[0].mxu0 %v2065
      %v3364 = vpop.f32.mrb[0].mxu0
      %v3365 = vadd.f32 %v3204, %v3364
      %v3366 = vpop.f32.mrb[0].mxu0
      %v3367 = vpop.f32.mrb[0].mxu0
      %v3368 = vadd.f32 %v3207, %v3367
      %v3369 = vpop.f32.mrb[0].mxu0
      %3370 = vmatprep.mubr.bf16.mxu0 %v2076
      %3371 = vmatmul.mubr.bf16.gmra.mrb[0].mxu0 %v2075
      %v3372 = vpop.f32.mrb[0].mxu0
      %v3373 = vadd.f32 %v3212, %v3372
      %v3374 = vpop.f32.mrb[0].mxu0
      %v3375 = vpop.f32.mrb[0].mxu0
      %v3376 = vadd.f32 %v3215, %v3375
      %v3377 = vpop.f32.mrb[0].mxu0
      %3378 = vmatprep.mubr.bf16.mxu0 %v2086
      %3379 = vmatmul.mubr.bf16.gmra.mrb[0].mxu0 %v2085
      %v3380 = vpop.f32.mrb[0].mxu0
      %v3381 = vadd.f32 %v3220, %v3380
      %v3382 = vpop.f32.mrb[0].mxu0
      %v3383 = vpop.f32.mrb[0].mxu0
      %v3384 = vadd.f32 %v3223, %v3383
      %v3385 = vpop.f32.mrb[0].mxu0
      %3386 = vmatprep.mubr.bf16.mxu0 %v2096
      %3387 = vmatmul.mubr.bf16.gmra.mrb[0].mxu0 %v2095
      %v3388 = vpop.f32.mrb[0].mxu0
      %v3389 = vadd.f32 %v3228, %v3388
      %v3390 = vpop.f32.mrb[0].mxu0
      %v3391 = vpop.f32.mrb[0].mxu0
      %v3392 = vadd.f32 %v3231, %v3391
      %v3393 = vpop.f32.mrb[0].mxu0
      %3394 = vmatprep.mubr.bf16.mxu0 %v2106
      %3395 = vmatmul.mubr.bf16.gmra.mrb[0].mxu0 %v2105
      %v3396 = vpop.f32.mrb[0].mxu0
      %v3397 = vadd.f32 %v3236, %v3396
      %v3398 = vpop.f32.mrb[0].mxu0
      %v3399 = vpop.f32.mrb[0].mxu0
      %v3400 = vadd.f32 %v3239, %v3399
      %v3401 = vpop.f32.mrb[0].mxu0
      %3402 = vmatprep.mubr.bf16.mxu0 %v2116
      %3403 = vmatmul.mubr.bf16.gmra.mrb[0].mxu0 %v2115
      %v3404 = vpop.f32.mrb[0].mxu0
      %v3405 = vadd.f32 %v3244, %v3404
      %v3406 = vpop.f32.mrb[0].mxu0
      %v3407 = vpop.f32.mrb[0].mxu0
      %v3408 = vadd.f32 %v3247, %v3407
      %v3409 = vpop.f32.mrb[0].mxu0
      %3410 = vmatprep.mubr.bf16.mxu0 %v2126
      %3411 = vmatmul.mubr.bf16.gmra.mrb[0].mxu0 %v2125
      %v3412 = vpop.f32.mrb[0].mxu0
      %v3413 = vadd.f32 %v3252, %v3412
      %v3414 = vpop.f32.mrb[0].mxu0
      %v3415 = vpop.f32.mrb[0].mxu0
      %v3416 = vadd.f32 %v3255, %v3415
      %v3417 = vpop.f32.mrb[0].mxu0
      %3418 = vmatprep.mubr.bf16.mxu0 %v2136
      %3419 = vmatmul.mubr.bf16.gmra.mrb[0].mxu0 %v2135
      %v3420 = vpop.f32.mrb[0].mxu0
      %v3421 = vadd.f32 %v3260, %v3420
      %v3422 = vpop.f32.mrb[0].mxu0
      %v3423 = vpop.f32.mrb[0].mxu0
      %v3424 = vadd.f32 %v3263, %v3423
      %v3425 = vpop.f32.mrb[0].mxu0
      %3426 = vmatprep.mubr.bf16.mxu0 %v2146
      %3427 = vmatmul.mubr.bf16.gmra.mrb[0].mxu0 %v2145
      %v3428 = vpop.f32.mrb[0].mxu0
      %v3429 = vadd.f32 %v3268, %v3428
      %v3430 = vpop.f32.mrb[0].mxu0
      %v3431 = vpop.f32.mrb[0].mxu0
      %v3432 = vadd.f32 %v3271, %v3431
      %v3433 = vpop.f32.mrb[0].mxu0
      %3434 = vmatprep.mubr.bf16.mxu0 %v2156
      %3435 = vmatmul.mubr.bf16.gmra.mrb[0].mxu0 %v2155
      %v3436 = vpop.f32.mrb[0].mxu0
      %v3437 = vadd.f32 %v3276, %v3436
      %v3438 = vpop.f32.mrb[0].mxu0
      %v3439 = vpop.f32.mrb[0].mxu0
      %v3440 = vadd.f32 %v3279, %v3439
      %v3441 = vpop.f32.mrb[0].mxu0
      %3442 = vmatprep.mubr.bf16.mxu0 %v2166
      %3443 = vmatmul.mubr.bf16.gmra.mrb[0].mxu0 %v2165
      %v3444 = vpop.f32.mrb[0].mxu0
      %v3445 = vadd.f32 %v3284, %v3444
      %v3446 = vpop.f32.mrb[0].mxu0
      %v3447 = vpop.f32.mrb[0].mxu0
      %v3448 = vadd.f32 %v3287, %v3447
      %v3449 = vpop.f32.mrb[0].mxu0
      %3450 = vmatprep.mubr.bf16.mxu0 %v2176
      %3451 = vmatmul.mubr.bf16.gmra.mrb[0].mxu0 %v2175
      %v3452 = vpop.f32.mrb[0].mxu0
      %v3453 = vadd.f32 %v3292, %v3452
      %v3454 = vpop.f32.mrb[0].mxu0
      %v3455 = vpop.f32.mrb[0].mxu0
      %v3456 = vadd.f32 %v3295, %v3455
      %v3457 = vpop.f32.mrb[0].mxu0
      %3458 = vmatprep.mubr.bf16.mxu0 %v2186
      %3459 = vmatmul.mubr.bf16.gmra.mrb[0].mxu0 %v2185
      %v3460 = vpop.f32.mrb[0].mxu0
      %v3461 = vadd.f32 %v3300, %v3460
      %v3462 = vpop.f32.mrb[0].mxu0
      %v3463 = vpop.f32.mrb[0].mxu0
      %v3464 = vadd.f32 %v3303, %v3463
      %v3465 = vpop.f32.mrb[0].mxu0
      %3466 = vmatprep.mubr.bf16.mxu0 %v2196
      %3467 = vmatmul.mubr.bf16.gmra.mrb[0].mxu0 %v2195
      %v3468 = vpop.f32.mrb[0].mxu0
      %v3469 = vadd.f32 %v3308, %v3468
      %v3470 = vpop.f32.mrb[0].mxu0
      %v3471 = vpop.f32.mrb[0].mxu0
      %v3472 = vadd.f32 %v3311, %v3471
      %v3473 = vpop.f32.mrb[0].mxu0
      %3474 = vdwg.mxu0
      %3475 = vmatprep.subr.bf16.mxu0 0
      %3476 = vmatpush1.bf16.msra.mxu0 %v2698
      %3477 = vmatprep.subr.bf16.mxu0 0
      %3478 = vmatpush1.bf16.msra.mxu0 %v2699
      %3479 = vmatprep.subr.bf16.mxu0 0
      %3480 = vmatpush1.bf16.msra.mxu0 %v2700
      %3481 = vmatprep.subr.bf16.mxu0 0
      %3482 = vmatpush1.bf16.msra.mxu0 %v2701
      %3483 = vmatprep.subr.bf16.mxu0 0
      %3484 = vmatpush1.bf16.msra.mxu0 %v2702
      %3485 = vmatprep.subr.bf16.mxu0 0
      %3486 = vmatpush1.bf16.msra.mxu0 %v2703
      %3487 = vmatprep.subr.bf16.mxu0 0
      %3488 = vmatpush1.bf16.msra.mxu0 %v2704
      %3489 = vmatprep.subr.bf16.mxu0 0
      %3490 = vmatpush1.bf16.msra.mxu0 %v2705
      %3491 = vmatprep.subr.bf16.mxu0 0
      %3492 = vmatpush1.bf16.msra.mxu0 %v2829
      %3493 = vmatprep.subr.bf16.mxu0 0
      %3494 = vmatpush1.bf16.msra.mxu0 0
      %3495 = vmatprep.subr.bf16.mxu0 0
      %3496 = vmatpush1.bf16.msra.mxu0 0
      %3497 = vmatprep.subr.bf16.mxu0 0
      %3498 = vmatpush1.bf16.msra.mxu0 0
      %3499 = vmatprep.subr.bf16.mxu0 0
      %3500 = vmatpush1.bf16.msra.mxu0 0
      %3501 = vmatprep.subr.bf16.mxu0 0
      %3502 = vmatpush1.bf16.msra.mxu0 0
      %3503 = vmatprep.subr.bf16.mxu0 0
      %3504 = vmatpush1.bf16.msra.mxu0 0
      %3505 = vmatprep.subr.bf16.mxu0 0
      %3506 = vmatpush1.bf16.msra.mxu0 0
      %3507 = vmatprep.mubr.bf16.mxu0 %v2780
      %3508 = vmatmul.mubr.bf16.gmra.mrb[0].mxu0 %v2047
      %v3509 = vpop.f32.mrb[0].mxu0
      %v3510 = vadd.f32 %v3349, %v3509
      %v3511 = vpop.f32.mrb[0].mxu0
      %v3512 = vpop.f32.mrb[0].mxu0
      %v3513 = vadd.f32 %v3352, %v3512
      %v3514 = vpop.f32.mrb[0].mxu0
      %3515 = vmatprep.mubr.bf16.mxu0 %v2783
      %3516 = vmatmul.mubr.bf16.gmra.mrb[0].mxu0 %v2057
      %v3517 = vpop.f32.mrb[0].mxu0
      %v3518 = vadd.f32 %v3357, %v3517
      %v3519 = vpop.f32.mrb[0].mxu0
      %v3520 = vpop.f32.mrb[0].mxu0
      %v3521 = vadd.f32 %v3360, %v3520
      %v3522 = vpop.f32.mrb[0].mxu0
      %3523 = vmatprep.mubr.bf16.mxu0 %v2786
      %3524 = vmatmul.mubr.bf16.gmra.mrb[0].mxu0 %v2067
      %v3525 = vpop.f32.mrb[0].mxu0
      %v3526 = vadd.f32 %v3365, %v3525
      %v3527 = vpop.f32.mrb[0].mxu0
      %v3528 = vpop.f32.mrb[0].mxu0
      %v3529 = vadd.f32 %v3368, %v3528
      %v3530 = vpop.f32.mrb[0].mxu0
      %3531 = vmatprep.mubr.bf16.mxu0 %v2789
      %3532 = vmatmul.mubr.bf16.gmra.mrb[0].mxu0 %v2077
      %v3533 = vpop.f32.mrb[0].mxu0
      %v3534 = vadd.f32 %v3373, %v3533
      %v3535 = vpop.f32.mrb[0].mxu0
      %v3536 = vpop.f32.mrb[0].mxu0
      %v3537 = vadd.f32 %v3376, %v3536
      %v3538 = vpop.f32.mrb[0].mxu0
      %3539 = vmatprep.mubr.bf16.mxu0 %v2792
      %3540 = vmatmul.mubr.bf16.gmra.mrb[0].mxu0 %v2087
      %v3541 = vpop.f32.mrb[0].mxu0
      %v3542 = vadd.f32 %v3381, %v3541
      %v3543 = vpop.f32.mrb[0].mxu0
      %v3544 = vpop.f32.mrb[0].mxu0
      %v3545 = vadd.f32 %v3384, %v3544
      %v3546 = vpop.f32.mrb[0].mxu0
      %3547 = vmatprep.mubr.bf16.mxu0 %v2795
      %3548 = vmatmul.mubr.bf16.gmra.mrb[0].mxu0 %v2097
      %v3549 = vpop.f32.mrb[0].mxu0
      %v3550 = vadd.f32 %v3389, %v3549
      %v3551 = vpop.f32.mrb[0].mxu0
      %v3552 = vpop.f32.mrb[0].mxu0
      %v3553 = vadd.f32 %v3392, %v3552
      %v3554 = vpop.f32.mrb[0].mxu0
      %3555 = vmatprep.mubr.bf16.mxu0 %v2798
      %3556 = vmatmul.mubr.bf16.gmra.mrb[0].mxu0 %v2107
      %v3557 = vpop.f32.mrb[0].mxu0
      %v3558 = vadd.f32 %v3397, %v3557
      %v3559 = vpop.f32.mrb[0].mxu0
      %v3560 = vpop.f32.mrb[0].mxu0
      %v3561 = vadd.f32 %v3400, %v3560
      %v3562 = vpop.f32.mrb[0].mxu0
      %3563 = vmatprep.mubr.bf16.mxu0 %v2801
      %3564 = vmatmul.mubr.bf16.gmra.mrb[0].mxu0 %v2117
      %v3565 = vpop.f32.mrb[0].mxu0
      %v3566 = vadd.f32 %v3405, %v3565
      %v3567 = vpop.f32.mrb[0].mxu0
      %v3568 = vpop.f32.mrb[0].mxu0
      %v3569 = vadd.f32 %v3408, %v3568
      %v3570 = vpop.f32.mrb[0].mxu0
      %3571 = vmatprep.mubr.bf16.mxu0 %v2804
      %3572 = vmatmul.mubr.bf16.gmra.mrb[0].mxu0 %v2127
      %v3573 = vpop.f32.mrb[0].mxu0
      %v3574 = vadd.f32 %v3413, %v3573
      %v3575 = vpop.f32.mrb[0].mxu0
      %v3576 = vpop.f32.mrb[0].mxu0
      %v3577 = vadd.f32 %v3416, %v3576
      %v3578 = vpop.f32.mrb[0].mxu0
      %3579 = vmatprep.mubr.bf16.mxu0 %v2807
      %3580 = vmatmul.mubr.bf16.gmra.mrb[0].mxu0 %v2137
      %v3581 = vpop.f32.mrb[0].mxu0
      %v3582 = vadd.f32 %v3421, %v3581
      %v3583 = vpop.f32.mrb[0].mxu0
      %v3584 = vpop.f32.mrb[0].mxu0
      %v3585 = vadd.f32 %v3424, %v3584
      %v3586 = vpop.f32.mrb[0].mxu0
      %3587 = vmatprep.mubr.bf16.mxu0 %v2810
      %3588 = vmatmul.mubr.bf16.gmra.mrb[0].mxu0 %v2147
      %v3589 = vpop.f32.mrb[0].mxu0
      %v3590 = vadd.f32 %v3429, %v3589
      %v3591 = vpop.f32.mrb[0].mxu0
      %v3592 = vpop.f32.mrb[0].mxu0
      %v3593 = vadd.f32 %v3432, %v3592
      %v3594 = vpop.f32.mrb[0].mxu0
      %3595 = vmatprep.mubr.bf16.mxu0 %v2813
      %3596 = vmatmul.mubr.bf16.gmra.mrb[0].mxu0 %v2157
      %v3597 = vpop.f32.mrb[0].mxu0
      %v3598 = vadd.f32 %v3437, %v3597
      %v3599 = vpop.f32.mrb[0].mxu0
      %v3600 = vpop.f32.mrb[0].mxu0
      %v3601 = vadd.f32 %v3440, %v3600
      %v3602 = vpop.f32.mrb[0].mxu0
      %3603 = vmatprep.mubr.bf16.mxu0 %v2816
      %3604 = vmatmul.mubr.bf16.gmra.mrb[0].mxu0 %v2167
      %v3605 = vpop.f32.mrb[0].mxu0
      %v3606 = vadd.f32 %v3445, %v3605
      %v3607 = vpop.f32.mrb[0].mxu0
      %v3608 = vpop.f32.mrb[0].mxu0
      %v3609 = vadd.f32 %v3448, %v3608
      %v3610 = vpop.f32.mrb[0].mxu0
      %3611 = vmatprep.mubr.bf16.mxu0 %v2819
      %3612 = vmatmul.mubr.bf16.gmra.mrb[0].mxu0 %v2177
      %v3613 = vpop.f32.mrb[0].mxu0
      %v3614 = vadd.f32 %v3453, %v3613
      %v3615 = vpop.f32.mrb[0].mxu0
      %v3616 = vpop.f32.mrb[0].mxu0
      %v3617 = vadd.f32 %v3456, %v3616
      %v3618 = vpop.f32.mrb[0].mxu0
      %3619 = vmatprep.mubr.bf16.mxu0 %v2822
      %3620 = vmatmul.mubr.bf16.gmra.mrb[0].mxu0 %v2187
      %v3621 = vpop.f32.mrb[0].mxu0
      %v3622 = vadd.f32 %v3461, %v3621
      %v3623 = vpop.f32.mrb[0].mxu0
      %v3624 = vpop.f32.mrb[0].mxu0
      %v3625 = vadd.f32 %v3464, %v3624
      %v3626 = vpop.f32.mrb[0].mxu0
      %3627 = vmatprep.mubr.bf16.mxu0 %v2825
      %3628 = vmatmul.mubr.bf16.gmra.mrb[0].mxu0 %v2197
      %v3629 = vpop.f32.mrb[0].mxu0
      %v3630 = vadd.f32 %v3469, %v3629
      %v3631 = vpop.f32.mrb[0].mxu0
      %v3632 = vpop.f32.mrb[0].mxu0
      %v3633 = vadd.f32 %v3472, %v3632
      %v3634 = vpop.f32.mrb[0].mxu0
      %3635 = vdwg.mxu0
      %3636 = vst.msk [vmem:[%s244] sm:$0xff] %vm436, %v3510
      %3637 = vst.msk [vmem:[%s244 + $0x8] sm:$0xff] %vm436, %v3513
      %3638 = vst.msk [vmem:[%s244 + $0x10] sm:$0xff] %vm436, %v3518
      %3639 = vst.msk [vmem:[%s244 + $0x18] sm:$0xff] %vm436, %v3521
      %3640 = vst.msk [vmem:[%s244 + $0x20] sm:$0xff] %vm436, %v3526
      %3641 = vst.msk [vmem:[%s244 + $0x28] sm:$0xff] %vm436, %v3529
      %3642 = vst.msk [vmem:[%s244 + $0x30] sm:$0xff] %vm436, %v3534
      %3643 = vst.msk [vmem:[%s244 + $0x38] sm:$0xff] %vm436, %v3537
      %3644 = vst.msk [vmem:[%s244 + $0x40] sm:$0xff] %vm436, %v3542
      %3645 = vst.msk [vmem:[%s244 + $0x48] sm:$0xff] %vm436, %v3545
      %3646 = vst.msk [vmem:[%s244 + $0x50] sm:$0xff] %vm436, %v3550
      %3647 = vst.msk [vmem:[%s244 + $0x58] sm:$0xff] %vm436, %v3553
      %3648 = vst.msk [vmem:[%s244 + $0x60] sm:$0xff] %vm436, %v3558
      %3649 = vst.msk [vmem:[%s244 + $0x68] sm:$0xff] %vm436, %v3561
      %3650 = vst.msk [vmem:[%s244 + $0x70] sm:$0xff] %vm436, %v3566
      %3651 = vst.msk [vmem:[%s244 + $0x78] sm:$0xff] %vm436, %v3569
      %3652 = vst.msk [vmem:[%s244 + $0x80] sm:$0xff] %vm436, %v3574
      %3653 = vst.msk [vmem:[%s244 + $0x88] sm:$0xff] %vm436, %v3577
      %3654 = vst.msk [vmem:[%s244 + $0x90] sm:$0xff] %vm436, %v3582
      %3655 = vst.msk [vmem:[%s244 + $0x98] sm:$0xff] %vm436, %v3585
      %3656 = vst.msk [vmem:[%s244 + $0xa0] sm:$0xff] %vm436, %v3590
      %3657 = vst.msk [vmem:[%s244 + $0xa8] sm:$0xff] %vm436, %v3593
      %3658 = vst.msk [vmem:[%s244 + $0xb0] sm:$0xff] %vm436, %v3598
      %3659 = vst.msk [vmem:[%s244 + $0xb8] sm:$0xff] %vm436, %v3601
      %3660 = vst.msk [vmem:[%s244 + $0xc0] sm:$0xff] %vm436, %v3606
      %3661 = vst.msk [vmem:[%s244 + $0xc8] sm:$0xff] %vm436, %v3609
      %3662 = vst.msk [vmem:[%s244 + $0xd0] sm:$0xff] %vm436, %v3614
      %3663 = vst.msk [vmem:[%s244 + $0xd8] sm:$0xff] %vm436, %v3617
      %3664 = vst.msk [vmem:[%s244 + $0xe0] sm:$0xff] %vm436, %v3622
      %3665 = vst.msk [vmem:[%s244 + $0xe8] sm:$0xff] %vm436, %v3625
      %3666 = vst.msk [vmem:[%s244 + $0xf0] sm:$0xff] %vm436, %v3630
      %3667 = vst.msk [vmem:[%s244 + $0xf8] sm:$0xff] %vm436, %v3633
      %p3668 = scmp.lt.s32.totalorder %s16, 1
      %s3669 = scalar_select %p3668, %s16, 1
      %s3670 = smul.addr %s3669, 32
      %s3671 = smul.addr %s3670, 8
      %s3672 = scalar_lea.vmem %s5, %s3671
      // Predicated region
      $region41: #{basic_block_forward.3} parent=39 // pred_check
        %p3673 = pneg %p149
      $region42: #{basic_block_forward.3} parent=39 // pred_check_branch
        %3675 = sbr.rel (%p3673) target = $region44
      $region43: #{basic_block_forward.3} parent=39 // pred_region
        _
      $region44: #{basic_block_forward.3} parent=39 // pred_fallthru
        _
    $region40: #{basic_block_forward.3} parent=5 // pred_fallthru
      _
    %p3676 = scmp.le.s32.totalorder 2, %s11
    // Predicated region
    $region45: #{basic_block_forward.3} parent=5 // pred_check
      %p3677 = pneg %p3676
    $region46: #{basic_block_forward.3} parent=5 // pred_check_branch
      %3679 = sbr.rel (%p3677) target = $region48
    $region47: #{basic_block_forward.3} parent=5 // pred_region
      %s3680 = ssub.s32 %s11, 2
      // Predicated region
      $region49: #{basic_block_forward.3} parent=47 // pred_check
        %p3681 = pneg %p155
      $region50: #{basic_block_forward.3} parent=47 // pred_check_branch
        %3683 = sbr.rel (%p3681) target = $region52
      $region51: #{basic_block_forward.3} parent=47 // pred_region
        %p3684 = scmp.lt.s32.totalorder %s17, 1
        %s3685 = scalar_select %p3684, %s17, 1
        %s3686 = smul.addr %s3685, 32
        %s3687 = smul.addr %s3686, 8
        %s3688 = scalar_lea.vmem %s5, %s3687
      $region52: #{basic_block_forward.3} parent=47 // pred_fallthru
        _
    $region48: #{basic_block_forward.3} parent=5 // pred_fallthru
      _
  $region6: #{basic_block_forward.3} parent=0 // loop_footer
    %s15 = sadd.s32 1, %s11
  $region7: #{basic_block_forward.3} parent=0 // loop_footer_branch
    %10 = sbr.rel target = $region3
  $region8: #{basic_block_forward.3} parent=0 // loop_exit
    _

</llo_original>
